<compile_context>
chip_gen: v7x
topology: tpu7x:2x2x1
jax: 0.10.0
libtpu: 0.0.40
codegen_flags: <defaults>
</compile_context>

<pallas_src>
import numpy as np
import jax
import jax.numpy as jnp
from jax.experimental import pallas as pl
from jax.experimental.pallas import tpu as pltpu

LN_EPS = 1e-5  # PyTorch nn.LayerNorm default


# ----------------------------------------------------------------------------
# Plain-JAX glue: window partition / reverse, masks, relative position bias
# ----------------------------------------------------------------------------
def window_partition(x, ws):
    B, H, W, C = x.shape
    x = x.reshape(B, H // ws, ws, W // ws, ws, C)
    return x.transpose(0, 1, 3, 2, 4, 5).reshape(-1, ws, ws, C)


def window_reverse(windows, ws, H, W):
    B = windows.shape[0] // (H * W // ws // ws)
    x = windows.reshape(B, H // ws, W // ws, ws, ws, -1)
    return x.transpose(0, 1, 3, 2, 4, 5).reshape(B, H, W, -1)


def relative_position_index(ws):
    coords = np.stack(np.meshgrid(np.arange(ws), np.arange(ws), indexing="ij"))
    coords_flat = coords.reshape(2, -1)
    rel = coords_flat[:, :, None] - coords_flat[:, None, :]
    rel = rel.transpose(1, 2, 0).astype(np.int64)
    rel[:, :, 0] += ws - 1
    rel[:, :, 1] += ws - 1
    rel[:, :, 0] *= 2 * ws - 1
    return rel.sum(-1)  # (ws*ws, ws*ws)


def gather_rel_bias(table, ws, num_heads):
    # table: ((2*ws-1)^2, num_heads) -> (num_heads, N, N). Computed ONCE per layer.
    idx = relative_position_index(ws).reshape(-1)
    N = ws * ws
    bias = jnp.asarray(table)[idx].reshape(N, N, num_heads)
    return jnp.transpose(bias, (2, 0, 1))


def compute_attn_mask(Hp, Wp, window_size, shift_size):
    # Same construction as Swin's BasicLayer (0 / -100.0), built on the PADDED size.
    img_mask = np.zeros((1, Hp, Wp, 1), np.float32)
    cnt = 0
    h_slices = (slice(0, -window_size), slice(-window_size, -shift_size),
                slice(-shift_size, None))
    w_slices = (slice(0, -window_size), slice(-window_size, -shift_size),
                slice(-shift_size, None))
    for h in h_slices:
        for w in w_slices:
            img_mask[:, h, w, :] = cnt
            cnt += 1
    mw = np.asarray(window_partition(jnp.asarray(img_mask), window_size))
    mw = mw.reshape(-1, window_size * window_size)
    attn_mask = mw[:, None, :] - mw[:, :, None]
    attn_mask = np.where(attn_mask != 0, -100.0, 0.0).astype(np.float32)
    return jnp.asarray(attn_mask)  # (nW, N, N)


# ----------------------------------------------------------------------------
# Tile-size helpers
# ----------------------------------------------------------------------------
def _pick_tm(M, cap=512):
    """Largest row tile <= cap that divides M (and keeps the (8,128) rule)."""
    if M <= cap:
        return M
    for t in range(cap, 7, -1):
        if M % t == 0 and t % 8 == 0:
            return t
    return M


def _pick_bw(B_, nW, N, max_rows=512):
    """Windows per grid step: divides B_, compatible with per-window mask order,
    and Bw*N rows <= max_rows."""
    best = 1
    for bw in range(1, B_ + 1):
        if B_ % bw:
            continue
        if (nW % bw != 0) and (bw % nW != 0):
            continue
        if bw * N > max_rows:
            continue
        best = max(best, bw)
    return best


# ----------------------------------------------------------------------------
# Pallas kernel 1: standalone LayerNorm (used only when spatial padding is needed)
# ----------------------------------------------------------------------------
def _layernorm_kernel(x_ref, g_ref, b_ref, o_ref):
    x = x_ref[...].astype(jnp.float32)
    mu = jnp.mean(x, axis=-1, keepdims=True)
    var = jnp.mean((x - mu) ** 2, axis=-1, keepdims=True)
    y = (x - mu) * jax.lax.rsqrt(var + LN_EPS) * g_ref[0] + b_ref[0]
    o_ref[...] = y.astype(o_ref.dtype)


def layernorm_pallas(x2d, gamma, beta, tm=None):
    M, C = x2d.shape
    tm = _pick_tm(M) if tm is None else min(tm, M)
    assert M % tm == 0
    return pl.pallas_call(
        _layernorm_kernel,
        out_shape=jax.ShapeDtypeStruct((M, C), x2d.dtype),
        grid=(M // tm,),
        in_specs=[
            pl.BlockSpec((tm, C), lambda i: (i, 0)),
            pl.BlockSpec((1, C), lambda i: (0, 0)),
            pl.BlockSpec((1, C), lambda i: (0, 0)),
        ],
        out_specs=pl.BlockSpec((tm, C), lambda i: (i, 0)),
        compiler_params=pltpu.CompilerParams(dimension_semantics=("parallel",)),
    )(x2d, gamma.reshape(1, C), beta.reshape(1, C))


# ----------------------------------------------------------------------------
# Pallas kernel 2: (optional LN1) + batched-window multi-head attention
# ----------------------------------------------------------------------------
def _make_attn_kernel(num_heads, head_dim, scale, C, N, Bw,
                      fuse_ln, use_mask, compute_dtype):
    def kernel(*refs):
        i = 0
        x_ref = refs[i]; i += 1
        mask_ref = None
        if use_mask:
            mask_ref = refs[i]; i += 1
        bias_ref = refs[i]; i += 1
        if fuse_ln:
            g1_ref, b1_ref = refs[i], refs[i + 1]; i += 2
        qkvw_ref, qkvb_ref, projw_ref, projb_ref, o_ref = refs[i:i + 5]

        # (Bw, N, C) -> (Bw*N, C) flat token slab.
        x = x_ref[...].reshape(Bw * N, C).astype(jnp.float32)
        if fuse_ln:
            mu = jnp.mean(x, axis=-1, keepdims=True)
            var = jnp.mean((x - mu) ** 2, axis=-1, keepdims=True)
            x = (x - mu) * jax.lax.rsqrt(var + LN_EPS) * g1_ref[0] + b1_ref[0]

        # One big QKV projection for all windows in the block.
        qkv = jnp.dot(x.astype(compute_dtype), qkvw_ref[...],
                      preferred_element_type=jnp.float32) + qkvb_ref[0]  # (Bw*N, 3C) f32

        def split_heads(z):
            # (Bw*N, C) -> (num_heads*Bw, N, head_dim), head-major batch order.
            parts = [z[:, h * head_dim:(h + 1) * head_dim] for h in range(num_heads)]
            return jnp.stack(parts, axis=0).reshape(num_heads * Bw, N, head_dim)

        q = split_heads(qkv[:, :C] * scale).astype(compute_dtype)
        k = split_heads(qkv[:, C:2 * C]).astype(compute_dtype)
        v = split_heads(qkv[:, 2 * C:]).astype(compute_dtype)

        # Single batched score matmul over all (head, window) groups.
        attn = jnp.einsum('gnd,gmd->gnm', q, k,
                          preferred_element_type=jnp.float32)          # (H*Bw, N, N)
        attn = attn.reshape(num_heads, Bw, N, N) + bias_ref[...][:, None, :, :]
        if use_mask:
            attn = attn + mask_ref[...][None, :, :, :]

        # Softmax in f32; divide on the EUP via approximate reciprocal.
        attn = attn - jnp.max(attn, axis=-1, keepdims=True)
        p = jnp.exp(attn)
        p = p * pl.reciprocal(jnp.sum(p, axis=-1, keepdims=True), approx=True)
        p = p.reshape(num_heads * Bw, N, N).astype(compute_dtype)

        out = jnp.einsum('gnm,gmd->gnd', p, v,
                         preferred_element_type=jnp.float32)           # (H*Bw, N, hd)
        out = out.reshape(num_heads, Bw * N, head_dim)
        out = jnp.concatenate([out[h] for h in range(num_heads)], axis=-1)  # (Bw*N, C)

        out = jnp.dot(out.astype(compute_dtype), projw_ref[...],
                      preferred_element_type=jnp.float32) + projb_ref[0]
        o_ref[...] = out.reshape(Bw, N, C).astype(o_ref.dtype)

    return kernel


def window_attention_pallas(xw, attn_mask, rel_bias, qkv_w, qkv_b, proj_w, proj_b,
                            num_heads, ln1=None, compute_dtype=jnp.float32):
    """xw: (B_, N, C) raw (if ln1 given) or pre-normalized windows."""
    B_, N, C = xw.shape
    use_mask = attn_mask is not None
    fuse_ln = ln1 is not None
    nW = attn_mask.shape[0] if use_mask else 1
    head_dim = C // num_heads
    scale = head_dim ** (-0.5)

    Bw = _pick_bw(B_, nW if use_mask else 1, N)

    inputs = [xw]
    in_specs = [pl.BlockSpec((Bw, N, C), lambda b: (b, 0, 0))]

    if use_mask:
        if Bw % nW == 0:
            # Each grid step covers whole images' window sets -> tile mask once.
            mask_arr = jnp.tile(attn_mask, (Bw // nW, 1, 1))
            mask_spec = pl.BlockSpec((Bw, N, N), lambda b: (0, 0, 0))
        else:  # nW % Bw == 0: consecutive windows map to a contiguous mask slice.
            nblk = nW // Bw
            mask_arr = attn_mask
            mask_spec = pl.BlockSpec((Bw, N, N), lambda b: (b % nblk, 0, 0))
        inputs.append(mask_arr)
        in_specs.append(mask_spec)

    inputs.append(rel_bias)
    in_specs.append(pl.BlockSpec((num_heads, N, N), lambda b: (0, 0, 0)))

    if fuse_ln:
        g1, b1 = ln1
        inputs += [g1.reshape(1, C), b1.reshape(1, C)]
        in_specs += [pl.BlockSpec((1, C), lambda b: (0, 0)),
                     pl.BlockSpec((1, C), lambda b: (0, 0))]

    # Weights cast to compute_dtype (bf16 on v5e/v6e/v7x halves DMA + feeds the MXU
    # at native rate); biases stay f32 since accumulation is f32.
    inputs += [qkv_w.astype(compute_dtype), qkv_b.reshape(1, 3 * C),
               proj_w.astype(compute_dtype), proj_b.reshape(1, C)]
    in_specs += [pl.BlockSpec((C, 3 * C), lambda b: (0, 0)),
                 pl.BlockSpec((1, 3 * C), lambda b: (0, 0)),
                 pl.BlockSpec((C, C), lambda b: (0, 0)),
                 pl.BlockSpec((1, C), lambda b: (0, 0))]

    kernel = _make_attn_kernel(num_heads, head_dim, scale, C, N, Bw,
                               fuse_ln, use_mask, compute_dtype)
    return pl.pallas_call(
        kernel,
        out_shape=jax.ShapeDtypeStruct((B_, N, C), xw.dtype),
        grid=(B_ // Bw,),
        in_specs=in_specs,
        out_specs=pl.BlockSpec((Bw, N, C), lambda b: (b, 0, 0)),
        compiler_params=pltpu.CompilerParams(dimension_semantics=("parallel",)),
    )(*inputs)


# ----------------------------------------------------------------------------
# Pallas kernel 3: residual-add + LayerNorm2 + MLP (exact GELU) + residual-add
# ----------------------------------------------------------------------------
def _make_mlp_kernel(compute_dtype):
    def kernel(sc_ref, a_ref, g_ref, b_ref, w1_ref, b1_ref, w2_ref, b2_ref, o_ref):
        x = sc_ref[...].astype(jnp.float32) + a_ref[...].astype(jnp.float32)
        mu = jnp.mean(x, axis=-1, keepdims=True)
        var = jnp.mean((x - mu) ** 2, axis=-1, keepdims=True)
        xn = (x - mu) * jax.lax.rsqrt(var + LN_EPS) * g_ref[0] + b_ref[0]
        h = jnp.dot(xn.astype(compute_dtype), w1_ref[...],
                    preferred_element_type=jnp.float32) + b1_ref[0]
        h = jax.nn.gelu(h, approximate=False)          # exact GELU (nn.GELU default)
        h = jnp.dot(h.astype(compute_dtype), w2_ref[...],
                    preferred_element_type=jnp.float32) + b2_ref[0]
        o_ref[...] = (x + h).astype(o_ref.dtype)
    return kernel


def residual_mlp_pallas(shortcut2d, attn2d, g2, b2, w1, b1, w2, bb2,
                        compute_dtype=jnp.float32, tm=None):
    M, C = shortcut2d.shape
    Hd = w1.shape[1]
    tm = _pick_tm(M) if tm is None else min(tm, M)
    assert M % tm == 0
    kernel = _make_mlp_kernel(compute_dtype)
    return pl.pallas_call(
        kernel,
        out_shape=jax.ShapeDtypeStruct((M, C), shortcut2d.dtype),
        grid=(M // tm,),
        in_specs=[
            pl.BlockSpec((tm, C), lambda i: (i, 0)),
            pl.BlockSpec((tm, C), lambda i: (i, 0)),
            pl.BlockSpec((1, C), lambda i: (0, 0)),
            pl.BlockSpec((1, C), lambda i: (0, 0)),
            pl.BlockSpec((C, Hd), lambda i: (0, 0)),
            pl.BlockSpec((1, Hd), lambda i: (0, 0)),
            pl.BlockSpec((Hd, C), lambda i: (0, 0)),
            pl.BlockSpec((1, C), lambda i: (0, 0)),
        ],
        out_specs=pl.BlockSpec((tm, C), lambda i: (i, 0)),
        compiler_params=pltpu.CompilerParams(dimension_semantics=("parallel",)),
    )(shortcut2d, attn2d, g2.reshape(1, C), b2.reshape(1, C),
      w1.astype(compute_dtype), b1.reshape(1, Hd),
      w2.astype(compute_dtype), bb2.reshape(1, C))


# ----------------------------------------------------------------------------
# Full SwinTransformerBlock forward (dropout / drop_path = 0 -> identity)
# ----------------------------------------------------------------------------
def swin_block_forward(x, mask_matrix, params, H, W, num_heads,
                       window_size, shift_size, compute_dtype=jnp.float32):
    B, L, C = x.shape
    assert L == H * W
    ws = window_size
    N = ws * ws
    shortcut2d = x.reshape(B * L, C)

    pad_r = (ws - W % ws) % ws
    pad_b = (ws - H % ws) % ws
    Hp, Wp = H + pad_b, W + pad_r

    # LN1 is fused into the attention kernel when there is no padding (LN commutes
    # with roll/windowing). With padding, padded tokens must stay zero AFTER the
    # norm (PyTorch order), so LN runs standalone first.
    if pad_r == 0 and pad_b == 0:
        xs = x.reshape(B, H, W, C)
        ln1 = (params["norm1_w"], params["norm1_b"])
    else:
        xs = layernorm_pallas(shortcut2d, params["norm1_w"],
                              params["norm1_b"]).reshape(B, H, W, C)
        xs = jnp.pad(xs, ((0, 0), (0, pad_b), (0, pad_r), (0, 0)))
        ln1 = None

    if shift_size > 0:
        shifted = jnp.roll(xs, shift=(-shift_size, -shift_size), axis=(1, 2))
        attn_mask = mask_matrix
    else:
        shifted = xs
        attn_mask = None   # no mask DMA / add at all on non-shifted blocks

    xw = window_partition(shifted, ws).reshape(-1, N, C)

    attn_windows = window_attention_pallas(
        xw, attn_mask, params["rel_bias"],
        params["qkv_w"], params["qkv_b"], params["proj_w"], params["proj_b"],
        num_heads, ln1=ln1, compute_dtype=compute_dtype)

    attn_windows = attn_windows.reshape(-1, ws, ws, C)
    shifted = window_reverse(attn_windows, ws, Hp, Wp)
    if shift_size > 0:
        xr = jnp.roll(shifted, shift=(shift_size, shift_size), axis=(1, 2))
    else:
        xr = shifted
    if pad_r > 0 or pad_b > 0:
        xr = xr[:, :H, :W, :]
    attn_out = xr.reshape(B * L, C)

    out = residual_mlp_pallas(shortcut2d, attn_out,
                              params["norm2_w"], params["norm2_b"],
                              params["fc1_w"], params["fc1_b"],
                              params["fc2_w"], params["fc2_b"],
                              compute_dtype=compute_dtype)
    return out.reshape(B, L, C)


# ----------------------------------------------------------------------------
# Pure-JAX reference (mirrors the PyTorch forward) for validation
# ----------------------------------------------------------------------------
def reference_forward(x, mask_matrix, params, H, W, num_heads,
                      window_size, shift_size):
    B, L, C = x.shape
    hd = C // num_heads
    scale = hd ** (-0.5)
    N = window_size * window_size

    def ln(v, g, b):
        mu = jnp.mean(v, -1, keepdims=True)
        var = jnp.mean((v - mu) ** 2, -1, keepdims=True)
        return (v - mu) / jnp.sqrt(var + LN_EPS) * g + b

    shortcut = x
    xn = ln(x, params["norm1_w"], params["norm1_b"]).reshape(B, H, W, C)
    pad_r = (window_size - W % window_size) % window_size
    pad_b = (window_size - H % window_size) % window_size
    if pad_r > 0 or pad_b > 0:
        xn = jnp.pad(xn, ((0, 0), (0, pad_b), (0, pad_r), (0, 0)))
    Hp, Wp = H + pad_b, W + pad_r
    if shift_size > 0:
        shifted = jnp.roll(xn, shift=(-shift_size, -shift_size), axis=(1, 2))
        mask = mask_matrix
    else:
        shifted = xn
        mask = jnp.zeros((1, N, N), dtype=x.dtype)

    xw = window_partition(shifted, window_size).reshape(-1, N, C)
    B_ = xw.shape[0]
    nW = mask.shape[0]

    qkv = xw @ params["qkv_w"] + params["qkv_b"]
    qkv = qkv.reshape(B_, N, 3, num_heads, hd).transpose(2, 0, 3, 1, 4)
    q, k, v = qkv[0] * scale, qkv[1], qkv[2]
    attn = q @ jnp.swapaxes(k, -2, -1)                     # (B_, nH, N, N)
    rel_bias = gather_rel_bias(params["rel_table"], window_size, num_heads)
    attn = attn + rel_bias[None]
    attn = attn.reshape(B_ // nW, nW, num_heads, N, N) + mask[None, :, None]
    attn = jax.nn.softmax(attn.reshape(B_, num_heads, N, N), axis=-1)
    out = (attn @ v).transpose(0, 2, 1, 3).reshape(B_, N, C)
    out = out @ params["proj_w"] + params["proj_b"]

    out = out.reshape(-1, window_size, window_size, C)
    shifted = window_reverse(out, window_size, Hp, Wp)
    if shift_size > 0:
        xr = jnp.roll(shifted, shift=(shift_size, shift_size), axis=(1, 2))
    else:
        xr = shifted
    if pad_r > 0 or pad_b > 0:
        xr = xr[:, :H, :W, :]
    x1 = shortcut + xr.reshape(B, L, C)

    h = ln(x1, params["norm2_w"], params["norm2_b"])
    h = jax.nn.gelu(h @ params["fc1_w"] + params["fc1_b"], approximate=False)
    h = h @ params["fc2_w"] + params["fc2_b"]
    return x1 + h


# ----------------------------------------------------------------------------
# Main
# ----------------------------------------------------------------------------
if __name__ == "__main__":
    C = 32
    num_heads = 4
    window_size = 4
    mlp_ratio = 4.0
    hidden = int(C * mlp_ratio)

    key = jax.random.PRNGKey(0)
    ks = jax.random.split(key, 16)

    params = {
        "norm1_w": 1.0 + 0.1 * jax.random.normal(ks[10], (C,), jnp.float32),
        "norm1_b": 0.05 * jax.random.normal(ks[11], (C,), jnp.float32),
        "norm2_w": 1.0 + 0.1 * jax.random.normal(ks[12], (C,), jnp.float32),
        "norm2_b": 0.05 * jax.random.normal(ks[13], (C,), jnp.float32),
        "qkv_w": 0.02 * jax.random.normal(ks[0], (C, 3 * C), jnp.float32),
        "qkv_b": 0.01 * jax.random.normal(ks[1], (3 * C,), jnp.float32),
        "proj_w": 0.02 * jax.random.normal(ks[2], (C, C), jnp.float32),
        "proj_b": 0.01 * jax.random.normal(ks[3], (C,), jnp.float32),
        "fc1_w": 0.02 * jax.random.normal(ks[4], (C, hidden), jnp.float32),
        "fc1_b": 0.01 * jax.random.normal(ks[5], (hidden,), jnp.float32),
        "fc2_w": 0.02 * jax.random.normal(ks[6], (hidden, C), jnp.float32),
        "fc2_b": 0.01 * jax.random.normal(ks[7], (C,), jnp.float32),
        "rel_table": 0.02 * jax.random.normal(
            ks[8], ((2 * window_size - 1) ** 2, num_heads), jnp.float32),
    }
    # Hoisted out of the per-block forward (computed once per layer).
    params["rel_bias"] = gather_rel_bias(params["rel_table"], window_size, num_heads)

    def run_case(B, H, W, shift_size, compute_dtype, rtol, atol):
        L = H * W
        x = jax.random.normal(jax.random.fold_in(key, 1000 * H + shift_size),
                              (B, L, C), jnp.float32)
        Hp = int(np.ceil(H / window_size)) * window_size
        Wp = int(np.ceil(W / window_size)) * window_size
        # The layer always builds the mask with shift = window_size // 2 on the
        # PADDED size; non-shifted blocks ignore it.
        mask_matrix = compute_attn_mask(Hp, Wp, window_size, window_size // 2)

        out = swin_block_forward(x, mask_matrix, params, H, W, num_heads,
                                 window_size, shift_size,
                                 compute_dtype=compute_dtype)
        out = jax.block_until_ready(out)
        ref = jax.block_until_ready(
            reference_forward(x, mask_matrix, params, H, W, num_heads,
                              window_size, shift_size))
        np.testing.assert_allclose(np.asarray(out), np.asarray(ref),
                                   rtol=rtol, atol=atol)
        assert np.all(np.isfinite(np.asarray(out)))

    # Shifted + masked, fused-LN path (no padding).
    run_case(2, 8, 8, window_size // 2, jnp.float32, 2e-3, 2e-3)
    # Non-shifted block: mask skipped entirely.
    run_case(2, 8, 8, 0, jnp.float32, 2e-3, 2e-3)
    # Padded path (H, W not multiples of window): standalone LN, mask on (Hp, Wp).
    run_case(2, 6, 6, window_size // 2, jnp.float32, 2e-3, 2e-3)
    # bf16 matmul inputs with f32 accumulation (v5e/v6e/v7x MXU-native path).
    run_case(2, 8, 8, window_size // 2, jnp.bfloat16, 3e-2, 3e-2)

    print("KERNEL_OK")
</pallas_src>

<mosaic_0001>
module attributes {stable_mosaic.version = 11 : i64} {
  func.func @kernel(%arg0: i32, %arg1: memref<8x16x32xf32, #tpu.memory_space<vmem>>, %arg2: memref<8x16x16xf32, #tpu.memory_space<vmem>>, %arg3: memref<4x16x16xf32, #tpu.memory_space<vmem>>, %arg4: memref<1x32xf32, #tpu.memory_space<vmem>>, %arg5: memref<1x32xf32, #tpu.memory_space<vmem>>, %arg6: memref<32x96xf32, #tpu.memory_space<vmem>>, %arg7: memref<1x96xf32, #tpu.memory_space<vmem>>, %arg8: memref<32x32xf32, #tpu.memory_space<vmem>>, %arg9: memref<1x32xf32, #tpu.memory_space<vmem>>, %arg10: memref<8x16x32xf32, #tpu.memory_space<vmem>>) attributes {dimension_semantics = [#tpu.dimension_semantics<parallel>], iteration_bounds = array<i64: 1>, scalar_prefetch = 0 : i64, scratch_operands = 0 : i64, tpu.core_type = #tpu.core_type<tc>, window_params = [{transform_indices = @transform_0, window_bounds = array<i64: 8, 16, 32>}, {pipeline_mode = #tpu.pipeline_mode<synchronous>, transform_indices = @transform_1, window_bounds = array<i64: 8, 16, 16>}, {pipeline_mode = #tpu.pipeline_mode<synchronous>, transform_indices = @transform_2, window_bounds = array<i64: 4, 16, 16>}, {pipeline_mode = #tpu.pipeline_mode<synchronous>, transform_indices = @transform_3, window_bounds = array<i64: 1, 32>}, {pipeline_mode = #tpu.pipeline_mode<synchronous>, transform_indices = @transform_4, window_bounds = array<i64: 1, 32>}, {pipeline_mode = #tpu.pipeline_mode<synchronous>, transform_indices = @transform_5, window_bounds = array<i64: 32, 96>}, {pipeline_mode = #tpu.pipeline_mode<synchronous>, transform_indices = @transform_6, window_bounds = array<i64: 1, 96>}, {pipeline_mode = #tpu.pipeline_mode<synchronous>, transform_indices = @transform_7, window_bounds = array<i64: 32, 32>}, {pipeline_mode = #tpu.pipeline_mode<synchronous>, transform_indices = @transform_8, window_bounds = array<i64: 1, 32>}, {transform_indices = @transform_9, window_bounds = array<i64: 8, 16, 32>}]} {
    %c0 = arith.constant 0 : index
    %c0_0 = arith.constant 0 : index
    %c0_1 = arith.constant 0 : index
    %0 = vector.load %arg1[%c0, %c0_0, %c0_1] : memref<8x16x32xf32, #tpu.memory_space<vmem>>, vector<8x16x32xf32>
    %1 = vector.shape_cast %0 : vector<8x16x32xf32> to vector<128x32xf32>
    %cst = arith.constant dense<0.000000e+00> : vector<128xf32>
    %2 = vector.multi_reduction <add>, %1, %cst [1] : vector<128x32xf32> to vector<128xf32>
    %3 = vector.shape_cast %2 : vector<128xf32> to vector<128x1xf32>
    %cst_2 = arith.constant 3.200000e+01 : f32
    %4 = vector.broadcast %cst_2 : f32 to vector<128x1xf32>
    %5 = arith.divf %3, %4 : vector<128x1xf32>
    %6 = vector.broadcast %5 : vector<128x1xf32> to vector<128x32xf32>
    %7 = arith.subf %1, %6 : vector<128x32xf32>
    %8 = arith.mulf %7, %7 : vector<128x32xf32>
    %cst_3 = arith.constant dense<0.000000e+00> : vector<128xf32>
    %9 = vector.multi_reduction <add>, %8, %cst_3 [1] : vector<128x32xf32> to vector<128xf32>
    %10 = vector.shape_cast %9 : vector<128xf32> to vector<128x1xf32>
    %cst_4 = arith.constant 3.200000e+01 : f32
    %11 = vector.broadcast %cst_4 : f32 to vector<128x1xf32>
    %12 = arith.divf %10, %11 : vector<128x1xf32>
    %13 = vector.broadcast %5 : vector<128x1xf32> to vector<128x32xf32>
    %14 = arith.subf %1, %13 : vector<128x32xf32>
    %cst_5 = arith.constant 9.99999974E-6 : f32
    %15 = vector.broadcast %cst_5 : f32 to vector<128x1xf32>
    %16 = arith.addf %12, %15 : vector<128x1xf32>
    %17 = math.rsqrt %16 : vector<128x1xf32>
    %18 = vector.broadcast %17 : vector<128x1xf32> to vector<128x32xf32>
    %19 = arith.mulf %14, %18 : vector<128x32xf32>
    %c0_6 = arith.constant 0 : index
    %c0_7 = arith.constant 0 : index
    %20 = vector.load %arg4[%c0_6, %c0_7] : memref<1x32xf32, #tpu.memory_space<vmem>>, vector<1x32xf32>
    %21 = vector.shape_cast %20 : vector<1x32xf32> to vector<32xf32>
    %22 = vector.shape_cast %21 : vector<32xf32> to vector<1x32xf32>
    %23 = vector.broadcast %22 : vector<1x32xf32> to vector<128x32xf32>
    %24 = arith.mulf %19, %23 : vector<128x32xf32>
    %c0_8 = arith.constant 0 : index
    %c0_9 = arith.constant 0 : index
    %25 = vector.load %arg5[%c0_8, %c0_9] : memref<1x32xf32, #tpu.memory_space<vmem>>, vector<1x32xf32>
    %26 = vector.shape_cast %25 : vector<1x32xf32> to vector<32xf32>
    %27 = vector.shape_cast %26 : vector<32xf32> to vector<1x32xf32>
    %28 = vector.broadcast %27 : vector<1x32xf32> to vector<128x32xf32>
    %29 = arith.addf %24, %28 : vector<128x32xf32>
    %c0_10 = arith.constant 0 : index
    %c0_11 = arith.constant 0 : index
    %30 = vector.load %arg6[%c0_10, %c0_11] : memref<32x96xf32, #tpu.memory_space<vmem>>, vector<32x96xf32>
    %cst_12 = arith.constant dense<0.000000e+00> : vector<128x96xf32>
    %31 = tpu.matmul %29, %30, %cst_12 {dimension_numbers = #tpu.dot_dimension_numbers<[1], [0], [0], [1], [0, 0, 1, 1], [], []>} : vector<128x32xf32>, vector<32x96xf32>, vector<128x96xf32> -> vector<128x96xf32>
    %c0_13 = arith.constant 0 : index
    %c0_14 = arith.constant 0 : index
    %32 = vector.load %arg7[%c0_13, %c0_14] : memref<1x96xf32, #tpu.memory_space<vmem>>, vector<1x96xf32>
    %33 = vector.shape_cast %32 : vector<1x96xf32> to vector<96xf32>
    %34 = vector.shape_cast %33 : vector<96xf32> to vector<1x96xf32>
    %35 = vector.broadcast %34 : vector<1x96xf32> to vector<128x96xf32>
    %36 = arith.addf %31, %35 : vector<128x96xf32>
    %37 = vector.extract_strided_slice %36 {offsets = [0, 0], sizes = [128, 32], strides = [1, 1]} : vector<128x96xf32> to vector<128x32xf32>
    %cst_15 = arith.constant 0.353553385 : f32
    %38 = vector.broadcast %cst_15 : f32 to vector<128x32xf32>
    %39 = arith.mulf %37, %38 : vector<128x32xf32>
    %40 = vector.extract_strided_slice %39 {offsets = [0, 0], sizes = [128, 8], strides = [1, 1]} : vector<128x32xf32> to vector<128x8xf32>
    %41 = vector.extract_strided_slice %39 {offsets = [0, 8], sizes = [128, 8], strides = [1, 1]} : vector<128x32xf32> to vector<128x8xf32>
    %42 = vector.extract_strided_slice %39 {offsets = [0, 16], sizes = [128, 8], strides = [1, 1]} : vector<128x32xf32> to vector<128x8xf32>
    %43 = vector.extract_strided_slice %39 {offsets = [0, 24], sizes = [128, 8], strides = [1, 1]} : vector<128x32xf32> to vector<128x8xf32>
    %44 = vector.shape_cast %40 : vector<128x8xf32> to vector<1x128x8xf32>
    %45 = vector.shape_cast %41 : vector<128x8xf32> to vector<1x128x8xf32>
    %46 = vector.shape_cast %42 : vector<128x8xf32> to vector<1x128x8xf32>
    %47 = vector.shape_cast %43 : vector<128x8xf32> to vector<1x128x8xf32>
    %48 = tpu.concatenate %44, %45, %46, %47 in 0 : vector<1x128x8xf32>, vector<1x128x8xf32>, vector<1x128x8xf32>, vector<1x128x8xf32> -> vector<4x128x8xf32>
    %49 = vector.shape_cast %48 : vector<4x128x8xf32> to vector<32x16x8xf32>
    %50 = vector.extract_strided_slice %36 {offsets = [0, 32], sizes = [128, 32], strides = [1, 1]} : vector<128x96xf32> to vector<128x32xf32>
    %51 = vector.extract_strided_slice %50 {offsets = [0, 0], sizes = [128, 8], strides = [1, 1]} : vector<128x32xf32> to vector<128x8xf32>
    %52 = vector.extract_strided_slice %50 {offsets = [0, 8], sizes = [128, 8], strides = [1, 1]} : vector<128x32xf32> to vector<128x8xf32>
    %53 = vector.extract_strided_slice %50 {offsets = [0, 16], sizes = [128, 8], strides = [1, 1]} : vector<128x32xf32> to vector<128x8xf32>
    %54 = vector.extract_strided_slice %50 {offsets = [0, 24], sizes = [128, 8], strides = [1, 1]} : vector<128x32xf32> to vector<128x8xf32>
    %55 = vector.shape_cast %51 : vector<128x8xf32> to vector<1x128x8xf32>
    %56 = vector.shape_cast %52 : vector<128x8xf32> to vector<1x128x8xf32>
    %57 = vector.shape_cast %53 : vector<128x8xf32> to vector<1x128x8xf32>
    %58 = vector.shape_cast %54 : vector<128x8xf32> to vector<1x128x8xf32>
    %59 = tpu.concatenate %55, %56, %57, %58 in 0 : vector<1x128x8xf32>, vector<1x128x8xf32>, vector<1x128x8xf32>, vector<1x128x8xf32> -> vector<4x128x8xf32>
    %60 = vector.shape_cast %59 : vector<4x128x8xf32> to vector<32x16x8xf32>
    %61 = vector.extract_strided_slice %36 {offsets = [0, 64], sizes = [128, 32], strides = [1, 1]} : vector<128x96xf32> to vector<128x32xf32>
    %62 = vector.extract_strided_slice %61 {offsets = [0, 0], sizes = [128, 8], strides = [1, 1]} : vector<128x32xf32> to vector<128x8xf32>
    %63 = vector.extract_strided_slice %61 {offsets = [0, 8], sizes = [128, 8], strides = [1, 1]} : vector<128x32xf32> to vector<128x8xf32>
    %64 = vector.extract_strided_slice %61 {offsets = [0, 16], sizes = [128, 8], strides = [1, 1]} : vector<128x32xf32> to vector<128x8xf32>
    %65 = vector.extract_strided_slice %61 {offsets = [0, 24], sizes = [128, 8], strides = [1, 1]} : vector<128x32xf32> to vector<128x8xf32>
    %66 = vector.shape_cast %62 : vector<128x8xf32> to vector<1x128x8xf32>
    %67 = vector.shape_cast %63 : vector<128x8xf32> to vector<1x128x8xf32>
    %68 = vector.shape_cast %64 : vector<128x8xf32> to vector<1x128x8xf32>
    %69 = vector.shape_cast %65 : vector<128x8xf32> to vector<1x128x8xf32>
    %70 = tpu.concatenate %66, %67, %68, %69 in 0 : vector<1x128x8xf32>, vector<1x128x8xf32>, vector<1x128x8xf32>, vector<1x128x8xf32> -> vector<4x128x8xf32>
    %71 = vector.shape_cast %70 : vector<4x128x8xf32> to vector<32x16x8xf32>
    "tpu.trace_start"() <{level = 10 : i32, message = "gnd,gmd->gnm"}> : () -> ()
    %cst_16 = arith.constant dense<0.000000e+00> : vector<32x16x16xf32>
    %72 = tpu.matmul %49, %60, %cst_16 {dimension_numbers = #tpu.dot_dimension_numbers<[2], [2], [1], [1], [0, 0, 0, 1, 1, 1], [0], [0]>} : vector<32x16x8xf32>, vector<32x16x8xf32>, vector<32x16x16xf32> -> vector<32x16x16xf32>
    "tpu.trace_stop"() : () -> ()
    %73 = vector.shape_cast %72 : vector<32x16x16xf32> to vector<4x8x16x16xf32>
    %c0_17 = arith.constant 0 : index
    %c0_18 = arith.constant 0 : index
    %c0_19 = arith.constant 0 : index
    %74 = vector.load %arg3[%c0_17, %c0_18, %c0_19] : memref<4x16x16xf32, #tpu.memory_space<vmem>>, vector<4x16x16xf32>
    %75 = vector.shape_cast %74 : vector<4x16x16xf32> to vector<4x1x16x16xf32>
    %76 = vector.broadcast %75 : vector<4x1x16x16xf32> to vector<4x8x16x16xf32>
    %77 = arith.addf %73, %76 : vector<4x8x16x16xf32>
    %c0_20 = arith.constant 0 : index
    %c0_21 = arith.constant 0 : index
    %c0_22 = arith.constant 0 : index
    %78 = vector.load %arg2[%c0_20, %c0_21, %c0_22] : memref<8x16x16xf32, #tpu.memory_space<vmem>>, vector<8x16x16xf32>
    %79 = vector.shape_cast %78 : vector<8x16x16xf32> to vector<1x8x16x16xf32>
    %80 = vector.broadcast %79 : vector<1x8x16x16xf32> to vector<4x8x16x16xf32>
    %81 = arith.addf %77, %80 : vector<4x8x16x16xf32>
    %cst_23 = arith.constant dense<0xFF800000> : vector<4x8x16xf32>
    %82 = vector.multi_reduction <maximumf>, %81, %cst_23 [3] : vector<4x8x16x16xf32> to vector<4x8x16xf32>
    %83 = vector.shape_cast %82 : vector<4x8x16xf32> to vector<4x8x16x1xf32>
    %84 = vector.broadcast %83 : vector<4x8x16x1xf32> to vector<4x8x16x16xf32>
    %85 = arith.subf %81, %84 : vector<4x8x16x16xf32>
    %86 = math.exp %85 : vector<4x8x16x16xf32>
    %cst_24 = arith.constant dense<0.000000e+00> : vector<4x8x16xf32>
    %87 = vector.multi_reduction <add>, %86, %cst_24 [3] : vector<4x8x16x16xf32> to vector<4x8x16xf32>
    %88 = vector.shape_cast %87 : vector<4x8x16xf32> to vector<4x8x16x1xf32>
    %89 = tpu.reciprocal %88 {approx = true} : vector<4x8x16x1xf32> -> vector<4x8x16x1xf32>
    %90 = vector.broadcast %89 : vector<4x8x16x1xf32> to vector<4x8x16x16xf32>
    %91 = arith.mulf %86, %90 : vector<4x8x16x16xf32>
    %92 = vector.shape_cast %91 : vector<4x8x16x16xf32> to vector<32x16x16xf32>
    "tpu.trace_start"() <{level = 10 : i32, message = "gnm,gmd->gnd"}> : () -> ()
    %cst_25 = arith.constant dense<0.000000e+00> : vector<32x16x8xf32>
    %93 = tpu.matmul %92, %71, %cst_25 {dimension_numbers = #tpu.dot_dimension_numbers<[2], [1], [1], [2], [0, 0, 0, 1, 1, 2], [0], [0]>} : vector<32x16x16xf32>, vector<32x16x8xf32>, vector<32x16x8xf32> -> vector<32x16x8xf32>
    "tpu.trace_stop"() : () -> ()
    %94 = vector.shape_cast %93 : vector<32x16x8xf32> to vector<4x128x8xf32>
    %95 = vector.extract_strided_slice %94 {offsets = [0, 0, 0], sizes = [1, 128, 8], strides = [1, 1, 1]} : vector<4x128x8xf32> to vector<1x128x8xf32>
    %96 = vector.shape_cast %95 : vector<1x128x8xf32> to vector<128x8xf32>
    %97 = vector.extract_strided_slice %94 {offsets = [1, 0, 0], sizes = [1, 128, 8], strides = [1, 1, 1]} : vector<4x128x8xf32> to vector<1x128x8xf32>
    %98 = vector.shape_cast %97 : vector<1x128x8xf32> to vector<128x8xf32>
    %99 = vector.extract_strided_slice %94 {offsets = [2, 0, 0], sizes = [1, 128, 8], strides = [1, 1, 1]} : vector<4x128x8xf32> to vector<1x128x8xf32>
    %100 = vector.shape_cast %99 : vector<1x128x8xf32> to vector<128x8xf32>
    %101 = vector.extract_strided_slice %94 {offsets = [3, 0, 0], sizes = [1, 128, 8], strides = [1, 1, 1]} : vector<4x128x8xf32> to vector<1x128x8xf32>
    %102 = vector.shape_cast %101 : vector<1x128x8xf32> to vector<128x8xf32>
    %103 = tpu.concatenate %96, %98, %100, %102 in 1 : vector<128x8xf32>, vector<128x8xf32>, vector<128x8xf32>, vector<128x8xf32> -> vector<128x32xf32>
    %c0_26 = arith.constant 0 : index
    %c0_27 = arith.constant 0 : index
    %104 = vector.load %arg8[%c0_26, %c0_27] : memref<32x32xf32, #tpu.memory_space<vmem>>, vector<32x32xf32>
    %cst_28 = arith.constant dense<0.000000e+00> : vector<128x32xf32>
    %105 = tpu.matmul %103, %104, %cst_28 {dimension_numbers = #tpu.dot_dimension_numbers<[1], [0], [0], [1], [0, 0, 1, 1], [], []>} : vector<128x32xf32>, vector<32x32xf32>, vector<128x32xf32> -> vector<128x32xf32>
    %c0_29 = arith.constant 0 : index
    %c0_30 = arith.constant 0 : index
    %106 = vector.load %arg9[%c0_29, %c0_30] : memref<1x32xf32, #tpu.memory_space<vmem>>, vector<1x32xf32>
    %107 = vector.shape_cast %106 : vector<1x32xf32> to vector<32xf32>
    %108 = vector.shape_cast %107 : vector<32xf32> to vector<1x32xf32>
    %109 = vector.broadcast %108 : vector<1x32xf32> to vector<128x32xf32>
    %110 = arith.addf %105, %109 : vector<128x32xf32>
    %111 = vector.shape_cast %110 : vector<128x32xf32> to vector<8x16x32xf32>
    %c0_31 = arith.constant 0 : index
    %c0_32 = arith.constant 0 : index
    %c0_33 = arith.constant 0 : index
    %112 = vector.load %arg10[%c0_31, %c0_32, %c0_33] : memref<8x16x32xf32, #tpu.memory_space<vmem>>, vector<8x16x32xf32>
    tpu.vector_store %arg10[%c0_31, %c0_32, %c0_33], %111 {strides = array<i32>} : memref<8x16x32xf32, #tpu.memory_space<vmem>>, vector<8x16x32xf32>,
    return
  }
  func.func @transform_0(%arg0: i32) -> (i32, i32, i32) {
    %c0_i32 = arith.constant 0 : i32
    %c0_i32_0 = arith.constant 0 : i32
    %c0_i32_1 = arith.constant 0 : i32
    return %arg0, %c0_i32, %c0_i32_0 : i32, i32, i32
  }
  func.func @transform_1(%arg0: i32) -> (i32, i32, i32) {
    %c0_i32 = arith.constant 0 : i32
    %c0_i32_0 = arith.constant 0 : i32
    %c0_i32_1 = arith.constant 0 : i32
    %c0_i32_2 = arith.constant 0 : i32
    return %c0_i32, %c0_i32_0, %c0_i32_1 : i32, i32, i32
  }
  func.func @transform_2(%arg0: i32) -> (i32, i32, i32) {
    %c0_i32 = arith.constant 0 : i32
    %c0_i32_0 = arith.constant 0 : i32
    %c0_i32_1 = arith.constant 0 : i32
    %c0_i32_2 = arith.constant 0 : i32
    return %c0_i32, %c0_i32_0, %c0_i32_1 : i32, i32, i32
  }
  func.func @transform_3(%arg0: i32) -> (i32, i32) {
    %c0_i32 = arith.constant 0 : i32
    %c0_i32_0 = arith.constant 0 : i32
    %c0_i32_1 = arith.constant 0 : i32
    return %c0_i32, %c0_i32_0 : i32, i32
  }
  func.func @transform_4(%arg0: i32) -> (i32, i32) {
    %c0_i32 = arith.constant 0 : i32
    %c0_i32_0 = arith.constant 0 : i32
    %c0_i32_1 = arith.constant 0 : i32
    return %c0_i32, %c0_i32_0 : i32, i32
  }
  func.func @transform_5(%arg0: i32) -> (i32, i32) {
    %c0_i32 = arith.constant 0 : i32
    %c0_i32_0 = arith.constant 0 : i32
    %c0_i32_1 = arith.constant 0 : i32
    return %c0_i32, %c0_i32_0 : i32, i32
  }
  func.func @transform_6(%arg0: i32) -> (i32, i32) {
    %c0_i32 = arith.constant 0 : i32
    %c0_i32_0 = arith.constant 0 : i32
    %c0_i32_1 = arith.constant 0 : i32
    return %c0_i32, %c0_i32_0 : i32, i32
  }
  func.func @transform_7(%arg0: i32) -> (i32, i32) {
    %c0_i32 = arith.constant 0 : i32
    %c0_i32_0 = arith.constant 0 : i32
    %c0_i32_1 = arith.constant 0 : i32
    return %c0_i32, %c0_i32_0 : i32, i32
  }
  func.func @transform_8(%arg0: i32) -> (i32, i32) {
    %c0_i32 = arith.constant 0 : i32
    %c0_i32_0 = arith.constant 0 : i32
    %c0_i32_1 = arith.constant 0 : i32
    return %c0_i32, %c0_i32_0 : i32, i32
  }
  func.func @transform_9(%arg0: i32) -> (i32, i32, i32) {
    %c0_i32 = arith.constant 0 : i32
    %c0_i32_0 = arith.constant 0 : i32
    %c0_i32_1 = arith.constant 0 : i32
    return %arg0, %c0_i32, %c0_i32_0 : i32, i32, i32
  }
}

</mosaic_0001>

<llo_original>
// kernel: tpu_custom_call.1
$region0: #{tpu_custom_call.1}
  #allocation0 [shape = 'u32[]', space=smem, size = 0x4, offset = 0x4, fixed_abs, tag = 'smem constant byte address 0x4 - core index']
  #allocation1 [shape = 'u32[144,128]{1,0:T(1,128)}', space=vmem, size = 0x12000, scoped, tag = 'internal scratch']
  %s0 = inlined_call_operand.hbm [shape: f32[8,16,32], index: 0, kind: input, shape index: {}]
  %s1 = inlined_call_operand.hbm [shape: f32[8,16,16], index: 1, kind: input, shape index: {}]
  %s2 = inlined_call_operand.hbm [shape: f32[4,16,16], index: 2, kind: input, shape index: {}]
  %s3 = inlined_call_operand.vmem [shape: f32[1,32], index: 3, kind: input, shape index: {}]
  %s4 = inlined_call_operand.vmem [shape: f32[1,32], index: 4, kind: input, shape index: {}]
  %s5 = inlined_call_operand.hbm [shape: f32[32,96], index: 5, kind: input, shape index: {}]
  %s6 = inlined_call_operand.vmem [shape: f32[1,96], index: 6, kind: input, shape index: {}]
  %s7 = inlined_call_operand.hbm [shape: f32[32,32], index: 7, kind: input, shape index: {}]
  %s8 = inlined_call_operand.vmem [shape: f32[1,32], index: 8, kind: input, shape index: {}]
  %s9 = inlined_call_operand.hbm [shape: f32[8,16,32], index: 9, kind: output, shape index: {}]
  %s10 = sld [smem:[#allocation0]]
  $region66: #{tpu_custom_call.1} parent=0
    _
  %s12 = ssub.s32 1, %s10
  %s13 = scalar_select 0, %s12, %s10
  $region1: #{tpu_custom_call.1} parent=0
    #allocation2 [shape = 'u8[65536]{0}', space=vmem, size = 0x10000, scoped, tag = 'input window, operand 0, single buffered']
    #allocation3 [shape = 's32[1]{0}', space=sflag, size = 0x4, scoped, tag = 'scoped memory for tpu_custom_call.1']
    #allocation4 [shape = 's32[1]{0}', space=sflag, size = 0x4, scoped, tag = 'scoped memory for tpu_custom_call.1']
    #allocation5 [shape = 'u8[65536]{0}', space=vmem, size = 0x10000, scoped, tag = 'input window, operand 1, single buffered']
    #allocation6 [shape = 's32[1]{0}', space=sflag, size = 0x4, scoped, tag = 'scoped memory for tpu_custom_call.1']
    #allocation7 [shape = 'u8[32768]{0}', space=vmem, size = 0x8000, scoped, tag = 'input window, operand 2, single buffered']
    #allocation8 [shape = 'u8[16384]{0}', space=vmem, size = 0x4000, scoped, tag = 'input window, operand 5, single buffered']
    #allocation9 [shape = 's32[1]{0}', space=sflag, size = 0x4, scoped, tag = 'scoped memory for tpu_custom_call.1']
    #allocation10 [shape = 'u8[16384]{0}', space=vmem, size = 0x4000, scoped, tag = 'input window, operand 7, single buffered']
    #allocation11 [shape = 'u8[65536]{0}', space=vmem, size = 0x10000, scoped, tag = 'output window, operand 0, single buffered']
    %14 = vsyncpa [#allocation3], 0
    %15 = vsyncpa [#allocation6], 0
    %16 = vsyncpa [#allocation9], 0
    %17 = vsyncpa [#allocation4], 0
    // Predicated region
    $region2: #{tpu_custom_call.1} parent=1 // pred_check
      _
    $region3: #{tpu_custom_call.1} parent=1 // pred_check_branch
      %19 = sbr.rel (0) target = $region5
    $region4: #{tpu_custom_call.1} parent=1 // pred_region
      %s21 = ssub.s32 2048, 2048
      %22 = vsyncadd [#allocation3], %s21
      %s23 = sshll.u32 [#allocation2], 4
      %s24 = int_to_ptr.vmem [resolvable:$true] %s23
      %29 = dma.hbm_to_vmem [thread:$0]  %s0, 2048, %s24, [#allocation3], 128, 128, 8
    $region5: #{tpu_custom_call.1} parent=1 // pred_fallthru
      _
    // Predicated region
    $region6: #{tpu_custom_call.1} parent=1 // pred_check
      _
    $region7: #{tpu_custom_call.1} parent=1 // pred_check_branch
      %31 = sbr.rel (0) target = $region9
    $region8: #{tpu_custom_call.1} parent=1 // pred_region
      %s33 = ssub.s32 2048, 2048
      %34 = vsyncadd [#allocation6], %s33
      %s35 = sshll.u32 [#allocation5], 4
      %s36 = int_to_ptr.vmem [resolvable:$true] %s35
      %41 = dma.hbm_to_vmem [thread:$0]  %s1, 2048, %s36, [#allocation6], 128, 128, 8
    $region9: #{tpu_custom_call.1} parent=1 // pred_fallthru
      _
    // Predicated region
    $region10: #{tpu_custom_call.1} parent=1 // pred_check
      _
    $region11: #{tpu_custom_call.1} parent=1 // pred_check_branch
      %43 = sbr.rel (0) target = $region13
    $region12: #{tpu_custom_call.1} parent=1 // pred_region
      %s45 = ssub.s32 1024, 1024
      %46 = vsyncadd [#allocation6], %s45
      %s47 = sshll.u32 [#allocation7], 4
      %s48 = int_to_ptr.vmem [resolvable:$true] %s47
      %53 = dma.hbm_to_vmem [thread:$0]  %s2, 1024, %s48, [#allocation6], 128, 128, 8
    $region13: #{tpu_custom_call.1} parent=1 // pred_fallthru
      _
    // Predicated region
    $region14: #{tpu_custom_call.1} parent=1 // pred_check
      _
    $region15: #{tpu_custom_call.1} parent=1 // pred_check_branch
      %55 = sbr.rel (0) target = $region17
    $region16: #{tpu_custom_call.1} parent=1 // pred_region
      _
    $region17: #{tpu_custom_call.1} parent=1 // pred_fallthru
      _
    // Predicated region
    $region18: #{tpu_custom_call.1} parent=1 // pred_check
      _
    $region19: #{tpu_custom_call.1} parent=1 // pred_check_branch
      %57 = sbr.rel (0) target = $region21
    $region20: #{tpu_custom_call.1} parent=1 // pred_region
      _
    $region21: #{tpu_custom_call.1} parent=1 // pred_fallthru
      _
    // Predicated region
    $region22: #{tpu_custom_call.1} parent=1 // pred_check
      _
    $region23: #{tpu_custom_call.1} parent=1 // pred_check_branch
      %59 = sbr.rel (0) target = $region25
    $region24: #{tpu_custom_call.1} parent=1 // pred_region
      %s61 = ssub.s32 512, 512
      %62 = vsyncadd [#allocation9], %s61
      %s63 = sshll.u32 [#allocation8], 4
      %s64 = int_to_ptr.vmem [resolvable:$true] %s63
      %69 = dma.hbm_to_vmem [thread:$0]  %s5, 512, %s64, [#allocation9], 128, 128, 8
    $region25: #{tpu_custom_call.1} parent=1 // pred_fallthru
      _
    // Predicated region
    $region26: #{tpu_custom_call.1} parent=1 // pred_check
      _
    $region27: #{tpu_custom_call.1} parent=1 // pred_check_branch
      %71 = sbr.rel (0) target = $region29
    $region28: #{tpu_custom_call.1} parent=1 // pred_region
      _
    $region29: #{tpu_custom_call.1} parent=1 // pred_fallthru
      _
    // Predicated region
    $region30: #{tpu_custom_call.1} parent=1 // pred_check
      _
    $region31: #{tpu_custom_call.1} parent=1 // pred_check_branch
      %73 = sbr.rel (0) target = $region33
    $region32: #{tpu_custom_call.1} parent=1 // pred_region
      %s75 = ssub.s32 512, 512
      %76 = vsyncadd [#allocation9], %s75
      %s77 = sshll.u32 [#allocation10], 4
      %s78 = int_to_ptr.vmem [resolvable:$true] %s77
      %83 = dma.hbm_to_vmem [thread:$0]  %s7, 512, %s78, [#allocation9], 128, 128, 8
    $region33: #{tpu_custom_call.1} parent=1 // pred_fallthru
      _
    // Predicated region
    $region34: #{tpu_custom_call.1} parent=1 // pred_check
      _
    $region35: #{tpu_custom_call.1} parent=1 // pred_check_branch
      %85 = sbr.rel (0) target = $region37
    $region36: #{tpu_custom_call.1} parent=1 // pred_region
      _
    $region37: #{tpu_custom_call.1} parent=1 // pred_fallthru
      _
    // Predicated region
    $region38: #{tpu_custom_call.1} parent=1 // pred_check
      _
    $region39: #{tpu_custom_call.1} parent=1 // pred_check_branch
      %87 = sbr.rel (0) target = $region41
    $region40: #{tpu_custom_call.1} parent=1 // pred_region
      %88 = dma.done [#allocation3], 2048
    $region41: #{tpu_custom_call.1} parent=1 // pred_fallthru
      _
    // Predicated region
    $region42: #{tpu_custom_call.1} parent=1 // pred_check
      _
    $region43: #{tpu_custom_call.1} parent=1 // pred_check_branch
      %90 = sbr.rel (0) target = $region45
    $region44: #{tpu_custom_call.1} parent=1 // pred_region
      %91 = dma.done [#allocation6], 2048
    $region45: #{tpu_custom_call.1} parent=1 // pred_fallthru
      _
    // Predicated region
    $region46: #{tpu_custom_call.1} parent=1 // pred_check
      _
    $region47: #{tpu_custom_call.1} parent=1 // pred_check_branch
      %93 = sbr.rel (0) target = $region49
    $region48: #{tpu_custom_call.1} parent=1 // pred_region
      %94 = dma.done [#allocation6], 1024
    $region49: #{tpu_custom_call.1} parent=1 // pred_fallthru
      _
    // Predicated region
    $region50: #{tpu_custom_call.1} parent=1 // pred_check
      _
    $region51: #{tpu_custom_call.1} parent=1 // pred_check_branch
      %96 = sbr.rel (0) target = $region53
    $region52: #{tpu_custom_call.1} parent=1 // pred_region
      %97 = dma.done [#allocation9], 512
    $region53: #{tpu_custom_call.1} parent=1 // pred_fallthru
      _
    // Predicated region
    $region54: #{tpu_custom_call.1} parent=1 // pred_check
      _
    $region55: #{tpu_custom_call.1} parent=1 // pred_check_branch
      %99 = sbr.rel (0) target = $region57
    $region56: #{tpu_custom_call.1} parent=1 // pred_region
      %100 = dma.done [#allocation9], 512
    $region57: #{tpu_custom_call.1} parent=1 // pred_fallthru
      _
    %v101 = vld [vmem:[#allocation2] sm:$0xff]
    %v102 = vld [vmem:[#allocation2 + $0x8] sm:$0xff]
    %v103 = vld [vmem:[#allocation2 + $0x10] sm:$0xff]
    %v104 = vld [vmem:[#allocation2 + $0x18] sm:$0xff]
    %v105 = vld [vmem:[#allocation2 + $0x20] sm:$0xff]
    %v106 = vld [vmem:[#allocation2 + $0x28] sm:$0xff]
    %v107 = vld [vmem:[#allocation2 + $0x30] sm:$0xff]
    %v108 = vld [vmem:[#allocation2 + $0x38] sm:$0xff]
    %v109 = vld [vmem:[#allocation2 + $0x40] sm:$0xff]
    %v110 = vld [vmem:[#allocation2 + $0x48] sm:$0xff]
    %v111 = vld [vmem:[#allocation2 + $0x50] sm:$0xff]
    %v112 = vld [vmem:[#allocation2 + $0x58] sm:$0xff]
    %v113 = vld [vmem:[#allocation2 + $0x60] sm:$0xff]
    %v114 = vld [vmem:[#allocation2 + $0x68] sm:$0xff]
    %v115 = vld [vmem:[#allocation2 + $0x70] sm:$0xff]
    %v116 = vld [vmem:[#allocation2 + $0x78] sm:$0xff]
    %vm117 = vcmask 261120
    %v118 = vsel %vm117, %v101, 0.0
    %119 = vadd.xlane.f32.xlu0 %v118
    %v120 = vpop.xlane.xlu0 %119
    %v121 = vsel %vm117, %v102, 0.0
    %122 = vadd.xlane.f32.xlu0 %v121
    %v123 = vpop.xlane.xlu0 %122
    %v124 = vsel %vm117, %v103, 0.0
    %125 = vadd.xlane.f32.xlu0 %v124
    %v126 = vpop.xlane.xlu0 %125
    %v127 = vsel %vm117, %v104, 0.0
    %128 = vadd.xlane.f32.xlu0 %v127
    %v129 = vpop.xlane.xlu0 %128
    %v130 = vsel %vm117, %v105, 0.0
    %131 = vadd.xlane.f32.xlu0 %v130
    %v132 = vpop.xlane.xlu0 %131
    %v133 = vsel %vm117, %v106, 0.0
    %134 = vadd.xlane.f32.xlu0 %v133
    %v135 = vpop.xlane.xlu0 %134
    %v136 = vsel %vm117, %v107, 0.0
    %137 = vadd.xlane.f32.xlu0 %v136
    %v138 = vpop.xlane.xlu0 %137
    %v139 = vsel %vm117, %v108, 0.0
    %140 = vadd.xlane.f32.xlu0 %v139
    %v141 = vpop.xlane.xlu0 %140
    %v142 = vsel %vm117, %v109, 0.0
    %143 = vadd.xlane.f32.xlu0 %v142
    %v144 = vpop.xlane.xlu0 %143
    %v145 = vsel %vm117, %v110, 0.0
    %146 = vadd.xlane.f32.xlu0 %v145
    %v147 = vpop.xlane.xlu0 %146
    %v148 = vsel %vm117, %v111, 0.0
    %149 = vadd.xlane.f32.xlu0 %v148
    %v150 = vpop.xlane.xlu0 %149
    %v151 = vsel %vm117, %v112, 0.0
    %152 = vadd.xlane.f32.xlu0 %v151
    %v153 = vpop.xlane.xlu0 %152
    %v154 = vsel %vm117, %v113, 0.0
    %155 = vadd.xlane.f32.xlu0 %v154
    %v156 = vpop.xlane.xlu0 %155
    %v157 = vsel %vm117, %v114, 0.0
    %158 = vadd.xlane.f32.xlu0 %v157
    %v159 = vpop.xlane.xlu0 %158
    %v160 = vsel %vm117, %v115, 0.0
    %161 = vadd.xlane.f32.xlu0 %v160
    %v162 = vpop.xlane.xlu0 %161
    %v163 = vsel %vm117, %v116, 0.0
    %164 = vadd.xlane.f32.xlu0 %v163
    %v165 = vpop.xlane.xlu0 %164
    %v166 = vrcp.pop 32.0
    %v167 = vmul.f32 %v120, %v166
    %v168 = vmul.f32 %v123, %v166
    %v169 = vmul.f32 %v126, %v166
    %v170 = vmul.f32 %v129, %v166
    %v171 = vmul.f32 %v132, %v166
    %v172 = vmul.f32 %v135, %v166
    %v173 = vmul.f32 %v138, %v166
    %v174 = vmul.f32 %v141, %v166
    %v175 = vmul.f32 %v144, %v166
    %v176 = vmul.f32 %v147, %v166
    %v177 = vmul.f32 %v150, %v166
    %v178 = vmul.f32 %v153, %v166
    %v179 = vmul.f32 %v156, %v166
    %v180 = vmul.f32 %v159, %v166
    %v181 = vmul.f32 %v162, %v166
    %v182 = vmul.f32 %v165, %v166
    %v183 = vsub.f32 %v101, %v167
    %v184 = vsub.f32 %v102, %v168
    %v185 = vsub.f32 %v103, %v169
    %v186 = vsub.f32 %v104, %v170
    %v187 = vsub.f32 %v105, %v171
    %v188 = vsub.f32 %v106, %v172
    %v189 = vsub.f32 %v107, %v173
    %v190 = vsub.f32 %v108, %v174
    %v191 = vsub.f32 %v109, %v175
    %v192 = vsub.f32 %v110, %v176
    %v193 = vsub.f32 %v111, %v177
    %v194 = vsub.f32 %v112, %v178
    %v195 = vsub.f32 %v113, %v179
    %v196 = vsub.f32 %v114, %v180
    %v197 = vsub.f32 %v115, %v181
    %v198 = vsub.f32 %v116, %v182
    %v199 = vmul.f32 %v183, %v183
    %v200 = vmul.f32 %v184, %v184
    %v201 = vmul.f32 %v185, %v185
    %v202 = vmul.f32 %v186, %v186
    %v203 = vmul.f32 %v187, %v187
    %v204 = vmul.f32 %v188, %v188
    %v205 = vmul.f32 %v189, %v189
    %v206 = vmul.f32 %v190, %v190
    %v207 = vmul.f32 %v191, %v191
    %v208 = vmul.f32 %v192, %v192
    %v209 = vmul.f32 %v193, %v193
    %v210 = vmul.f32 %v194, %v194
    %v211 = vmul.f32 %v195, %v195
    %v212 = vmul.f32 %v196, %v196
    %v213 = vmul.f32 %v197, %v197
    %v214 = vmul.f32 %v198, %v198
    %v215 = vsel %vm117, %v199, 0.0
    %216 = vadd.xlane.f32.xlu0 %v215
    %v217 = vpop.xlane.xlu0 %216
    %v218 = vsel %vm117, %v200, 0.0
    %219 = vadd.xlane.f32.xlu0 %v218
    %v220 = vpop.xlane.xlu0 %219
    %v221 = vsel %vm117, %v201, 0.0
    %222 = vadd.xlane.f32.xlu0 %v221
    %v223 = vpop.xlane.xlu0 %222
    %v224 = vsel %vm117, %v202, 0.0
    %225 = vadd.xlane.f32.xlu0 %v224
    %v226 = vpop.xlane.xlu0 %225
    %v227 = vsel %vm117, %v203, 0.0
    %228 = vadd.xlane.f32.xlu0 %v227
    %v229 = vpop.xlane.xlu0 %228
    %v230 = vsel %vm117, %v204, 0.0
    %231 = vadd.xlane.f32.xlu0 %v230
    %v232 = vpop.xlane.xlu0 %231
    %v233 = vsel %vm117, %v205, 0.0
    %234 = vadd.xlane.f32.xlu0 %v233
    %v235 = vpop.xlane.xlu0 %234
    %v236 = vsel %vm117, %v206, 0.0
    %237 = vadd.xlane.f32.xlu0 %v236
    %v238 = vpop.xlane.xlu0 %237
    %v239 = vsel %vm117, %v207, 0.0
    %240 = vadd.xlane.f32.xlu0 %v239
    %v241 = vpop.xlane.xlu0 %240
    %v242 = vsel %vm117, %v208, 0.0
    %243 = vadd.xlane.f32.xlu0 %v242
    %v244 = vpop.xlane.xlu0 %243
    %v245 = vsel %vm117, %v209, 0.0
    %246 = vadd.xlane.f32.xlu0 %v245
    %v247 = vpop.xlane.xlu0 %246
    %v248 = vsel %vm117, %v210, 0.0
    %249 = vadd.xlane.f32.xlu0 %v248
    %v250 = vpop.xlane.xlu0 %249
    %v251 = vsel %vm117, %v211, 0.0
    %252 = vadd.xlane.f32.xlu0 %v251
    %v253 = vpop.xlane.xlu0 %252
    %v254 = vsel %vm117, %v212, 0.0
    %255 = vadd.xlane.f32.xlu0 %v254
    %v256 = vpop.xlane.xlu0 %255
    %v257 = vsel %vm117, %v213, 0.0
    %258 = vadd.xlane.f32.xlu0 %v257
    %v259 = vpop.xlane.xlu0 %258
    %v260 = vsel %vm117, %v214, 0.0
    %261 = vadd.xlane.f32.xlu0 %v260
    %v262 = vpop.xlane.xlu0 %261
    %v263 = vmul.f32 %v217, %v166
    %v264 = vmul.f32 %v220, %v166
    %v265 = vmul.f32 %v223, %v166
    %v266 = vmul.f32 %v226, %v166
    %v267 = vmul.f32 %v229, %v166
    %v268 = vmul.f32 %v232, %v166
    %v269 = vmul.f32 %v235, %v166
    %v270 = vmul.f32 %v238, %v166
    %v271 = vmul.f32 %v241, %v166
    %v272 = vmul.f32 %v244, %v166
    %v273 = vmul.f32 %v247, %v166
    %v274 = vmul.f32 %v250, %v166
    %v275 = vmul.f32 %v253, %v166
    %v276 = vmul.f32 %v256, %v166
    %v277 = vmul.f32 %v259, %v166
    %v278 = vmul.f32 %v262, %v166
    %v279 = vadd.f32 %v263, 1e-05
    %v280 = vadd.f32 %v264, 1e-05
    %v281 = vadd.f32 %v265, 1e-05
    %v282 = vadd.f32 %v266, 1e-05
    %v283 = vadd.f32 %v267, 1e-05
    %v284 = vadd.f32 %v268, 1e-05
    %v285 = vadd.f32 %v269, 1e-05
    %v286 = vadd.f32 %v270, 1e-05
    %v287 = vadd.f32 %v271, 1e-05
    %v288 = vadd.f32 %v272, 1e-05
    %v289 = vadd.f32 %v273, 1e-05
    %v290 = vadd.f32 %v274, 1e-05
    %v291 = vadd.f32 %v275, 1e-05
    %v292 = vadd.f32 %v276, 1e-05
    %v293 = vadd.f32 %v277, 1e-05
    %v294 = vadd.f32 %v278, 1e-05
    %v295 = vrsqrt.pop %v279
    %v296 = vrsqrt.pop %v280
    %v297 = vrsqrt.pop %v281
    %v298 = vrsqrt.pop %v282
    %v299 = vrsqrt.pop %v283
    %v300 = vrsqrt.pop %v284
    %v301 = vrsqrt.pop %v285
    %v302 = vrsqrt.pop %v286
    %v303 = vrsqrt.pop %v287
    %v304 = vrsqrt.pop %v288
    %v305 = vrsqrt.pop %v289
    %v306 = vrsqrt.pop %v290
    %v307 = vrsqrt.pop %v291
    %v308 = vrsqrt.pop %v292
    %v309 = vrsqrt.pop %v293
    %v310 = vrsqrt.pop %v294
    %v311 = vmul.f32 %v183, %v295
    %v312 = vmul.f32 %v184, %v296
    %v313 = vmul.f32 %v185, %v297
    %v314 = vmul.f32 %v186, %v298
    %v315 = vmul.f32 %v187, %v299
    %v316 = vmul.f32 %v188, %v300
    %v317 = vmul.f32 %v189, %v301
    %v318 = vmul.f32 %v190, %v302
    %v319 = vmul.f32 %v191, %v303
    %v320 = vmul.f32 %v192, %v304
    %v321 = vmul.f32 %v193, %v305
    %v322 = vmul.f32 %v194, %v306
    %v323 = vmul.f32 %v195, %v307
    %v324 = vmul.f32 %v196, %v308
    %v325 = vmul.f32 %v197, %v309
    %v326 = vmul.f32 %v198, %v310
    %v327 = vld [vmem:[%s3] sm:$0x1]
    %v329 = vlaneseq
    %v330 = vshrl.u32 %v329, 7
    %v331 = vsub.s32 0, %v330
    %v332 = vrot.slane %v327, %v331
    %v334 = vmul.f32 %v311, %v332
    %v335 = vmul.f32 %v312, %v332
    %v336 = vmul.f32 %v313, %v332
    %v337 = vmul.f32 %v314, %v332
    %v338 = vmul.f32 %v315, %v332
    %v339 = vmul.f32 %v316, %v332
    %v340 = vmul.f32 %v317, %v332
    %v341 = vmul.f32 %v318, %v332
    %v342 = vmul.f32 %v319, %v332
    %v343 = vmul.f32 %v320, %v332
    %v344 = vmul.f32 %v321, %v332
    %v345 = vmul.f32 %v322, %v332
    %v346 = vmul.f32 %v323, %v332
    %v347 = vmul.f32 %v324, %v332
    %v348 = vmul.f32 %v325, %v332
    %v349 = vmul.f32 %v326, %v332
    %v350 = vld [vmem:[%s4] sm:$0x1]
    %v352 = vlaneseq
    %v353 = vshrl.u32 %v352, 7
    %v354 = vsub.s32 0, %v353
    %v355 = vrot.slane %v350, %v354
    %v357 = vadd.f32 %v334, %v355
    %v358 = vadd.f32 %v335, %v355
    %v359 = vadd.f32 %v336, %v355
    %v360 = vadd.f32 %v337, %v355
    %v361 = vadd.f32 %v338, %v355
    %v362 = vadd.f32 %v339, %v355
    %v363 = vadd.f32 %v340, %v355
    %v364 = vadd.f32 %v341, %v355
    %v365 = vadd.f32 %v342, %v355
    %v366 = vadd.f32 %v343, %v355
    %v367 = vadd.f32 %v344, %v355
    %v368 = vadd.f32 %v345, %v355
    %v369 = vadd.f32 %v346, %v355
    %v370 = vadd.f32 %v347, %v355
    %v371 = vadd.f32 %v348, %v355
    %v372 = vadd.f32 %v349, %v355
    %v373 = vld [vmem:[#allocation8] sm:$0xff]
    %v374 = vld [vmem:[#allocation8 + $0x8] sm:$0xff]
    %v375 = vld [vmem:[#allocation8 + $0x10] sm:$0xff]
    %v376 = vld [vmem:[#allocation8 + $0x18] sm:$0xff]
    %v377 = vld [vmem:[%s6] sm:$0x1]
    %v379 = vlaneseq
    %v380 = vshrl.u32 %v379, 7
    %v381 = vsub.s32 0, %v380
    %v382 = vrot.slane %v377, %v381
    %v385 = vsel %vm117, %v357, 0
    %v388 = vsel %vm117, %v358, 0
    %v391 = vsel %vm117, %v359, 0
    %v394 = vsel %vm117, %v360, 0
    %v397 = vsel %vm117, %v361, 0
    %v400 = vsel %vm117, %v362, 0
    %v403 = vsel %vm117, %v363, 0
    %v406 = vsel %vm117, %v364, 0
    %v409 = vsel %vm117, %v365, 0
    %v412 = vsel %vm117, %v366, 0
    %v415 = vsel %vm117, %v367, 0
    %v418 = vsel %vm117, %v368, 0
    %v421 = vsel %vm117, %v369, 0
    %v424 = vsel %vm117, %v370, 0
    %v427 = vsel %vm117, %v371, 0
    %v430 = vsel %vm117, %v372, 0
    %432 = vmatprep.subr.mxu0 0.0
    %433 = vmatpush1.msra.mxu0 %v373
    %434 = vmatprep.subr.mxu0 0.0
    %435 = vmatpush1.msra.mxu0 %v374
    %436 = vmatprep.subr.mxu0 0.0
    %437 = vmatpush1.msra.mxu0 %v375
    %438 = vmatprep.subr.mxu0 0.0
    %439 = vmatpush1.msra.mxu0 %v376
    %440 = vmatprep.subr.mxu0 0.0
    %441 = vmatpush1.msra.mxu0 0.0
    %442 = vmatprep.subr.mxu0 0.0
    %443 = vmatpush1.msra.mxu0 0.0
    %444 = vmatprep.subr.mxu0 0.0
    %445 = vmatpush1.msra.mxu0 0.0
    %446 = vmatprep.subr.mxu0 0.0
    %447 = vmatpush1.msra.mxu0 0.0
    %448 = vmatprep.subr.mxu0 0.0
    %449 = vmatpush1.msra.mxu0 0.0
    %450 = vmatprep.subr.mxu0 0.0
    %451 = vmatpush1.msra.mxu0 0.0
    %452 = vmatprep.subr.mxu0 0.0
    %453 = vmatpush1.msra.mxu0 0.0
    %454 = vmatprep.subr.mxu0 0.0
    %455 = vmatpush1.msra.mxu0 0.0
    %456 = vmatprep.subr.mxu0 0.0
    %457 = vmatpush1.msra.mxu0 0.0
    %458 = vmatprep.subr.mxu0 0.0
    %459 = vmatpush1.msra.mxu0 0.0
    %460 = vmatprep.subr.mxu0 0.0
    %461 = vmatpush1.msra.mxu0 0.0
    %462 = vmatprep.subr.mxu0 0.0
    %463 = vmatpush1.msra.mxu0 0.0
    %464 = vmatprep.subr.mxu0 0.0
    %465 = vmatpush1.msra.mxu0 0.0
    %466 = vmatprep.subr.mxu0 0.0
    %467 = vmatpush1.msra.mxu0 0.0
    %468 = vmatprep.subr.mxu0 0.0
    %469 = vmatpush1.msra.mxu0 0.0
    %470 = vmatprep.subr.mxu0 0.0
    %471 = vmatpush1.msra.mxu0 0.0
    %472 = vmatprep.subr.mxu0 0.0
    %473 = vmatpush1.msra.mxu0 0.0
    %474 = vmatprep.subr.mxu0 0.0
    %475 = vmatpush1.msra.mxu0 0.0
    %476 = vmatprep.subr.mxu0 0.0
    %477 = vmatpush1.msra.mxu0 0.0
    %478 = vmatprep.subr.mxu0 0.0
    %479 = vmatpush1.msra.mxu0 0.0
    %480 = vmatprep.subr.mxu0 0.0
    %481 = vmatpush1.msra.mxu0 0.0
    %482 = vmatprep.subr.mxu0 0.0
    %483 = vmatpush1.msra.mxu0 0.0
    %484 = vmatprep.subr.mxu0 0.0
    %485 = vmatpush1.msra.mxu0 0.0
    %486 = vmatprep.subr.mxu0 0.0
    %487 = vmatpush1.msra.mxu0 0.0
    %488 = vmatprep.subr.mxu0 0.0
    %489 = vmatpush1.msra.mxu0 0.0
    %490 = vmatprep.subr.mxu0 0.0
    %491 = vmatpush1.msra.mxu0 0.0
    %492 = vmatprep.subr.mxu0 0.0
    %493 = vmatpush1.msra.mxu0 0.0
    %494 = vmatprep.subr.mxu0 0.0
    %495 = vmatpush1.msra.mxu0 0.0
    %496 = vmatprep.mubr.f32.mxu0 0.0
    %497 = vmatmul.mubr.f32.gmra.mrb[0].mxu0 %v385
    %v498 = vpop.f32.mrb[0].mxu0
    %v499 = vadd.f32 %v382, %v498
    %v500 = vpop.f32.mrb[0].mxu0
    %501 = vmatprep.mubr.f32.mxu0 0.0
    %502 = vmatmul.mubr.f32.gmra.mrb[0].mxu0 %v388
    %v503 = vpop.f32.mrb[0].mxu0
    %v504 = vadd.f32 %v382, %v503
    %v505 = vpop.f32.mrb[0].mxu0
    %506 = vmatprep.mubr.f32.mxu0 0.0
    %507 = vmatmul.mubr.f32.gmra.mrb[0].mxu0 %v391
    %v508 = vpop.f32.mrb[0].mxu0
    %v509 = vadd.f32 %v382, %v508
    %v510 = vpop.f32.mrb[0].mxu0
    %511 = vmatprep.mubr.f32.mxu0 0.0
    %512 = vmatmul.mubr.f32.gmra.mrb[0].mxu0 %v394
    %v513 = vpop.f32.mrb[0].mxu0
    %v514 = vadd.f32 %v382, %v513
    %v515 = vpop.f32.mrb[0].mxu0
    %516 = vmatprep.mubr.f32.mxu0 0.0
    %517 = vmatmul.mubr.f32.gmra.mrb[0].mxu0 %v397
    %v518 = vpop.f32.mrb[0].mxu0
    %v519 = vadd.f32 %v382, %v518
    %v520 = vpop.f32.mrb[0].mxu0
    %521 = vmatprep.mubr.f32.mxu0 0.0
    %522 = vmatmul.mubr.f32.gmra.mrb[0].mxu0 %v400
    %v523 = vpop.f32.mrb[0].mxu0
    %v524 = vadd.f32 %v382, %v523
    %v525 = vpop.f32.mrb[0].mxu0
    %526 = vmatprep.mubr.f32.mxu0 0.0
    %527 = vmatmul.mubr.f32.gmra.mrb[0].mxu0 %v403
    %v528 = vpop.f32.mrb[0].mxu0
    %v529 = vadd.f32 %v382, %v528
    %v530 = vpop.f32.mrb[0].mxu0
    %531 = vmatprep.mubr.f32.mxu0 0.0
    %532 = vmatmul.mubr.f32.gmra.mrb[0].mxu0 %v406
    %v533 = vpop.f32.mrb[0].mxu0
    %v534 = vadd.f32 %v382, %v533
    %v535 = vpop.f32.mrb[0].mxu0
    %536 = vmatprep.mubr.f32.mxu0 0.0
    %537 = vmatmul.mubr.f32.gmra.mrb[0].mxu0 %v409
    %v538 = vpop.f32.mrb[0].mxu0
    %v539 = vadd.f32 %v382, %v538
    %v540 = vpop.f32.mrb[0].mxu0
    %541 = vmatprep.mubr.f32.mxu0 0.0
    %542 = vmatmul.mubr.f32.gmra.mrb[0].mxu0 %v412
    %v543 = vpop.f32.mrb[0].mxu0
    %v544 = vadd.f32 %v382, %v543
    %v545 = vpop.f32.mrb[0].mxu0
    %546 = vmatprep.mubr.f32.mxu0 0.0
    %547 = vmatmul.mubr.f32.gmra.mrb[0].mxu0 %v415
    %v548 = vpop.f32.mrb[0].mxu0
    %v549 = vadd.f32 %v382, %v548
    %v550 = vpop.f32.mrb[0].mxu0
    %551 = vmatprep.mubr.f32.mxu0 0.0
    %552 = vmatmul.mubr.f32.gmra.mrb[0].mxu0 %v418
    %v553 = vpop.f32.mrb[0].mxu0
    %v554 = vadd.f32 %v382, %v553
    %v555 = vpop.f32.mrb[0].mxu0
    %556 = vmatprep.mubr.f32.mxu0 0.0
    %557 = vmatmul.mubr.f32.gmra.mrb[0].mxu0 %v421
    %v558 = vpop.f32.mrb[0].mxu0
    %v559 = vadd.f32 %v382, %v558
    %v560 = vpop.f32.mrb[0].mxu0
    %561 = vmatprep.mubr.f32.mxu0 0.0
    %562 = vmatmul.mubr.f32.gmra.mrb[0].mxu0 %v424
    %v563 = vpop.f32.mrb[0].mxu0
    %v564 = vadd.f32 %v382, %v563
    %v565 = vpop.f32.mrb[0].mxu0
    %566 = vmatprep.mubr.f32.mxu0 0.0
    %567 = vmatmul.mubr.f32.gmra.mrb[0].mxu0 %v427
    %v568 = vpop.f32.mrb[0].mxu0
    %v569 = vadd.f32 %v382, %v568
    %v570 = vpop.f32.mrb[0].mxu0
    %571 = vmatprep.mubr.f32.mxu0 0.0
    %572 = vmatmul.mubr.f32.gmra.mrb[0].mxu0 %v430
    %v573 = vpop.f32.mrb[0].mxu0
    %v574 = vadd.f32 %v382, %v573
    %v575 = vpop.f32.mrb[0].mxu0
    %576 = vdwg.mxu0
    %v577 = vmul.f32 %v499, 0.35355338
    %v578 = vmul.f32 %v504, 0.35355338
    %v579 = vmul.f32 %v509, 0.35355338
    %v580 = vmul.f32 %v514, 0.35355338
    %v581 = vmul.f32 %v519, 0.35355338
    %v582 = vmul.f32 %v524, 0.35355338
    %v583 = vmul.f32 %v529, 0.35355338
    %v584 = vmul.f32 %v534, 0.35355338
    %v585 = vmul.f32 %v539, 0.35355338
    %v586 = vmul.f32 %v544, 0.35355338
    %v587 = vmul.f32 %v549, 0.35355338
    %v588 = vmul.f32 %v554, 0.35355338
    %v589 = vmul.f32 %v559, 0.35355338
    %v590 = vmul.f32 %v564, 0.35355338
    %v591 = vmul.f32 %v569, 0.35355338
    %v592 = vmul.f32 %v574, 0.35355338
    %609 = vrot.lane.b32.xlu0 %v577, 120
    %v610 = vpop.permute.xlu0 %609
    %611 = vrot.lane.b32.xlu0 %v578, 120
    %v612 = vpop.permute.xlu0 %611
    %613 = vrot.lane.b32.xlu0 %v579, 120
    %v614 = vpop.permute.xlu0 %613
    %615 = vrot.lane.b32.xlu0 %v580, 120
    %v616 = vpop.permute.xlu0 %615
    %617 = vrot.lane.b32.xlu0 %v581, 120
    %v618 = vpop.permute.xlu0 %617
    %619 = vrot.lane.b32.xlu0 %v582, 120
    %v620 = vpop.permute.xlu0 %619
    %621 = vrot.lane.b32.xlu0 %v583, 120
    %v622 = vpop.permute.xlu0 %621
    %623 = vrot.lane.b32.xlu0 %v584, 120
    %v624 = vpop.permute.xlu0 %623
    %625 = vrot.lane.b32.xlu0 %v585, 120
    %v626 = vpop.permute.xlu0 %625
    %627 = vrot.lane.b32.xlu0 %v586, 120
    %v628 = vpop.permute.xlu0 %627
    %629 = vrot.lane.b32.xlu0 %v587, 120
    %v630 = vpop.permute.xlu0 %629
    %631 = vrot.lane.b32.xlu0 %v588, 120
    %v632 = vpop.permute.xlu0 %631
    %633 = vrot.lane.b32.xlu0 %v589, 120
    %v634 = vpop.permute.xlu0 %633
    %635 = vrot.lane.b32.xlu0 %v590, 120
    %v636 = vpop.permute.xlu0 %635
    %637 = vrot.lane.b32.xlu0 %v591, 120
    %v638 = vpop.permute.xlu0 %637
    %639 = vrot.lane.b32.xlu0 %v592, 120
    %v640 = vpop.permute.xlu0 %639
    %641 = vrot.lane.b32.xlu0 %v577, 112
    %v642 = vpop.permute.xlu0 %641
    %643 = vrot.lane.b32.xlu0 %v578, 112
    %v644 = vpop.permute.xlu0 %643
    %645 = vrot.lane.b32.xlu0 %v579, 112
    %v646 = vpop.permute.xlu0 %645
    %647 = vrot.lane.b32.xlu0 %v580, 112
    %v648 = vpop.permute.xlu0 %647
    %649 = vrot.lane.b32.xlu0 %v581, 112
    %v650 = vpop.permute.xlu0 %649
    %651 = vrot.lane.b32.xlu0 %v582, 112
    %v652 = vpop.permute.xlu0 %651
    %653 = vrot.lane.b32.xlu0 %v583, 112
    %v654 = vpop.permute.xlu0 %653
    %655 = vrot.lane.b32.xlu0 %v584, 112
    %v656 = vpop.permute.xlu0 %655
    %657 = vrot.lane.b32.xlu0 %v585, 112
    %v658 = vpop.permute.xlu0 %657
    %659 = vrot.lane.b32.xlu0 %v586, 112
    %v660 = vpop.permute.xlu0 %659
    %661 = vrot.lane.b32.xlu0 %v587, 112
    %v662 = vpop.permute.xlu0 %661
    %663 = vrot.lane.b32.xlu0 %v588, 112
    %v664 = vpop.permute.xlu0 %663
    %665 = vrot.lane.b32.xlu0 %v589, 112
    %v666 = vpop.permute.xlu0 %665
    %667 = vrot.lane.b32.xlu0 %v590, 112
    %v668 = vpop.permute.xlu0 %667
    %669 = vrot.lane.b32.xlu0 %v591, 112
    %v670 = vpop.permute.xlu0 %669
    %671 = vrot.lane.b32.xlu0 %v592, 112
    %v672 = vpop.permute.xlu0 %671
    %673 = vrot.lane.b32.xlu0 %v577, 104
    %v674 = vpop.permute.xlu0 %673
    %675 = vrot.lane.b32.xlu0 %v578, 104
    %v676 = vpop.permute.xlu0 %675
    %677 = vrot.lane.b32.xlu0 %v579, 104
    %v678 = vpop.permute.xlu0 %677
    %679 = vrot.lane.b32.xlu0 %v580, 104
    %v680 = vpop.permute.xlu0 %679
    %681 = vrot.lane.b32.xlu0 %v581, 104
    %v682 = vpop.permute.xlu0 %681
    %683 = vrot.lane.b32.xlu0 %v582, 104
    %v684 = vpop.permute.xlu0 %683
    %685 = vrot.lane.b32.xlu0 %v583, 104
    %v686 = vpop.permute.xlu0 %685
    %687 = vrot.lane.b32.xlu0 %v584, 104
    %v688 = vpop.permute.xlu0 %687
    %689 = vrot.lane.b32.xlu0 %v585, 104
    %v690 = vpop.permute.xlu0 %689
    %691 = vrot.lane.b32.xlu0 %v586, 104
    %v692 = vpop.permute.xlu0 %691
    %693 = vrot.lane.b32.xlu0 %v587, 104
    %v694 = vpop.permute.xlu0 %693
    %695 = vrot.lane.b32.xlu0 %v588, 104
    %v696 = vpop.permute.xlu0 %695
    %697 = vrot.lane.b32.xlu0 %v589, 104
    %v698 = vpop.permute.xlu0 %697
    %699 = vrot.lane.b32.xlu0 %v590, 104
    %v700 = vpop.permute.xlu0 %699
    %701 = vrot.lane.b32.xlu0 %v591, 104
    %v702 = vpop.permute.xlu0 %701
    %703 = vrot.lane.b32.xlu0 %v592, 104
    %v704 = vpop.permute.xlu0 %703
    %721 = vrot.lane.b32.xlu0 %v499, 120
    %v722 = vpop.permute.xlu0 %721
    %723 = vrot.lane.b32.xlu0 %v504, 120
    %v724 = vpop.permute.xlu0 %723
    %725 = vrot.lane.b32.xlu0 %v509, 120
    %v726 = vpop.permute.xlu0 %725
    %727 = vrot.lane.b32.xlu0 %v514, 120
    %v728 = vpop.permute.xlu0 %727
    %729 = vrot.lane.b32.xlu0 %v519, 120
    %v730 = vpop.permute.xlu0 %729
    %731 = vrot.lane.b32.xlu0 %v524, 120
    %v732 = vpop.permute.xlu0 %731
    %733 = vrot.lane.b32.xlu0 %v529, 120
    %v734 = vpop.permute.xlu0 %733
    %735 = vrot.lane.b32.xlu0 %v534, 120
    %v736 = vpop.permute.xlu0 %735
    %737 = vrot.lane.b32.xlu0 %v539, 120
    %v738 = vpop.permute.xlu0 %737
    %739 = vrot.lane.b32.xlu0 %v544, 120
    %v740 = vpop.permute.xlu0 %739
    %741 = vrot.lane.b32.xlu0 %v549, 120
    %v742 = vpop.permute.xlu0 %741
    %743 = vrot.lane.b32.xlu0 %v554, 120
    %v744 = vpop.permute.xlu0 %743
    %745 = vrot.lane.b32.xlu0 %v559, 120
    %v746 = vpop.permute.xlu0 %745
    %747 = vrot.lane.b32.xlu0 %v564, 120
    %v748 = vpop.permute.xlu0 %747
    %749 = vrot.lane.b32.xlu0 %v569, 120
    %v750 = vpop.permute.xlu0 %749
    %751 = vrot.lane.b32.xlu0 %v574, 120
    %v752 = vpop.permute.xlu0 %751
    %753 = vrot.lane.b32.xlu0 %v499, 112
    %v754 = vpop.permute.xlu0 %753
    %755 = vrot.lane.b32.xlu0 %v504, 112
    %v756 = vpop.permute.xlu0 %755
    %757 = vrot.lane.b32.xlu0 %v509, 112
    %v758 = vpop.permute.xlu0 %757
    %759 = vrot.lane.b32.xlu0 %v514, 112
    %v760 = vpop.permute.xlu0 %759
    %761 = vrot.lane.b32.xlu0 %v519, 112
    %v762 = vpop.permute.xlu0 %761
    %763 = vrot.lane.b32.xlu0 %v524, 112
    %v764 = vpop.permute.xlu0 %763
    %765 = vrot.lane.b32.xlu0 %v529, 112
    %v766 = vpop.permute.xlu0 %765
    %767 = vrot.lane.b32.xlu0 %v534, 112
    %v768 = vpop.permute.xlu0 %767
    %769 = vrot.lane.b32.xlu0 %v539, 112
    %v770 = vpop.permute.xlu0 %769
    %771 = vrot.lane.b32.xlu0 %v544, 112
    %v772 = vpop.permute.xlu0 %771
    %773 = vrot.lane.b32.xlu0 %v549, 112
    %v774 = vpop.permute.xlu0 %773
    %775 = vrot.lane.b32.xlu0 %v554, 112
    %v776 = vpop.permute.xlu0 %775
    %777 = vrot.lane.b32.xlu0 %v559, 112
    %v778 = vpop.permute.xlu0 %777
    %779 = vrot.lane.b32.xlu0 %v564, 112
    %v780 = vpop.permute.xlu0 %779
    %781 = vrot.lane.b32.xlu0 %v569, 112
    %v782 = vpop.permute.xlu0 %781
    %783 = vrot.lane.b32.xlu0 %v574, 112
    %v784 = vpop.permute.xlu0 %783
    %785 = vrot.lane.b32.xlu0 %v499, 104
    %v786 = vpop.permute.xlu0 %785
    %787 = vrot.lane.b32.xlu0 %v504, 104
    %v788 = vpop.permute.xlu0 %787
    %789 = vrot.lane.b32.xlu0 %v509, 104
    %v790 = vpop.permute.xlu0 %789
    %791 = vrot.lane.b32.xlu0 %v514, 104
    %v792 = vpop.permute.xlu0 %791
    %793 = vrot.lane.b32.xlu0 %v519, 104
    %v794 = vpop.permute.xlu0 %793
    %795 = vrot.lane.b32.xlu0 %v524, 104
    %v796 = vpop.permute.xlu0 %795
    %797 = vrot.lane.b32.xlu0 %v529, 104
    %v798 = vpop.permute.xlu0 %797
    %799 = vrot.lane.b32.xlu0 %v534, 104
    %v800 = vpop.permute.xlu0 %799
    %801 = vrot.lane.b32.xlu0 %v539, 104
    %v802 = vpop.permute.xlu0 %801
    %803 = vrot.lane.b32.xlu0 %v544, 104
    %v804 = vpop.permute.xlu0 %803
    %805 = vrot.lane.b32.xlu0 %v549, 104
    %v806 = vpop.permute.xlu0 %805
    %807 = vrot.lane.b32.xlu0 %v554, 104
    %v808 = vpop.permute.xlu0 %807
    %809 = vrot.lane.b32.xlu0 %v559, 104
    %v810 = vpop.permute.xlu0 %809
    %811 = vrot.lane.b32.xlu0 %v564, 104
    %v812 = vpop.permute.xlu0 %811
    %813 = vrot.lane.b32.xlu0 %v569, 104
    %v814 = vpop.permute.xlu0 %813
    %815 = vrot.lane.b32.xlu0 %v574, 104
    %v816 = vpop.permute.xlu0 %815
    %817 = vrot.lane.b32.xlu0 %v499, 96
    %v818 = vpop.permute.xlu0 %817
    %819 = vrot.lane.b32.xlu0 %v504, 96
    %v820 = vpop.permute.xlu0 %819
    %vm821 = vcmask 64512
    %v822 = vsel %vm821, %v577, 0
    %v824 = vsel %vm821, %v578, 0
    %v826 = vsel %vm821, %v818, 0
    %v828 = vsel %vm821, %v820, 0
    %830 = vmatprep.subr.mxu0 0.0
    %831 = vmatpush1.xpose.msra.mxu0 %v826
    %832 = vmatprep.subr.mxu0 0.0
    %833 = vmatpush1.xpose.msra.mxu0 %v828
    %834 = vmatprep.subr.mxu0 0.0
    %835 = vmatpush1.xpose.msra.mxu0 0.0
    %836 = vmatprep.subr.mxu0 0.0
    %837 = vmatpush1.xpose.msra.mxu0 0.0
    %838 = vmatprep.subr.mxu0 0.0
    %839 = vmatpush1.xpose.msra.mxu0 0.0
    %840 = vmatprep.subr.mxu0 0.0
    %841 = vmatpush1.xpose.msra.mxu0 0.0
    %842 = vmatprep.subr.mxu0 0.0
    %843 = vmatpush1.xpose.msra.mxu0 0.0
    %844 = vmatprep.subr.mxu0 0.0
    %845 = vmatpush1.xpose.msra.mxu0 0.0
    %846 = vmatprep.subr.mxu0 0.0
    %847 = vmatpush1.xpose.msra.mxu0 0.0
    %848 = vmatprep.subr.mxu0 0.0
    %849 = vmatpush1.xpose.msra.mxu0 0.0
    %850 = vmatprep.subr.mxu0 0.0
    %851 = vmatpush1.xpose.msra.mxu0 0.0
    %852 = vmatprep.subr.mxu0 0.0
    %853 = vmatpush1.xpose.msra.mxu0 0.0
    %854 = vmatprep.subr.mxu0 0.0
    %855 = vmatpush1.xpose.msra.mxu0 0.0
    %856 = vmatprep.subr.mxu0 0.0
    %857 = vmatpush1.xpose.msra.mxu0 0.0
    %858 = vmatprep.subr.mxu0 0.0
    %859 = vmatpush1.xpose.msra.mxu0 0.0
    %860 = vmatprep.subr.mxu0 0.0
    %861 = vmatpush1.xpose.msra.mxu0 0.0
    %862 = vmatprep.subr.mxu0 0.0
    %863 = vmatpush1.xpose.msra.mxu0 0.0
    %864 = vmatprep.subr.mxu0 0.0
    %865 = vmatpush1.xpose.msra.mxu0 0.0
    %866 = vmatprep.subr.mxu0 0.0
    %867 = vmatpush1.xpose.msra.mxu0 0.0
    %868 = vmatprep.subr.mxu0 0.0
    %869 = vmatpush1.xpose.msra.mxu0 0.0
    %870 = vmatprep.subr.mxu0 0.0
    %871 = vmatpush1.xpose.msra.mxu0 0.0
    %872 = vmatprep.subr.mxu0 0.0
    %873 = vmatpush1.xpose.msra.mxu0 0.0
    %874 = vmatprep.subr.mxu0 0.0
    %875 = vmatpush1.xpose.msra.mxu0 0.0
    %876 = vmatprep.subr.mxu0 0.0
    %877 = vmatpush1.xpose.msra.mxu0 0.0
    %878 = vmatprep.subr.mxu0 0.0
    %879 = vmatpush1.xpose.msra.mxu0 0.0
    %880 = vmatprep.subr.mxu0 0.0
    %881 = vmatpush1.xpose.msra.mxu0 0.0
    %882 = vmatprep.subr.mxu0 0.0
    %883 = vmatpush1.xpose.msra.mxu0 0.0
    %884 = vmatprep.subr.mxu0 0.0
    %885 = vmatpush1.xpose.msra.mxu0 0.0
    %886 = vmatprep.subr.mxu0 0.0
    %887 = vmatpush1.xpose.msra.mxu0 0.0
    %888 = vmatprep.subr.mxu0 0.0
    %889 = vmatpush1.xpose.msra.mxu0 0.0
    %890 = vmatprep.subr.mxu0 0.0
    %891 = vmatpush1.xpose.msra.mxu0 0.0
    %892 = vmatprep.subr.mxu0 0.0
    %893 = vmatpush1.xpose.msra.mxu0 0.0
    %894 = vmatprep.mubr.f32.mxu0 0.0
    %895 = vmatmul.mubr.f32.gmra.mrb[0].mxu0 %v822
    %v896 = vpop.f32.mrb[0].mxu0
    %v897 = vadd.f32 0.0, %v896
    %v898 = vpop.f32.mrb[0].mxu0
    %899 = vmatprep.mubr.f32.mxu0 0.0
    %900 = vmatmul.mubr.f32.gmra.mrb[0].mxu0 %v824
    %v901 = vpop.f32.mrb[0].mxu0
    %v902 = vadd.f32 0.0, %v901
    %v903 = vpop.f32.mrb[0].mxu0
    %904 = vdwg.mxu0
    %905 = vrot.lane.b32.xlu0 %v509, 96
    %v906 = vpop.permute.xlu0 %905
    %907 = vrot.lane.b32.xlu0 %v514, 96
    %v908 = vpop.permute.xlu0 %907
    %v909 = vsel %vm821, %v579, 0
    %v911 = vsel %vm821, %v580, 0
    %v913 = vsel %vm821, %v906, 0
    %v915 = vsel %vm821, %v908, 0
    %917 = vmatprep.subr.mxu0 0.0
    %918 = vmatpush1.xpose.msra.mxu0 %v913
    %919 = vmatprep.subr.mxu0 0.0
    %920 = vmatpush1.xpose.msra.mxu0 %v915
    %921 = vmatprep.subr.mxu0 0.0
    %922 = vmatpush1.xpose.msra.mxu0 0.0
    %923 = vmatprep.subr.mxu0 0.0
    %924 = vmatpush1.xpose.msra.mxu0 0.0
    %925 = vmatprep.subr.mxu0 0.0
    %926 = vmatpush1.xpose.msra.mxu0 0.0
    %927 = vmatprep.subr.mxu0 0.0
    %928 = vmatpush1.xpose.msra.mxu0 0.0
    %929 = vmatprep.subr.mxu0 0.0
    %930 = vmatpush1.xpose.msra.mxu0 0.0
    %931 = vmatprep.subr.mxu0 0.0
    %932 = vmatpush1.xpose.msra.mxu0 0.0
    %933 = vmatprep.subr.mxu0 0.0
    %934 = vmatpush1.xpose.msra.mxu0 0.0
    %935 = vmatprep.subr.mxu0 0.0
    %936 = vmatpush1.xpose.msra.mxu0 0.0
    %937 = vmatprep.subr.mxu0 0.0
    %938 = vmatpush1.xpose.msra.mxu0 0.0
    %939 = vmatprep.subr.mxu0 0.0
    %940 = vmatpush1.xpose.msra.mxu0 0.0
    %941 = vmatprep.subr.mxu0 0.0
    %942 = vmatpush1.xpose.msra.mxu0 0.0
    %943 = vmatprep.subr.mxu0 0.0
    %944 = vmatpush1.xpose.msra.mxu0 0.0
    %945 = vmatprep.subr.mxu0 0.0
    %946 = vmatpush1.xpose.msra.mxu0 0.0
    %947 = vmatprep.subr.mxu0 0.0
    %948 = vmatpush1.xpose.msra.mxu0 0.0
    %949 = vmatprep.subr.mxu0 0.0
    %950 = vmatpush1.xpose.msra.mxu0 0.0
    %951 = vmatprep.subr.mxu0 0.0
    %952 = vmatpush1.xpose.msra.mxu0 0.0
    %953 = vmatprep.subr.mxu0 0.0
    %954 = vmatpush1.xpose.msra.mxu0 0.0
    %955 = vmatprep.subr.mxu0 0.0
    %956 = vmatpush1.xpose.msra.mxu0 0.0
    %957 = vmatprep.subr.mxu0 0.0
    %958 = vmatpush1.xpose.msra.mxu0 0.0
    %959 = vmatprep.subr.mxu0 0.0
    %960 = vmatpush1.xpose.msra.mxu0 0.0
    %961 = vmatprep.subr.mxu0 0.0
    %962 = vmatpush1.xpose.msra.mxu0 0.0
    %963 = vmatprep.subr.mxu0 0.0
    %964 = vmatpush1.xpose.msra.mxu0 0.0
    %965 = vmatprep.subr.mxu0 0.0
    %966 = vmatpush1.xpose.msra.mxu0 0.0
    %967 = vmatprep.subr.mxu0 0.0
    %968 = vmatpush1.xpose.msra.mxu0 0.0
    %969 = vmatprep.subr.mxu0 0.0
    %970 = vmatpush1.xpose.msra.mxu0 0.0
    %971 = vmatprep.subr.mxu0 0.0
    %972 = vmatpush1.xpose.msra.mxu0 0.0
    %973 = vmatprep.subr.mxu0 0.0
    %974 = vmatpush1.xpose.msra.mxu0 0.0
    %975 = vmatprep.subr.mxu0 0.0
    %976 = vmatpush1.xpose.msra.mxu0 0.0
    %977 = vmatprep.subr.mxu0 0.0
    %978 = vmatpush1.xpose.msra.mxu0 0.0
    %979 = vmatprep.subr.mxu0 0.0
    %980 = vmatpush1.xpose.msra.mxu0 0.0
    %981 = vmatprep.mubr.f32.mxu0 0.0
    %982 = vmatmul.mubr.f32.gmra.mrb[0].mxu0 %v909
    %v983 = vpop.f32.mrb[0].mxu0
    %v984 = vadd.f32 0.0, %v983
    %v985 = vpop.f32.mrb[0].mxu0
    %986 = vmatprep.mubr.f32.mxu0 0.0
    %987 = vmatmul.mubr.f32.gmra.mrb[0].mxu0 %v911
    %v988 = vpop.f32.mrb[0].mxu0
    %v989 = vadd.f32 0.0, %v988
    %v990 = vpop.f32.mrb[0].mxu0
    %991 = vdwg.mxu0
    %992 = vrot.lane.b32.xlu0 %v519, 96
    %v993 = vpop.permute.xlu0 %992
    %994 = vrot.lane.b32.xlu0 %v524, 96
    %v995 = vpop.permute.xlu0 %994
    %v996 = vsel %vm821, %v581, 0
    %v998 = vsel %vm821, %v582, 0
    %v1000 = vsel %vm821, %v993, 0
    %v1002 = vsel %vm821, %v995, 0
    %1004 = vmatprep.subr.mxu0 0.0
    %1005 = vmatpush1.xpose.msra.mxu0 %v1000
    %1006 = vmatprep.subr.mxu0 0.0
    %1007 = vmatpush1.xpose.msra.mxu0 %v1002
    %1008 = vmatprep.subr.mxu0 0.0
    %1009 = vmatpush1.xpose.msra.mxu0 0.0
    %1010 = vmatprep.subr.mxu0 0.0
    %1011 = vmatpush1.xpose.msra.mxu0 0.0
    %1012 = vmatprep.subr.mxu0 0.0
    %1013 = vmatpush1.xpose.msra.mxu0 0.0
    %1014 = vmatprep.subr.mxu0 0.0
    %1015 = vmatpush1.xpose.msra.mxu0 0.0
    %1016 = vmatprep.subr.mxu0 0.0
    %1017 = vmatpush1.xpose.msra.mxu0 0.0
    %1018 = vmatprep.subr.mxu0 0.0
    %1019 = vmatpush1.xpose.msra.mxu0 0.0
    %1020 = vmatprep.subr.mxu0 0.0
    %1021 = vmatpush1.xpose.msra.mxu0 0.0
    %1022 = vmatprep.subr.mxu0 0.0
    %1023 = vmatpush1.xpose.msra.mxu0 0.0
    %1024 = vmatprep.subr.mxu0 0.0
    %1025 = vmatpush1.xpose.msra.mxu0 0.0
    %1026 = vmatprep.subr.mxu0 0.0
    %1027 = vmatpush1.xpose.msra.mxu0 0.0
    %1028 = vmatprep.subr.mxu0 0.0
    %1029 = vmatpush1.xpose.msra.mxu0 0.0
    %1030 = vmatprep.subr.mxu0 0.0
    %1031 = vmatpush1.xpose.msra.mxu0 0.0
    %1032 = vmatprep.subr.mxu0 0.0
    %1033 = vmatpush1.xpose.msra.mxu0 0.0
    %1034 = vmatprep.subr.mxu0 0.0
    %1035 = vmatpush1.xpose.msra.mxu0 0.0
    %1036 = vmatprep.subr.mxu0 0.0
    %1037 = vmatpush1.xpose.msra.mxu0 0.0
    %1038 = vmatprep.subr.mxu0 0.0
    %1039 = vmatpush1.xpose.msra.mxu0 0.0
    %1040 = vmatprep.subr.mxu0 0.0
    %1041 = vmatpush1.xpose.msra.mxu0 0.0
    %1042 = vmatprep.subr.mxu0 0.0
    %1043 = vmatpush1.xpose.msra.mxu0 0.0
    %1044 = vmatprep.subr.mxu0 0.0
    %1045 = vmatpush1.xpose.msra.mxu0 0.0
    %1046 = vmatprep.subr.mxu0 0.0
    %1047 = vmatpush1.xpose.msra.mxu0 0.0
    %1048 = vmatprep.subr.mxu0 0.0
    %1049 = vmatpush1.xpose.msra.mxu0 0.0
    %1050 = vmatprep.subr.mxu0 0.0
    %1051 = vmatpush1.xpose.msra.mxu0 0.0
    %1052 = vmatprep.subr.mxu0 0.0
    %1053 = vmatpush1.xpose.msra.mxu0 0.0
    %1054 = vmatprep.subr.mxu0 0.0
    %1055 = vmatpush1.xpose.msra.mxu0 0.0
    %1056 = vmatprep.subr.mxu0 0.0
    %1057 = vmatpush1.xpose.msra.mxu0 0.0
    %1058 = vmatprep.subr.mxu0 0.0
    %1059 = vmatpush1.xpose.msra.mxu0 0.0
    %1060 = vmatprep.subr.mxu0 0.0
    %1061 = vmatpush1.xpose.msra.mxu0 0.0
    %1062 = vmatprep.subr.mxu0 0.0
    %1063 = vmatpush1.xpose.msra.mxu0 0.0
    %1064 = vmatprep.subr.mxu0 0.0
    %1065 = vmatpush1.xpose.msra.mxu0 0.0
    %1066 = vmatprep.subr.mxu0 0.0
    %1067 = vmatpush1.xpose.msra.mxu0 0.0
    %1068 = vmatprep.mubr.f32.mxu0 0.0
    %1069 = vmatmul.mubr.f32.gmra.mrb[0].mxu0 %v996
    %v1070 = vpop.f32.mrb[0].mxu0
    %v1071 = vadd.f32 0.0, %v1070
    %v1072 = vpop.f32.mrb[0].mxu0
    %1073 = vmatprep.mubr.f32.mxu0 0.0
    %1074 = vmatmul.mubr.f32.gmra.mrb[0].mxu0 %v998
    %v1075 = vpop.f32.mrb[0].mxu0
    %v1076 = vadd.f32 0.0, %v1075
    %v1077 = vpop.f32.mrb[0].mxu0
    %1078 = vdwg.mxu0
    %1079 = vrot.lane.b32.xlu0 %v529, 96
    %v1080 = vpop.permute.xlu0 %1079
    %1081 = vrot.lane.b32.xlu0 %v534, 96
    %v1082 = vpop.permute.xlu0 %1081
    %v1083 = vsel %vm821, %v583, 0
    %v1085 = vsel %vm821, %v584, 0
    %v1087 = vsel %vm821, %v1080, 0
    %v1089 = vsel %vm821, %v1082, 0
    %1091 = vmatprep.subr.mxu0 0.0
    %1092 = vmatpush1.xpose.msra.mxu0 %v1087
    %1093 = vmatprep.subr.mxu0 0.0
    %1094 = vmatpush1.xpose.msra.mxu0 %v1089
    %1095 = vmatprep.subr.mxu0 0.0
    %1096 = vmatpush1.xpose.msra.mxu0 0.0
    %1097 = vmatprep.subr.mxu0 0.0
    %1098 = vmatpush1.xpose.msra.mxu0 0.0
    %1099 = vmatprep.subr.mxu0 0.0
    %1100 = vmatpush1.xpose.msra.mxu0 0.0
    %1101 = vmatprep.subr.mxu0 0.0
    %1102 = vmatpush1.xpose.msra.mxu0 0.0
    %1103 = vmatprep.subr.mxu0 0.0
    %1104 = vmatpush1.xpose.msra.mxu0 0.0
    %1105 = vmatprep.subr.mxu0 0.0
    %1106 = vmatpush1.xpose.msra.mxu0 0.0
    %1107 = vmatprep.subr.mxu0 0.0
    %1108 = vmatpush1.xpose.msra.mxu0 0.0
    %1109 = vmatprep.subr.mxu0 0.0
    %1110 = vmatpush1.xpose.msra.mxu0 0.0
    %1111 = vmatprep.subr.mxu0 0.0
    %1112 = vmatpush1.xpose.msra.mxu0 0.0
    %1113 = vmatprep.subr.mxu0 0.0
    %1114 = vmatpush1.xpose.msra.mxu0 0.0
    %1115 = vmatprep.subr.mxu0 0.0
    %1116 = vmatpush1.xpose.msra.mxu0 0.0
    %1117 = vmatprep.subr.mxu0 0.0
    %1118 = vmatpush1.xpose.msra.mxu0 0.0
    %1119 = vmatprep.subr.mxu0 0.0
    %1120 = vmatpush1.xpose.msra.mxu0 0.0
    %1121 = vmatprep.subr.mxu0 0.0
    %1122 = vmatpush1.xpose.msra.mxu0 0.0
    %1123 = vmatprep.subr.mxu0 0.0
    %1124 = vmatpush1.xpose.msra.mxu0 0.0
    %1125 = vmatprep.subr.mxu0 0.0
    %1126 = vmatpush1.xpose.msra.mxu0 0.0
    %1127 = vmatprep.subr.mxu0 0.0
    %1128 = vmatpush1.xpose.msra.mxu0 0.0
    %1129 = vmatprep.subr.mxu0 0.0
    %1130 = vmatpush1.xpose.msra.mxu0 0.0
    %1131 = vmatprep.subr.mxu0 0.0
    %1132 = vmatpush1.xpose.msra.mxu0 0.0
    %1133 = vmatprep.subr.mxu0 0.0
    %1134 = vmatpush1.xpose.msra.mxu0 0.0
    %1135 = vmatprep.subr.mxu0 0.0
    %1136 = vmatpush1.xpose.msra.mxu0 0.0
    %1137 = vmatprep.subr.mxu0 0.0
    %1138 = vmatpush1.xpose.msra.mxu0 0.0
    %1139 = vmatprep.subr.mxu0 0.0
    %1140 = vmatpush1.xpose.msra.mxu0 0.0
    %1141 = vmatprep.subr.mxu0 0.0
    %1142 = vmatpush1.xpose.msra.mxu0 0.0
    %1143 = vmatprep.subr.mxu0 0.0
    %1144 = vmatpush1.xpose.msra.mxu0 0.0
    %1145 = vmatprep.subr.mxu0 0.0
    %1146 = vmatpush1.xpose.msra.mxu0 0.0
    %1147 = vmatprep.subr.mxu0 0.0
    %1148 = vmatpush1.xpose.msra.mxu0 0.0
    %1149 = vmatprep.subr.mxu0 0.0
    %1150 = vmatpush1.xpose.msra.mxu0 0.0
    %1151 = vmatprep.subr.mxu0 0.0
    %1152 = vmatpush1.xpose.msra.mxu0 0.0
    %1153 = vmatprep.subr.mxu0 0.0
    %1154 = vmatpush1.xpose.msra.mxu0 0.0
    %1155 = vmatprep.mubr.f32.mxu0 0.0
    %1156 = vmatmul.mubr.f32.gmra.mrb[0].mxu0 %v1083
    %v1157 = vpop.f32.mrb[0].mxu0
    %v1158 = vadd.f32 0.0, %v1157
    %v1159 = vpop.f32.mrb[0].mxu0
    %1160 = vmatprep.mubr.f32.mxu0 0.0
    %1161 = vmatmul.mubr.f32.gmra.mrb[0].mxu0 %v1085
    %v1162 = vpop.f32.mrb[0].mxu0
    %v1163 = vadd.f32 0.0, %v1162
    %v1164 = vpop.f32.mrb[0].mxu0
    %1165 = vdwg.mxu0
    %1166 = vrot.lane.b32.xlu0 %v539, 96
    %v1167 = vpop.permute.xlu0 %1166
    %1168 = vrot.lane.b32.xlu0 %v544, 96
    %v1169 = vpop.permute.xlu0 %1168
    %v1170 = vsel %vm821, %v585, 0
    %v1172 = vsel %vm821, %v586, 0
    %v1174 = vsel %vm821, %v1167, 0
    %v1176 = vsel %vm821, %v1169, 0
    %1178 = vmatprep.subr.mxu0 0.0
    %1179 = vmatpush1.xpose.msra.mxu0 %v1174
    %1180 = vmatprep.subr.mxu0 0.0
    %1181 = vmatpush1.xpose.msra.mxu0 %v1176
    %1182 = vmatprep.subr.mxu0 0.0
    %1183 = vmatpush1.xpose.msra.mxu0 0.0
    %1184 = vmatprep.subr.mxu0 0.0
    %1185 = vmatpush1.xpose.msra.mxu0 0.0
    %1186 = vmatprep.subr.mxu0 0.0
    %1187 = vmatpush1.xpose.msra.mxu0 0.0
    %1188 = vmatprep.subr.mxu0 0.0
    %1189 = vmatpush1.xpose.msra.mxu0 0.0
    %1190 = vmatprep.subr.mxu0 0.0
    %1191 = vmatpush1.xpose.msra.mxu0 0.0
    %1192 = vmatprep.subr.mxu0 0.0
    %1193 = vmatpush1.xpose.msra.mxu0 0.0
    %1194 = vmatprep.subr.mxu0 0.0
    %1195 = vmatpush1.xpose.msra.mxu0 0.0
    %1196 = vmatprep.subr.mxu0 0.0
    %1197 = vmatpush1.xpose.msra.mxu0 0.0
    %1198 = vmatprep.subr.mxu0 0.0
    %1199 = vmatpush1.xpose.msra.mxu0 0.0
    %1200 = vmatprep.subr.mxu0 0.0
    %1201 = vmatpush1.xpose.msra.mxu0 0.0
    %1202 = vmatprep.subr.mxu0 0.0
    %1203 = vmatpush1.xpose.msra.mxu0 0.0
    %1204 = vmatprep.subr.mxu0 0.0
    %1205 = vmatpush1.xpose.msra.mxu0 0.0
    %1206 = vmatprep.subr.mxu0 0.0
    %1207 = vmatpush1.xpose.msra.mxu0 0.0
    %1208 = vmatprep.subr.mxu0 0.0
    %1209 = vmatpush1.xpose.msra.mxu0 0.0
    %1210 = vmatprep.subr.mxu0 0.0
    %1211 = vmatpush1.xpose.msra.mxu0 0.0
    %1212 = vmatprep.subr.mxu0 0.0
    %1213 = vmatpush1.xpose.msra.mxu0 0.0
    %1214 = vmatprep.subr.mxu0 0.0
    %1215 = vmatpush1.xpose.msra.mxu0 0.0
    %1216 = vmatprep.subr.mxu0 0.0
    %1217 = vmatpush1.xpose.msra.mxu0 0.0
    %1218 = vmatprep.subr.mxu0 0.0
    %1219 = vmatpush1.xpose.msra.mxu0 0.0
    %1220 = vmatprep.subr.mxu0 0.0
    %1221 = vmatpush1.xpose.msra.mxu0 0.0
    %1222 = vmatprep.subr.mxu0 0.0
    %1223 = vmatpush1.xpose.msra.mxu0 0.0
    %1224 = vmatprep.subr.mxu0 0.0
    %1225 = vmatpush1.xpose.msra.mxu0 0.0
    %1226 = vmatprep.subr.mxu0 0.0
    %1227 = vmatpush1.xpose.msra.mxu0 0.0
    %1228 = vmatprep.subr.mxu0 0.0
    %1229 = vmatpush1.xpose.msra.mxu0 0.0
    %1230 = vmatprep.subr.mxu0 0.0
    %1231 = vmatpush1.xpose.msra.mxu0 0.0
    %1232 = vmatprep.subr.mxu0 0.0
    %1233 = vmatpush1.xpose.msra.mxu0 0.0
    %1234 = vmatprep.subr.mxu0 0.0
    %1235 = vmatpush1.xpose.msra.mxu0 0.0
    %1236 = vmatprep.subr.mxu0 0.0
    %1237 = vmatpush1.xpose.msra.mxu0 0.0
    %1238 = vmatprep.subr.mxu0 0.0
    %1239 = vmatpush1.xpose.msra.mxu0 0.0
    %1240 = vmatprep.subr.mxu0 0.0
    %1241 = vmatpush1.xpose.msra.mxu0 0.0
    %1242 = vmatprep.mubr.f32.mxu0 0.0
    %1243 = vmatmul.mubr.f32.gmra.mrb[0].mxu0 %v1170
    %v1244 = vpop.f32.mrb[0].mxu0
    %v1245 = vadd.f32 0.0, %v1244
    %v1246 = vpop.f32.mrb[0].mxu0
    %1247 = vmatprep.mubr.f32.mxu0 0.0
    %1248 = vmatmul.mubr.f32.gmra.mrb[0].mxu0 %v1172
    %v1249 = vpop.f32.mrb[0].mxu0
    %v1250 = vadd.f32 0.0, %v1249
    %v1251 = vpop.f32.mrb[0].mxu0
    %1252 = vdwg.mxu0
    %1253 = vrot.lane.b32.xlu0 %v549, 96
    %v1254 = vpop.permute.xlu0 %1253
    %1255 = vrot.lane.b32.xlu0 %v554, 96
    %v1256 = vpop.permute.xlu0 %1255
    %v1257 = vsel %vm821, %v587, 0
    %v1259 = vsel %vm821, %v588, 0
    %v1261 = vsel %vm821, %v1254, 0
    %v1263 = vsel %vm821, %v1256, 0
    %1265 = vmatprep.subr.mxu0 0.0
    %1266 = vmatpush1.xpose.msra.mxu0 %v1261
    %1267 = vmatprep.subr.mxu0 0.0
    %1268 = vmatpush1.xpose.msra.mxu0 %v1263
    %1269 = vmatprep.subr.mxu0 0.0
    %1270 = vmatpush1.xpose.msra.mxu0 0.0
    %1271 = vmatprep.subr.mxu0 0.0
    %1272 = vmatpush1.xpose.msra.mxu0 0.0
    %1273 = vmatprep.subr.mxu0 0.0
    %1274 = vmatpush1.xpose.msra.mxu0 0.0
    %1275 = vmatprep.subr.mxu0 0.0
    %1276 = vmatpush1.xpose.msra.mxu0 0.0
    %1277 = vmatprep.subr.mxu0 0.0
    %1278 = vmatpush1.xpose.msra.mxu0 0.0
    %1279 = vmatprep.subr.mxu0 0.0
    %1280 = vmatpush1.xpose.msra.mxu0 0.0
    %1281 = vmatprep.subr.mxu0 0.0
    %1282 = vmatpush1.xpose.msra.mxu0 0.0
    %1283 = vmatprep.subr.mxu0 0.0
    %1284 = vmatpush1.xpose.msra.mxu0 0.0
    %1285 = vmatprep.subr.mxu0 0.0
    %1286 = vmatpush1.xpose.msra.mxu0 0.0
    %1287 = vmatprep.subr.mxu0 0.0
    %1288 = vmatpush1.xpose.msra.mxu0 0.0
    %1289 = vmatprep.subr.mxu0 0.0
    %1290 = vmatpush1.xpose.msra.mxu0 0.0
    %1291 = vmatprep.subr.mxu0 0.0
    %1292 = vmatpush1.xpose.msra.mxu0 0.0
    %1293 = vmatprep.subr.mxu0 0.0
    %1294 = vmatpush1.xpose.msra.mxu0 0.0
    %1295 = vmatprep.subr.mxu0 0.0
    %1296 = vmatpush1.xpose.msra.mxu0 0.0
    %1297 = vmatprep.subr.mxu0 0.0
    %1298 = vmatpush1.xpose.msra.mxu0 0.0
    %1299 = vmatprep.subr.mxu0 0.0
    %1300 = vmatpush1.xpose.msra.mxu0 0.0
    %1301 = vmatprep.subr.mxu0 0.0
    %1302 = vmatpush1.xpose.msra.mxu0 0.0
    %1303 = vmatprep.subr.mxu0 0.0
    %1304 = vmatpush1.xpose.msra.mxu0 0.0
    %1305 = vmatprep.subr.mxu0 0.0
    %1306 = vmatpush1.xpose.msra.mxu0 0.0
    %1307 = vmatprep.subr.mxu0 0.0
    %1308 = vmatpush1.xpose.msra.mxu0 0.0
    %1309 = vmatprep.subr.mxu0 0.0
    %1310 = vmatpush1.xpose.msra.mxu0 0.0
    %1311 = vmatprep.subr.mxu0 0.0
    %1312 = vmatpush1.xpose.msra.mxu0 0.0
    %1313 = vmatprep.subr.mxu0 0.0
    %1314 = vmatpush1.xpose.msra.mxu0 0.0
    %1315 = vmatprep.subr.mxu0 0.0
    %1316 = vmatpush1.xpose.msra.mxu0 0.0
    %1317 = vmatprep.subr.mxu0 0.0
    %1318 = vmatpush1.xpose.msra.mxu0 0.0
    %1319 = vmatprep.subr.mxu0 0.0
    %1320 = vmatpush1.xpose.msra.mxu0 0.0
    %1321 = vmatprep.subr.mxu0 0.0
    %1322 = vmatpush1.xpose.msra.mxu0 0.0
    %1323 = vmatprep.subr.mxu0 0.0
    %1324 = vmatpush1.xpose.msra.mxu0 0.0
    %1325 = vmatprep.subr.mxu0 0.0
    %1326 = vmatpush1.xpose.msra.mxu0 0.0
    %1327 = vmatprep.subr.mxu0 0.0
    %1328 = vmatpush1.xpose.msra.mxu0 0.0
    %1329 = vmatprep.mubr.f32.mxu0 0.0
    %1330 = vmatmul.mubr.f32.gmra.mrb[0].mxu0 %v1257
    %v1331 = vpop.f32.mrb[0].mxu0
    %v1332 = vadd.f32 0.0, %v1331
    %v1333 = vpop.f32.mrb[0].mxu0
    %1334 = vmatprep.mubr.f32.mxu0 0.0
    %1335 = vmatmul.mubr.f32.gmra.mrb[0].mxu0 %v1259
    %v1336 = vpop.f32.mrb[0].mxu0
    %v1337 = vadd.f32 0.0, %v1336
    %v1338 = vpop.f32.mrb[0].mxu0
    %1339 = vdwg.mxu0
    %1340 = vrot.lane.b32.xlu0 %v559, 96
    %v1341 = vpop.permute.xlu0 %1340
    %1342 = vrot.lane.b32.xlu0 %v564, 96
    %v1343 = vpop.permute.xlu0 %1342
    %v1344 = vsel %vm821, %v589, 0
    %v1346 = vsel %vm821, %v590, 0
    %v1348 = vsel %vm821, %v1341, 0
    %v1350 = vsel %vm821, %v1343, 0
    %1352 = vmatprep.subr.mxu0 0.0
    %1353 = vmatpush1.xpose.msra.mxu0 %v1348
    %1354 = vmatprep.subr.mxu0 0.0
    %1355 = vmatpush1.xpose.msra.mxu0 %v1350
    %1356 = vmatprep.subr.mxu0 0.0
    %1357 = vmatpush1.xpose.msra.mxu0 0.0
    %1358 = vmatprep.subr.mxu0 0.0
    %1359 = vmatpush1.xpose.msra.mxu0 0.0
    %1360 = vmatprep.subr.mxu0 0.0
    %1361 = vmatpush1.xpose.msra.mxu0 0.0
    %1362 = vmatprep.subr.mxu0 0.0
    %1363 = vmatpush1.xpose.msra.mxu0 0.0
    %1364 = vmatprep.subr.mxu0 0.0
    %1365 = vmatpush1.xpose.msra.mxu0 0.0
    %1366 = vmatprep.subr.mxu0 0.0
    %1367 = vmatpush1.xpose.msra.mxu0 0.0
    %1368 = vmatprep.subr.mxu0 0.0
    %1369 = vmatpush1.xpose.msra.mxu0 0.0
    %1370 = vmatprep.subr.mxu0 0.0
    %1371 = vmatpush1.xpose.msra.mxu0 0.0
    %1372 = vmatprep.subr.mxu0 0.0
    %1373 = vmatpush1.xpose.msra.mxu0 0.0
    %1374 = vmatprep.subr.mxu0 0.0
    %1375 = vmatpush1.xpose.msra.mxu0 0.0
    %1376 = vmatprep.subr.mxu0 0.0
    %1377 = vmatpush1.xpose.msra.mxu0 0.0
    %1378 = vmatprep.subr.mxu0 0.0
    %1379 = vmatpush1.xpose.msra.mxu0 0.0
    %1380 = vmatprep.subr.mxu0 0.0
    %1381 = vmatpush1.xpose.msra.mxu0 0.0
    %1382 = vmatprep.subr.mxu0 0.0
    %1383 = vmatpush1.xpose.msra.mxu0 0.0
    %1384 = vmatprep.subr.mxu0 0.0
    %1385 = vmatpush1.xpose.msra.mxu0 0.0
    %1386 = vmatprep.subr.mxu0 0.0
    %1387 = vmatpush1.xpose.msra.mxu0 0.0
    %1388 = vmatprep.subr.mxu0 0.0
    %1389 = vmatpush1.xpose.msra.mxu0 0.0
    %1390 = vmatprep.subr.mxu0 0.0
    %1391 = vmatpush1.xpose.msra.mxu0 0.0
    %1392 = vmatprep.subr.mxu0 0.0
    %1393 = vmatpush1.xpose.msra.mxu0 0.0
    %1394 = vmatprep.subr.mxu0 0.0
    %1395 = vmatpush1.xpose.msra.mxu0 0.0
    %1396 = vmatprep.subr.mxu0 0.0
    %1397 = vmatpush1.xpose.msra.mxu0 0.0
    %1398 = vmatprep.subr.mxu0 0.0
    %1399 = vmatpush1.xpose.msra.mxu0 0.0
    %1400 = vmatprep.subr.mxu0 0.0
    %1401 = vmatpush1.xpose.msra.mxu0 0.0
    %1402 = vmatprep.subr.mxu0 0.0
    %1403 = vmatpush1.xpose.msra.mxu0 0.0
    %1404 = vmatprep.subr.mxu0 0.0
    %1405 = vmatpush1.xpose.msra.mxu0 0.0
    %1406 = vmatprep.subr.mxu0 0.0
    %1407 = vmatpush1.xpose.msra.mxu0 0.0
    %1408 = vmatprep.subr.mxu0 0.0
    %1409 = vmatpush1.xpose.msra.mxu0 0.0
    %1410 = vmatprep.subr.mxu0 0.0
    %1411 = vmatpush1.xpose.msra.mxu0 0.0
    %1412 = vmatprep.subr.mxu0 0.0
    %1413 = vmatpush1.xpose.msra.mxu0 0.0
    %1414 = vmatprep.subr.mxu0 0.0
    %1415 = vmatpush1.xpose.msra.mxu0 0.0
    %1416 = vmatprep.mubr.f32.mxu0 0.0
    %1417 = vmatmul.mubr.f32.gmra.mrb[0].mxu0 %v1344
    %v1418 = vpop.f32.mrb[0].mxu0
    %v1419 = vadd.f32 0.0, %v1418
    %v1420 = vpop.f32.mrb[0].mxu0
    %1421 = vmatprep.mubr.f32.mxu0 0.0
    %1422 = vmatmul.mubr.f32.gmra.mrb[0].mxu0 %v1346
    %v1423 = vpop.f32.mrb[0].mxu0
    %v1424 = vadd.f32 0.0, %v1423
    %v1425 = vpop.f32.mrb[0].mxu0
    %1426 = vdwg.mxu0
    %1427 = vrot.lane.b32.xlu0 %v569, 96
    %v1428 = vpop.permute.xlu0 %1427
    %1429 = vrot.lane.b32.xlu0 %v574, 96
    %v1430 = vpop.permute.xlu0 %1429
    %v1431 = vsel %vm821, %v591, 0
    %v1433 = vsel %vm821, %v592, 0
    %v1435 = vsel %vm821, %v1428, 0
    %v1437 = vsel %vm821, %v1430, 0
    %1439 = vmatprep.subr.mxu0 0.0
    %1440 = vmatpush1.xpose.msra.mxu0 %v1435
    %1441 = vmatprep.subr.mxu0 0.0
    %1442 = vmatpush1.xpose.msra.mxu0 %v1437
    %1443 = vmatprep.subr.mxu0 0.0
    %1444 = vmatpush1.xpose.msra.mxu0 0.0
    %1445 = vmatprep.subr.mxu0 0.0
    %1446 = vmatpush1.xpose.msra.mxu0 0.0
    %1447 = vmatprep.subr.mxu0 0.0
    %1448 = vmatpush1.xpose.msra.mxu0 0.0
    %1449 = vmatprep.subr.mxu0 0.0
    %1450 = vmatpush1.xpose.msra.mxu0 0.0
    %1451 = vmatprep.subr.mxu0 0.0
    %1452 = vmatpush1.xpose.msra.mxu0 0.0
    %1453 = vmatprep.subr.mxu0 0.0
    %1454 = vmatpush1.xpose.msra.mxu0 0.0
    %1455 = vmatprep.subr.mxu0 0.0
    %1456 = vmatpush1.xpose.msra.mxu0 0.0
    %1457 = vmatprep.subr.mxu0 0.0
    %1458 = vmatpush1.xpose.msra.mxu0 0.0
    %1459 = vmatprep.subr.mxu0 0.0
    %1460 = vmatpush1.xpose.msra.mxu0 0.0
    %1461 = vmatprep.subr.mxu0 0.0
    %1462 = vmatpush1.xpose.msra.mxu0 0.0
    %1463 = vmatprep.subr.mxu0 0.0
    %1464 = vmatpush1.xpose.msra.mxu0 0.0
    %1465 = vmatprep.subr.mxu0 0.0
    %1466 = vmatpush1.xpose.msra.mxu0 0.0
    %1467 = vmatprep.subr.mxu0 0.0
    %1468 = vmatpush1.xpose.msra.mxu0 0.0
    %1469 = vmatprep.subr.mxu0 0.0
    %1470 = vmatpush1.xpose.msra.mxu0 0.0
    %1471 = vmatprep.subr.mxu0 0.0
    %1472 = vmatpush1.xpose.msra.mxu0 0.0
    %1473 = vmatprep.subr.mxu0 0.0
    %1474 = vmatpush1.xpose.msra.mxu0 0.0
    %1475 = vmatprep.subr.mxu0 0.0
    %1476 = vmatpush1.xpose.msra.mxu0 0.0
    %1477 = vmatprep.subr.mxu0 0.0
    %1478 = vmatpush1.xpose.msra.mxu0 0.0
    %1479 = vmatprep.subr.mxu0 0.0
    %1480 = vmatpush1.xpose.msra.mxu0 0.0
    %1481 = vmatprep.subr.mxu0 0.0
    %1482 = vmatpush1.xpose.msra.mxu0 0.0
    %1483 = vmatprep.subr.mxu0 0.0
    %1484 = vmatpush1.xpose.msra.mxu0 0.0
    %1485 = vmatprep.subr.mxu0 0.0
    %1486 = vmatpush1.xpose.msra.mxu0 0.0
    %1487 = vmatprep.subr.mxu0 0.0
    %1488 = vmatpush1.xpose.msra.mxu0 0.0
    %1489 = vmatprep.subr.mxu0 0.0
    %1490 = vmatpush1.xpose.msra.mxu0 0.0
    %1491 = vmatprep.subr.mxu0 0.0
    %1492 = vmatpush1.xpose.msra.mxu0 0.0
    %1493 = vmatprep.subr.mxu0 0.0
    %1494 = vmatpush1.xpose.msra.mxu0 0.0
    %1495 = vmatprep.subr.mxu0 0.0
    %1496 = vmatpush1.xpose.msra.mxu0 0.0
    %1497 = vmatprep.subr.mxu0 0.0
    %1498 = vmatpush1.xpose.msra.mxu0 0.0
    %1499 = vmatprep.subr.mxu0 0.0
    %1500 = vmatpush1.xpose.msra.mxu0 0.0
    %1501 = vmatprep.subr.mxu0 0.0
    %1502 = vmatpush1.xpose.msra.mxu0 0.0
    %1503 = vmatprep.mubr.f32.mxu0 0.0
    %1504 = vmatmul.mubr.f32.gmra.mrb[0].mxu0 %v1431
    %v1505 = vpop.f32.mrb[0].mxu0
    %v1506 = vadd.f32 0.0, %v1505
    %v1507 = vpop.f32.mrb[0].mxu0
    %1508 = vmatprep.mubr.f32.mxu0 0.0
    %1509 = vmatmul.mubr.f32.gmra.mrb[0].mxu0 %v1433
    %v1510 = vpop.f32.mrb[0].mxu0
    %v1511 = vadd.f32 0.0, %v1510
    %v1512 = vpop.f32.mrb[0].mxu0
    %1513 = vdwg.mxu0
    %1514 = vrot.lane.b32.xlu0 %v722, 96
    %v1515 = vpop.permute.xlu0 %1514
    %1516 = vrot.lane.b32.xlu0 %v724, 96
    %v1517 = vpop.permute.xlu0 %1516
    %v1518 = vsel %vm821, %v610, 0
    %v1520 = vsel %vm821, %v612, 0
    %v1522 = vsel %vm821, %v1515, 0
    %v1524 = vsel %vm821, %v1517, 0
    %1526 = vmatprep.subr.mxu0 0.0
    %1527 = vmatpush1.xpose.msra.mxu0 %v1522
    %1528 = vmatprep.subr.mxu0 0.0
    %1529 = vmatpush1.xpose.msra.mxu0 %v1524
    %1530 = vmatprep.subr.mxu0 0.0
    %1531 = vmatpush1.xpose.msra.mxu0 0.0
    %1532 = vmatprep.subr.mxu0 0.0
    %1533 = vmatpush1.xpose.msra.mxu0 0.0
    %1534 = vmatprep.subr.mxu0 0.0
    %1535 = vmatpush1.xpose.msra.mxu0 0.0
    %1536 = vmatprep.subr.mxu0 0.0
    %1537 = vmatpush1.xpose.msra.mxu0 0.0
    %1538 = vmatprep.subr.mxu0 0.0
    %1539 = vmatpush1.xpose.msra.mxu0 0.0
    %1540 = vmatprep.subr.mxu0 0.0
    %1541 = vmatpush1.xpose.msra.mxu0 0.0
    %1542 = vmatprep.subr.mxu0 0.0
    %1543 = vmatpush1.xpose.msra.mxu0 0.0
    %1544 = vmatprep.subr.mxu0 0.0
    %1545 = vmatpush1.xpose.msra.mxu0 0.0
    %1546 = vmatprep.subr.mxu0 0.0
    %1547 = vmatpush1.xpose.msra.mxu0 0.0
    %1548 = vmatprep.subr.mxu0 0.0
    %1549 = vmatpush1.xpose.msra.mxu0 0.0
    %1550 = vmatprep.subr.mxu0 0.0
    %1551 = vmatpush1.xpose.msra.mxu0 0.0
    %1552 = vmatprep.subr.mxu0 0.0
    %1553 = vmatpush1.xpose.msra.mxu0 0.0
    %1554 = vmatprep.subr.mxu0 0.0
    %1555 = vmatpush1.xpose.msra.mxu0 0.0
    %1556 = vmatprep.subr.mxu0 0.0
    %1557 = vmatpush1.xpose.msra.mxu0 0.0
    %1558 = vmatprep.subr.mxu0 0.0
    %1559 = vmatpush1.xpose.msra.mxu0 0.0
    %1560 = vmatprep.subr.mxu0 0.0
    %1561 = vmatpush1.xpose.msra.mxu0 0.0
    %1562 = vmatprep.subr.mxu0 0.0
    %1563 = vmatpush1.xpose.msra.mxu0 0.0
    %1564 = vmatprep.subr.mxu0 0.0
    %1565 = vmatpush1.xpose.msra.mxu0 0.0
    %1566 = vmatprep.subr.mxu0 0.0
    %1567 = vmatpush1.xpose.msra.mxu0 0.0
    %1568 = vmatprep.subr.mxu0 0.0
    %1569 = vmatpush1.xpose.msra.mxu0 0.0
    %1570 = vmatprep.subr.mxu0 0.0
    %1571 = vmatpush1.xpose.msra.mxu0 0.0
    %1572 = vmatprep.subr.mxu0 0.0
    %1573 = vmatpush1.xpose.msra.mxu0 0.0
    %1574 = vmatprep.subr.mxu0 0.0
    %1575 = vmatpush1.xpose.msra.mxu0 0.0
    %1576 = vmatprep.subr.mxu0 0.0
    %1577 = vmatpush1.xpose.msra.mxu0 0.0
    %1578 = vmatprep.subr.mxu0 0.0
    %1579 = vmatpush1.xpose.msra.mxu0 0.0
    %1580 = vmatprep.subr.mxu0 0.0
    %1581 = vmatpush1.xpose.msra.mxu0 0.0
    %1582 = vmatprep.subr.mxu0 0.0
    %1583 = vmatpush1.xpose.msra.mxu0 0.0
    %1584 = vmatprep.subr.mxu0 0.0
    %1585 = vmatpush1.xpose.msra.mxu0 0.0
    %1586 = vmatprep.subr.mxu0 0.0
    %1587 = vmatpush1.xpose.msra.mxu0 0.0
    %1588 = vmatprep.subr.mxu0 0.0
    %1589 = vmatpush1.xpose.msra.mxu0 0.0
    %1590 = vmatprep.mubr.f32.mxu0 0.0
    %1591 = vmatmul.mubr.f32.gmra.mrb[0].mxu0 %v1518
    %v1592 = vpop.f32.mrb[0].mxu0
    %v1593 = vadd.f32 0.0, %v1592
    %v1594 = vpop.f32.mrb[0].mxu0
    %1595 = vmatprep.mubr.f32.mxu0 0.0
    %1596 = vmatmul.mubr.f32.gmra.mrb[0].mxu0 %v1520
    %v1597 = vpop.f32.mrb[0].mxu0
    %v1598 = vadd.f32 0.0, %v1597
    %v1599 = vpop.f32.mrb[0].mxu0
    %1600 = vdwg.mxu0
    %1601 = vrot.lane.b32.xlu0 %v726, 96
    %v1602 = vpop.permute.xlu0 %1601
    %1603 = vrot.lane.b32.xlu0 %v728, 96
    %v1604 = vpop.permute.xlu0 %1603
    %v1605 = vsel %vm821, %v614, 0
    %v1607 = vsel %vm821, %v616, 0
    %v1609 = vsel %vm821, %v1602, 0
    %v1611 = vsel %vm821, %v1604, 0
    %1613 = vmatprep.subr.mxu0 0.0
    %1614 = vmatpush1.xpose.msra.mxu0 %v1609
    %1615 = vmatprep.subr.mxu0 0.0
    %1616 = vmatpush1.xpose.msra.mxu0 %v1611
    %1617 = vmatprep.subr.mxu0 0.0
    %1618 = vmatpush1.xpose.msra.mxu0 0.0
    %1619 = vmatprep.subr.mxu0 0.0
    %1620 = vmatpush1.xpose.msra.mxu0 0.0
    %1621 = vmatprep.subr.mxu0 0.0
    %1622 = vmatpush1.xpose.msra.mxu0 0.0
    %1623 = vmatprep.subr.mxu0 0.0
    %1624 = vmatpush1.xpose.msra.mxu0 0.0
    %1625 = vmatprep.subr.mxu0 0.0
    %1626 = vmatpush1.xpose.msra.mxu0 0.0
    %1627 = vmatprep.subr.mxu0 0.0
    %1628 = vmatpush1.xpose.msra.mxu0 0.0
    %1629 = vmatprep.subr.mxu0 0.0
    %1630 = vmatpush1.xpose.msra.mxu0 0.0
    %1631 = vmatprep.subr.mxu0 0.0
    %1632 = vmatpush1.xpose.msra.mxu0 0.0
    %1633 = vmatprep.subr.mxu0 0.0
    %1634 = vmatpush1.xpose.msra.mxu0 0.0
    %1635 = vmatprep.subr.mxu0 0.0
    %1636 = vmatpush1.xpose.msra.mxu0 0.0
    %1637 = vmatprep.subr.mxu0 0.0
    %1638 = vmatpush1.xpose.msra.mxu0 0.0
    %1639 = vmatprep.subr.mxu0 0.0
    %1640 = vmatpush1.xpose.msra.mxu0 0.0
    %1641 = vmatprep.subr.mxu0 0.0
    %1642 = vmatpush1.xpose.msra.mxu0 0.0
    %1643 = vmatprep.subr.mxu0 0.0
    %1644 = vmatpush1.xpose.msra.mxu0 0.0
    %1645 = vmatprep.subr.mxu0 0.0
    %1646 = vmatpush1.xpose.msra.mxu0 0.0
    %1647 = vmatprep.subr.mxu0 0.0
    %1648 = vmatpush1.xpose.msra.mxu0 0.0
    %1649 = vmatprep.subr.mxu0 0.0
    %1650 = vmatpush1.xpose.msra.mxu0 0.0
    %1651 = vmatprep.subr.mxu0 0.0
    %1652 = vmatpush1.xpose.msra.mxu0 0.0
    %1653 = vmatprep.subr.mxu0 0.0
    %1654 = vmatpush1.xpose.msra.mxu0 0.0
    %1655 = vmatprep.subr.mxu0 0.0
    %1656 = vmatpush1.xpose.msra.mxu0 0.0
    %1657 = vmatprep.subr.mxu0 0.0
    %1658 = vmatpush1.xpose.msra.mxu0 0.0
    %1659 = vmatprep.subr.mxu0 0.0
    %1660 = vmatpush1.xpose.msra.mxu0 0.0
    %1661 = vmatprep.subr.mxu0 0.0
    %1662 = vmatpush1.xpose.msra.mxu0 0.0
    %1663 = vmatprep.subr.mxu0 0.0
    %1664 = vmatpush1.xpose.msra.mxu0 0.0
    %1665 = vmatprep.subr.mxu0 0.0
    %1666 = vmatpush1.xpose.msra.mxu0 0.0
    %1667 = vmatprep.subr.mxu0 0.0
    %1668 = vmatpush1.xpose.msra.mxu0 0.0
    %1669 = vmatprep.subr.mxu0 0.0
    %1670 = vmatpush1.xpose.msra.mxu0 0.0
    %1671 = vmatprep.subr.mxu0 0.0
    %1672 = vmatpush1.xpose.msra.mxu0 0.0
    %1673 = vmatprep.subr.mxu0 0.0
    %1674 = vmatpush1.xpose.msra.mxu0 0.0
    %1675 = vmatprep.subr.mxu0 0.0
    %1676 = vmatpush1.xpose.msra.mxu0 0.0
    %1677 = vmatprep.mubr.f32.mxu0 0.0
    %1678 = vmatmul.mubr.f32.gmra.mrb[0].mxu0 %v1605
    %v1679 = vpop.f32.mrb[0].mxu0
    %v1680 = vadd.f32 0.0, %v1679
    %v1681 = vpop.f32.mrb[0].mxu0
    %1682 = vmatprep.mubr.f32.mxu0 0.0
    %1683 = vmatmul.mubr.f32.gmra.mrb[0].mxu0 %v1607
    %v1684 = vpop.f32.mrb[0].mxu0
    %v1685 = vadd.f32 0.0, %v1684
    %v1686 = vpop.f32.mrb[0].mxu0
    %1687 = vdwg.mxu0
    %1688 = vrot.lane.b32.xlu0 %v730, 96
    %v1689 = vpop.permute.xlu0 %1688
    %1690 = vrot.lane.b32.xlu0 %v732, 96
    %v1691 = vpop.permute.xlu0 %1690
    %v1692 = vsel %vm821, %v618, 0
    %v1694 = vsel %vm821, %v620, 0
    %v1696 = vsel %vm821, %v1689, 0
    %v1698 = vsel %vm821, %v1691, 0
    %1700 = vmatprep.subr.mxu0 0.0
    %1701 = vmatpush1.xpose.msra.mxu0 %v1696
    %1702 = vmatprep.subr.mxu0 0.0
    %1703 = vmatpush1.xpose.msra.mxu0 %v1698
    %1704 = vmatprep.subr.mxu0 0.0
    %1705 = vmatpush1.xpose.msra.mxu0 0.0
    %1706 = vmatprep.subr.mxu0 0.0
    %1707 = vmatpush1.xpose.msra.mxu0 0.0
    %1708 = vmatprep.subr.mxu0 0.0
    %1709 = vmatpush1.xpose.msra.mxu0 0.0
    %1710 = vmatprep.subr.mxu0 0.0
    %1711 = vmatpush1.xpose.msra.mxu0 0.0
    %1712 = vmatprep.subr.mxu0 0.0
    %1713 = vmatpush1.xpose.msra.mxu0 0.0
    %1714 = vmatprep.subr.mxu0 0.0
    %1715 = vmatpush1.xpose.msra.mxu0 0.0
    %1716 = vmatprep.subr.mxu0 0.0
    %1717 = vmatpush1.xpose.msra.mxu0 0.0
    %1718 = vmatprep.subr.mxu0 0.0
    %1719 = vmatpush1.xpose.msra.mxu0 0.0
    %1720 = vmatprep.subr.mxu0 0.0
    %1721 = vmatpush1.xpose.msra.mxu0 0.0
    %1722 = vmatprep.subr.mxu0 0.0
    %1723 = vmatpush1.xpose.msra.mxu0 0.0
    %1724 = vmatprep.subr.mxu0 0.0
    %1725 = vmatpush1.xpose.msra.mxu0 0.0
    %1726 = vmatprep.subr.mxu0 0.0
    %1727 = vmatpush1.xpose.msra.mxu0 0.0
    %1728 = vmatprep.subr.mxu0 0.0
    %1729 = vmatpush1.xpose.msra.mxu0 0.0
    %1730 = vmatprep.subr.mxu0 0.0
    %1731 = vmatpush1.xpose.msra.mxu0 0.0
    %1732 = vmatprep.subr.mxu0 0.0
    %1733 = vmatpush1.xpose.msra.mxu0 0.0
    %1734 = vmatprep.subr.mxu0 0.0
    %1735 = vmatpush1.xpose.msra.mxu0 0.0
    %1736 = vmatprep.subr.mxu0 0.0
    %1737 = vmatpush1.xpose.msra.mxu0 0.0
    %1738 = vmatprep.subr.mxu0 0.0
    %1739 = vmatpush1.xpose.msra.mxu0 0.0
    %1740 = vmatprep.subr.mxu0 0.0
    %1741 = vmatpush1.xpose.msra.mxu0 0.0
    %1742 = vmatprep.subr.mxu0 0.0
    %1743 = vmatpush1.xpose.msra.mxu0 0.0
    %1744 = vmatprep.subr.mxu0 0.0
    %1745 = vmatpush1.xpose.msra.mxu0 0.0
    %1746 = vmatprep.subr.mxu0 0.0
    %1747 = vmatpush1.xpose.msra.mxu0 0.0
    %1748 = vmatprep.subr.mxu0 0.0
    %1749 = vmatpush1.xpose.msra.mxu0 0.0
    %1750 = vmatprep.subr.mxu0 0.0
    %1751 = vmatpush1.xpose.msra.mxu0 0.0
    %1752 = vmatprep.subr.mxu0 0.0
    %1753 = vmatpush1.xpose.msra.mxu0 0.0
    %1754 = vmatprep.subr.mxu0 0.0
    %1755 = vmatpush1.xpose.msra.mxu0 0.0
    %1756 = vmatprep.subr.mxu0 0.0
    %1757 = vmatpush1.xpose.msra.mxu0 0.0
    %1758 = vmatprep.subr.mxu0 0.0
    %1759 = vmatpush1.xpose.msra.mxu0 0.0
    %1760 = vmatprep.subr.mxu0 0.0
    %1761 = vmatpush1.xpose.msra.mxu0 0.0
    %1762 = vmatprep.subr.mxu0 0.0
    %1763 = vmatpush1.xpose.msra.mxu0 0.0
    %1764 = vmatprep.mubr.f32.mxu0 0.0
    %1765 = vmatmul.mubr.f32.gmra.mrb[0].mxu0 %v1692
    %v1766 = vpop.f32.mrb[0].mxu0
    %v1767 = vadd.f32 0.0, %v1766
    %v1768 = vpop.f32.mrb[0].mxu0
    %1769 = vmatprep.mubr.f32.mxu0 0.0
    %1770 = vmatmul.mubr.f32.gmra.mrb[0].mxu0 %v1694
    %v1771 = vpop.f32.mrb[0].mxu0
    %v1772 = vadd.f32 0.0, %v1771
    %v1773 = vpop.f32.mrb[0].mxu0
    %1774 = vdwg.mxu0
    %1775 = vrot.lane.b32.xlu0 %v734, 96
    %v1776 = vpop.permute.xlu0 %1775
    %1777 = vrot.lane.b32.xlu0 %v736, 96
    %v1778 = vpop.permute.xlu0 %1777
    %v1779 = vsel %vm821, %v622, 0
    %v1781 = vsel %vm821, %v624, 0
    %v1783 = vsel %vm821, %v1776, 0
    %v1785 = vsel %vm821, %v1778, 0
    %1787 = vmatprep.subr.mxu0 0.0
    %1788 = vmatpush1.xpose.msra.mxu0 %v1783
    %1789 = vmatprep.subr.mxu0 0.0
    %1790 = vmatpush1.xpose.msra.mxu0 %v1785
    %1791 = vmatprep.subr.mxu0 0.0
    %1792 = vmatpush1.xpose.msra.mxu0 0.0
    %1793 = vmatprep.subr.mxu0 0.0
    %1794 = vmatpush1.xpose.msra.mxu0 0.0
    %1795 = vmatprep.subr.mxu0 0.0
    %1796 = vmatpush1.xpose.msra.mxu0 0.0
    %1797 = vmatprep.subr.mxu0 0.0
    %1798 = vmatpush1.xpose.msra.mxu0 0.0
    %1799 = vmatprep.subr.mxu0 0.0
    %1800 = vmatpush1.xpose.msra.mxu0 0.0
    %1801 = vmatprep.subr.mxu0 0.0
    %1802 = vmatpush1.xpose.msra.mxu0 0.0
    %1803 = vmatprep.subr.mxu0 0.0
    %1804 = vmatpush1.xpose.msra.mxu0 0.0
    %1805 = vmatprep.subr.mxu0 0.0
    %1806 = vmatpush1.xpose.msra.mxu0 0.0
    %1807 = vmatprep.subr.mxu0 0.0
    %1808 = vmatpush1.xpose.msra.mxu0 0.0
    %1809 = vmatprep.subr.mxu0 0.0
    %1810 = vmatpush1.xpose.msra.mxu0 0.0
    %1811 = vmatprep.subr.mxu0 0.0
    %1812 = vmatpush1.xpose.msra.mxu0 0.0
    %1813 = vmatprep.subr.mxu0 0.0
    %1814 = vmatpush1.xpose.msra.mxu0 0.0
    %1815 = vmatprep.subr.mxu0 0.0
    %1816 = vmatpush1.xpose.msra.mxu0 0.0
    %1817 = vmatprep.subr.mxu0 0.0
    %1818 = vmatpush1.xpose.msra.mxu0 0.0
    %1819 = vmatprep.subr.mxu0 0.0
    %1820 = vmatpush1.xpose.msra.mxu0 0.0
    %1821 = vmatprep.subr.mxu0 0.0
    %1822 = vmatpush1.xpose.msra.mxu0 0.0
    %1823 = vmatprep.subr.mxu0 0.0
    %1824 = vmatpush1.xpose.msra.mxu0 0.0
    %1825 = vmatprep.subr.mxu0 0.0
    %1826 = vmatpush1.xpose.msra.mxu0 0.0
    %1827 = vmatprep.subr.mxu0 0.0
    %1828 = vmatpush1.xpose.msra.mxu0 0.0
    %1829 = vmatprep.subr.mxu0 0.0
    %1830 = vmatpush1.xpose.msra.mxu0 0.0
    %1831 = vmatprep.subr.mxu0 0.0
    %1832 = vmatpush1.xpose.msra.mxu0 0.0
    %1833 = vmatprep.subr.mxu0 0.0
    %1834 = vmatpush1.xpose.msra.mxu0 0.0
    %1835 = vmatprep.subr.mxu0 0.0
    %1836 = vmatpush1.xpose.msra.mxu0 0.0
    %1837 = vmatprep.subr.mxu0 0.0
    %1838 = vmatpush1.xpose.msra.mxu0 0.0
    %1839 = vmatprep.subr.mxu0 0.0
    %1840 = vmatpush1.xpose.msra.mxu0 0.0
    %1841 = vmatprep.subr.mxu0 0.0
    %1842 = vmatpush1.xpose.msra.mxu0 0.0
    %1843 = vmatprep.subr.mxu0 0.0
    %1844 = vmatpush1.xpose.msra.mxu0 0.0
    %1845 = vmatprep.subr.mxu0 0.0
    %1846 = vmatpush1.xpose.msra.mxu0 0.0
    %1847 = vmatprep.subr.mxu0 0.0
    %1848 = vmatpush1.xpose.msra.mxu0 0.0
    %1849 = vmatprep.subr.mxu0 0.0
    %1850 = vmatpush1.xpose.msra.mxu0 0.0
    %1851 = vmatprep.mubr.f32.mxu0 0.0
    %1852 = vmatmul.mubr.f32.gmra.mrb[0].mxu0 %v1779
    %v1853 = vpop.f32.mrb[0].mxu0
    %v1854 = vadd.f32 0.0, %v1853
    %v1855 = vpop.f32.mrb[0].mxu0
    %1856 = vmatprep.mubr.f32.mxu0 0.0
    %1857 = vmatmul.mubr.f32.gmra.mrb[0].mxu0 %v1781
    %v1858 = vpop.f32.mrb[0].mxu0
    %v1859 = vadd.f32 0.0, %v1858
    %v1860 = vpop.f32.mrb[0].mxu0
    %1861 = vdwg.mxu0
    %1862 = vrot.lane.b32.xlu0 %v738, 96
    %v1863 = vpop.permute.xlu0 %1862
    %1864 = vrot.lane.b32.xlu0 %v740, 96
    %v1865 = vpop.permute.xlu0 %1864
    %v1866 = vsel %vm821, %v626, 0
    %v1868 = vsel %vm821, %v628, 0
    %v1870 = vsel %vm821, %v1863, 0
    %v1872 = vsel %vm821, %v1865, 0
    %1874 = vmatprep.subr.mxu0 0.0
    %1875 = vmatpush1.xpose.msra.mxu0 %v1870
    %1876 = vmatprep.subr.mxu0 0.0
    %1877 = vmatpush1.xpose.msra.mxu0 %v1872
    %1878 = vmatprep.subr.mxu0 0.0
    %1879 = vmatpush1.xpose.msra.mxu0 0.0
    %1880 = vmatprep.subr.mxu0 0.0
    %1881 = vmatpush1.xpose.msra.mxu0 0.0
    %1882 = vmatprep.subr.mxu0 0.0
    %1883 = vmatpush1.xpose.msra.mxu0 0.0
    %1884 = vmatprep.subr.mxu0 0.0
    %1885 = vmatpush1.xpose.msra.mxu0 0.0
    %1886 = vmatprep.subr.mxu0 0.0
    %1887 = vmatpush1.xpose.msra.mxu0 0.0
    %1888 = vmatprep.subr.mxu0 0.0
    %1889 = vmatpush1.xpose.msra.mxu0 0.0
    %1890 = vmatprep.subr.mxu0 0.0
    %1891 = vmatpush1.xpose.msra.mxu0 0.0
    %1892 = vmatprep.subr.mxu0 0.0
    %1893 = vmatpush1.xpose.msra.mxu0 0.0
    %1894 = vmatprep.subr.mxu0 0.0
    %1895 = vmatpush1.xpose.msra.mxu0 0.0
    %1896 = vmatprep.subr.mxu0 0.0
    %1897 = vmatpush1.xpose.msra.mxu0 0.0
    %1898 = vmatprep.subr.mxu0 0.0
    %1899 = vmatpush1.xpose.msra.mxu0 0.0
    %1900 = vmatprep.subr.mxu0 0.0
    %1901 = vmatpush1.xpose.msra.mxu0 0.0
    %1902 = vmatprep.subr.mxu0 0.0
    %1903 = vmatpush1.xpose.msra.mxu0 0.0
    %1904 = vmatprep.subr.mxu0 0.0
    %1905 = vmatpush1.xpose.msra.mxu0 0.0
    %1906 = vmatprep.subr.mxu0 0.0
    %1907 = vmatpush1.xpose.msra.mxu0 0.0
    %1908 = vmatprep.subr.mxu0 0.0
    %1909 = vmatpush1.xpose.msra.mxu0 0.0
    %1910 = vmatprep.subr.mxu0 0.0
    %1911 = vmatpush1.xpose.msra.mxu0 0.0
    %1912 = vmatprep.subr.mxu0 0.0
    %1913 = vmatpush1.xpose.msra.mxu0 0.0
    %1914 = vmatprep.subr.mxu0 0.0
    %1915 = vmatpush1.xpose.msra.mxu0 0.0
    %1916 = vmatprep.subr.mxu0 0.0
    %1917 = vmatpush1.xpose.msra.mxu0 0.0
    %1918 = vmatprep.subr.mxu0 0.0
    %1919 = vmatpush1.xpose.msra.mxu0 0.0
    %1920 = vmatprep.subr.mxu0 0.0
    %1921 = vmatpush1.xpose.msra.mxu0 0.0
    %1922 = vmatprep.subr.mxu0 0.0
    %1923 = vmatpush1.xpose.msra.mxu0 0.0
    %1924 = vmatprep.subr.mxu0 0.0
    %1925 = vmatpush1.xpose.msra.mxu0 0.0
    %1926 = vmatprep.subr.mxu0 0.0
    %1927 = vmatpush1.xpose.msra.mxu0 0.0
    %1928 = vmatprep.subr.mxu0 0.0
    %1929 = vmatpush1.xpose.msra.mxu0 0.0
    %1930 = vmatprep.subr.mxu0 0.0
    %1931 = vmatpush1.xpose.msra.mxu0 0.0
    %1932 = vmatprep.subr.mxu0 0.0
    %1933 = vmatpush1.xpose.msra.mxu0 0.0
    %1934 = vmatprep.subr.mxu0 0.0
    %1935 = vmatpush1.xpose.msra.mxu0 0.0
    %1936 = vmatprep.subr.mxu0 0.0
    %1937 = vmatpush1.xpose.msra.mxu0 0.0
    %1938 = vmatprep.mubr.f32.mxu0 0.0
    %1939 = vmatmul.mubr.f32.gmra.mrb[0].mxu0 %v1866
    %v1940 = vpop.f32.mrb[0].mxu0
    %v1941 = vadd.f32 0.0, %v1940
    %v1942 = vpop.f32.mrb[0].mxu0
    %1943 = vmatprep.mubr.f32.mxu0 0.0
    %1944 = vmatmul.mubr.f32.gmra.mrb[0].mxu0 %v1868
    %v1945 = vpop.f32.mrb[0].mxu0
    %v1946 = vadd.f32 0.0, %v1945
    %v1947 = vpop.f32.mrb[0].mxu0
    %1948 = vdwg.mxu0
    %1949 = vrot.lane.b32.xlu0 %v742, 96
    %v1950 = vpop.permute.xlu0 %1949
    %1951 = vrot.lane.b32.xlu0 %v744, 96
    %v1952 = vpop.permute.xlu0 %1951
    %v1953 = vsel %vm821, %v630, 0
    %v1955 = vsel %vm821, %v632, 0
    %v1957 = vsel %vm821, %v1950, 0
    %v1959 = vsel %vm821, %v1952, 0
    %1961 = vmatprep.subr.mxu0 0.0
    %1962 = vmatpush1.xpose.msra.mxu0 %v1957
    %1963 = vmatprep.subr.mxu0 0.0
    %1964 = vmatpush1.xpose.msra.mxu0 %v1959
    %1965 = vmatprep.subr.mxu0 0.0
    %1966 = vmatpush1.xpose.msra.mxu0 0.0
    %1967 = vmatprep.subr.mxu0 0.0
    %1968 = vmatpush1.xpose.msra.mxu0 0.0
    %1969 = vmatprep.subr.mxu0 0.0
    %1970 = vmatpush1.xpose.msra.mxu0 0.0
    %1971 = vmatprep.subr.mxu0 0.0
    %1972 = vmatpush1.xpose.msra.mxu0 0.0
    %1973 = vmatprep.subr.mxu0 0.0
    %1974 = vmatpush1.xpose.msra.mxu0 0.0
    %1975 = vmatprep.subr.mxu0 0.0
    %1976 = vmatpush1.xpose.msra.mxu0 0.0
    %1977 = vmatprep.subr.mxu0 0.0
    %1978 = vmatpush1.xpose.msra.mxu0 0.0
    %1979 = vmatprep.subr.mxu0 0.0
    %1980 = vmatpush1.xpose.msra.mxu0 0.0
    %1981 = vmatprep.subr.mxu0 0.0
    %1982 = vmatpush1.xpose.msra.mxu0 0.0
    %1983 = vmatprep.subr.mxu0 0.0
    %1984 = vmatpush1.xpose.msra.mxu0 0.0
    %1985 = vmatprep.subr.mxu0 0.0
    %1986 = vmatpush1.xpose.msra.mxu0 0.0
    %1987 = vmatprep.subr.mxu0 0.0
    %1988 = vmatpush1.xpose.msra.mxu0 0.0
    %1989 = vmatprep.subr.mxu0 0.0
    %1990 = vmatpush1.xpose.msra.mxu0 0.0
    %1991 = vmatprep.subr.mxu0 0.0
    %1992 = vmatpush1.xpose.msra.mxu0 0.0
    %1993 = vmatprep.subr.mxu0 0.0
    %1994 = vmatpush1.xpose.msra.mxu0 0.0
    %1995 = vmatprep.subr.mxu0 0.0
    %1996 = vmatpush1.xpose.msra.mxu0 0.0
    %1997 = vmatprep.subr.mxu0 0.0
    %1998 = vmatpush1.xpose.msra.mxu0 0.0
    %1999 = vmatprep.subr.mxu0 0.0
    %2000 = vmatpush1.xpose.msra.mxu0 0.0
    %2001 = vmatprep.subr.mxu0 0.0
    %2002 = vmatpush1.xpose.msra.mxu0 0.0
    %2003 = vmatprep.subr.mxu0 0.0
    %2004 = vmatpush1.xpose.msra.mxu0 0.0
    %2005 = vmatprep.subr.mxu0 0.0
    %2006 = vmatpush1.xpose.msra.mxu0 0.0
    %2007 = vmatprep.subr.mxu0 0.0
    %2008 = vmatpush1.xpose.msra.mxu0 0.0
    %2009 = vmatprep.subr.mxu0 0.0
    %2010 = vmatpush1.xpose.msra.mxu0 0.0
    %2011 = vmatprep.subr.mxu0 0.0
    %2012 = vmatpush1.xpose.msra.mxu0 0.0
    %2013 = vmatprep.subr.mxu0 0.0
    %2014 = vmatpush1.xpose.msra.mxu0 0.0
    %2015 = vmatprep.subr.mxu0 0.0
    %2016 = vmatpush1.xpose.msra.mxu0 0.0
    %2017 = vmatprep.subr.mxu0 0.0
    %2018 = vmatpush1.xpose.msra.mxu0 0.0
    %2019 = vmatprep.subr.mxu0 0.0
    %2020 = vmatpush1.xpose.msra.mxu0 0.0
    %2021 = vmatprep.subr.mxu0 0.0
    %2022 = vmatpush1.xpose.msra.mxu0 0.0
    %2023 = vmatprep.subr.mxu0 0.0
    %2024 = vmatpush1.xpose.msra.mxu0 0.0
    %2025 = vmatprep.mubr.f32.mxu0 0.0
    %2026 = vmatmul.mubr.f32.gmra.mrb[0].mxu0 %v1953
    %v2027 = vpop.f32.mrb[0].mxu0
    %v2028 = vadd.f32 0.0, %v2027
    %v2029 = vpop.f32.mrb[0].mxu0
    %2030 = vmatprep.mubr.f32.mxu0 0.0
    %2031 = vmatmul.mubr.f32.gmra.mrb[0].mxu0 %v1955
    %v2032 = vpop.f32.mrb[0].mxu0
    %v2033 = vadd.f32 0.0, %v2032
    %v2034 = vpop.f32.mrb[0].mxu0
    %2035 = vdwg.mxu0
    %2036 = vrot.lane.b32.xlu0 %v746, 96
    %v2037 = vpop.permute.xlu0 %2036
    %2038 = vrot.lane.b32.xlu0 %v748, 96
    %v2039 = vpop.permute.xlu0 %2038
    %v2040 = vsel %vm821, %v634, 0
    %v2042 = vsel %vm821, %v636, 0
    %v2044 = vsel %vm821, %v2037, 0
    %v2046 = vsel %vm821, %v2039, 0
    %2048 = vmatprep.subr.mxu0 0.0
    %2049 = vmatpush1.xpose.msra.mxu0 %v2044
    %2050 = vmatprep.subr.mxu0 0.0
    %2051 = vmatpush1.xpose.msra.mxu0 %v2046
    %2052 = vmatprep.subr.mxu0 0.0
    %2053 = vmatpush1.xpose.msra.mxu0 0.0
    %2054 = vmatprep.subr.mxu0 0.0
    %2055 = vmatpush1.xpose.msra.mxu0 0.0
    %2056 = vmatprep.subr.mxu0 0.0
    %2057 = vmatpush1.xpose.msra.mxu0 0.0
    %2058 = vmatprep.subr.mxu0 0.0
    %2059 = vmatpush1.xpose.msra.mxu0 0.0
    %2060 = vmatprep.subr.mxu0 0.0
    %2061 = vmatpush1.xpose.msra.mxu0 0.0
    %2062 = vmatprep.subr.mxu0 0.0
    %2063 = vmatpush1.xpose.msra.mxu0 0.0
    %2064 = vmatprep.subr.mxu0 0.0
    %2065 = vmatpush1.xpose.msra.mxu0 0.0
    %2066 = vmatprep.subr.mxu0 0.0
    %2067 = vmatpush1.xpose.msra.mxu0 0.0
    %2068 = vmatprep.subr.mxu0 0.0
    %2069 = vmatpush1.xpose.msra.mxu0 0.0
    %2070 = vmatprep.subr.mxu0 0.0
    %2071 = vmatpush1.xpose.msra.mxu0 0.0
    %2072 = vmatprep.subr.mxu0 0.0
    %2073 = vmatpush1.xpose.msra.mxu0 0.0
    %2074 = vmatprep.subr.mxu0 0.0
    %2075 = vmatpush1.xpose.msra.mxu0 0.0
    %2076 = vmatprep.subr.mxu0 0.0
    %2077 = vmatpush1.xpose.msra.mxu0 0.0
    %2078 = vmatprep.subr.mxu0 0.0
    %2079 = vmatpush1.xpose.msra.mxu0 0.0
    %2080 = vmatprep.subr.mxu0 0.0
    %2081 = vmatpush1.xpose.msra.mxu0 0.0
    %2082 = vmatprep.subr.mxu0 0.0
    %2083 = vmatpush1.xpose.msra.mxu0 0.0
    %2084 = vmatprep.subr.mxu0 0.0
    %2085 = vmatpush1.xpose.msra.mxu0 0.0
    %2086 = vmatprep.subr.mxu0 0.0
    %2087 = vmatpush1.xpose.msra.mxu0 0.0
    %2088 = vmatprep.subr.mxu0 0.0
    %2089 = vmatpush1.xpose.msra.mxu0 0.0
    %2090 = vmatprep.subr.mxu0 0.0
    %2091 = vmatpush1.xpose.msra.mxu0 0.0
    %2092 = vmatprep.subr.mxu0 0.0
    %2093 = vmatpush1.xpose.msra.mxu0 0.0
    %2094 = vmatprep.subr.mxu0 0.0
    %2095 = vmatpush1.xpose.msra.mxu0 0.0
    %2096 = vmatprep.subr.mxu0 0.0
    %2097 = vmatpush1.xpose.msra.mxu0 0.0
    %2098 = vmatprep.subr.mxu0 0.0
    %2099 = vmatpush1.xpose.msra.mxu0 0.0
    %2100 = vmatprep.subr.mxu0 0.0
    %2101 = vmatpush1.xpose.msra.mxu0 0.0
    %2102 = vmatprep.subr.mxu0 0.0
    %2103 = vmatpush1.xpose.msra.mxu0 0.0
    %2104 = vmatprep.subr.mxu0 0.0
    %2105 = vmatpush1.xpose.msra.mxu0 0.0
    %2106 = vmatprep.subr.mxu0 0.0
    %2107 = vmatpush1.xpose.msra.mxu0 0.0
    %2108 = vmatprep.subr.mxu0 0.0
    %2109 = vmatpush1.xpose.msra.mxu0 0.0
    %2110 = vmatprep.subr.mxu0 0.0
    %2111 = vmatpush1.xpose.msra.mxu0 0.0
    %2112 = vmatprep.mubr.f32.mxu0 0.0
    %2113 = vmatmul.mubr.f32.gmra.mrb[0].mxu0 %v2040
    %v2114 = vpop.f32.mrb[0].mxu0
    %v2115 = vadd.f32 0.0, %v2114
    %v2116 = vpop.f32.mrb[0].mxu0
    %2117 = vmatprep.mubr.f32.mxu0 0.0
    %2118 = vmatmul.mubr.f32.gmra.mrb[0].mxu0 %v2042
    %v2119 = vpop.f32.mrb[0].mxu0
    %v2120 = vadd.f32 0.0, %v2119
    %v2121 = vpop.f32.mrb[0].mxu0
    %2122 = vdwg.mxu0
    %2123 = vrot.lane.b32.xlu0 %v750, 96
    %v2124 = vpop.permute.xlu0 %2123
    %2125 = vrot.lane.b32.xlu0 %v752, 96
    %v2126 = vpop.permute.xlu0 %2125
    %v2127 = vsel %vm821, %v638, 0
    %v2129 = vsel %vm821, %v640, 0
    %v2131 = vsel %vm821, %v2124, 0
    %v2133 = vsel %vm821, %v2126, 0
    %2135 = vmatprep.subr.mxu0 0.0
    %2136 = vmatpush1.xpose.msra.mxu0 %v2131
    %2137 = vmatprep.subr.mxu0 0.0
    %2138 = vmatpush1.xpose.msra.mxu0 %v2133
    %2139 = vmatprep.subr.mxu0 0.0
    %2140 = vmatpush1.xpose.msra.mxu0 0.0
    %2141 = vmatprep.subr.mxu0 0.0
    %2142 = vmatpush1.xpose.msra.mxu0 0.0
    %2143 = vmatprep.subr.mxu0 0.0
    %2144 = vmatpush1.xpose.msra.mxu0 0.0
    %2145 = vmatprep.subr.mxu0 0.0
    %2146 = vmatpush1.xpose.msra.mxu0 0.0
    %2147 = vmatprep.subr.mxu0 0.0
    %2148 = vmatpush1.xpose.msra.mxu0 0.0
    %2149 = vmatprep.subr.mxu0 0.0
    %2150 = vmatpush1.xpose.msra.mxu0 0.0
    %2151 = vmatprep.subr.mxu0 0.0
    %2152 = vmatpush1.xpose.msra.mxu0 0.0
    %2153 = vmatprep.subr.mxu0 0.0
    %2154 = vmatpush1.xpose.msra.mxu0 0.0
    %2155 = vmatprep.subr.mxu0 0.0
    %2156 = vmatpush1.xpose.msra.mxu0 0.0
    %2157 = vmatprep.subr.mxu0 0.0
    %2158 = vmatpush1.xpose.msra.mxu0 0.0
    %2159 = vmatprep.subr.mxu0 0.0
    %2160 = vmatpush1.xpose.msra.mxu0 0.0
    %2161 = vmatprep.subr.mxu0 0.0
    %2162 = vmatpush1.xpose.msra.mxu0 0.0
    %2163 = vmatprep.subr.mxu0 0.0
    %2164 = vmatpush1.xpose.msra.mxu0 0.0
    %2165 = vmatprep.subr.mxu0 0.0
    %2166 = vmatpush1.xpose.msra.mxu0 0.0
    %2167 = vmatprep.subr.mxu0 0.0
    %2168 = vmatpush1.xpose.msra.mxu0 0.0
    %2169 = vmatprep.subr.mxu0 0.0
    %2170 = vmatpush1.xpose.msra.mxu0 0.0
    %2171 = vmatprep.subr.mxu0 0.0
    %2172 = vmatpush1.xpose.msra.mxu0 0.0
    %2173 = vmatprep.subr.mxu0 0.0
    %2174 = vmatpush1.xpose.msra.mxu0 0.0
    %2175 = vmatprep.subr.mxu0 0.0
    %2176 = vmatpush1.xpose.msra.mxu0 0.0
    %2177 = vmatprep.subr.mxu0 0.0
    %2178 = vmatpush1.xpose.msra.mxu0 0.0
    %2179 = vmatprep.subr.mxu0 0.0
    %2180 = vmatpush1.xpose.msra.mxu0 0.0
    %2181 = vmatprep.subr.mxu0 0.0
    %2182 = vmatpush1.xpose.msra.mxu0 0.0
    %2183 = vmatprep.subr.mxu0 0.0
    %2184 = vmatpush1.xpose.msra.mxu0 0.0
    %2185 = vmatprep.subr.mxu0 0.0
    %2186 = vmatpush1.xpose.msra.mxu0 0.0
    %2187 = vmatprep.subr.mxu0 0.0
    %2188 = vmatpush1.xpose.msra.mxu0 0.0
    %2189 = vmatprep.subr.mxu0 0.0
    %2190 = vmatpush1.xpose.msra.mxu0 0.0
    %2191 = vmatprep.subr.mxu0 0.0
    %2192 = vmatpush1.xpose.msra.mxu0 0.0
    %2193 = vmatprep.subr.mxu0 0.0
    %2194 = vmatpush1.xpose.msra.mxu0 0.0
    %2195 = vmatprep.subr.mxu0 0.0
    %2196 = vmatpush1.xpose.msra.mxu0 0.0
    %2197 = vmatprep.subr.mxu0 0.0
    %2198 = vmatpush1.xpose.msra.mxu0 0.0
    %2199 = vmatprep.mubr.f32.mxu0 0.0
    %2200 = vmatmul.mubr.f32.gmra.mrb[0].mxu0 %v2127
    %v2201 = vpop.f32.mrb[0].mxu0
    %v2202 = vadd.f32 0.0, %v2201
    %v2203 = vpop.f32.mrb[0].mxu0
    %2204 = vmatprep.mubr.f32.mxu0 0.0
    %2205 = vmatmul.mubr.f32.gmra.mrb[0].mxu0 %v2129
    %v2206 = vpop.f32.mrb[0].mxu0
    %v2207 = vadd.f32 0.0, %v2206
    %v2208 = vpop.f32.mrb[0].mxu0
    %2209 = vdwg.mxu0
    %2210 = vrot.lane.b32.xlu0 %v754, 96
    %v2211 = vpop.permute.xlu0 %2210
    %2212 = vrot.lane.b32.xlu0 %v756, 96
    %v2213 = vpop.permute.xlu0 %2212
    %v2214 = vsel %vm821, %v642, 0
    %v2216 = vsel %vm821, %v644, 0
    %v2218 = vsel %vm821, %v2211, 0
    %v2220 = vsel %vm821, %v2213, 0
    %2222 = vmatprep.subr.mxu0 0.0
    %2223 = vmatpush1.xpose.msra.mxu0 %v2218
    %2224 = vmatprep.subr.mxu0 0.0
    %2225 = vmatpush1.xpose.msra.mxu0 %v2220
    %2226 = vmatprep.subr.mxu0 0.0
    %2227 = vmatpush1.xpose.msra.mxu0 0.0
    %2228 = vmatprep.subr.mxu0 0.0
    %2229 = vmatpush1.xpose.msra.mxu0 0.0
    %2230 = vmatprep.subr.mxu0 0.0
    %2231 = vmatpush1.xpose.msra.mxu0 0.0
    %2232 = vmatprep.subr.mxu0 0.0
    %2233 = vmatpush1.xpose.msra.mxu0 0.0
    %2234 = vmatprep.subr.mxu0 0.0
    %2235 = vmatpush1.xpose.msra.mxu0 0.0
    %2236 = vmatprep.subr.mxu0 0.0
    %2237 = vmatpush1.xpose.msra.mxu0 0.0
    %2238 = vmatprep.subr.mxu0 0.0
    %2239 = vmatpush1.xpose.msra.mxu0 0.0
    %2240 = vmatprep.subr.mxu0 0.0
    %2241 = vmatpush1.xpose.msra.mxu0 0.0
    %2242 = vmatprep.subr.mxu0 0.0
    %2243 = vmatpush1.xpose.msra.mxu0 0.0
    %2244 = vmatprep.subr.mxu0 0.0
    %2245 = vmatpush1.xpose.msra.mxu0 0.0
    %2246 = vmatprep.subr.mxu0 0.0
    %2247 = vmatpush1.xpose.msra.mxu0 0.0
    %2248 = vmatprep.subr.mxu0 0.0
    %2249 = vmatpush1.xpose.msra.mxu0 0.0
    %2250 = vmatprep.subr.mxu0 0.0
    %2251 = vmatpush1.xpose.msra.mxu0 0.0
    %2252 = vmatprep.subr.mxu0 0.0
    %2253 = vmatpush1.xpose.msra.mxu0 0.0
    %2254 = vmatprep.subr.mxu0 0.0
    %2255 = vmatpush1.xpose.msra.mxu0 0.0
    %2256 = vmatprep.subr.mxu0 0.0
    %2257 = vmatpush1.xpose.msra.mxu0 0.0
    %2258 = vmatprep.subr.mxu0 0.0
    %2259 = vmatpush1.xpose.msra.mxu0 0.0
    %2260 = vmatprep.subr.mxu0 0.0
    %2261 = vmatpush1.xpose.msra.mxu0 0.0
    %2262 = vmatprep.subr.mxu0 0.0
    %2263 = vmatpush1.xpose.msra.mxu0 0.0
    %2264 = vmatprep.subr.mxu0 0.0
    %2265 = vmatpush1.xpose.msra.mxu0 0.0
    %2266 = vmatprep.subr.mxu0 0.0
    %2267 = vmatpush1.xpose.msra.mxu0 0.0
    %2268 = vmatprep.subr.mxu0 0.0
    %2269 = vmatpush1.xpose.msra.mxu0 0.0
    %2270 = vmatprep.subr.mxu0 0.0
    %2271 = vmatpush1.xpose.msra.mxu0 0.0
    %2272 = vmatprep.subr.mxu0 0.0
    %2273 = vmatpush1.xpose.msra.mxu0 0.0
    %2274 = vmatprep.subr.mxu0 0.0
    %2275 = vmatpush1.xpose.msra.mxu0 0.0
    %2276 = vmatprep.subr.mxu0 0.0
    %2277 = vmatpush1.xpose.msra.mxu0 0.0
    %2278 = vmatprep.subr.mxu0 0.0
    %2279 = vmatpush1.xpose.msra.mxu0 0.0
    %2280 = vmatprep.subr.mxu0 0.0
    %2281 = vmatpush1.xpose.msra.mxu0 0.0
    %2282 = vmatprep.subr.mxu0 0.0
    %2283 = vmatpush1.xpose.msra.mxu0 0.0
    %2284 = vmatprep.subr.mxu0 0.0
    %2285 = vmatpush1.xpose.msra.mxu0 0.0
    %2286 = vmatprep.mubr.f32.mxu0 0.0
    %2287 = vmatmul.mubr.f32.gmra.mrb[0].mxu0 %v2214
    %v2288 = vpop.f32.mrb[0].mxu0
    %v2289 = vadd.f32 0.0, %v2288
    %v2290 = vpop.f32.mrb[0].mxu0
    %2291 = vmatprep.mubr.f32.mxu0 0.0
    %2292 = vmatmul.mubr.f32.gmra.mrb[0].mxu0 %v2216
    %v2293 = vpop.f32.mrb[0].mxu0
    %v2294 = vadd.f32 0.0, %v2293
    %v2295 = vpop.f32.mrb[0].mxu0
    %2296 = vdwg.mxu0
    %2297 = vrot.lane.b32.xlu0 %v758, 96
    %v2298 = vpop.permute.xlu0 %2297
    %2299 = vrot.lane.b32.xlu0 %v760, 96
    %v2300 = vpop.permute.xlu0 %2299
    %v2301 = vsel %vm821, %v646, 0
    %v2303 = vsel %vm821, %v648, 0
    %v2305 = vsel %vm821, %v2298, 0
    %v2307 = vsel %vm821, %v2300, 0
    %2309 = vmatprep.subr.mxu0 0.0
    %2310 = vmatpush1.xpose.msra.mxu0 %v2305
    %2311 = vmatprep.subr.mxu0 0.0
    %2312 = vmatpush1.xpose.msra.mxu0 %v2307
    %2313 = vmatprep.subr.mxu0 0.0
    %2314 = vmatpush1.xpose.msra.mxu0 0.0
    %2315 = vmatprep.subr.mxu0 0.0
    %2316 = vmatpush1.xpose.msra.mxu0 0.0
    %2317 = vmatprep.subr.mxu0 0.0
    %2318 = vmatpush1.xpose.msra.mxu0 0.0
    %2319 = vmatprep.subr.mxu0 0.0
    %2320 = vmatpush1.xpose.msra.mxu0 0.0
    %2321 = vmatprep.subr.mxu0 0.0
    %2322 = vmatpush1.xpose.msra.mxu0 0.0
    %2323 = vmatprep.subr.mxu0 0.0
    %2324 = vmatpush1.xpose.msra.mxu0 0.0
    %2325 = vmatprep.subr.mxu0 0.0
    %2326 = vmatpush1.xpose.msra.mxu0 0.0
    %2327 = vmatprep.subr.mxu0 0.0
    %2328 = vmatpush1.xpose.msra.mxu0 0.0
    %2329 = vmatprep.subr.mxu0 0.0
    %2330 = vmatpush1.xpose.msra.mxu0 0.0
    %2331 = vmatprep.subr.mxu0 0.0
    %2332 = vmatpush1.xpose.msra.mxu0 0.0
    %2333 = vmatprep.subr.mxu0 0.0
    %2334 = vmatpush1.xpose.msra.mxu0 0.0
    %2335 = vmatprep.subr.mxu0 0.0
    %2336 = vmatpush1.xpose.msra.mxu0 0.0
    %2337 = vmatprep.subr.mxu0 0.0
    %2338 = vmatpush1.xpose.msra.mxu0 0.0
    %2339 = vmatprep.subr.mxu0 0.0
    %2340 = vmatpush1.xpose.msra.mxu0 0.0
    %2341 = vmatprep.subr.mxu0 0.0
    %2342 = vmatpush1.xpose.msra.mxu0 0.0
    %2343 = vmatprep.subr.mxu0 0.0
    %2344 = vmatpush1.xpose.msra.mxu0 0.0
    %2345 = vmatprep.subr.mxu0 0.0
    %2346 = vmatpush1.xpose.msra.mxu0 0.0
    %2347 = vmatprep.subr.mxu0 0.0
    %2348 = vmatpush1.xpose.msra.mxu0 0.0
    %2349 = vmatprep.subr.mxu0 0.0
    %2350 = vmatpush1.xpose.msra.mxu0 0.0
    %2351 = vmatprep.subr.mxu0 0.0
    %2352 = vmatpush1.xpose.msra.mxu0 0.0
    %2353 = vmatprep.subr.mxu0 0.0
    %2354 = vmatpush1.xpose.msra.mxu0 0.0
    %2355 = vmatprep.subr.mxu0 0.0
    %2356 = vmatpush1.xpose.msra.mxu0 0.0
    %2357 = vmatprep.subr.mxu0 0.0
    %2358 = vmatpush1.xpose.msra.mxu0 0.0
    %2359 = vmatprep.subr.mxu0 0.0
    %2360 = vmatpush1.xpose.msra.mxu0 0.0
    %2361 = vmatprep.subr.mxu0 0.0
    %2362 = vmatpush1.xpose.msra.mxu0 0.0
    %2363 = vmatprep.subr.mxu0 0.0
    %2364 = vmatpush1.xpose.msra.mxu0 0.0
    %2365 = vmatprep.subr.mxu0 0.0
    %2366 = vmatpush1.xpose.msra.mxu0 0.0
    %2367 = vmatprep.subr.mxu0 0.0
    %2368 = vmatpush1.xpose.msra.mxu0 0.0
    %2369 = vmatprep.subr.mxu0 0.0
    %2370 = vmatpush1.xpose.msra.mxu0 0.0
    %2371 = vmatprep.subr.mxu0 0.0
    %2372 = vmatpush1.xpose.msra.mxu0 0.0
    %2373 = vmatprep.mubr.f32.mxu0 0.0
    %2374 = vmatmul.mubr.f32.gmra.mrb[0].mxu0 %v2301
    %v2375 = vpop.f32.mrb[0].mxu0
    %v2376 = vadd.f32 0.0, %v2375
    %v2377 = vpop.f32.mrb[0].mxu0
    %2378 = vmatprep.mubr.f32.mxu0 0.0
    %2379 = vmatmul.mubr.f32.gmra.mrb[0].mxu0 %v2303
    %v2380 = vpop.f32.mrb[0].mxu0
    %v2381 = vadd.f32 0.0, %v2380
    %v2382 = vpop.f32.mrb[0].mxu0
    %2383 = vdwg.mxu0
    %2384 = vrot.lane.b32.xlu0 %v762, 96
    %v2385 = vpop.permute.xlu0 %2384
    %2386 = vrot.lane.b32.xlu0 %v764, 96
    %v2387 = vpop.permute.xlu0 %2386
    %v2388 = vsel %vm821, %v650, 0
    %v2390 = vsel %vm821, %v652, 0
    %v2392 = vsel %vm821, %v2385, 0
    %v2394 = vsel %vm821, %v2387, 0
    %2396 = vmatprep.subr.mxu0 0.0
    %2397 = vmatpush1.xpose.msra.mxu0 %v2392
    %2398 = vmatprep.subr.mxu0 0.0
    %2399 = vmatpush1.xpose.msra.mxu0 %v2394
    %2400 = vmatprep.subr.mxu0 0.0
    %2401 = vmatpush1.xpose.msra.mxu0 0.0
    %2402 = vmatprep.subr.mxu0 0.0
    %2403 = vmatpush1.xpose.msra.mxu0 0.0
    %2404 = vmatprep.subr.mxu0 0.0
    %2405 = vmatpush1.xpose.msra.mxu0 0.0
    %2406 = vmatprep.subr.mxu0 0.0
    %2407 = vmatpush1.xpose.msra.mxu0 0.0
    %2408 = vmatprep.subr.mxu0 0.0
    %2409 = vmatpush1.xpose.msra.mxu0 0.0
    %2410 = vmatprep.subr.mxu0 0.0
    %2411 = vmatpush1.xpose.msra.mxu0 0.0
    %2412 = vmatprep.subr.mxu0 0.0
    %2413 = vmatpush1.xpose.msra.mxu0 0.0
    %2414 = vmatprep.subr.mxu0 0.0
    %2415 = vmatpush1.xpose.msra.mxu0 0.0
    %2416 = vmatprep.subr.mxu0 0.0
    %2417 = vmatpush1.xpose.msra.mxu0 0.0
    %2418 = vmatprep.subr.mxu0 0.0
    %2419 = vmatpush1.xpose.msra.mxu0 0.0
    %2420 = vmatprep.subr.mxu0 0.0
    %2421 = vmatpush1.xpose.msra.mxu0 0.0
    %2422 = vmatprep.subr.mxu0 0.0
    %2423 = vmatpush1.xpose.msra.mxu0 0.0
    %2424 = vmatprep.subr.mxu0 0.0
    %2425 = vmatpush1.xpose.msra.mxu0 0.0
    %2426 = vmatprep.subr.mxu0 0.0
    %2427 = vmatpush1.xpose.msra.mxu0 0.0
    %2428 = vmatprep.subr.mxu0 0.0
    %2429 = vmatpush1.xpose.msra.mxu0 0.0
    %2430 = vmatprep.subr.mxu0 0.0
    %2431 = vmatpush1.xpose.msra.mxu0 0.0
    %2432 = vmatprep.subr.mxu0 0.0
    %2433 = vmatpush1.xpose.msra.mxu0 0.0
    %2434 = vmatprep.subr.mxu0 0.0
    %2435 = vmatpush1.xpose.msra.mxu0 0.0
    %2436 = vmatprep.subr.mxu0 0.0
    %2437 = vmatpush1.xpose.msra.mxu0 0.0
    %2438 = vmatprep.subr.mxu0 0.0
    %2439 = vmatpush1.xpose.msra.mxu0 0.0
    %2440 = vmatprep.subr.mxu0 0.0
    %2441 = vmatpush1.xpose.msra.mxu0 0.0
    %2442 = vmatprep.subr.mxu0 0.0
    %2443 = vmatpush1.xpose.msra.mxu0 0.0
    %2444 = vmatprep.subr.mxu0 0.0
    %2445 = vmatpush1.xpose.msra.mxu0 0.0
    %2446 = vmatprep.subr.mxu0 0.0
    %2447 = vmatpush1.xpose.msra.mxu0 0.0
    %2448 = vmatprep.subr.mxu0 0.0
    %2449 = vmatpush1.xpose.msra.mxu0 0.0
    %2450 = vmatprep.subr.mxu0 0.0
    %2451 = vmatpush1.xpose.msra.mxu0 0.0
    %2452 = vmatprep.subr.mxu0 0.0
    %2453 = vmatpush1.xpose.msra.mxu0 0.0
    %2454 = vmatprep.subr.mxu0 0.0
    %2455 = vmatpush1.xpose.msra.mxu0 0.0
    %2456 = vmatprep.subr.mxu0 0.0
    %2457 = vmatpush1.xpose.msra.mxu0 0.0
    %2458 = vmatprep.subr.mxu0 0.0
    %2459 = vmatpush1.xpose.msra.mxu0 0.0
    %2460 = vmatprep.mubr.f32.mxu0 0.0
    %2461 = vmatmul.mubr.f32.gmra.mrb[0].mxu0 %v2388
    %v2462 = vpop.f32.mrb[0].mxu0
    %v2463 = vadd.f32 0.0, %v2462
    %v2464 = vpop.f32.mrb[0].mxu0
    %2465 = vmatprep.mubr.f32.mxu0 0.0
    %2466 = vmatmul.mubr.f32.gmra.mrb[0].mxu0 %v2390
    %v2467 = vpop.f32.mrb[0].mxu0
    %v2468 = vadd.f32 0.0, %v2467
    %v2469 = vpop.f32.mrb[0].mxu0
    %2470 = vdwg.mxu0
    %2471 = vrot.lane.b32.xlu0 %v766, 96
    %v2472 = vpop.permute.xlu0 %2471
    %2473 = vrot.lane.b32.xlu0 %v768, 96
    %v2474 = vpop.permute.xlu0 %2473
    %v2475 = vsel %vm821, %v654, 0
    %v2477 = vsel %vm821, %v656, 0
    %v2479 = vsel %vm821, %v2472, 0
    %v2481 = vsel %vm821, %v2474, 0
    %2483 = vmatprep.subr.mxu0 0.0
    %2484 = vmatpush1.xpose.msra.mxu0 %v2479
    %2485 = vmatprep.subr.mxu0 0.0
    %2486 = vmatpush1.xpose.msra.mxu0 %v2481
    %2487 = vmatprep.subr.mxu0 0.0
    %2488 = vmatpush1.xpose.msra.mxu0 0.0
    %2489 = vmatprep.subr.mxu0 0.0
    %2490 = vmatpush1.xpose.msra.mxu0 0.0
    %2491 = vmatprep.subr.mxu0 0.0
    %2492 = vmatpush1.xpose.msra.mxu0 0.0
    %2493 = vmatprep.subr.mxu0 0.0
    %2494 = vmatpush1.xpose.msra.mxu0 0.0
    %2495 = vmatprep.subr.mxu0 0.0
    %2496 = vmatpush1.xpose.msra.mxu0 0.0
    %2497 = vmatprep.subr.mxu0 0.0
    %2498 = vmatpush1.xpose.msra.mxu0 0.0
    %2499 = vmatprep.subr.mxu0 0.0
    %2500 = vmatpush1.xpose.msra.mxu0 0.0
    %2501 = vmatprep.subr.mxu0 0.0
    %2502 = vmatpush1.xpose.msra.mxu0 0.0
    %2503 = vmatprep.subr.mxu0 0.0
    %2504 = vmatpush1.xpose.msra.mxu0 0.0
    %2505 = vmatprep.subr.mxu0 0.0
    %2506 = vmatpush1.xpose.msra.mxu0 0.0
    %2507 = vmatprep.subr.mxu0 0.0
    %2508 = vmatpush1.xpose.msra.mxu0 0.0
    %2509 = vmatprep.subr.mxu0 0.0
    %2510 = vmatpush1.xpose.msra.mxu0 0.0
    %2511 = vmatprep.subr.mxu0 0.0
    %2512 = vmatpush1.xpose.msra.mxu0 0.0
    %2513 = vmatprep.subr.mxu0 0.0
    %2514 = vmatpush1.xpose.msra.mxu0 0.0
    %2515 = vmatprep.subr.mxu0 0.0
    %2516 = vmatpush1.xpose.msra.mxu0 0.0
    %2517 = vmatprep.subr.mxu0 0.0
    %2518 = vmatpush1.xpose.msra.mxu0 0.0
    %2519 = vmatprep.subr.mxu0 0.0
    %2520 = vmatpush1.xpose.msra.mxu0 0.0
    %2521 = vmatprep.subr.mxu0 0.0
    %2522 = vmatpush1.xpose.msra.mxu0 0.0
    %2523 = vmatprep.subr.mxu0 0.0
    %2524 = vmatpush1.xpose.msra.mxu0 0.0
    %2525 = vmatprep.subr.mxu0 0.0
    %2526 = vmatpush1.xpose.msra.mxu0 0.0
    %2527 = vmatprep.subr.mxu0 0.0
    %2528 = vmatpush1.xpose.msra.mxu0 0.0
    %2529 = vmatprep.subr.mxu0 0.0
    %2530 = vmatpush1.xpose.msra.mxu0 0.0
    %2531 = vmatprep.subr.mxu0 0.0
    %2532 = vmatpush1.xpose.msra.mxu0 0.0
    %2533 = vmatprep.subr.mxu0 0.0
    %2534 = vmatpush1.xpose.msra.mxu0 0.0
    %2535 = vmatprep.subr.mxu0 0.0
    %2536 = vmatpush1.xpose.msra.mxu0 0.0
    %2537 = vmatprep.subr.mxu0 0.0
    %2538 = vmatpush1.xpose.msra.mxu0 0.0
    %2539 = vmatprep.subr.mxu0 0.0
    %2540 = vmatpush1.xpose.msra.mxu0 0.0
    %2541 = vmatprep.subr.mxu0 0.0
    %2542 = vmatpush1.xpose.msra.mxu0 0.0
    %2543 = vmatprep.subr.mxu0 0.0
    %2544 = vmatpush1.xpose.msra.mxu0 0.0
    %2545 = vmatprep.subr.mxu0 0.0
    %2546 = vmatpush1.xpose.msra.mxu0 0.0
    %2547 = vmatprep.mubr.f32.mxu0 0.0
    %2548 = vmatmul.mubr.f32.gmra.mrb[0].mxu0 %v2475
    %v2549 = vpop.f32.mrb[0].mxu0
    %v2550 = vadd.f32 0.0, %v2549
    %v2551 = vpop.f32.mrb[0].mxu0
    %2552 = vmatprep.mubr.f32.mxu0 0.0
    %2553 = vmatmul.mubr.f32.gmra.mrb[0].mxu0 %v2477
    %v2554 = vpop.f32.mrb[0].mxu0
    %v2555 = vadd.f32 0.0, %v2554
    %v2556 = vpop.f32.mrb[0].mxu0
    %2557 = vdwg.mxu0
    %2558 = vrot.lane.b32.xlu0 %v770, 96
    %v2559 = vpop.permute.xlu0 %2558
    %2560 = vrot.lane.b32.xlu0 %v772, 96
    %v2561 = vpop.permute.xlu0 %2560
    %v2562 = vsel %vm821, %v658, 0
    %v2564 = vsel %vm821, %v660, 0
    %v2566 = vsel %vm821, %v2559, 0
    %v2568 = vsel %vm821, %v2561, 0
    %2570 = vmatprep.subr.mxu0 0.0
    %2571 = vmatpush1.xpose.msra.mxu0 %v2566
    %2572 = vmatprep.subr.mxu0 0.0
    %2573 = vmatpush1.xpose.msra.mxu0 %v2568
    %2574 = vmatprep.subr.mxu0 0.0
    %2575 = vmatpush1.xpose.msra.mxu0 0.0
    %2576 = vmatprep.subr.mxu0 0.0
    %2577 = vmatpush1.xpose.msra.mxu0 0.0
    %2578 = vmatprep.subr.mxu0 0.0
    %2579 = vmatpush1.xpose.msra.mxu0 0.0
    %2580 = vmatprep.subr.mxu0 0.0
    %2581 = vmatpush1.xpose.msra.mxu0 0.0
    %2582 = vmatprep.subr.mxu0 0.0
    %2583 = vmatpush1.xpose.msra.mxu0 0.0
    %2584 = vmatprep.subr.mxu0 0.0
    %2585 = vmatpush1.xpose.msra.mxu0 0.0
    %2586 = vmatprep.subr.mxu0 0.0
    %2587 = vmatpush1.xpose.msra.mxu0 0.0
    %2588 = vmatprep.subr.mxu0 0.0
    %2589 = vmatpush1.xpose.msra.mxu0 0.0
    %2590 = vmatprep.subr.mxu0 0.0
    %2591 = vmatpush1.xpose.msra.mxu0 0.0
    %2592 = vmatprep.subr.mxu0 0.0
    %2593 = vmatpush1.xpose.msra.mxu0 0.0
    %2594 = vmatprep.subr.mxu0 0.0
    %2595 = vmatpush1.xpose.msra.mxu0 0.0
    %2596 = vmatprep.subr.mxu0 0.0
    %2597 = vmatpush1.xpose.msra.mxu0 0.0
    %2598 = vmatprep.subr.mxu0 0.0
    %2599 = vmatpush1.xpose.msra.mxu0 0.0
    %2600 = vmatprep.subr.mxu0 0.0
    %2601 = vmatpush1.xpose.msra.mxu0 0.0
    %2602 = vmatprep.subr.mxu0 0.0
    %2603 = vmatpush1.xpose.msra.mxu0 0.0
    %2604 = vmatprep.subr.mxu0 0.0
    %2605 = vmatpush1.xpose.msra.mxu0 0.0
    %2606 = vmatprep.subr.mxu0 0.0
    %2607 = vmatpush1.xpose.msra.mxu0 0.0
    %2608 = vmatprep.subr.mxu0 0.0
    %2609 = vmatpush1.xpose.msra.mxu0 0.0
    %2610 = vmatprep.subr.mxu0 0.0
    %2611 = vmatpush1.xpose.msra.mxu0 0.0
    %2612 = vmatprep.subr.mxu0 0.0
    %2613 = vmatpush1.xpose.msra.mxu0 0.0
    %2614 = vmatprep.subr.mxu0 0.0
    %2615 = vmatpush1.xpose.msra.mxu0 0.0
    %2616 = vmatprep.subr.mxu0 0.0
    %2617 = vmatpush1.xpose.msra.mxu0 0.0
    %2618 = vmatprep.subr.mxu0 0.0
    %2619 = vmatpush1.xpose.msra.mxu0 0.0
    %2620 = vmatprep.subr.mxu0 0.0
    %2621 = vmatpush1.xpose.msra.mxu0 0.0
    %2622 = vmatprep.subr.mxu0 0.0
    %2623 = vmatpush1.xpose.msra.mxu0 0.0
    %2624 = vmatprep.subr.mxu0 0.0
    %2625 = vmatpush1.xpose.msra.mxu0 0.0
    %2626 = vmatprep.subr.mxu0 0.0
    %2627 = vmatpush1.xpose.msra.mxu0 0.0
    %2628 = vmatprep.subr.mxu0 0.0
    %2629 = vmatpush1.xpose.msra.mxu0 0.0
    %2630 = vmatprep.subr.mxu0 0.0
    %2631 = vmatpush1.xpose.msra.mxu0 0.0
    %2632 = vmatprep.subr.mxu0 0.0
    %2633 = vmatpush1.xpose.msra.mxu0 0.0
    %2634 = vmatprep.mubr.f32.mxu0 0.0
    %2635 = vmatmul.mubr.f32.gmra.mrb[0].mxu0 %v2562
    %v2636 = vpop.f32.mrb[0].mxu0
    %v2637 = vadd.f32 0.0, %v2636
    %v2638 = vpop.f32.mrb[0].mxu0
    %2639 = vmatprep.mubr.f32.mxu0 0.0
    %2640 = vmatmul.mubr.f32.gmra.mrb[0].mxu0 %v2564
    %v2641 = vpop.f32.mrb[0].mxu0
    %v2642 = vadd.f32 0.0, %v2641
    %v2643 = vpop.f32.mrb[0].mxu0
    %2644 = vdwg.mxu0
    %2645 = vrot.lane.b32.xlu0 %v774, 96
    %v2646 = vpop.permute.xlu0 %2645
    %2647 = vrot.lane.b32.xlu0 %v776, 96
    %v2648 = vpop.permute.xlu0 %2647
    %v2649 = vsel %vm821, %v662, 0
    %v2651 = vsel %vm821, %v664, 0
    %v2653 = vsel %vm821, %v2646, 0
    %v2655 = vsel %vm821, %v2648, 0
    %2657 = vmatprep.subr.mxu0 0.0
    %2658 = vmatpush1.xpose.msra.mxu0 %v2653
    %2659 = vmatprep.subr.mxu0 0.0
    %2660 = vmatpush1.xpose.msra.mxu0 %v2655
    %2661 = vmatprep.subr.mxu0 0.0
    %2662 = vmatpush1.xpose.msra.mxu0 0.0
    %2663 = vmatprep.subr.mxu0 0.0
    %2664 = vmatpush1.xpose.msra.mxu0 0.0
    %2665 = vmatprep.subr.mxu0 0.0
    %2666 = vmatpush1.xpose.msra.mxu0 0.0
    %2667 = vmatprep.subr.mxu0 0.0
    %2668 = vmatpush1.xpose.msra.mxu0 0.0
    %2669 = vmatprep.subr.mxu0 0.0
    %2670 = vmatpush1.xpose.msra.mxu0 0.0
    %2671 = vmatprep.subr.mxu0 0.0
    %2672 = vmatpush1.xpose.msra.mxu0 0.0
    %2673 = vmatprep.subr.mxu0 0.0
    %2674 = vmatpush1.xpose.msra.mxu0 0.0
    %2675 = vmatprep.subr.mxu0 0.0
    %2676 = vmatpush1.xpose.msra.mxu0 0.0
    %2677 = vmatprep.subr.mxu0 0.0
    %2678 = vmatpush1.xpose.msra.mxu0 0.0
    %2679 = vmatprep.subr.mxu0 0.0
    %2680 = vmatpush1.xpose.msra.mxu0 0.0
    %2681 = vmatprep.subr.mxu0 0.0
    %2682 = vmatpush1.xpose.msra.mxu0 0.0
    %2683 = vmatprep.subr.mxu0 0.0
    %2684 = vmatpush1.xpose.msra.mxu0 0.0
    %2685 = vmatprep.subr.mxu0 0.0
    %2686 = vmatpush1.xpose.msra.mxu0 0.0
    %2687 = vmatprep.subr.mxu0 0.0
    %2688 = vmatpush1.xpose.msra.mxu0 0.0
    %2689 = vmatprep.subr.mxu0 0.0
    %2690 = vmatpush1.xpose.msra.mxu0 0.0
    %2691 = vmatprep.subr.mxu0 0.0
    %2692 = vmatpush1.xpose.msra.mxu0 0.0
    %2693 = vmatprep.subr.mxu0 0.0
    %2694 = vmatpush1.xpose.msra.mxu0 0.0
    %2695 = vmatprep.subr.mxu0 0.0
    %2696 = vmatpush1.xpose.msra.mxu0 0.0
    %2697 = vmatprep.subr.mxu0 0.0
    %2698 = vmatpush1.xpose.msra.mxu0 0.0
    %2699 = vmatprep.subr.mxu0 0.0
    %2700 = vmatpush1.xpose.msra.mxu0 0.0
    %2701 = vmatprep.subr.mxu0 0.0
    %2702 = vmatpush1.xpose.msra.mxu0 0.0
    %2703 = vmatprep.subr.mxu0 0.0
    %2704 = vmatpush1.xpose.msra.mxu0 0.0
    %2705 = vmatprep.subr.mxu0 0.0
    %2706 = vmatpush1.xpose.msra.mxu0 0.0
    %2707 = vmatprep.subr.mxu0 0.0
    %2708 = vmatpush1.xpose.msra.mxu0 0.0
    %2709 = vmatprep.subr.mxu0 0.0
    %2710 = vmatpush1.xpose.msra.mxu0 0.0
    %2711 = vmatprep.subr.mxu0 0.0
    %2712 = vmatpush1.xpose.msra.mxu0 0.0
    %2713 = vmatprep.subr.mxu0 0.0
    %2714 = vmatpush1.xpose.msra.mxu0 0.0
    %2715 = vmatprep.subr.mxu0 0.0
    %2716 = vmatpush1.xpose.msra.mxu0 0.0
    %2717 = vmatprep.subr.mxu0 0.0
    %2718 = vmatpush1.xpose.msra.mxu0 0.0
    %2719 = vmatprep.subr.mxu0 0.0
    %2720 = vmatpush1.xpose.msra.mxu0 0.0
    %2721 = vmatprep.mubr.f32.mxu0 0.0
    %2722 = vmatmul.mubr.f32.gmra.mrb[0].mxu0 %v2649
    %v2723 = vpop.f32.mrb[0].mxu0
    %v2724 = vadd.f32 0.0, %v2723
    %v2725 = vpop.f32.mrb[0].mxu0
    %2726 = vmatprep.mubr.f32.mxu0 0.0
    %2727 = vmatmul.mubr.f32.gmra.mrb[0].mxu0 %v2651
    %v2728 = vpop.f32.mrb[0].mxu0
    %v2729 = vadd.f32 0.0, %v2728
    %v2730 = vpop.f32.mrb[0].mxu0
    %2731 = vdwg.mxu0
    %2732 = vrot.lane.b32.xlu0 %v778, 96
    %v2733 = vpop.permute.xlu0 %2732
    %2734 = vrot.lane.b32.xlu0 %v780, 96
    %v2735 = vpop.permute.xlu0 %2734
    %v2736 = vsel %vm821, %v666, 0
    %v2738 = vsel %vm821, %v668, 0
    %v2740 = vsel %vm821, %v2733, 0
    %v2742 = vsel %vm821, %v2735, 0
    %2744 = vmatprep.subr.mxu0 0.0
    %2745 = vmatpush1.xpose.msra.mxu0 %v2740
    %2746 = vmatprep.subr.mxu0 0.0
    %2747 = vmatpush1.xpose.msra.mxu0 %v2742
    %2748 = vmatprep.subr.mxu0 0.0
    %2749 = vmatpush1.xpose.msra.mxu0 0.0
    %2750 = vmatprep.subr.mxu0 0.0
    %2751 = vmatpush1.xpose.msra.mxu0 0.0
    %2752 = vmatprep.subr.mxu0 0.0
    %2753 = vmatpush1.xpose.msra.mxu0 0.0
    %2754 = vmatprep.subr.mxu0 0.0
    %2755 = vmatpush1.xpose.msra.mxu0 0.0
    %2756 = vmatprep.subr.mxu0 0.0
    %2757 = vmatpush1.xpose.msra.mxu0 0.0
    %2758 = vmatprep.subr.mxu0 0.0
    %2759 = vmatpush1.xpose.msra.mxu0 0.0
    %2760 = vmatprep.subr.mxu0 0.0
    %2761 = vmatpush1.xpose.msra.mxu0 0.0
    %2762 = vmatprep.subr.mxu0 0.0
    %2763 = vmatpush1.xpose.msra.mxu0 0.0
    %2764 = vmatprep.subr.mxu0 0.0
    %2765 = vmatpush1.xpose.msra.mxu0 0.0
    %2766 = vmatprep.subr.mxu0 0.0
    %2767 = vmatpush1.xpose.msra.mxu0 0.0
    %2768 = vmatprep.subr.mxu0 0.0
    %2769 = vmatpush1.xpose.msra.mxu0 0.0
    %2770 = vmatprep.subr.mxu0 0.0
    %2771 = vmatpush1.xpose.msra.mxu0 0.0
    %2772 = vmatprep.subr.mxu0 0.0
    %2773 = vmatpush1.xpose.msra.mxu0 0.0
    %2774 = vmatprep.subr.mxu0 0.0
    %2775 = vmatpush1.xpose.msra.mxu0 0.0
    %2776 = vmatprep.subr.mxu0 0.0
    %2777 = vmatpush1.xpose.msra.mxu0 0.0
    %2778 = vmatprep.subr.mxu0 0.0
    %2779 = vmatpush1.xpose.msra.mxu0 0.0
    %2780 = vmatprep.subr.mxu0 0.0
    %2781 = vmatpush1.xpose.msra.mxu0 0.0
    %2782 = vmatprep.subr.mxu0 0.0
    %2783 = vmatpush1.xpose.msra.mxu0 0.0
    %2784 = vmatprep.subr.mxu0 0.0
    %2785 = vmatpush1.xpose.msra.mxu0 0.0
    %2786 = vmatprep.subr.mxu0 0.0
    %2787 = vmatpush1.xpose.msra.mxu0 0.0
    %2788 = vmatprep.subr.mxu0 0.0
    %2789 = vmatpush1.xpose.msra.mxu0 0.0
    %2790 = vmatprep.subr.mxu0 0.0
    %2791 = vmatpush1.xpose.msra.mxu0 0.0
    %2792 = vmatprep.subr.mxu0 0.0
    %2793 = vmatpush1.xpose.msra.mxu0 0.0
    %2794 = vmatprep.subr.mxu0 0.0
    %2795 = vmatpush1.xpose.msra.mxu0 0.0
    %2796 = vmatprep.subr.mxu0 0.0
    %2797 = vmatpush1.xpose.msra.mxu0 0.0
    %2798 = vmatprep.subr.mxu0 0.0
    %2799 = vmatpush1.xpose.msra.mxu0 0.0
    %2800 = vmatprep.subr.mxu0 0.0
    %2801 = vmatpush1.xpose.msra.mxu0 0.0
    %2802 = vmatprep.subr.mxu0 0.0
    %2803 = vmatpush1.xpose.msra.mxu0 0.0
    %2804 = vmatprep.subr.mxu0 0.0
    %2805 = vmatpush1.xpose.msra.mxu0 0.0
    %2806 = vmatprep.subr.mxu0 0.0
    %2807 = vmatpush1.xpose.msra.mxu0 0.0
    %2808 = vmatprep.mubr.f32.mxu0 0.0
    %2809 = vmatmul.mubr.f32.gmra.mrb[0].mxu0 %v2736
    %v2810 = vpop.f32.mrb[0].mxu0
    %v2811 = vadd.f32 0.0, %v2810
    %v2812 = vpop.f32.mrb[0].mxu0
    %2813 = vmatprep.mubr.f32.mxu0 0.0
    %2814 = vmatmul.mubr.f32.gmra.mrb[0].mxu0 %v2738
    %v2815 = vpop.f32.mrb[0].mxu0
    %v2816 = vadd.f32 0.0, %v2815
    %v2817 = vpop.f32.mrb[0].mxu0
    %2818 = vdwg.mxu0
    %2819 = vrot.lane.b32.xlu0 %v782, 96
    %v2820 = vpop.permute.xlu0 %2819
    %2821 = vrot.lane.b32.xlu0 %v784, 96
    %v2822 = vpop.permute.xlu0 %2821
    %v2823 = vsel %vm821, %v670, 0
    %v2825 = vsel %vm821, %v672, 0
    %v2827 = vsel %vm821, %v2820, 0
    %v2829 = vsel %vm821, %v2822, 0
    %2831 = vmatprep.subr.mxu0 0.0
    %2832 = vmatpush1.xpose.msra.mxu0 %v2827
    %2833 = vmatprep.subr.mxu0 0.0
    %2834 = vmatpush1.xpose.msra.mxu0 %v2829
    %2835 = vmatprep.subr.mxu0 0.0
    %2836 = vmatpush1.xpose.msra.mxu0 0.0
    %2837 = vmatprep.subr.mxu0 0.0
    %2838 = vmatpush1.xpose.msra.mxu0 0.0
    %2839 = vmatprep.subr.mxu0 0.0
    %2840 = vmatpush1.xpose.msra.mxu0 0.0
    %2841 = vmatprep.subr.mxu0 0.0
    %2842 = vmatpush1.xpose.msra.mxu0 0.0
    %2843 = vmatprep.subr.mxu0 0.0
    %2844 = vmatpush1.xpose.msra.mxu0 0.0
    %2845 = vmatprep.subr.mxu0 0.0
    %2846 = vmatpush1.xpose.msra.mxu0 0.0
    %2847 = vmatprep.subr.mxu0 0.0
    %2848 = vmatpush1.xpose.msra.mxu0 0.0
    %2849 = vmatprep.subr.mxu0 0.0
    %2850 = vmatpush1.xpose.msra.mxu0 0.0
    %2851 = vmatprep.subr.mxu0 0.0
    %2852 = vmatpush1.xpose.msra.mxu0 0.0
    %2853 = vmatprep.subr.mxu0 0.0
    %2854 = vmatpush1.xpose.msra.mxu0 0.0
    %2855 = vmatprep.subr.mxu0 0.0
    %2856 = vmatpush1.xpose.msra.mxu0 0.0
    %2857 = vmatprep.subr.mxu0 0.0
    %2858 = vmatpush1.xpose.msra.mxu0 0.0
    %2859 = vmatprep.subr.mxu0 0.0
    %2860 = vmatpush1.xpose.msra.mxu0 0.0
    %2861 = vmatprep.subr.mxu0 0.0
    %2862 = vmatpush1.xpose.msra.mxu0 0.0
    %2863 = vmatprep.subr.mxu0 0.0
    %2864 = vmatpush1.xpose.msra.mxu0 0.0
    %2865 = vmatprep.subr.mxu0 0.0
    %2866 = vmatpush1.xpose.msra.mxu0 0.0
    %2867 = vmatprep.subr.mxu0 0.0
    %2868 = vmatpush1.xpose.msra.mxu0 0.0
    %2869 = vmatprep.subr.mxu0 0.0
    %2870 = vmatpush1.xpose.msra.mxu0 0.0
    %2871 = vmatprep.subr.mxu0 0.0
    %2872 = vmatpush1.xpose.msra.mxu0 0.0
    %2873 = vmatprep.subr.mxu0 0.0
    %2874 = vmatpush1.xpose.msra.mxu0 0.0
    %2875 = vmatprep.subr.mxu0 0.0
    %2876 = vmatpush1.xpose.msra.mxu0 0.0
    %2877 = vmatprep.subr.mxu0 0.0
    %2878 = vmatpush1.xpose.msra.mxu0 0.0
    %2879 = vmatprep.subr.mxu0 0.0
    %2880 = vmatpush1.xpose.msra.mxu0 0.0
    %2881 = vmatprep.subr.mxu0 0.0
    %2882 = vmatpush1.xpose.msra.mxu0 0.0
    %2883 = vmatprep.subr.mxu0 0.0
    %2884 = vmatpush1.xpose.msra.mxu0 0.0
    %2885 = vmatprep.subr.mxu0 0.0
    %2886 = vmatpush1.xpose.msra.mxu0 0.0
    %2887 = vmatprep.subr.mxu0 0.0
    %2888 = vmatpush1.xpose.msra.mxu0 0.0
    %2889 = vmatprep.subr.mxu0 0.0
    %2890 = vmatpush1.xpose.msra.mxu0 0.0
    %2891 = vmatprep.subr.mxu0 0.0
    %2892 = vmatpush1.xpose.msra.mxu0 0.0
    %2893 = vmatprep.subr.mxu0 0.0
    %2894 = vmatpush1.xpose.msra.mxu0 0.0
    %2895 = vmatprep.mubr.f32.mxu0 0.0
    %2896 = vmatmul.mubr.f32.gmra.mrb[0].mxu0 %v2823
    %v2897 = vpop.f32.mrb[0].mxu0
    %v2898 = vadd.f32 0.0, %v2897
    %v2899 = vpop.f32.mrb[0].mxu0
    %2900 = vmatprep.mubr.f32.mxu0 0.0
    %2901 = vmatmul.mubr.f32.gmra.mrb[0].mxu0 %v2825
    %v2902 = vpop.f32.mrb[0].mxu0
    %v2903 = vadd.f32 0.0, %v2902
    %v2904 = vpop.f32.mrb[0].mxu0
    %2905 = vdwg.mxu0
    %2906 = vrot.lane.b32.xlu0 %v786, 96
    %v2907 = vpop.permute.xlu0 %2906
    %2908 = vrot.lane.b32.xlu0 %v788, 96
    %v2909 = vpop.permute.xlu0 %2908
    %v2910 = vsel %vm821, %v674, 0
    %v2912 = vsel %vm821, %v676, 0
    %v2914 = vsel %vm821, %v2907, 0
    %v2916 = vsel %vm821, %v2909, 0
    %2918 = vmatprep.subr.mxu0 0.0
    %2919 = vmatpush1.xpose.msra.mxu0 %v2914
    %2920 = vmatprep.subr.mxu0 0.0
    %2921 = vmatpush1.xpose.msra.mxu0 %v2916
    %2922 = vmatprep.subr.mxu0 0.0
    %2923 = vmatpush1.xpose.msra.mxu0 0.0
    %2924 = vmatprep.subr.mxu0 0.0
    %2925 = vmatpush1.xpose.msra.mxu0 0.0
    %2926 = vmatprep.subr.mxu0 0.0
    %2927 = vmatpush1.xpose.msra.mxu0 0.0
    %2928 = vmatprep.subr.mxu0 0.0
    %2929 = vmatpush1.xpose.msra.mxu0 0.0
    %2930 = vmatprep.subr.mxu0 0.0
    %2931 = vmatpush1.xpose.msra.mxu0 0.0
    %2932 = vmatprep.subr.mxu0 0.0
    %2933 = vmatpush1.xpose.msra.mxu0 0.0
    %2934 = vmatprep.subr.mxu0 0.0
    %2935 = vmatpush1.xpose.msra.mxu0 0.0
    %2936 = vmatprep.subr.mxu0 0.0
    %2937 = vmatpush1.xpose.msra.mxu0 0.0
    %2938 = vmatprep.subr.mxu0 0.0
    %2939 = vmatpush1.xpose.msra.mxu0 0.0
    %2940 = vmatprep.subr.mxu0 0.0
    %2941 = vmatpush1.xpose.msra.mxu0 0.0
    %2942 = vmatprep.subr.mxu0 0.0
    %2943 = vmatpush1.xpose.msra.mxu0 0.0
    %2944 = vmatprep.subr.mxu0 0.0
    %2945 = vmatpush1.xpose.msra.mxu0 0.0
    %2946 = vmatprep.subr.mxu0 0.0
    %2947 = vmatpush1.xpose.msra.mxu0 0.0
    %2948 = vmatprep.subr.mxu0 0.0
    %2949 = vmatpush1.xpose.msra.mxu0 0.0
    %2950 = vmatprep.subr.mxu0 0.0
    %2951 = vmatpush1.xpose.msra.mxu0 0.0
    %2952 = vmatprep.subr.mxu0 0.0
    %2953 = vmatpush1.xpose.msra.mxu0 0.0
    %2954 = vmatprep.subr.mxu0 0.0
    %2955 = vmatpush1.xpose.msra.mxu0 0.0
    %2956 = vmatprep.subr.mxu0 0.0
    %2957 = vmatpush1.xpose.msra.mxu0 0.0
    %2958 = vmatprep.subr.mxu0 0.0
    %2959 = vmatpush1.xpose.msra.mxu0 0.0
    %2960 = vmatprep.subr.mxu0 0.0
    %2961 = vmatpush1.xpose.msra.mxu0 0.0
    %2962 = vmatprep.subr.mxu0 0.0
    %2963 = vmatpush1.xpose.msra.mxu0 0.0
    %2964 = vmatprep.subr.mxu0 0.0
    %2965 = vmatpush1.xpose.msra.mxu0 0.0
    %2966 = vmatprep.subr.mxu0 0.0
    %2967 = vmatpush1.xpose.msra.mxu0 0.0
    %2968 = vmatprep.subr.mxu0 0.0
    %2969 = vmatpush1.xpose.msra.mxu0 0.0
    %2970 = vmatprep.subr.mxu0 0.0
    %2971 = vmatpush1.xpose.msra.mxu0 0.0
    %2972 = vmatprep.subr.mxu0 0.0
    %2973 = vmatpush1.xpose.msra.mxu0 0.0
    %2974 = vmatprep.subr.mxu0 0.0
    %2975 = vmatpush1.xpose.msra.mxu0 0.0
    %2976 = vmatprep.subr.mxu0 0.0
    %2977 = vmatpush1.xpose.msra.mxu0 0.0
    %2978 = vmatprep.subr.mxu0 0.0
    %2979 = vmatpush1.xpose.msra.mxu0 0.0
    %2980 = vmatprep.subr.mxu0 0.0
    %2981 = vmatpush1.xpose.msra.mxu0 0.0
    %2982 = vmatprep.mubr.f32.mxu0 0.0
    %2983 = vmatmul.mubr.f32.gmra.mrb[0].mxu0 %v2910
    %v2984 = vpop.f32.mrb[0].mxu0
    %v2985 = vadd.f32 0.0, %v2984
    %v2986 = vpop.f32.mrb[0].mxu0
    %2987 = vmatprep.mubr.f32.mxu0 0.0
    %2988 = vmatmul.mubr.f32.gmra.mrb[0].mxu0 %v2912
    %v2989 = vpop.f32.mrb[0].mxu0
    %v2990 = vadd.f32 0.0, %v2989
    %v2991 = vpop.f32.mrb[0].mxu0
    %2992 = vdwg.mxu0
    %2993 = vrot.lane.b32.xlu0 %v790, 96
    %v2994 = vpop.permute.xlu0 %2993
    %2995 = vrot.lane.b32.xlu0 %v792, 96
    %v2996 = vpop.permute.xlu0 %2995
    %v2997 = vsel %vm821, %v678, 0
    %v2999 = vsel %vm821, %v680, 0
    %v3001 = vsel %vm821, %v2994, 0
    %v3003 = vsel %vm821, %v2996, 0
    %3005 = vmatprep.subr.mxu0 0.0
    %3006 = vmatpush1.xpose.msra.mxu0 %v3001
    %3007 = vmatprep.subr.mxu0 0.0
    %3008 = vmatpush1.xpose.msra.mxu0 %v3003
    %3009 = vmatprep.subr.mxu0 0.0
    %3010 = vmatpush1.xpose.msra.mxu0 0.0
    %3011 = vmatprep.subr.mxu0 0.0
    %3012 = vmatpush1.xpose.msra.mxu0 0.0
    %3013 = vmatprep.subr.mxu0 0.0
    %3014 = vmatpush1.xpose.msra.mxu0 0.0
    %3015 = vmatprep.subr.mxu0 0.0
    %3016 = vmatpush1.xpose.msra.mxu0 0.0
    %3017 = vmatprep.subr.mxu0 0.0
    %3018 = vmatpush1.xpose.msra.mxu0 0.0
    %3019 = vmatprep.subr.mxu0 0.0
    %3020 = vmatpush1.xpose.msra.mxu0 0.0
    %3021 = vmatprep.subr.mxu0 0.0
    %3022 = vmatpush1.xpose.msra.mxu0 0.0
    %3023 = vmatprep.subr.mxu0 0.0
    %3024 = vmatpush1.xpose.msra.mxu0 0.0
    %3025 = vmatprep.subr.mxu0 0.0
    %3026 = vmatpush1.xpose.msra.mxu0 0.0
    %3027 = vmatprep.subr.mxu0 0.0
    %3028 = vmatpush1.xpose.msra.mxu0 0.0
    %3029 = vmatprep.subr.mxu0 0.0
    %3030 = vmatpush1.xpose.msra.mxu0 0.0
    %3031 = vmatprep.subr.mxu0 0.0
    %3032 = vmatpush1.xpose.msra.mxu0 0.0
    %3033 = vmatprep.subr.mxu0 0.0
    %3034 = vmatpush1.xpose.msra.mxu0 0.0
    %3035 = vmatprep.subr.mxu0 0.0
    %3036 = vmatpush1.xpose.msra.mxu0 0.0
    %3037 = vmatprep.subr.mxu0 0.0
    %3038 = vmatpush1.xpose.msra.mxu0 0.0
    %3039 = vmatprep.subr.mxu0 0.0
    %3040 = vmatpush1.xpose.msra.mxu0 0.0
    %3041 = vmatprep.subr.mxu0 0.0
    %3042 = vmatpush1.xpose.msra.mxu0 0.0
    %3043 = vmatprep.subr.mxu0 0.0
    %3044 = vmatpush1.xpose.msra.mxu0 0.0
    %3045 = vmatprep.subr.mxu0 0.0
    %3046 = vmatpush1.xpose.msra.mxu0 0.0
    %3047 = vmatprep.subr.mxu0 0.0
    %3048 = vmatpush1.xpose.msra.mxu0 0.0
    %3049 = vmatprep.subr.mxu0 0.0
    %3050 = vmatpush1.xpose.msra.mxu0 0.0
    %3051 = vmatprep.subr.mxu0 0.0
    %3052 = vmatpush1.xpose.msra.mxu0 0.0
    %3053 = vmatprep.subr.mxu0 0.0
    %3054 = vmatpush1.xpose.msra.mxu0 0.0
    %3055 = vmatprep.subr.mxu0 0.0
    %3056 = vmatpush1.xpose.msra.mxu0 0.0
    %3057 = vmatprep.subr.mxu0 0.0
    %3058 = vmatpush1.xpose.msra.mxu0 0.0
    %3059 = vmatprep.subr.mxu0 0.0
    %3060 = vmatpush1.xpose.msra.mxu0 0.0
    %3061 = vmatprep.subr.mxu0 0.0
    %3062 = vmatpush1.xpose.msra.mxu0 0.0
    %3063 = vmatprep.subr.mxu0 0.0
    %3064 = vmatpush1.xpose.msra.mxu0 0.0
    %3065 = vmatprep.subr.mxu0 0.0
    %3066 = vmatpush1.xpose.msra.mxu0 0.0
    %3067 = vmatprep.subr.mxu0 0.0
    %3068 = vmatpush1.xpose.msra.mxu0 0.0
    %3069 = vmatprep.mubr.f32.mxu0 0.0
    %3070 = vmatmul.mubr.f32.gmra.mrb[0].mxu0 %v2997
    %v3071 = vpop.f32.mrb[0].mxu0
    %v3072 = vadd.f32 0.0, %v3071
    %v3073 = vpop.f32.mrb[0].mxu0
    %3074 = vmatprep.mubr.f32.mxu0 0.0
    %3075 = vmatmul.mubr.f32.gmra.mrb[0].mxu0 %v2999
    %v3076 = vpop.f32.mrb[0].mxu0
    %v3077 = vadd.f32 0.0, %v3076
    %v3078 = vpop.f32.mrb[0].mxu0
    %3079 = vdwg.mxu0
    %3080 = vrot.lane.b32.xlu0 %v794, 96
    %v3081 = vpop.permute.xlu0 %3080
    %3082 = vrot.lane.b32.xlu0 %v796, 96
    %v3083 = vpop.permute.xlu0 %3082
    %v3084 = vsel %vm821, %v682, 0
    %v3086 = vsel %vm821, %v684, 0
    %v3088 = vsel %vm821, %v3081, 0
    %v3090 = vsel %vm821, %v3083, 0
    %3092 = vmatprep.subr.mxu0 0.0
    %3093 = vmatpush1.xpose.msra.mxu0 %v3088
    %3094 = vmatprep.subr.mxu0 0.0
    %3095 = vmatpush1.xpose.msra.mxu0 %v3090
    %3096 = vmatprep.subr.mxu0 0.0
    %3097 = vmatpush1.xpose.msra.mxu0 0.0
    %3098 = vmatprep.subr.mxu0 0.0
    %3099 = vmatpush1.xpose.msra.mxu0 0.0
    %3100 = vmatprep.subr.mxu0 0.0
    %3101 = vmatpush1.xpose.msra.mxu0 0.0
    %3102 = vmatprep.subr.mxu0 0.0
    %3103 = vmatpush1.xpose.msra.mxu0 0.0
    %3104 = vmatprep.subr.mxu0 0.0
    %3105 = vmatpush1.xpose.msra.mxu0 0.0
    %3106 = vmatprep.subr.mxu0 0.0
    %3107 = vmatpush1.xpose.msra.mxu0 0.0
    %3108 = vmatprep.subr.mxu0 0.0
    %3109 = vmatpush1.xpose.msra.mxu0 0.0
    %3110 = vmatprep.subr.mxu0 0.0
    %3111 = vmatpush1.xpose.msra.mxu0 0.0
    %3112 = vmatprep.subr.mxu0 0.0
    %3113 = vmatpush1.xpose.msra.mxu0 0.0
    %3114 = vmatprep.subr.mxu0 0.0
    %3115 = vmatpush1.xpose.msra.mxu0 0.0
    %3116 = vmatprep.subr.mxu0 0.0
    %3117 = vmatpush1.xpose.msra.mxu0 0.0
    %3118 = vmatprep.subr.mxu0 0.0
    %3119 = vmatpush1.xpose.msra.mxu0 0.0
    %3120 = vmatprep.subr.mxu0 0.0
    %3121 = vmatpush1.xpose.msra.mxu0 0.0
    %3122 = vmatprep.subr.mxu0 0.0
    %3123 = vmatpush1.xpose.msra.mxu0 0.0
    %3124 = vmatprep.subr.mxu0 0.0
    %3125 = vmatpush1.xpose.msra.mxu0 0.0
    %3126 = vmatprep.subr.mxu0 0.0
    %3127 = vmatpush1.xpose.msra.mxu0 0.0
    %3128 = vmatprep.subr.mxu0 0.0
    %3129 = vmatpush1.xpose.msra.mxu0 0.0
    %3130 = vmatprep.subr.mxu0 0.0
    %3131 = vmatpush1.xpose.msra.mxu0 0.0
    %3132 = vmatprep.subr.mxu0 0.0
    %3133 = vmatpush1.xpose.msra.mxu0 0.0
    %3134 = vmatprep.subr.mxu0 0.0
    %3135 = vmatpush1.xpose.msra.mxu0 0.0
    %3136 = vmatprep.subr.mxu0 0.0
    %3137 = vmatpush1.xpose.msra.mxu0 0.0
    %3138 = vmatprep.subr.mxu0 0.0
    %3139 = vmatpush1.xpose.msra.mxu0 0.0
    %3140 = vmatprep.subr.mxu0 0.0
    %3141 = vmatpush1.xpose.msra.mxu0 0.0
    %3142 = vmatprep.subr.mxu0 0.0
    %3143 = vmatpush1.xpose.msra.mxu0 0.0
    %3144 = vmatprep.subr.mxu0 0.0
    %3145 = vmatpush1.xpose.msra.mxu0 0.0
    %3146 = vmatprep.subr.mxu0 0.0
    %3147 = vmatpush1.xpose.msra.mxu0 0.0
    %3148 = vmatprep.subr.mxu0 0.0
    %3149 = vmatpush1.xpose.msra.mxu0 0.0
    %3150 = vmatprep.subr.mxu0 0.0
    %3151 = vmatpush1.xpose.msra.mxu0 0.0
    %3152 = vmatprep.subr.mxu0 0.0
    %3153 = vmatpush1.xpose.msra.mxu0 0.0
    %3154 = vmatprep.subr.mxu0 0.0
    %3155 = vmatpush1.xpose.msra.mxu0 0.0
    %3156 = vmatprep.mubr.f32.mxu0 0.0
    %3157 = vmatmul.mubr.f32.gmra.mrb[0].mxu0 %v3084
    %v3158 = vpop.f32.mrb[0].mxu0
    %v3159 = vadd.f32 0.0, %v3158
    %v3160 = vpop.f32.mrb[0].mxu0
    %3161 = vmatprep.mubr.f32.mxu0 0.0
    %3162 = vmatmul.mubr.f32.gmra.mrb[0].mxu0 %v3086
    %v3163 = vpop.f32.mrb[0].mxu0
    %v3164 = vadd.f32 0.0, %v3163
    %v3165 = vpop.f32.mrb[0].mxu0
    %3166 = vdwg.mxu0
    %3167 = vrot.lane.b32.xlu0 %v798, 96
    %v3168 = vpop.permute.xlu0 %3167
    %3169 = vrot.lane.b32.xlu0 %v800, 96
    %v3170 = vpop.permute.xlu0 %3169
    %v3171 = vsel %vm821, %v686, 0
    %v3173 = vsel %vm821, %v688, 0
    %v3175 = vsel %vm821, %v3168, 0
    %v3177 = vsel %vm821, %v3170, 0
    %3179 = vmatprep.subr.mxu0 0.0
    %3180 = vmatpush1.xpose.msra.mxu0 %v3175
    %3181 = vmatprep.subr.mxu0 0.0
    %3182 = vmatpush1.xpose.msra.mxu0 %v3177
    %3183 = vmatprep.subr.mxu0 0.0
    %3184 = vmatpush1.xpose.msra.mxu0 0.0
    %3185 = vmatprep.subr.mxu0 0.0
    %3186 = vmatpush1.xpose.msra.mxu0 0.0
    %3187 = vmatprep.subr.mxu0 0.0
    %3188 = vmatpush1.xpose.msra.mxu0 0.0
    %3189 = vmatprep.subr.mxu0 0.0
    %3190 = vmatpush1.xpose.msra.mxu0 0.0
    %3191 = vmatprep.subr.mxu0 0.0
    %3192 = vmatpush1.xpose.msra.mxu0 0.0
    %3193 = vmatprep.subr.mxu0 0.0
    %3194 = vmatpush1.xpose.msra.mxu0 0.0
    %3195 = vmatprep.subr.mxu0 0.0
    %3196 = vmatpush1.xpose.msra.mxu0 0.0
    %3197 = vmatprep.subr.mxu0 0.0
    %3198 = vmatpush1.xpose.msra.mxu0 0.0
    %3199 = vmatprep.subr.mxu0 0.0
    %3200 = vmatpush1.xpose.msra.mxu0 0.0
    %3201 = vmatprep.subr.mxu0 0.0
    %3202 = vmatpush1.xpose.msra.mxu0 0.0
    %3203 = vmatprep.subr.mxu0 0.0
    %3204 = vmatpush1.xpose.msra.mxu0 0.0
    %3205 = vmatprep.subr.mxu0 0.0
    %3206 = vmatpush1.xpose.msra.mxu0 0.0
    %3207 = vmatprep.subr.mxu0 0.0
    %3208 = vmatpush1.xpose.msra.mxu0 0.0
    %3209 = vmatprep.subr.mxu0 0.0
    %3210 = vmatpush1.xpose.msra.mxu0 0.0
    %3211 = vmatprep.subr.mxu0 0.0
    %3212 = vmatpush1.xpose.msra.mxu0 0.0
    %3213 = vmatprep.subr.mxu0 0.0
    %3214 = vmatpush1.xpose.msra.mxu0 0.0
    %3215 = vmatprep.subr.mxu0 0.0
    %3216 = vmatpush1.xpose.msra.mxu0 0.0
    %3217 = vmatprep.subr.mxu0 0.0
    %3218 = vmatpush1.xpose.msra.mxu0 0.0
    %3219 = vmatprep.subr.mxu0 0.0
    %3220 = vmatpush1.xpose.msra.mxu0 0.0
    %3221 = vmatprep.subr.mxu0 0.0
    %3222 = vmatpush1.xpose.msra.mxu0 0.0
    %3223 = vmatprep.subr.mxu0 0.0
    %3224 = vmatpush1.xpose.msra.mxu0 0.0
    %3225 = vmatprep.subr.mxu0 0.0
    %3226 = vmatpush1.xpose.msra.mxu0 0.0
    %3227 = vmatprep.subr.mxu0 0.0
    %3228 = vmatpush1.xpose.msra.mxu0 0.0
    %3229 = vmatprep.subr.mxu0 0.0
    %3230 = vmatpush1.xpose.msra.mxu0 0.0
    %3231 = vmatprep.subr.mxu0 0.0
    %3232 = vmatpush1.xpose.msra.mxu0 0.0
    %3233 = vmatprep.subr.mxu0 0.0
    %3234 = vmatpush1.xpose.msra.mxu0 0.0
    %3235 = vmatprep.subr.mxu0 0.0
    %3236 = vmatpush1.xpose.msra.mxu0 0.0
    %3237 = vmatprep.subr.mxu0 0.0
    %3238 = vmatpush1.xpose.msra.mxu0 0.0
    %3239 = vmatprep.subr.mxu0 0.0
    %3240 = vmatpush1.xpose.msra.mxu0 0.0
    %3241 = vmatprep.subr.mxu0 0.0
    %3242 = vmatpush1.xpose.msra.mxu0 0.0
    %3243 = vmatprep.mubr.f32.mxu0 0.0
    %3244 = vmatmul.mubr.f32.gmra.mrb[0].mxu0 %v3171
    %v3245 = vpop.f32.mrb[0].mxu0
    %v3246 = vadd.f32 0.0, %v3245
    %v3247 = vpop.f32.mrb[0].mxu0
    %3248 = vmatprep.mubr.f32.mxu0 0.0
    %3249 = vmatmul.mubr.f32.gmra.mrb[0].mxu0 %v3173
    %v3250 = vpop.f32.mrb[0].mxu0
    %v3251 = vadd.f32 0.0, %v3250
    %v3252 = vpop.f32.mrb[0].mxu0
    %3253 = vdwg.mxu0
    %3254 = vrot.lane.b32.xlu0 %v802, 96
    %v3255 = vpop.permute.xlu0 %3254
    %3256 = vrot.lane.b32.xlu0 %v804, 96
    %v3257 = vpop.permute.xlu0 %3256
    %v3258 = vsel %vm821, %v690, 0
    %v3260 = vsel %vm821, %v692, 0
    %v3262 = vsel %vm821, %v3255, 0
    %v3264 = vsel %vm821, %v3257, 0
    %3266 = vmatprep.subr.mxu0 0.0
    %3267 = vmatpush1.xpose.msra.mxu0 %v3262
    %3268 = vmatprep.subr.mxu0 0.0
    %3269 = vmatpush1.xpose.msra.mxu0 %v3264
    %3270 = vmatprep.subr.mxu0 0.0
    %3271 = vmatpush1.xpose.msra.mxu0 0.0
    %3272 = vmatprep.subr.mxu0 0.0
    %3273 = vmatpush1.xpose.msra.mxu0 0.0
    %3274 = vmatprep.subr.mxu0 0.0
    %3275 = vmatpush1.xpose.msra.mxu0 0.0
    %3276 = vmatprep.subr.mxu0 0.0
    %3277 = vmatpush1.xpose.msra.mxu0 0.0
    %3278 = vmatprep.subr.mxu0 0.0
    %3279 = vmatpush1.xpose.msra.mxu0 0.0
    %3280 = vmatprep.subr.mxu0 0.0
    %3281 = vmatpush1.xpose.msra.mxu0 0.0
    %3282 = vmatprep.subr.mxu0 0.0
    %3283 = vmatpush1.xpose.msra.mxu0 0.0
    %3284 = vmatprep.subr.mxu0 0.0
    %3285 = vmatpush1.xpose.msra.mxu0 0.0
    %3286 = vmatprep.subr.mxu0 0.0
    %3287 = vmatpush1.xpose.msra.mxu0 0.0
    %3288 = vmatprep.subr.mxu0 0.0
    %3289 = vmatpush1.xpose.msra.mxu0 0.0
    %3290 = vmatprep.subr.mxu0 0.0
    %3291 = vmatpush1.xpose.msra.mxu0 0.0
    %3292 = vmatprep.subr.mxu0 0.0
    %3293 = vmatpush1.xpose.msra.mxu0 0.0
    %3294 = vmatprep.subr.mxu0 0.0
    %3295 = vmatpush1.xpose.msra.mxu0 0.0
    %3296 = vmatprep.subr.mxu0 0.0
    %3297 = vmatpush1.xpose.msra.mxu0 0.0
    %3298 = vmatprep.subr.mxu0 0.0
    %3299 = vmatpush1.xpose.msra.mxu0 0.0
    %3300 = vmatprep.subr.mxu0 0.0
    %3301 = vmatpush1.xpose.msra.mxu0 0.0
    %3302 = vmatprep.subr.mxu0 0.0
    %3303 = vmatpush1.xpose.msra.mxu0 0.0
    %3304 = vmatprep.subr.mxu0 0.0
    %3305 = vmatpush1.xpose.msra.mxu0 0.0
    %3306 = vmatprep.subr.mxu0 0.0
    %3307 = vmatpush1.xpose.msra.mxu0 0.0
    %3308 = vmatprep.subr.mxu0 0.0
    %3309 = vmatpush1.xpose.msra.mxu0 0.0
    %3310 = vmatprep.subr.mxu0 0.0
    %3311 = vmatpush1.xpose.msra.mxu0 0.0
    %3312 = vmatprep.subr.mxu0 0.0
    %3313 = vmatpush1.xpose.msra.mxu0 0.0
    %3314 = vmatprep.subr.mxu0 0.0
    %3315 = vmatpush1.xpose.msra.mxu0 0.0
    %3316 = vmatprep.subr.mxu0 0.0
    %3317 = vmatpush1.xpose.msra.mxu0 0.0
    %3318 = vmatprep.subr.mxu0 0.0
    %3319 = vmatpush1.xpose.msra.mxu0 0.0
    %3320 = vmatprep.subr.mxu0 0.0
    %3321 = vmatpush1.xpose.msra.mxu0 0.0
    %3322 = vmatprep.subr.mxu0 0.0
    %3323 = vmatpush1.xpose.msra.mxu0 0.0
    %3324 = vmatprep.subr.mxu0 0.0
    %3325 = vmatpush1.xpose.msra.mxu0 0.0
    %3326 = vmatprep.subr.mxu0 0.0
    %3327 = vmatpush1.xpose.msra.mxu0 0.0
    %3328 = vmatprep.subr.mxu0 0.0
    %3329 = vmatpush1.xpose.msra.mxu0 0.0
    %3330 = vmatprep.mubr.f32.mxu0 0.0
    %3331 = vmatmul.mubr.f32.gmra.mrb[0].mxu0 %v3258
    %v3332 = vpop.f32.mrb[0].mxu0
    %v3333 = vadd.f32 0.0, %v3332
    %v3334 = vpop.f32.mrb[0].mxu0
    %3335 = vmatprep.mubr.f32.mxu0 0.0
    %3336 = vmatmul.mubr.f32.gmra.mrb[0].mxu0 %v3260
    %v3337 = vpop.f32.mrb[0].mxu0
    %v3338 = vadd.f32 0.0, %v3337
    %v3339 = vpop.f32.mrb[0].mxu0
    %3340 = vdwg.mxu0
    %3341 = vrot.lane.b32.xlu0 %v806, 96
    %v3342 = vpop.permute.xlu0 %3341
    %3343 = vrot.lane.b32.xlu0 %v808, 96
    %v3344 = vpop.permute.xlu0 %3343
    %v3345 = vsel %vm821, %v694, 0
    %v3347 = vsel %vm821, %v696, 0
    %v3349 = vsel %vm821, %v3342, 0
    %v3351 = vsel %vm821, %v3344, 0
    %3353 = vmatprep.subr.mxu0 0.0
    %3354 = vmatpush1.xpose.msra.mxu0 %v3349
    %3355 = vmatprep.subr.mxu0 0.0
    %3356 = vmatpush1.xpose.msra.mxu0 %v3351
    %3357 = vmatprep.subr.mxu0 0.0
    %3358 = vmatpush1.xpose.msra.mxu0 0.0
    %3359 = vmatprep.subr.mxu0 0.0
    %3360 = vmatpush1.xpose.msra.mxu0 0.0
    %3361 = vmatprep.subr.mxu0 0.0
    %3362 = vmatpush1.xpose.msra.mxu0 0.0
    %3363 = vmatprep.subr.mxu0 0.0
    %3364 = vmatpush1.xpose.msra.mxu0 0.0
    %3365 = vmatprep.subr.mxu0 0.0
    %3366 = vmatpush1.xpose.msra.mxu0 0.0
    %3367 = vmatprep.subr.mxu0 0.0
    %3368 = vmatpush1.xpose.msra.mxu0 0.0
    %3369 = vmatprep.subr.mxu0 0.0
    %3370 = vmatpush1.xpose.msra.mxu0 0.0
    %3371 = vmatprep.subr.mxu0 0.0
    %3372 = vmatpush1.xpose.msra.mxu0 0.0
    %3373 = vmatprep.subr.mxu0 0.0
    %3374 = vmatpush1.xpose.msra.mxu0 0.0
    %3375 = vmatprep.subr.mxu0 0.0
    %3376 = vmatpush1.xpose.msra.mxu0 0.0
    %3377 = vmatprep.subr.mxu0 0.0
    %3378 = vmatpush1.xpose.msra.mxu0 0.0
    %3379 = vmatprep.subr.mxu0 0.0
    %3380 = vmatpush1.xpose.msra.mxu0 0.0
    %3381 = vmatprep.subr.mxu0 0.0
    %3382 = vmatpush1.xpose.msra.mxu0 0.0
    %3383 = vmatprep.subr.mxu0 0.0
    %3384 = vmatpush1.xpose.msra.mxu0 0.0
    %3385 = vmatprep.subr.mxu0 0.0
    %3386 = vmatpush1.xpose.msra.mxu0 0.0
    %3387 = vmatprep.subr.mxu0 0.0
    %3388 = vmatpush1.xpose.msra.mxu0 0.0
    %3389 = vmatprep.subr.mxu0 0.0
    %3390 = vmatpush1.xpose.msra.mxu0 0.0
    %3391 = vmatprep.subr.mxu0 0.0
    %3392 = vmatpush1.xpose.msra.mxu0 0.0
    %3393 = vmatprep.subr.mxu0 0.0
    %3394 = vmatpush1.xpose.msra.mxu0 0.0
    %3395 = vmatprep.subr.mxu0 0.0
    %3396 = vmatpush1.xpose.msra.mxu0 0.0
    %3397 = vmatprep.subr.mxu0 0.0
    %3398 = vmatpush1.xpose.msra.mxu0 0.0
    %3399 = vmatprep.subr.mxu0 0.0
    %3400 = vmatpush1.xpose.msra.mxu0 0.0
    %3401 = vmatprep.subr.mxu0 0.0
    %3402 = vmatpush1.xpose.msra.mxu0 0.0
    %3403 = vmatprep.subr.mxu0 0.0
    %3404 = vmatpush1.xpose.msra.mxu0 0.0
    %3405 = vmatprep.subr.mxu0 0.0
    %3406 = vmatpush1.xpose.msra.mxu0 0.0
    %3407 = vmatprep.subr.mxu0 0.0
    %3408 = vmatpush1.xpose.msra.mxu0 0.0
    %3409 = vmatprep.subr.mxu0 0.0
    %3410 = vmatpush1.xpose.msra.mxu0 0.0
    %3411 = vmatprep.subr.mxu0 0.0
    %3412 = vmatpush1.xpose.msra.mxu0 0.0
    %3413 = vmatprep.subr.mxu0 0.0
    %3414 = vmatpush1.xpose.msra.mxu0 0.0
    %3415 = vmatprep.subr.mxu0 0.0
    %3416 = vmatpush1.xpose.msra.mxu0 0.0
    %3417 = vmatprep.mubr.f32.mxu0 0.0
    %3418 = vmatmul.mubr.f32.gmra.mrb[0].mxu0 %v3345
    %v3419 = vpop.f32.mrb[0].mxu0
    %v3420 = vadd.f32 0.0, %v3419
    %v3421 = vpop.f32.mrb[0].mxu0
    %3422 = vmatprep.mubr.f32.mxu0 0.0
    %3423 = vmatmul.mubr.f32.gmra.mrb[0].mxu0 %v3347
    %v3424 = vpop.f32.mrb[0].mxu0
    %v3425 = vadd.f32 0.0, %v3424
    %v3426 = vpop.f32.mrb[0].mxu0
    %3427 = vdwg.mxu0
    %3428 = vrot.lane.b32.xlu0 %v810, 96
    %v3429 = vpop.permute.xlu0 %3428
    %3430 = vrot.lane.b32.xlu0 %v812, 96
    %v3431 = vpop.permute.xlu0 %3430
    %v3432 = vsel %vm821, %v698, 0
    %v3434 = vsel %vm821, %v700, 0
    %v3436 = vsel %vm821, %v3429, 0
    %v3438 = vsel %vm821, %v3431, 0
    %3440 = vmatprep.subr.mxu0 0.0
    %3441 = vmatpush1.xpose.msra.mxu0 %v3436
    %3442 = vmatprep.subr.mxu0 0.0
    %3443 = vmatpush1.xpose.msra.mxu0 %v3438
    %3444 = vmatprep.subr.mxu0 0.0
    %3445 = vmatpush1.xpose.msra.mxu0 0.0
    %3446 = vmatprep.subr.mxu0 0.0
    %3447 = vmatpush1.xpose.msra.mxu0 0.0
    %3448 = vmatprep.subr.mxu0 0.0
    %3449 = vmatpush1.xpose.msra.mxu0 0.0
    %3450 = vmatprep.subr.mxu0 0.0
    %3451 = vmatpush1.xpose.msra.mxu0 0.0
    %3452 = vmatprep.subr.mxu0 0.0
    %3453 = vmatpush1.xpose.msra.mxu0 0.0
    %3454 = vmatprep.subr.mxu0 0.0
    %3455 = vmatpush1.xpose.msra.mxu0 0.0
    %3456 = vmatprep.subr.mxu0 0.0
    %3457 = vmatpush1.xpose.msra.mxu0 0.0
    %3458 = vmatprep.subr.mxu0 0.0
    %3459 = vmatpush1.xpose.msra.mxu0 0.0
    %3460 = vmatprep.subr.mxu0 0.0
    %3461 = vmatpush1.xpose.msra.mxu0 0.0
    %3462 = vmatprep.subr.mxu0 0.0
    %3463 = vmatpush1.xpose.msra.mxu0 0.0
    %3464 = vmatprep.subr.mxu0 0.0
    %3465 = vmatpush1.xpose.msra.mxu0 0.0
    %3466 = vmatprep.subr.mxu0 0.0
    %3467 = vmatpush1.xpose.msra.mxu0 0.0
    %3468 = vmatprep.subr.mxu0 0.0
    %3469 = vmatpush1.xpose.msra.mxu0 0.0
    %3470 = vmatprep.subr.mxu0 0.0
    %3471 = vmatpush1.xpose.msra.mxu0 0.0
    %3472 = vmatprep.subr.mxu0 0.0
    %3473 = vmatpush1.xpose.msra.mxu0 0.0
    %3474 = vmatprep.subr.mxu0 0.0
    %3475 = vmatpush1.xpose.msra.mxu0 0.0
    %3476 = vmatprep.subr.mxu0 0.0
    %3477 = vmatpush1.xpose.msra.mxu0 0.0
    %3478 = vmatprep.subr.mxu0 0.0
    %3479 = vmatpush1.xpose.msra.mxu0 0.0
    %3480 = vmatprep.subr.mxu0 0.0
    %3481 = vmatpush1.xpose.msra.mxu0 0.0
    %3482 = vmatprep.subr.mxu0 0.0
    %3483 = vmatpush1.xpose.msra.mxu0 0.0
    %3484 = vmatprep.subr.mxu0 0.0
    %3485 = vmatpush1.xpose.msra.mxu0 0.0
    %3486 = vmatprep.subr.mxu0 0.0
    %3487 = vmatpush1.xpose.msra.mxu0 0.0
    %3488 = vmatprep.subr.mxu0 0.0
    %3489 = vmatpush1.xpose.msra.mxu0 0.0
    %3490 = vmatprep.subr.mxu0 0.0
    %3491 = vmatpush1.xpose.msra.mxu0 0.0
    %3492 = vmatprep.subr.mxu0 0.0
    %3493 = vmatpush1.xpose.msra.mxu0 0.0
    %3494 = vmatprep.subr.mxu0 0.0
    %3495 = vmatpush1.xpose.msra.mxu0 0.0
    %3496 = vmatprep.subr.mxu0 0.0
    %3497 = vmatpush1.xpose.msra.mxu0 0.0
    %3498 = vmatprep.subr.mxu0 0.0
    %3499 = vmatpush1.xpose.msra.mxu0 0.0
    %3500 = vmatprep.subr.mxu0 0.0
    %3501 = vmatpush1.xpose.msra.mxu0 0.0
    %3502 = vmatprep.subr.mxu0 0.0
    %3503 = vmatpush1.xpose.msra.mxu0 0.0
    %3504 = vmatprep.mubr.f32.mxu0 0.0
    %3505 = vmatmul.mubr.f32.gmra.mrb[0].mxu0 %v3432
    %v3506 = vpop.f32.mrb[0].mxu0
    %v3507 = vadd.f32 0.0, %v3506
    %v3508 = vpop.f32.mrb[0].mxu0
    %3509 = vmatprep.mubr.f32.mxu0 0.0
    %3510 = vmatmul.mubr.f32.gmra.mrb[0].mxu0 %v3434
    %v3511 = vpop.f32.mrb[0].mxu0
    %v3512 = vadd.f32 0.0, %v3511
    %v3513 = vpop.f32.mrb[0].mxu0
    %3514 = vdwg.mxu0
    %3515 = vrot.lane.b32.xlu0 %v814, 96
    %v3516 = vpop.permute.xlu0 %3515
    %3517 = vrot.lane.b32.xlu0 %v816, 96
    %v3518 = vpop.permute.xlu0 %3517
    %v3519 = vsel %vm821, %v702, 0
    %v3521 = vsel %vm821, %v704, 0
    %v3523 = vsel %vm821, %v3516, 0
    %v3525 = vsel %vm821, %v3518, 0
    %3527 = vmatprep.subr.mxu0 0.0
    %3528 = vmatpush1.xpose.msra.mxu0 %v3523
    %3529 = vmatprep.subr.mxu0 0.0
    %3530 = vmatpush1.xpose.msra.mxu0 %v3525
    %3531 = vmatprep.subr.mxu0 0.0
    %3532 = vmatpush1.xpose.msra.mxu0 0.0
    %3533 = vmatprep.subr.mxu0 0.0
    %3534 = vmatpush1.xpose.msra.mxu0 0.0
    %3535 = vmatprep.subr.mxu0 0.0
    %3536 = vmatpush1.xpose.msra.mxu0 0.0
    %3537 = vmatprep.subr.mxu0 0.0
    %3538 = vmatpush1.xpose.msra.mxu0 0.0
    %3539 = vmatprep.subr.mxu0 0.0
    %3540 = vmatpush1.xpose.msra.mxu0 0.0
    %3541 = vmatprep.subr.mxu0 0.0
    %3542 = vmatpush1.xpose.msra.mxu0 0.0
    %3543 = vmatprep.subr.mxu0 0.0
    %3544 = vmatpush1.xpose.msra.mxu0 0.0
    %3545 = vmatprep.subr.mxu0 0.0
    %3546 = vmatpush1.xpose.msra.mxu0 0.0
    %3547 = vmatprep.subr.mxu0 0.0
    %3548 = vmatpush1.xpose.msra.mxu0 0.0
    %3549 = vmatprep.subr.mxu0 0.0
    %3550 = vmatpush1.xpose.msra.mxu0 0.0
    %3551 = vmatprep.subr.mxu0 0.0
    %3552 = vmatpush1.xpose.msra.mxu0 0.0
    %3553 = vmatprep.subr.mxu0 0.0
    %3554 = vmatpush1.xpose.msra.mxu0 0.0
    %3555 = vmatprep.subr.mxu0 0.0
    %3556 = vmatpush1.xpose.msra.mxu0 0.0
    %3557 = vmatprep.subr.mxu0 0.0
    %3558 = vmatpush1.xpose.msra.mxu0 0.0
    %3559 = vmatprep.subr.mxu0 0.0
    %3560 = vmatpush1.xpose.msra.mxu0 0.0
    %3561 = vmatprep.subr.mxu0 0.0
    %3562 = vmatpush1.xpose.msra.mxu0 0.0
    %3563 = vmatprep.subr.mxu0 0.0
    %3564 = vmatpush1.xpose.msra.mxu0 0.0
    %3565 = vmatprep.subr.mxu0 0.0
    %3566 = vmatpush1.xpose.msra.mxu0 0.0
    %3567 = vmatprep.subr.mxu0 0.0
    %3568 = vmatpush1.xpose.msra.mxu0 0.0
    %3569 = vmatprep.subr.mxu0 0.0
    %3570 = vmatpush1.xpose.msra.mxu0 0.0
    %3571 = vmatprep.subr.mxu0 0.0
    %3572 = vmatpush1.xpose.msra.mxu0 0.0
    %3573 = vmatprep.subr.mxu0 0.0
    %3574 = vmatpush1.xpose.msra.mxu0 0.0
    %3575 = vmatprep.subr.mxu0 0.0
    %3576 = vmatpush1.xpose.msra.mxu0 0.0
    %3577 = vmatprep.subr.mxu0 0.0
    %3578 = vmatpush1.xpose.msra.mxu0 0.0
    %3579 = vmatprep.subr.mxu0 0.0
    %3580 = vmatpush1.xpose.msra.mxu0 0.0
    %3581 = vmatprep.subr.mxu0 0.0
    %3582 = vmatpush1.xpose.msra.mxu0 0.0
    %3583 = vmatprep.subr.mxu0 0.0
    %3584 = vmatpush1.xpose.msra.mxu0 0.0
    %3585 = vmatprep.subr.mxu0 0.0
    %3586 = vmatpush1.xpose.msra.mxu0 0.0
    %3587 = vmatprep.subr.mxu0 0.0
    %3588 = vmatpush1.xpose.msra.mxu0 0.0
    %3589 = vmatprep.subr.mxu0 0.0
    %3590 = vmatpush1.xpose.msra.mxu0 0.0
    %3591 = vmatprep.mubr.f32.mxu0 0.0
    %3592 = vmatmul.mubr.f32.gmra.mrb[0].mxu0 %v3519
    %v3593 = vpop.f32.mrb[0].mxu0
    %v3594 = vadd.f32 0.0, %v3593
    %v3595 = vpop.f32.mrb[0].mxu0
    %3596 = vmatprep.mubr.f32.mxu0 0.0
    %3597 = vmatmul.mubr.f32.gmra.mrb[0].mxu0 %v3521
    %v3598 = vpop.f32.mrb[0].mxu0
    %v3599 = vadd.f32 0.0, %v3598
    %v3600 = vpop.f32.mrb[0].mxu0
    %3601 = vdwg.mxu0
    %v3602 = vld [vmem:[#allocation7] sm:$0xff]
    %v3603 = vld [vmem:[#allocation7 + $0x8] sm:$0xff]
    %v3604 = vld [vmem:[#allocation7 + $0x10] sm:$0xff]
    %v3605 = vld [vmem:[#allocation7 + $0x18] sm:$0xff]
    %v3606 = vld [vmem:[#allocation7 + $0x20] sm:$0xff]
    %v3607 = vld [vmem:[#allocation7 + $0x28] sm:$0xff]
    %v3608 = vld [vmem:[#allocation7 + $0x30] sm:$0xff]
    %v3609 = vld [vmem:[#allocation7 + $0x38] sm:$0xff]
    %v3610 = vadd.f32 %v897, %v3602
    %v3611 = vadd.f32 %v902, %v3603
    %v3612 = vadd.f32 %v984, %v3602
    %v3613 = vadd.f32 %v989, %v3603
    %v3614 = vadd.f32 %v1071, %v3602
    %v3615 = vadd.f32 %v1076, %v3603
    %v3616 = vadd.f32 %v1158, %v3602
    %v3617 = vadd.f32 %v1163, %v3603
    %v3618 = vadd.f32 %v1245, %v3602
    %v3619 = vadd.f32 %v1250, %v3603
    %v3620 = vadd.f32 %v1332, %v3602
    %v3621 = vadd.f32 %v1337, %v3603
    %v3622 = vadd.f32 %v1419, %v3602
    %v3623 = vadd.f32 %v1424, %v3603
    %v3624 = vadd.f32 %v1506, %v3602
    %v3625 = vadd.f32 %v1511, %v3603
    %v3626 = vadd.f32 %v1593, %v3604
    %v3627 = vadd.f32 %v1598, %v3605
    %v3628 = vadd.f32 %v1680, %v3604
    %v3629 = vadd.f32 %v1685, %v3605
    %v3630 = vadd.f32 %v1767, %v3604
    %v3631 = vadd.f32 %v1772, %v3605
    %v3632 = vadd.f32 %v1854, %v3604
    %v3633 = vadd.f32 %v1859, %v3605
    %v3634 = vadd.f32 %v1941, %v3604
    %v3635 = vadd.f32 %v1946, %v3605
    %v3636 = vadd.f32 %v2028, %v3604
    %v3637 = vadd.f32 %v2033, %v3605
    %v3638 = vadd.f32 %v2115, %v3604
    %v3639 = vadd.f32 %v2120, %v3605
    %v3640 = vadd.f32 %v2202, %v3604
    %v3641 = vadd.f32 %v2207, %v3605
    %v3642 = vadd.f32 %v2289, %v3606
    %v3643 = vadd.f32 %v2294, %v3607
    %v3644 = vadd.f32 %v2376, %v3606
    %v3645 = vadd.f32 %v2381, %v3607
    %v3646 = vadd.f32 %v2463, %v3606
    %v3647 = vadd.f32 %v2468, %v3607
    %v3648 = vadd.f32 %v2550, %v3606
    %v3649 = vadd.f32 %v2555, %v3607
    %v3650 = vadd.f32 %v2637, %v3606
    %v3651 = vadd.f32 %v2642, %v3607
    %v3652 = vadd.f32 %v2724, %v3606
    %v3653 = vadd.f32 %v2729, %v3607
    %v3654 = vadd.f32 %v2811, %v3606
    %v3655 = vadd.f32 %v2816, %v3607
    %v3656 = vadd.f32 %v2898, %v3606
    %v3657 = vadd.f32 %v2903, %v3607
    %v3658 = vadd.f32 %v2985, %v3608
    %v3659 = vadd.f32 %v2990, %v3609
    %v3660 = vadd.f32 %v3072, %v3608
    %v3661 = vadd.f32 %v3077, %v3609
    %v3662 = vadd.f32 %v3159, %v3608
    %v3663 = vadd.f32 %v3164, %v3609
    %v3664 = vadd.f32 %v3246, %v3608
    %v3665 = vadd.f32 %v3251, %v3609
    %v3666 = vadd.f32 %v3333, %v3608
    %v3667 = vadd.f32 %v3338, %v3609
    %v3668 = vadd.f32 %v3420, %v3608
    %v3669 = vadd.f32 %v3425, %v3609
    %v3670 = vadd.f32 %v3507, %v3608
    %v3671 = vadd.f32 %v3512, %v3609
    %v3672 = vadd.f32 %v3594, %v3608
    %v3673 = vadd.f32 %v3599, %v3609
    %v3674 = vld [vmem:[#allocation5] sm:$0xff]
    %v3675 = vld [vmem:[#allocation5 + $0x8] sm:$0xff]
    %v3676 = vld [vmem:[#allocation5 + $0x10] sm:$0xff]
    %v3677 = vld [vmem:[#allocation5 + $0x18] sm:$0xff]
    %v3678 = vld [vmem:[#allocation5 + $0x20] sm:$0xff]
    %v3679 = vld [vmem:[#allocation5 + $0x28] sm:$0xff]
    %v3680 = vld [vmem:[#allocation5 + $0x30] sm:$0xff]
    %v3681 = vld [vmem:[#allocation5 + $0x38] sm:$0xff]
    %v3682 = vld [vmem:[#allocation5 + $0x40] sm:$0xff]
    %v3683 = vld [vmem:[#allocation5 + $0x48] sm:$0xff]
    %v3684 = vld [vmem:[#allocation5 + $0x50] sm:$0xff]
    %v3685 = vld [vmem:[#allocation5 + $0x58] sm:$0xff]
    %v3686 = vld [vmem:[#allocation5 + $0x60] sm:$0xff]
    %v3687 = vld [vmem:[#allocation5 + $0x68] sm:$0xff]
    %v3688 = vld [vmem:[#allocation5 + $0x70] sm:$0xff]
    %v3689 = vld [vmem:[#allocation5 + $0x78] sm:$0xff]
    %v3690 = vadd.f32 %v3610, %v3674
    %v3691 = vadd.f32 %v3611, %v3675
    %v3692 = vadd.f32 %v3612, %v3676
    %v3693 = vadd.f32 %v3613, %v3677
    %v3694 = vadd.f32 %v3614, %v3678
    %v3695 = vadd.f32 %v3615, %v3679
    %v3696 = vadd.f32 %v3616, %v3680
    %v3697 = vadd.f32 %v3617, %v3681
    %v3698 = vadd.f32 %v3618, %v3682
    %v3699 = vadd.f32 %v3619, %v3683
    %v3700 = vadd.f32 %v3620, %v3684
    %v3701 = vadd.f32 %v3621, %v3685
    %v3702 = vadd.f32 %v3622, %v3686
    %v3703 = vadd.f32 %v3623, %v3687
    %v3704 = vadd.f32 %v3624, %v3688
    %v3705 = vadd.f32 %v3625, %v3689
    %v3706 = vadd.f32 %v3626, %v3674
    %v3707 = vadd.f32 %v3627, %v3675
    %v3708 = vadd.f32 %v3628, %v3676
    %v3709 = vadd.f32 %v3629, %v3677
    %v3710 = vadd.f32 %v3630, %v3678
    %v3711 = vadd.f32 %v3631, %v3679
    %v3712 = vadd.f32 %v3632, %v3680
    %v3713 = vadd.f32 %v3633, %v3681
    %v3714 = vadd.f32 %v3634, %v3682
    %v3715 = vadd.f32 %v3635, %v3683
    %v3716 = vadd.f32 %v3636, %v3684
    %v3717 = vadd.f32 %v3637, %v3685
    %v3718 = vadd.f32 %v3638, %v3686
    %v3719 = vadd.f32 %v3639, %v3687
    %v3720 = vadd.f32 %v3640, %v3688
    %v3721 = vadd.f32 %v3641, %v3689
    %v3722 = vadd.f32 %v3642, %v3674
    %v3723 = vadd.f32 %v3643, %v3675
    %v3724 = vadd.f32 %v3644, %v3676
    %v3725 = vadd.f32 %v3645, %v3677
    %v3726 = vadd.f32 %v3646, %v3678
    %v3727 = vadd.f32 %v3647, %v3679
    %v3728 = vadd.f32 %v3648, %v3680
    %v3729 = vadd.f32 %v3649, %v3681
    %v3730 = vadd.f32 %v3650, %v3682
    %v3731 = vadd.f32 %v3651, %v3683
    %v3732 = vadd.f32 %v3652, %v3684
    %v3733 = vadd.f32 %v3653, %v3685
    %v3734 = vadd.f32 %v3654, %v3686
    %v3735 = vadd.f32 %v3655, %v3687
    %v3736 = vadd.f32 %v3656, %v3688
    %v3737 = vadd.f32 %v3657, %v3689
    %v3738 = vadd.f32 %v3658, %v3674
    %v3739 = vadd.f32 %v3659, %v3675
    %v3740 = vadd.f32 %v3660, %v3676
    %v3741 = vadd.f32 %v3661, %v3677
    %v3742 = vadd.f32 %v3662, %v3678
    %v3743 = vadd.f32 %v3663, %v3679
    %v3744 = vadd.f32 %v3664, %v3680
    %v3745 = vadd.f32 %v3665, %v3681
    %v3746 = vadd.f32 %v3666, %v3682
    %v3747 = vadd.f32 %v3667, %v3683
    %v3748 = vadd.f32 %v3668, %v3684
    %v3749 = vadd.f32 %v3669, %v3685
    %v3750 = vadd.f32 %v3670, %v3686
    %v3751 = vadd.f32 %v3671, %v3687
    %v3752 = vadd.f32 %v3672, %v3688
    %v3753 = vadd.f32 %v3673, %v3689
    %vm3754 = vcmask 130048
    %v3755 = vsel %vm3754, %v3690, -inf
    %3756 = vmax.xlane.f32.xlu0 %v3755
    %v3757 = vpop.xlane.xlu0 %3756
    %v3758 = vsel %vm3754, %v3691, -inf
    %3759 = vmax.xlane.f32.xlu0 %v3758
    %v3760 = vpop.xlane.xlu0 %3759
    %v3761 = vsel %vm3754, %v3692, -inf
    %3762 = vmax.xlane.f32.xlu0 %v3761
    %v3763 = vpop.xlane.xlu0 %3762
    %v3764 = vsel %vm3754, %v3693, -inf
    %3765 = vmax.xlane.f32.xlu0 %v3764
    %v3766 = vpop.xlane.xlu0 %3765
    %v3767 = vsel %vm3754, %v3694, -inf
    %3768 = vmax.xlane.f32.xlu0 %v3767
    %v3769 = vpop.xlane.xlu0 %3768
    %v3770 = vsel %vm3754, %v3695, -inf
    %3771 = vmax.xlane.f32.xlu0 %v3770
    %v3772 = vpop.xlane.xlu0 %3771
    %v3773 = vsel %vm3754, %v3696, -inf
    %3774 = vmax.xlane.f32.xlu0 %v3773
    %v3775 = vpop.xlane.xlu0 %3774
    %v3776 = vsel %vm3754, %v3697, -inf
    %3777 = vmax.xlane.f32.xlu0 %v3776
    %v3778 = vpop.xlane.xlu0 %3777
    %v3779 = vsel %vm3754, %v3698, -inf
    %3780 = vmax.xlane.f32.xlu0 %v3779
    %v3781 = vpop.xlane.xlu0 %3780
    %v3782 = vsel %vm3754, %v3699, -inf
    %3783 = vmax.xlane.f32.xlu0 %v3782
    %v3784 = vpop.xlane.xlu0 %3783
    %v3785 = vsel %vm3754, %v3700, -inf
    %3786 = vmax.xlane.f32.xlu0 %v3785
    %v3787 = vpop.xlane.xlu0 %3786
    %v3788 = vsel %vm3754, %v3701, -inf
    %3789 = vmax.xlane.f32.xlu0 %v3788
    %v3790 = vpop.xlane.xlu0 %3789
    %v3791 = vsel %vm3754, %v3702, -inf
    %3792 = vmax.xlane.f32.xlu0 %v3791
    %v3793 = vpop.xlane.xlu0 %3792
    %v3794 = vsel %vm3754, %v3703, -inf
    %3795 = vmax.xlane.f32.xlu0 %v3794
    %v3796 = vpop.xlane.xlu0 %3795
    %v3797 = vsel %vm3754, %v3704, -inf
    %3798 = vmax.xlane.f32.xlu0 %v3797
    %v3799 = vpop.xlane.xlu0 %3798
    %v3800 = vsel %vm3754, %v3705, -inf
    %3801 = vmax.xlane.f32.xlu0 %v3800
    %v3802 = vpop.xlane.xlu0 %3801
    %v3803 = vsel %vm3754, %v3706, -inf
    %3804 = vmax.xlane.f32.xlu0 %v3803
    %v3805 = vpop.xlane.xlu0 %3804
    %v3806 = vsel %vm3754, %v3707, -inf
    %3807 = vmax.xlane.f32.xlu0 %v3806
    %v3808 = vpop.xlane.xlu0 %3807
    %v3809 = vsel %vm3754, %v3708, -inf
    %3810 = vmax.xlane.f32.xlu0 %v3809
    %v3811 = vpop.xlane.xlu0 %3810
    %v3812 = vsel %vm3754, %v3709, -inf
    %3813 = vmax.xlane.f32.xlu0 %v3812
    %v3814 = vpop.xlane.xlu0 %3813
    %v3815 = vsel %vm3754, %v3710, -inf
    %3816 = vmax.xlane.f32.xlu0 %v3815
    %v3817 = vpop.xlane.xlu0 %3816
    %v3818 = vsel %vm3754, %v3711, -inf
    %3819 = vmax.xlane.f32.xlu0 %v3818
    %v3820 = vpop.xlane.xlu0 %3819
    %v3821 = vsel %vm3754, %v3712, -inf
    %3822 = vmax.xlane.f32.xlu0 %v3821
    %v3823 = vpop.xlane.xlu0 %3822
    %v3824 = vsel %vm3754, %v3713, -inf
    %3825 = vmax.xlane.f32.xlu0 %v3824
    %v3826 = vpop.xlane.xlu0 %3825
    %v3827 = vsel %vm3754, %v3714, -inf
    %3828 = vmax.xlane.f32.xlu0 %v3827
    %v3829 = vpop.xlane.xlu0 %3828
    %v3830 = vsel %vm3754, %v3715, -inf
    %3831 = vmax.xlane.f32.xlu0 %v3830
    %v3832 = vpop.xlane.xlu0 %3831
    %v3833 = vsel %vm3754, %v3716, -inf
    %3834 = vmax.xlane.f32.xlu0 %v3833
    %v3835 = vpop.xlane.xlu0 %3834
    %v3836 = vsel %vm3754, %v3717, -inf
    %3837 = vmax.xlane.f32.xlu0 %v3836
    %v3838 = vpop.xlane.xlu0 %3837
    %v3839 = vsel %vm3754, %v3718, -inf
    %3840 = vmax.xlane.f32.xlu0 %v3839
    %v3841 = vpop.xlane.xlu0 %3840
    %v3842 = vsel %vm3754, %v3719, -inf
    %3843 = vmax.xlane.f32.xlu0 %v3842
    %v3844 = vpop.xlane.xlu0 %3843
    %v3845 = vsel %vm3754, %v3720, -inf
    %3846 = vmax.xlane.f32.xlu0 %v3845
    %v3847 = vpop.xlane.xlu0 %3846
    %v3848 = vsel %vm3754, %v3721, -inf
    %3849 = vmax.xlane.f32.xlu0 %v3848
    %v3850 = vpop.xlane.xlu0 %3849
    %v3851 = vsel %vm3754, %v3722, -inf
    %3852 = vmax.xlane.f32.xlu0 %v3851
    %v3853 = vpop.xlane.xlu0 %3852
    %v3854 = vsel %vm3754, %v3723, -inf
    %3855 = vmax.xlane.f32.xlu0 %v3854
    %v3856 = vpop.xlane.xlu0 %3855
    %v3857 = vsel %vm3754, %v3724, -inf
    %3858 = vmax.xlane.f32.xlu0 %v3857
    %v3859 = vpop.xlane.xlu0 %3858
    %v3860 = vsel %vm3754, %v3725, -inf
    %3861 = vmax.xlane.f32.xlu0 %v3860
    %v3862 = vpop.xlane.xlu0 %3861
    %v3863 = vsel %vm3754, %v3726, -inf
    %3864 = vmax.xlane.f32.xlu0 %v3863
    %v3865 = vpop.xlane.xlu0 %3864
    %v3866 = vsel %vm3754, %v3727, -inf
    %3867 = vmax.xlane.f32.xlu0 %v3866
    %v3868 = vpop.xlane.xlu0 %3867
    %v3869 = vsel %vm3754, %v3728, -inf
    %3870 = vmax.xlane.f32.xlu0 %v3869
    %v3871 = vpop.xlane.xlu0 %3870
    %v3872 = vsel %vm3754, %v3729, -inf
    %3873 = vmax.xlane.f32.xlu0 %v3872
    %v3874 = vpop.xlane.xlu0 %3873
    %v3875 = vsel %vm3754, %v3730, -inf
    %3876 = vmax.xlane.f32.xlu0 %v3875
    %v3877 = vpop.xlane.xlu0 %3876
    %v3878 = vsel %vm3754, %v3731, -inf
    %3879 = vmax.xlane.f32.xlu0 %v3878
    %v3880 = vpop.xlane.xlu0 %3879
    %v3881 = vsel %vm3754, %v3732, -inf
    %3882 = vmax.xlane.f32.xlu0 %v3881
    %v3883 = vpop.xlane.xlu0 %3882
    %v3884 = vsel %vm3754, %v3733, -inf
    %3885 = vmax.xlane.f32.xlu0 %v3884
    %v3886 = vpop.xlane.xlu0 %3885
    %v3887 = vsel %vm3754, %v3734, -inf
    %3888 = vmax.xlane.f32.xlu0 %v3887
    %v3889 = vpop.xlane.xlu0 %3888
    %v3890 = vsel %vm3754, %v3735, -inf
    %3891 = vmax.xlane.f32.xlu0 %v3890
    %v3892 = vpop.xlane.xlu0 %3891
    %v3893 = vsel %vm3754, %v3736, -inf
    %3894 = vmax.xlane.f32.xlu0 %v3893
    %v3895 = vpop.xlane.xlu0 %3894
    %v3896 = vsel %vm3754, %v3737, -inf
    %3897 = vmax.xlane.f32.xlu0 %v3896
    %v3898 = vpop.xlane.xlu0 %3897
    %v3899 = vsel %vm3754, %v3738, -inf
    %3900 = vmax.xlane.f32.xlu0 %v3899
    %v3901 = vpop.xlane.xlu0 %3900
    %v3902 = vsel %vm3754, %v3739, -inf
    %3903 = vmax.xlane.f32.xlu0 %v3902
    %v3904 = vpop.xlane.xlu0 %3903
    %v3905 = vsel %vm3754, %v3740, -inf
    %3906 = vmax.xlane.f32.xlu0 %v3905
    %v3907 = vpop.xlane.xlu0 %3906
    %v3908 = vsel %vm3754, %v3741, -inf
    %3909 = vmax.xlane.f32.xlu0 %v3908
    %v3910 = vpop.xlane.xlu0 %3909
    %v3911 = vsel %vm3754, %v3742, -inf
    %3912 = vmax.xlane.f32.xlu0 %v3911
    %v3913 = vpop.xlane.xlu0 %3912
    %v3914 = vsel %vm3754, %v3743, -inf
    %3915 = vmax.xlane.f32.xlu0 %v3914
    %v3916 = vpop.xlane.xlu0 %3915
    %v3917 = vsel %vm3754, %v3744, -inf
    %3918 = vmax.xlane.f32.xlu0 %v3917
    %v3919 = vpop.xlane.xlu0 %3918
    %v3920 = vsel %vm3754, %v3745, -inf
    %3921 = vmax.xlane.f32.xlu0 %v3920
    %v3922 = vpop.xlane.xlu0 %3921
    %v3923 = vsel %vm3754, %v3746, -inf
    %3924 = vmax.xlane.f32.xlu0 %v3923
    %v3925 = vpop.xlane.xlu0 %3924
    %v3926 = vsel %vm3754, %v3747, -inf
    %3927 = vmax.xlane.f32.xlu0 %v3926
    %v3928 = vpop.xlane.xlu0 %3927
    %v3929 = vsel %vm3754, %v3748, -inf
    %3930 = vmax.xlane.f32.xlu0 %v3929
    %v3931 = vpop.xlane.xlu0 %3930
    %v3932 = vsel %vm3754, %v3749, -inf
    %3933 = vmax.xlane.f32.xlu0 %v3932
    %v3934 = vpop.xlane.xlu0 %3933
    %v3935 = vsel %vm3754, %v3750, -inf
    %3936 = vmax.xlane.f32.xlu0 %v3935
    %v3937 = vpop.xlane.xlu0 %3936
    %v3938 = vsel %vm3754, %v3751, -inf
    %3939 = vmax.xlane.f32.xlu0 %v3938
    %v3940 = vpop.xlane.xlu0 %3939
    %v3941 = vsel %vm3754, %v3752, -inf
    %3942 = vmax.xlane.f32.xlu0 %v3941
    %v3943 = vpop.xlane.xlu0 %3942
    %v3944 = vsel %vm3754, %v3753, -inf
    %3945 = vmax.xlane.f32.xlu0 %v3944
    %v3946 = vpop.xlane.xlu0 %3945
    %v3947 = vsub.f32 %v3690, %v3757
    %v3948 = vsub.f32 %v3691, %v3760
    %v3949 = vsub.f32 %v3692, %v3763
    %v3950 = vsub.f32 %v3693, %v3766
    %v3951 = vsub.f32 %v3694, %v3769
    %v3952 = vsub.f32 %v3695, %v3772
    %v3953 = vsub.f32 %v3696, %v3775
    %v3954 = vsub.f32 %v3697, %v3778
    %v3955 = vsub.f32 %v3698, %v3781
    %v3956 = vsub.f32 %v3699, %v3784
    %v3957 = vsub.f32 %v3700, %v3787
    %v3958 = vsub.f32 %v3701, %v3790
    %v3959 = vsub.f32 %v3702, %v3793
    %v3960 = vsub.f32 %v3703, %v3796
    %v3961 = vsub.f32 %v3704, %v3799
    %v3962 = vsub.f32 %v3705, %v3802
    %v3963 = vsub.f32 %v3706, %v3805
    %v3964 = vsub.f32 %v3707, %v3808
    %v3965 = vsub.f32 %v3708, %v3811
    %v3966 = vsub.f32 %v3709, %v3814
    %v3967 = vsub.f32 %v3710, %v3817
    %v3968 = vsub.f32 %v3711, %v3820
    %v3969 = vsub.f32 %v3712, %v3823
    %v3970 = vsub.f32 %v3713, %v3826
    %v3971 = vsub.f32 %v3714, %v3829
    %v3972 = vsub.f32 %v3715, %v3832
    %v3973 = vsub.f32 %v3716, %v3835
    %v3974 = vsub.f32 %v3717, %v3838
    %v3975 = vsub.f32 %v3718, %v3841
    %v3976 = vsub.f32 %v3719, %v3844
    %v3977 = vsub.f32 %v3720, %v3847
    %v3978 = vsub.f32 %v3721, %v3850
    %v3979 = vsub.f32 %v3722, %v3853
    %v3980 = vsub.f32 %v3723, %v3856
    %v3981 = vsub.f32 %v3724, %v3859
    %v3982 = vsub.f32 %v3725, %v3862
    %v3983 = vsub.f32 %v3726, %v3865
    %v3984 = vsub.f32 %v3727, %v3868
    %v3985 = vsub.f32 %v3728, %v3871
    %v3986 = vsub.f32 %v3729, %v3874
    %v3987 = vsub.f32 %v3730, %v3877
    %v3988 = vsub.f32 %v3731, %v3880
    %v3989 = vsub.f32 %v3732, %v3883
    %v3990 = vsub.f32 %v3733, %v3886
    %v3991 = vsub.f32 %v3734, %v3889
    %v3992 = vsub.f32 %v3735, %v3892
    %v3993 = vsub.f32 %v3736, %v3895
    %v3994 = vsub.f32 %v3737, %v3898
    %v3995 = vsub.f32 %v3738, %v3901
    %v3996 = vsub.f32 %v3739, %v3904
    %v3997 = vsub.f32 %v3740, %v3907
    %v3998 = vsub.f32 %v3741, %v3910
    %v3999 = vsub.f32 %v3742, %v3913
    %v4000 = vsub.f32 %v3743, %v3916
    %v4001 = vsub.f32 %v3744, %v3919
    %v4002 = vsub.f32 %v3745, %v3922
    %v4003 = vsub.f32 %v3746, %v3925
    %v4004 = vsub.f32 %v3747, %v3928
    %v4005 = vsub.f32 %v3748, %v3931
    %v4006 = vsub.f32 %v3749, %v3934
    %v4007 = vsub.f32 %v3750, %v3937
    %v4008 = vsub.f32 %v3751, %v3940
    %v4009 = vsub.f32 %v3752, %v3943
    %v4010 = vsub.f32 %v3753, %v3946
    %v4011 = vmul.f32 %v3947, 1.442695
    %v4012 = vpow.pop %v4011
    %v4013 = vmul.f32 %v3948, 1.442695
    %v4014 = vpow.pop %v4013
    %v4015 = vmul.f32 %v3949, 1.442695
    %v4016 = vpow.pop %v4015
    %v4017 = vmul.f32 %v3950, 1.442695
    %v4018 = vpow.pop %v4017
    %v4019 = vmul.f32 %v3951, 1.442695
    %v4020 = vpow.pop %v4019
    %v4021 = vmul.f32 %v3952, 1.442695
    %v4022 = vpow.pop %v4021
    %v4023 = vmul.f32 %v3953, 1.442695
    %v4024 = vpow.pop %v4023
    %v4025 = vmul.f32 %v3954, 1.442695
    %v4026 = vpow.pop %v4025
    %v4027 = vmul.f32 %v3955, 1.442695
    %v4028 = vpow.pop %v4027
    %v4029 = vmul.f32 %v3956, 1.442695
    %v4030 = vpow.pop %v4029
    %v4031 = vmul.f32 %v3957, 1.442695
    %v4032 = vpow.pop %v4031
    %v4033 = vmul.f32 %v3958, 1.442695
    %v4034 = vpow.pop %v4033
    %v4035 = vmul.f32 %v3959, 1.442695
    %v4036 = vpow.pop %v4035
    %v4037 = vmul.f32 %v3960, 1.442695
    %v4038 = vpow.pop %v4037
    %v4039 = vmul.f32 %v3961, 1.442695
    %v4040 = vpow.pop %v4039
    %v4041 = vmul.f32 %v3962, 1.442695
    %v4042 = vpow.pop %v4041
    %v4043 = vmul.f32 %v3963, 1.442695
    %v4044 = vpow.pop %v4043
    %v4045 = vmul.f32 %v3964, 1.442695
    %v4046 = vpow.pop %v4045
    %v4047 = vmul.f32 %v3965, 1.442695
    %v4048 = vpow.pop %v4047
    %v4049 = vmul.f32 %v3966, 1.442695
    %v4050 = vpow.pop %v4049
    %v4051 = vmul.f32 %v3967, 1.442695
    %v4052 = vpow.pop %v4051
    %v4053 = vmul.f32 %v3968, 1.442695
    %v4054 = vpow.pop %v4053
    %v4055 = vmul.f32 %v3969, 1.442695
    %v4056 = vpow.pop %v4055
    %v4057 = vmul.f32 %v3970, 1.442695
    %v4058 = vpow.pop %v4057
    %v4059 = vmul.f32 %v3971, 1.442695
    %v4060 = vpow.pop %v4059
    %v4061 = vmul.f32 %v3972, 1.442695
    %v4062 = vpow.pop %v4061
    %v4063 = vmul.f32 %v3973, 1.442695
    %v4064 = vpow.pop %v4063
    %v4065 = vmul.f32 %v3974, 1.442695
    %v4066 = vpow.pop %v4065
    %v4067 = vmul.f32 %v3975, 1.442695
    %v4068 = vpow.pop %v4067
    %v4069 = vmul.f32 %v3976, 1.442695
    %v4070 = vpow.pop %v4069
    %v4071 = vmul.f32 %v3977, 1.442695
    %v4072 = vpow.pop %v4071
    %v4073 = vmul.f32 %v3978, 1.442695
    %v4074 = vpow.pop %v4073
    %v4075 = vmul.f32 %v3979, 1.442695
    %v4076 = vpow.pop %v4075
    %v4077 = vmul.f32 %v3980, 1.442695
    %v4078 = vpow.pop %v4077
    %v4079 = vmul.f32 %v3981, 1.442695
    %v4080 = vpow.pop %v4079
    %v4081 = vmul.f32 %v3982, 1.442695
    %v4082 = vpow.pop %v4081
    %v4083 = vmul.f32 %v3983, 1.442695
    %v4084 = vpow.pop %v4083
    %v4085 = vmul.f32 %v3984, 1.442695
    %v4086 = vpow.pop %v4085
    %v4087 = vmul.f32 %v3985, 1.442695
    %v4088 = vpow.pop %v4087
    %v4089 = vmul.f32 %v3986, 1.442695
    %v4090 = vpow.pop %v4089
    %v4091 = vmul.f32 %v3987, 1.442695
    %v4092 = vpow.pop %v4091
    %v4093 = vmul.f32 %v3988, 1.442695
    %v4094 = vpow.pop %v4093
    %v4095 = vmul.f32 %v3989, 1.442695
    %v4096 = vpow.pop %v4095
    %v4097 = vmul.f32 %v3990, 1.442695
    %v4098 = vpow.pop %v4097
    %v4099 = vmul.f32 %v3991, 1.442695
    %v4100 = vpow.pop %v4099
    %v4101 = vmul.f32 %v3992, 1.442695
    %v4102 = vpow.pop %v4101
    %v4103 = vmul.f32 %v3993, 1.442695
    %v4104 = vpow.pop %v4103
    %v4105 = vmul.f32 %v3994, 1.442695
    %v4106 = vpow.pop %v4105
    %v4107 = vmul.f32 %v3995, 1.442695
    %v4108 = vpow.pop %v4107
    %v4109 = vmul.f32 %v3996, 1.442695
    %v4110 = vpow.pop %v4109
    %v4111 = vmul.f32 %v3997, 1.442695
    %v4112 = vpow.pop %v4111
    %v4113 = vmul.f32 %v3998, 1.442695
    %v4114 = vpow.pop %v4113
    %v4115 = vmul.f32 %v3999, 1.442695
    %v4116 = vpow.pop %v4115
    %v4117 = vmul.f32 %v4000, 1.442695
    %v4118 = vpow.pop %v4117
    %v4119 = vmul.f32 %v4001, 1.442695
    %v4120 = vpow.pop %v4119
    %v4121 = vmul.f32 %v4002, 1.442695
    %v4122 = vpow.pop %v4121
    %v4123 = vmul.f32 %v4003, 1.442695
    %v4124 = vpow.pop %v4123
    %v4125 = vmul.f32 %v4004, 1.442695
    %v4126 = vpow.pop %v4125
    %v4127 = vmul.f32 %v4005, 1.442695
    %v4128 = vpow.pop %v4127
    %v4129 = vmul.f32 %v4006, 1.442695
    %v4130 = vpow.pop %v4129
    %v4131 = vmul.f32 %v4007, 1.442695
    %v4132 = vpow.pop %v4131
    %v4133 = vmul.f32 %v4008, 1.442695
    %v4134 = vpow.pop %v4133
    %v4135 = vmul.f32 %v4009, 1.442695
    %v4136 = vpow.pop %v4135
    %v4137 = vmul.f32 %v4010, 1.442695
    %v4138 = vpow.pop %v4137
    %v4139 = vsel %vm3754, %v4012, 0.0
    %4140 = vadd.xlane.f32.xlu0 %v4139
    %v4141 = vpop.xlane.xlu0 %4140
    %v4142 = vsel %vm3754, %v4014, 0.0
    %4143 = vadd.xlane.f32.xlu0 %v4142
    %v4144 = vpop.xlane.xlu0 %4143
    %v4145 = vsel %vm3754, %v4016, 0.0
    %4146 = vadd.xlane.f32.xlu0 %v4145
    %v4147 = vpop.xlane.xlu0 %4146
    %v4148 = vsel %vm3754, %v4018, 0.0
    %4149 = vadd.xlane.f32.xlu0 %v4148
    %v4150 = vpop.xlane.xlu0 %4149
    %v4151 = vsel %vm3754, %v4020, 0.0
    %4152 = vadd.xlane.f32.xlu0 %v4151
    %v4153 = vpop.xlane.xlu0 %4152
    %v4154 = vsel %vm3754, %v4022, 0.0
    %4155 = vadd.xlane.f32.xlu0 %v4154
    %v4156 = vpop.xlane.xlu0 %4155
    %v4157 = vsel %vm3754, %v4024, 0.0
    %4158 = vadd.xlane.f32.xlu0 %v4157
    %v4159 = vpop.xlane.xlu0 %4158
    %v4160 = vsel %vm3754, %v4026, 0.0
    %4161 = vadd.xlane.f32.xlu0 %v4160
    %v4162 = vpop.xlane.xlu0 %4161
    %v4163 = vsel %vm3754, %v4028, 0.0
    %4164 = vadd.xlane.f32.xlu0 %v4163
    %v4165 = vpop.xlane.xlu0 %4164
    %v4166 = vsel %vm3754, %v4030, 0.0
    %4167 = vadd.xlane.f32.xlu0 %v4166
    %v4168 = vpop.xlane.xlu0 %4167
    %v4169 = vsel %vm3754, %v4032, 0.0
    %4170 = vadd.xlane.f32.xlu0 %v4169
    %v4171 = vpop.xlane.xlu0 %4170
    %v4172 = vsel %vm3754, %v4034, 0.0
    %4173 = vadd.xlane.f32.xlu0 %v4172
    %v4174 = vpop.xlane.xlu0 %4173
    %v4175 = vsel %vm3754, %v4036, 0.0
    %4176 = vadd.xlane.f32.xlu0 %v4175
    %v4177 = vpop.xlane.xlu0 %4176
    %v4178 = vsel %vm3754, %v4038, 0.0
    %4179 = vadd.xlane.f32.xlu0 %v4178
    %v4180 = vpop.xlane.xlu0 %4179
    %v4181 = vsel %vm3754, %v4040, 0.0
    %4182 = vadd.xlane.f32.xlu0 %v4181
    %v4183 = vpop.xlane.xlu0 %4182
    %v4184 = vsel %vm3754, %v4042, 0.0
    %4185 = vadd.xlane.f32.xlu0 %v4184
    %v4186 = vpop.xlane.xlu0 %4185
    %v4187 = vsel %vm3754, %v4044, 0.0
    %4188 = vadd.xlane.f32.xlu0 %v4187
    %v4189 = vpop.xlane.xlu0 %4188
    %v4190 = vsel %vm3754, %v4046, 0.0
    %4191 = vadd.xlane.f32.xlu0 %v4190
    %v4192 = vpop.xlane.xlu0 %4191
    %v4193 = vsel %vm3754, %v4048, 0.0
    %4194 = vadd.xlane.f32.xlu0 %v4193
    %v4195 = vpop.xlane.xlu0 %4194
    %v4196 = vsel %vm3754, %v4050, 0.0
    %4197 = vadd.xlane.f32.xlu0 %v4196
    %v4198 = vpop.xlane.xlu0 %4197
    %v4199 = vsel %vm3754, %v4052, 0.0
    %4200 = vadd.xlane.f32.xlu0 %v4199
    %v4201 = vpop.xlane.xlu0 %4200
    %v4202 = vsel %vm3754, %v4054, 0.0
    %4203 = vadd.xlane.f32.xlu0 %v4202
    %v4204 = vpop.xlane.xlu0 %4203
    %v4205 = vsel %vm3754, %v4056, 0.0
    %4206 = vadd.xlane.f32.xlu0 %v4205
    %v4207 = vpop.xlane.xlu0 %4206
    %v4208 = vsel %vm3754, %v4058, 0.0
    %4209 = vadd.xlane.f32.xlu0 %v4208
    %v4210 = vpop.xlane.xlu0 %4209
    %v4211 = vsel %vm3754, %v4060, 0.0
    %4212 = vadd.xlane.f32.xlu0 %v4211
    %v4213 = vpop.xlane.xlu0 %4212
    %v4214 = vsel %vm3754, %v4062, 0.0
    %4215 = vadd.xlane.f32.xlu0 %v4214
    %v4216 = vpop.xlane.xlu0 %4215
    %v4217 = vsel %vm3754, %v4064, 0.0
    %4218 = vadd.xlane.f32.xlu0 %v4217
    %v4219 = vpop.xlane.xlu0 %4218
    %v4220 = vsel %vm3754, %v4066, 0.0
    %4221 = vadd.xlane.f32.xlu0 %v4220
    %v4222 = vpop.xlane.xlu0 %4221
    %v4223 = vsel %vm3754, %v4068, 0.0
    %4224 = vadd.xlane.f32.xlu0 %v4223
    %v4225 = vpop.xlane.xlu0 %4224
    %v4226 = vsel %vm3754, %v4070, 0.0
    %4227 = vadd.xlane.f32.xlu0 %v4226
    %v4228 = vpop.xlane.xlu0 %4227
    %v4229 = vsel %vm3754, %v4072, 0.0
    %4230 = vadd.xlane.f32.xlu0 %v4229
    %v4231 = vpop.xlane.xlu0 %4230
    %v4232 = vsel %vm3754, %v4074, 0.0
    %4233 = vadd.xlane.f32.xlu0 %v4232
    %v4234 = vpop.xlane.xlu0 %4233
    %v4235 = vsel %vm3754, %v4076, 0.0
    %4236 = vadd.xlane.f32.xlu0 %v4235
    %v4237 = vpop.xlane.xlu0 %4236
    %v4238 = vsel %vm3754, %v4078, 0.0
    %4239 = vadd.xlane.f32.xlu0 %v4238
    %v4240 = vpop.xlane.xlu0 %4239
    %v4241 = vsel %vm3754, %v4080, 0.0
    %4242 = vadd.xlane.f32.xlu0 %v4241
    %v4243 = vpop.xlane.xlu0 %4242
    %v4244 = vsel %vm3754, %v4082, 0.0
    %4245 = vadd.xlane.f32.xlu0 %v4244
    %v4246 = vpop.xlane.xlu0 %4245
    %v4247 = vsel %vm3754, %v4084, 0.0
    %4248 = vadd.xlane.f32.xlu0 %v4247
    %v4249 = vpop.xlane.xlu0 %4248
    %v4250 = vsel %vm3754, %v4086, 0.0
    %4251 = vadd.xlane.f32.xlu0 %v4250
    %v4252 = vpop.xlane.xlu0 %4251
    %v4253 = vsel %vm3754, %v4088, 0.0
    %4254 = vadd.xlane.f32.xlu0 %v4253
    %v4255 = vpop.xlane.xlu0 %4254
    %v4256 = vsel %vm3754, %v4090, 0.0
    %4257 = vadd.xlane.f32.xlu0 %v4256
    %v4258 = vpop.xlane.xlu0 %4257
    %v4259 = vsel %vm3754, %v4092, 0.0
    %4260 = vadd.xlane.f32.xlu0 %v4259
    %v4261 = vpop.xlane.xlu0 %4260
    %v4262 = vsel %vm3754, %v4094, 0.0
    %4263 = vadd.xlane.f32.xlu0 %v4262
    %v4264 = vpop.xlane.xlu0 %4263
    %v4265 = vsel %vm3754, %v4096, 0.0
    %4266 = vadd.xlane.f32.xlu0 %v4265
    %v4267 = vpop.xlane.xlu0 %4266
    %v4268 = vsel %vm3754, %v4098, 0.0
    %4269 = vadd.xlane.f32.xlu0 %v4268
    %v4270 = vpop.xlane.xlu0 %4269
    %v4271 = vsel %vm3754, %v4100, 0.0
    %4272 = vadd.xlane.f32.xlu0 %v4271
    %v4273 = vpop.xlane.xlu0 %4272
    %v4274 = vsel %vm3754, %v4102, 0.0
    %4275 = vadd.xlane.f32.xlu0 %v4274
    %v4276 = vpop.xlane.xlu0 %4275
    %v4277 = vsel %vm3754, %v4104, 0.0
    %4278 = vadd.xlane.f32.xlu0 %v4277
    %v4279 = vpop.xlane.xlu0 %4278
    %v4280 = vsel %vm3754, %v4106, 0.0
    %4281 = vadd.xlane.f32.xlu0 %v4280
    %v4282 = vpop.xlane.xlu0 %4281
    %v4283 = vsel %vm3754, %v4108, 0.0
    %4284 = vadd.xlane.f32.xlu0 %v4283
    %v4285 = vpop.xlane.xlu0 %4284
    %v4286 = vsel %vm3754, %v4110, 0.0
    %4287 = vadd.xlane.f32.xlu0 %v4286
    %v4288 = vpop.xlane.xlu0 %4287
    %v4289 = vsel %vm3754, %v4112, 0.0
    %4290 = vadd.xlane.f32.xlu0 %v4289
    %v4291 = vpop.xlane.xlu0 %4290
    %v4292 = vsel %vm3754, %v4114, 0.0
    %4293 = vadd.xlane.f32.xlu0 %v4292
    %v4294 = vpop.xlane.xlu0 %4293
    %v4295 = vsel %vm3754, %v4116, 0.0
    %4296 = vadd.xlane.f32.xlu0 %v4295
    %v4297 = vpop.xlane.xlu0 %4296
    %v4298 = vsel %vm3754, %v4118, 0.0
    %4299 = vadd.xlane.f32.xlu0 %v4298
    %v4300 = vpop.xlane.xlu0 %4299
    %v4301 = vsel %vm3754, %v4120, 0.0
    %4302 = vadd.xlane.f32.xlu0 %v4301
    %v4303 = vpop.xlane.xlu0 %4302
    %v4304 = vsel %vm3754, %v4122, 0.0
    %4305 = vadd.xlane.f32.xlu0 %v4304
    %v4306 = vpop.xlane.xlu0 %4305
    %v4307 = vsel %vm3754, %v4124, 0.0
    %4308 = vadd.xlane.f32.xlu0 %v4307
    %v4309 = vpop.xlane.xlu0 %4308
    %v4310 = vsel %vm3754, %v4126, 0.0
    %4311 = vadd.xlane.f32.xlu0 %v4310
    %v4312 = vpop.xlane.xlu0 %4311
    %v4313 = vsel %vm3754, %v4128, 0.0
    %4314 = vadd.xlane.f32.xlu0 %v4313
    %v4315 = vpop.xlane.xlu0 %4314
    %v4316 = vsel %vm3754, %v4130, 0.0
    %4317 = vadd.xlane.f32.xlu0 %v4316
    %v4318 = vpop.xlane.xlu0 %4317
    %v4319 = vsel %vm3754, %v4132, 0.0
    %4320 = vadd.xlane.f32.xlu0 %v4319
    %v4321 = vpop.xlane.xlu0 %4320
    %v4322 = vsel %vm3754, %v4134, 0.0
    %4323 = vadd.xlane.f32.xlu0 %v4322
    %v4324 = vpop.xlane.xlu0 %4323
    %v4325 = vsel %vm3754, %v4136, 0.0
    %4326 = vadd.xlane.f32.xlu0 %v4325
    %v4327 = vpop.xlane.xlu0 %4326
    %v4328 = vsel %vm3754, %v4138, 0.0
    %4329 = vadd.xlane.f32.xlu0 %v4328
    %v4330 = vpop.xlane.xlu0 %4329
    %v4331 = vrcp.pop %v4141
    %v4332 = vrcp.pop %v4144
    %v4333 = vrcp.pop %v4147
    %v4334 = vrcp.pop %v4150
    %v4335 = vrcp.pop %v4153
    %v4336 = vrcp.pop %v4156
    %v4337 = vrcp.pop %v4159
    %v4338 = vrcp.pop %v4162
    %v4339 = vrcp.pop %v4165
    %v4340 = vrcp.pop %v4168
    %v4341 = vrcp.pop %v4171
    %v4342 = vrcp.pop %v4174
    %v4343 = vrcp.pop %v4177
    %v4344 = vrcp.pop %v4180
    %v4345 = vrcp.pop %v4183
    %v4346 = vrcp.pop %v4186
    %v4347 = vrcp.pop %v4189
    %v4348 = vrcp.pop %v4192
    %v4349 = vrcp.pop %v4195
    %v4350 = vrcp.pop %v4198
    %v4351 = vrcp.pop %v4201
    %v4352 = vrcp.pop %v4204
    %v4353 = vrcp.pop %v4207
    %v4354 = vrcp.pop %v4210
    %v4355 = vrcp.pop %v4213
    %v4356 = vrcp.pop %v4216
    %v4357 = vrcp.pop %v4219
    %v4358 = vrcp.pop %v4222
    %v4359 = vrcp.pop %v4225
    %v4360 = vrcp.pop %v4228
    %v4361 = vrcp.pop %v4231
    %v4362 = vrcp.pop %v4234
    %v4363 = vrcp.pop %v4237
    %v4364 = vrcp.pop %v4240
    %v4365 = vrcp.pop %v4243
    %v4366 = vrcp.pop %v4246
    %v4367 = vrcp.pop %v4249
    %v4368 = vrcp.pop %v4252
    %v4369 = vrcp.pop %v4255
    %v4370 = vrcp.pop %v4258
    %v4371 = vrcp.pop %v4261
    %v4372 = vrcp.pop %v4264
    %v4373 = vrcp.pop %v4267
    %v4374 = vrcp.pop %v4270
    %v4375 = vrcp.pop %v4273
    %v4376 = vrcp.pop %v4276
    %v4377 = vrcp.pop %v4279
    %v4378 = vrcp.pop %v4282
    %v4379 = vrcp.pop %v4285
    %v4380 = vrcp.pop %v4288
    %v4381 = vrcp.pop %v4291
    %v4382 = vrcp.pop %v4294
    %v4383 = vrcp.pop %v4297
    %v4384 = vrcp.pop %v4300
    %v4385 = vrcp.pop %v4303
    %v4386 = vrcp.pop %v4306
    %v4387 = vrcp.pop %v4309
    %v4388 = vrcp.pop %v4312
    %v4389 = vrcp.pop %v4315
    %v4390 = vrcp.pop %v4318
    %v4391 = vrcp.pop %v4321
    %v4392 = vrcp.pop %v4324
    %v4393 = vrcp.pop %v4327
    %v4394 = vrcp.pop %v4330
    %v4395 = vmul.f32 %v4012, %v4331
    %v4396 = vmul.f32 %v4014, %v4332
    %v4397 = vmul.f32 %v4016, %v4333
    %v4398 = vmul.f32 %v4018, %v4334
    %v4399 = vmul.f32 %v4020, %v4335
    %v4400 = vmul.f32 %v4022, %v4336
    %v4401 = vmul.f32 %v4024, %v4337
    %v4402 = vmul.f32 %v4026, %v4338
    %v4403 = vmul.f32 %v4028, %v4339
    %v4404 = vmul.f32 %v4030, %v4340
    %v4405 = vmul.f32 %v4032, %v4341
    %v4406 = vmul.f32 %v4034, %v4342
    %v4407 = vmul.f32 %v4036, %v4343
    %v4408 = vmul.f32 %v4038, %v4344
    %v4409 = vmul.f32 %v4040, %v4345
    %v4410 = vmul.f32 %v4042, %v4346
    %v4411 = vmul.f32 %v4044, %v4347
    %v4412 = vmul.f32 %v4046, %v4348
    %v4413 = vmul.f32 %v4048, %v4349
    %v4414 = vmul.f32 %v4050, %v4350
    %v4415 = vmul.f32 %v4052, %v4351
    %v4416 = vmul.f32 %v4054, %v4352
    %v4417 = vmul.f32 %v4056, %v4353
    %v4418 = vmul.f32 %v4058, %v4354
    %v4419 = vmul.f32 %v4060, %v4355
    %v4420 = vmul.f32 %v4062, %v4356
    %v4421 = vmul.f32 %v4064, %v4357
    %v4422 = vmul.f32 %v4066, %v4358
    %v4423 = vmul.f32 %v4068, %v4359
    %v4424 = vmul.f32 %v4070, %v4360
    %v4425 = vmul.f32 %v4072, %v4361
    %v4426 = vmul.f32 %v4074, %v4362
    %v4427 = vmul.f32 %v4076, %v4363
    %v4428 = vmul.f32 %v4078, %v4364
    %v4429 = vmul.f32 %v4080, %v4365
    %v4430 = vmul.f32 %v4082, %v4366
    %v4431 = vmul.f32 %v4084, %v4367
    %v4432 = vmul.f32 %v4086, %v4368
    %v4433 = vmul.f32 %v4088, %v4369
    %v4434 = vmul.f32 %v4090, %v4370
    %v4435 = vmul.f32 %v4092, %v4371
    %v4436 = vmul.f32 %v4094, %v4372
    %v4437 = vmul.f32 %v4096, %v4373
    %v4438 = vmul.f32 %v4098, %v4374
    %v4439 = vmul.f32 %v4100, %v4375
    %v4440 = vmul.f32 %v4102, %v4376
    %v4441 = vmul.f32 %v4104, %v4377
    %v4442 = vmul.f32 %v4106, %v4378
    %v4443 = vmul.f32 %v4108, %v4379
    %v4444 = vmul.f32 %v4110, %v4380
    %v4445 = vmul.f32 %v4112, %v4381
    %v4446 = vmul.f32 %v4114, %v4382
    %v4447 = vmul.f32 %v4116, %v4383
    %v4448 = vmul.f32 %v4118, %v4384
    %v4449 = vmul.f32 %v4120, %v4385
    %v4450 = vmul.f32 %v4122, %v4386
    %v4451 = vmul.f32 %v4124, %v4387
    %v4452 = vmul.f32 %v4126, %v4388
    %v4453 = vmul.f32 %v4128, %v4389
    %v4454 = vmul.f32 %v4130, %v4390
    %v4455 = vmul.f32 %v4132, %v4391
    %v4456 = vmul.f32 %v4134, %v4392
    %v4457 = vmul.f32 %v4136, %v4393
    %v4458 = vmul.f32 %v4138, %v4394
    %4459 = vrot.lane.b32.xlu0 %v499, 64
    %v4460 = vpop.permute.xlu0 %4459
    %4461 = vrot.lane.b32.xlu0 %v504, 64
    %v4462 = vpop.permute.xlu0 %4461
    %v4466 = vsel %vm3754, %v4395, 0
    %v4469 = vsel %vm3754, %v4396, 0
    %4471 = vmatprep.subr.mxu0 0.0
    %4472 = vmatpush1.msra.mxu0 %v4460
    %4473 = vmatprep.subr.mxu0 0.0
    %4474 = vmatpush1.msra.mxu0 %v4462
    %4475 = vmatprep.subr.mxu0 0.0
    %4476 = vmatpush1.msra.mxu0 0.0
    %4477 = vmatprep.subr.mxu0 0.0
    %4478 = vmatpush1.msra.mxu0 0.0
    %4479 = vmatprep.subr.mxu0 0.0
    %4480 = vmatpush1.msra.mxu0 0.0
    %4481 = vmatprep.subr.mxu0 0.0
    %4482 = vmatpush1.msra.mxu0 0.0
    %4483 = vmatprep.subr.mxu0 0.0
    %4484 = vmatpush1.msra.mxu0 0.0
    %4485 = vmatprep.subr.mxu0 0.0
    %4486 = vmatpush1.msra.mxu0 0.0
    %4487 = vmatprep.subr.mxu0 0.0
    %4488 = vmatpush1.msra.mxu0 0.0
    %4489 = vmatprep.subr.mxu0 0.0
    %4490 = vmatpush1.msra.mxu0 0.0
    %4491 = vmatprep.subr.mxu0 0.0
    %4492 = vmatpush1.msra.mxu0 0.0
    %4493 = vmatprep.subr.mxu0 0.0
    %4494 = vmatpush1.msra.mxu0 0.0
    %4495 = vmatprep.subr.mxu0 0.0
    %4496 = vmatpush1.msra.mxu0 0.0
    %4497 = vmatprep.subr.mxu0 0.0
    %4498 = vmatpush1.msra.mxu0 0.0
    %4499 = vmatprep.subr.mxu0 0.0
    %4500 = vmatpush1.msra.mxu0 0.0
    %4501 = vmatprep.subr.mxu0 0.0
    %4502 = vmatpush1.msra.mxu0 0.0
    %4503 = vmatprep.subr.mxu0 0.0
    %4504 = vmatpush1.msra.mxu0 0.0
    %4505 = vmatprep.subr.mxu0 0.0
    %4506 = vmatpush1.msra.mxu0 0.0
    %4507 = vmatprep.subr.mxu0 0.0
    %4508 = vmatpush1.msra.mxu0 0.0
    %4509 = vmatprep.subr.mxu0 0.0
    %4510 = vmatpush1.msra.mxu0 0.0
    %4511 = vmatprep.subr.mxu0 0.0
    %4512 = vmatpush1.msra.mxu0 0.0
    %4513 = vmatprep.subr.mxu0 0.0
    %4514 = vmatpush1.msra.mxu0 0.0
    %4515 = vmatprep.subr.mxu0 0.0
    %4516 = vmatpush1.msra.mxu0 0.0
    %4517 = vmatprep.subr.mxu0 0.0
    %4518 = vmatpush1.msra.mxu0 0.0
    %4519 = vmatprep.subr.mxu0 0.0
    %4520 = vmatpush1.msra.mxu0 0.0
    %4521 = vmatprep.subr.mxu0 0.0
    %4522 = vmatpush1.msra.mxu0 0.0
    %4523 = vmatprep.subr.mxu0 0.0
    %4524 = vmatpush1.msra.mxu0 0.0
    %4525 = vmatprep.subr.mxu0 0.0
    %4526 = vmatpush1.msra.mxu0 0.0
    %4527 = vmatprep.subr.mxu0 0.0
    %4528 = vmatpush1.msra.mxu0 0.0
    %4529 = vmatprep.subr.mxu0 0.0
    %4530 = vmatpush1.msra.mxu0 0.0
    %4531 = vmatprep.subr.mxu0 0.0
    %4532 = vmatpush1.msra.mxu0 0.0
    %4533 = vmatprep.subr.mxu0 0.0
    %4534 = vmatpush1.msra.mxu0 0.0
    %4535 = vmatprep.mubr.f32.mxu0 0.0
    %4536 = vmatmul.mubr.f32.gmra.mrb[0].mxu0 %v4466
    %v4537 = vpop.f32.mrb[0].mxu0
    %v4538 = vadd.f32 0.0, %v4537
    %v4539 = vpop.f32.mrb[0].mxu0
    %4540 = vmatprep.mubr.f32.mxu0 0.0
    %4541 = vmatmul.mubr.f32.gmra.mrb[0].mxu0 %v4469
    %v4542 = vpop.f32.mrb[0].mxu0
    %v4543 = vadd.f32 0.0, %v4542
    %v4544 = vpop.f32.mrb[0].mxu0
    %4545 = vdwg.mxu0
    %4546 = vrot.lane.b32.xlu0 %v509, 64
    %v4547 = vpop.permute.xlu0 %4546
    %4548 = vrot.lane.b32.xlu0 %v514, 64
    %v4549 = vpop.permute.xlu0 %4548
    %v4553 = vsel %vm3754, %v4397, 0
    %v4556 = vsel %vm3754, %v4398, 0
    %4558 = vmatprep.subr.mxu0 0.0
    %4559 = vmatpush1.msra.mxu0 %v4547
    %4560 = vmatprep.subr.mxu0 0.0
    %4561 = vmatpush1.msra.mxu0 %v4549
    %4562 = vmatprep.subr.mxu0 0.0
    %4563 = vmatpush1.msra.mxu0 0.0
    %4564 = vmatprep.subr.mxu0 0.0
    %4565 = vmatpush1.msra.mxu0 0.0
    %4566 = vmatprep.subr.mxu0 0.0
    %4567 = vmatpush1.msra.mxu0 0.0
    %4568 = vmatprep.subr.mxu0 0.0
    %4569 = vmatpush1.msra.mxu0 0.0
    %4570 = vmatprep.subr.mxu0 0.0
    %4571 = vmatpush1.msra.mxu0 0.0
    %4572 = vmatprep.subr.mxu0 0.0
    %4573 = vmatpush1.msra.mxu0 0.0
    %4574 = vmatprep.subr.mxu0 0.0
    %4575 = vmatpush1.msra.mxu0 0.0
    %4576 = vmatprep.subr.mxu0 0.0
    %4577 = vmatpush1.msra.mxu0 0.0
    %4578 = vmatprep.subr.mxu0 0.0
    %4579 = vmatpush1.msra.mxu0 0.0
    %4580 = vmatprep.subr.mxu0 0.0
    %4581 = vmatpush1.msra.mxu0 0.0
    %4582 = vmatprep.subr.mxu0 0.0
    %4583 = vmatpush1.msra.mxu0 0.0
    %4584 = vmatprep.subr.mxu0 0.0
    %4585 = vmatpush1.msra.mxu0 0.0
    %4586 = vmatprep.subr.mxu0 0.0
    %4587 = vmatpush1.msra.mxu0 0.0
    %4588 = vmatprep.subr.mxu0 0.0
    %4589 = vmatpush1.msra.mxu0 0.0
    %4590 = vmatprep.subr.mxu0 0.0
    %4591 = vmatpush1.msra.mxu0 0.0
    %4592 = vmatprep.subr.mxu0 0.0
    %4593 = vmatpush1.msra.mxu0 0.0
    %4594 = vmatprep.subr.mxu0 0.0
    %4595 = vmatpush1.msra.mxu0 0.0
    %4596 = vmatprep.subr.mxu0 0.0
    %4597 = vmatpush1.msra.mxu0 0.0
    %4598 = vmatprep.subr.mxu0 0.0
    %4599 = vmatpush1.msra.mxu0 0.0
    %4600 = vmatprep.subr.mxu0 0.0
    %4601 = vmatpush1.msra.mxu0 0.0
    %4602 = vmatprep.subr.mxu0 0.0
    %4603 = vmatpush1.msra.mxu0 0.0
    %4604 = vmatprep.subr.mxu0 0.0
    %4605 = vmatpush1.msra.mxu0 0.0
    %4606 = vmatprep.subr.mxu0 0.0
    %4607 = vmatpush1.msra.mxu0 0.0
    %4608 = vmatprep.subr.mxu0 0.0
    %4609 = vmatpush1.msra.mxu0 0.0
    %4610 = vmatprep.subr.mxu0 0.0
    %4611 = vmatpush1.msra.mxu0 0.0
    %4612 = vmatprep.subr.mxu0 0.0
    %4613 = vmatpush1.msra.mxu0 0.0
    %4614 = vmatprep.subr.mxu0 0.0
    %4615 = vmatpush1.msra.mxu0 0.0
    %4616 = vmatprep.subr.mxu0 0.0
    %4617 = vmatpush1.msra.mxu0 0.0
    %4618 = vmatprep.subr.mxu0 0.0
    %4619 = vmatpush1.msra.mxu0 0.0
    %4620 = vmatprep.subr.mxu0 0.0
    %4621 = vmatpush1.msra.mxu0 0.0
    %4622 = vmatprep.mubr.f32.mxu0 0.0
    %4623 = vmatmul.mubr.f32.gmra.mrb[0].mxu0 %v4553
    %v4624 = vpop.f32.mrb[0].mxu0
    %v4625 = vadd.f32 0.0, %v4624
    %v4626 = vpop.f32.mrb[0].mxu0
    %4627 = vmatprep.mubr.f32.mxu0 0.0
    %4628 = vmatmul.mubr.f32.gmra.mrb[0].mxu0 %v4556
    %v4629 = vpop.f32.mrb[0].mxu0
    %v4630 = vadd.f32 0.0, %v4629
    %v4631 = vpop.f32.mrb[0].mxu0
    %4632 = vdwg.mxu0
    %4633 = vrot.lane.b32.xlu0 %v519, 64
    %v4634 = vpop.permute.xlu0 %4633
    %4635 = vrot.lane.b32.xlu0 %v524, 64
    %v4636 = vpop.permute.xlu0 %4635
    %v4640 = vsel %vm3754, %v4399, 0
    %v4643 = vsel %vm3754, %v4400, 0
    %4645 = vmatprep.subr.mxu0 0.0
    %4646 = vmatpush1.msra.mxu0 %v4634
    %4647 = vmatprep.subr.mxu0 0.0
    %4648 = vmatpush1.msra.mxu0 %v4636
    %4649 = vmatprep.subr.mxu0 0.0
    %4650 = vmatpush1.msra.mxu0 0.0
    %4651 = vmatprep.subr.mxu0 0.0
    %4652 = vmatpush1.msra.mxu0 0.0
    %4653 = vmatprep.subr.mxu0 0.0
    %4654 = vmatpush1.msra.mxu0 0.0
    %4655 = vmatprep.subr.mxu0 0.0
    %4656 = vmatpush1.msra.mxu0 0.0
    %4657 = vmatprep.subr.mxu0 0.0
    %4658 = vmatpush1.msra.mxu0 0.0
    %4659 = vmatprep.subr.mxu0 0.0
    %4660 = vmatpush1.msra.mxu0 0.0
    %4661 = vmatprep.subr.mxu0 0.0
    %4662 = vmatpush1.msra.mxu0 0.0
    %4663 = vmatprep.subr.mxu0 0.0
    %4664 = vmatpush1.msra.mxu0 0.0
    %4665 = vmatprep.subr.mxu0 0.0
    %4666 = vmatpush1.msra.mxu0 0.0
    %4667 = vmatprep.subr.mxu0 0.0
    %4668 = vmatpush1.msra.mxu0 0.0
    %4669 = vmatprep.subr.mxu0 0.0
    %4670 = vmatpush1.msra.mxu0 0.0
    %4671 = vmatprep.subr.mxu0 0.0
    %4672 = vmatpush1.msra.mxu0 0.0
    %4673 = vmatprep.subr.mxu0 0.0
    %4674 = vmatpush1.msra.mxu0 0.0
    %4675 = vmatprep.subr.mxu0 0.0
    %4676 = vmatpush1.msra.mxu0 0.0
    %4677 = vmatprep.subr.mxu0 0.0
    %4678 = vmatpush1.msra.mxu0 0.0
    %4679 = vmatprep.subr.mxu0 0.0
    %4680 = vmatpush1.msra.mxu0 0.0
    %4681 = vmatprep.subr.mxu0 0.0
    %4682 = vmatpush1.msra.mxu0 0.0
    %4683 = vmatprep.subr.mxu0 0.0
    %4684 = vmatpush1.msra.mxu0 0.0
    %4685 = vmatprep.subr.mxu0 0.0
    %4686 = vmatpush1.msra.mxu0 0.0
    %4687 = vmatprep.subr.mxu0 0.0
    %4688 = vmatpush1.msra.mxu0 0.0
    %4689 = vmatprep.subr.mxu0 0.0
    %4690 = vmatpush1.msra.mxu0 0.0
    %4691 = vmatprep.subr.mxu0 0.0
    %4692 = vmatpush1.msra.mxu0 0.0
    %4693 = vmatprep.subr.mxu0 0.0
    %4694 = vmatpush1.msra.mxu0 0.0
    %4695 = vmatprep.subr.mxu0 0.0
    %4696 = vmatpush1.msra.mxu0 0.0
    %4697 = vmatprep.subr.mxu0 0.0
    %4698 = vmatpush1.msra.mxu0 0.0
    %4699 = vmatprep.subr.mxu0 0.0
    %4700 = vmatpush1.msra.mxu0 0.0
    %4701 = vmatprep.subr.mxu0 0.0
    %4702 = vmatpush1.msra.mxu0 0.0
    %4703 = vmatprep.subr.mxu0 0.0
    %4704 = vmatpush1.msra.mxu0 0.0
    %4705 = vmatprep.subr.mxu0 0.0
    %4706 = vmatpush1.msra.mxu0 0.0
    %4707 = vmatprep.subr.mxu0 0.0
    %4708 = vmatpush1.msra.mxu0 0.0
    %4709 = vmatprep.mubr.f32.mxu0 0.0
    %4710 = vmatmul.mubr.f32.gmra.mrb[0].mxu0 %v4640
    %v4711 = vpop.f32.mrb[0].mxu0
    %v4712 = vadd.f32 0.0, %v4711
    %v4713 = vpop.f32.mrb[0].mxu0
    %4714 = vmatprep.mubr.f32.mxu0 0.0
    %4715 = vmatmul.mubr.f32.gmra.mrb[0].mxu0 %v4643
    %v4716 = vpop.f32.mrb[0].mxu0
    %v4717 = vadd.f32 0.0, %v4716
    %v4718 = vpop.f32.mrb[0].mxu0
    %4719 = vdwg.mxu0
    %4720 = vrot.lane.b32.xlu0 %v529, 64
    %v4721 = vpop.permute.xlu0 %4720
    %4722 = vrot.lane.b32.xlu0 %v534, 64
    %v4723 = vpop.permute.xlu0 %4722
    %v4727 = vsel %vm3754, %v4401, 0
    %v4730 = vsel %vm3754, %v4402, 0
    %4732 = vmatprep.subr.mxu0 0.0
    %4733 = vmatpush1.msra.mxu0 %v4721
    %4734 = vmatprep.subr.mxu0 0.0
    %4735 = vmatpush1.msra.mxu0 %v4723
    %4736 = vmatprep.subr.mxu0 0.0
    %4737 = vmatpush1.msra.mxu0 0.0
    %4738 = vmatprep.subr.mxu0 0.0
    %4739 = vmatpush1.msra.mxu0 0.0
    %4740 = vmatprep.subr.mxu0 0.0
    %4741 = vmatpush1.msra.mxu0 0.0
    %4742 = vmatprep.subr.mxu0 0.0
    %4743 = vmatpush1.msra.mxu0 0.0
    %4744 = vmatprep.subr.mxu0 0.0
    %4745 = vmatpush1.msra.mxu0 0.0
    %4746 = vmatprep.subr.mxu0 0.0
    %4747 = vmatpush1.msra.mxu0 0.0
    %4748 = vmatprep.subr.mxu0 0.0
    %4749 = vmatpush1.msra.mxu0 0.0
    %4750 = vmatprep.subr.mxu0 0.0
    %4751 = vmatpush1.msra.mxu0 0.0
    %4752 = vmatprep.subr.mxu0 0.0
    %4753 = vmatpush1.msra.mxu0 0.0
    %4754 = vmatprep.subr.mxu0 0.0
    %4755 = vmatpush1.msra.mxu0 0.0
    %4756 = vmatprep.subr.mxu0 0.0
    %4757 = vmatpush1.msra.mxu0 0.0
    %4758 = vmatprep.subr.mxu0 0.0
    %4759 = vmatpush1.msra.mxu0 0.0
    %4760 = vmatprep.subr.mxu0 0.0
    %4761 = vmatpush1.msra.mxu0 0.0
    %4762 = vmatprep.subr.mxu0 0.0
    %4763 = vmatpush1.msra.mxu0 0.0
    %4764 = vmatprep.subr.mxu0 0.0
    %4765 = vmatpush1.msra.mxu0 0.0
    %4766 = vmatprep.subr.mxu0 0.0
    %4767 = vmatpush1.msra.mxu0 0.0
    %4768 = vmatprep.subr.mxu0 0.0
    %4769 = vmatpush1.msra.mxu0 0.0
    %4770 = vmatprep.subr.mxu0 0.0
    %4771 = vmatpush1.msra.mxu0 0.0
    %4772 = vmatprep.subr.mxu0 0.0
    %4773 = vmatpush1.msra.mxu0 0.0
    %4774 = vmatprep.subr.mxu0 0.0
    %4775 = vmatpush1.msra.mxu0 0.0
    %4776 = vmatprep.subr.mxu0 0.0
    %4777 = vmatpush1.msra.mxu0 0.0
    %4778 = vmatprep.subr.mxu0 0.0
    %4779 = vmatpush1.msra.mxu0 0.0
    %4780 = vmatprep.subr.mxu0 0.0
    %4781 = vmatpush1.msra.mxu0 0.0
    %4782 = vmatprep.subr.mxu0 0.0
    %4783 = vmatpush1.msra.mxu0 0.0
    %4784 = vmatprep.subr.mxu0 0.0
    %4785 = vmatpush1.msra.mxu0 0.0
    %4786 = vmatprep.subr.mxu0 0.0
    %4787 = vmatpush1.msra.mxu0 0.0
    %4788 = vmatprep.subr.mxu0 0.0
    %4789 = vmatpush1.msra.mxu0 0.0
    %4790 = vmatprep.subr.mxu0 0.0
    %4791 = vmatpush1.msra.mxu0 0.0
    %4792 = vmatprep.subr.mxu0 0.0
    %4793 = vmatpush1.msra.mxu0 0.0
    %4794 = vmatprep.subr.mxu0 0.0
    %4795 = vmatpush1.msra.mxu0 0.0
    %4796 = vmatprep.mubr.f32.mxu0 0.0
    %4797 = vmatmul.mubr.f32.gmra.mrb[0].mxu0 %v4727
    %v4798 = vpop.f32.mrb[0].mxu0
    %v4799 = vadd.f32 0.0, %v4798
    %v4800 = vpop.f32.mrb[0].mxu0
    %4801 = vmatprep.mubr.f32.mxu0 0.0
    %4802 = vmatmul.mubr.f32.gmra.mrb[0].mxu0 %v4730
    %v4803 = vpop.f32.mrb[0].mxu0
    %v4804 = vadd.f32 0.0, %v4803
    %v4805 = vpop.f32.mrb[0].mxu0
    %4806 = vdwg.mxu0
    %4807 = vrot.lane.b32.xlu0 %v539, 64
    %v4808 = vpop.permute.xlu0 %4807
    %4809 = vrot.lane.b32.xlu0 %v544, 64
    %v4810 = vpop.permute.xlu0 %4809
    %v4814 = vsel %vm3754, %v4403, 0
    %v4817 = vsel %vm3754, %v4404, 0
    %4819 = vmatprep.subr.mxu0 0.0
    %4820 = vmatpush1.msra.mxu0 %v4808
    %4821 = vmatprep.subr.mxu0 0.0
    %4822 = vmatpush1.msra.mxu0 %v4810
    %4823 = vmatprep.subr.mxu0 0.0
    %4824 = vmatpush1.msra.mxu0 0.0
    %4825 = vmatprep.subr.mxu0 0.0
    %4826 = vmatpush1.msra.mxu0 0.0
    %4827 = vmatprep.subr.mxu0 0.0
    %4828 = vmatpush1.msra.mxu0 0.0
    %4829 = vmatprep.subr.mxu0 0.0
    %4830 = vmatpush1.msra.mxu0 0.0
    %4831 = vmatprep.subr.mxu0 0.0
    %4832 = vmatpush1.msra.mxu0 0.0
    %4833 = vmatprep.subr.mxu0 0.0
    %4834 = vmatpush1.msra.mxu0 0.0
    %4835 = vmatprep.subr.mxu0 0.0
    %4836 = vmatpush1.msra.mxu0 0.0
    %4837 = vmatprep.subr.mxu0 0.0
    %4838 = vmatpush1.msra.mxu0 0.0
    %4839 = vmatprep.subr.mxu0 0.0
    %4840 = vmatpush1.msra.mxu0 0.0
    %4841 = vmatprep.subr.mxu0 0.0
    %4842 = vmatpush1.msra.mxu0 0.0
    %4843 = vmatprep.subr.mxu0 0.0
    %4844 = vmatpush1.msra.mxu0 0.0
    %4845 = vmatprep.subr.mxu0 0.0
    %4846 = vmatpush1.msra.mxu0 0.0
    %4847 = vmatprep.subr.mxu0 0.0
    %4848 = vmatpush1.msra.mxu0 0.0
    %4849 = vmatprep.subr.mxu0 0.0
    %4850 = vmatpush1.msra.mxu0 0.0
    %4851 = vmatprep.subr.mxu0 0.0
    %4852 = vmatpush1.msra.mxu0 0.0
    %4853 = vmatprep.subr.mxu0 0.0
    %4854 = vmatpush1.msra.mxu0 0.0
    %4855 = vmatprep.subr.mxu0 0.0
    %4856 = vmatpush1.msra.mxu0 0.0
    %4857 = vmatprep.subr.mxu0 0.0
    %4858 = vmatpush1.msra.mxu0 0.0
    %4859 = vmatprep.subr.mxu0 0.0
    %4860 = vmatpush1.msra.mxu0 0.0
    %4861 = vmatprep.subr.mxu0 0.0
    %4862 = vmatpush1.msra.mxu0 0.0
    %4863 = vmatprep.subr.mxu0 0.0
    %4864 = vmatpush1.msra.mxu0 0.0
    %4865 = vmatprep.subr.mxu0 0.0
    %4866 = vmatpush1.msra.mxu0 0.0
    %4867 = vmatprep.subr.mxu0 0.0
    %4868 = vmatpush1.msra.mxu0 0.0
    %4869 = vmatprep.subr.mxu0 0.0
    %4870 = vmatpush1.msra.mxu0 0.0
    %4871 = vmatprep.subr.mxu0 0.0
    %4872 = vmatpush1.msra.mxu0 0.0
    %4873 = vmatprep.subr.mxu0 0.0
    %4874 = vmatpush1.msra.mxu0 0.0
    %4875 = vmatprep.subr.mxu0 0.0
    %4876 = vmatpush1.msra.mxu0 0.0
    %4877 = vmatprep.subr.mxu0 0.0
    %4878 = vmatpush1.msra.mxu0 0.0
    %4879 = vmatprep.subr.mxu0 0.0
    %4880 = vmatpush1.msra.mxu0 0.0
    %4881 = vmatprep.subr.mxu0 0.0
    %4882 = vmatpush1.msra.mxu0 0.0
    %4883 = vmatprep.mubr.f32.mxu0 0.0
    %4884 = vmatmul.mubr.f32.gmra.mrb[0].mxu0 %v4814
    %v4885 = vpop.f32.mrb[0].mxu0
    %v4886 = vadd.f32 0.0, %v4885
    %v4887 = vpop.f32.mrb[0].mxu0
    %4888 = vmatprep.mubr.f32.mxu0 0.0
    %4889 = vmatmul.mubr.f32.gmra.mrb[0].mxu0 %v4817
    %v4890 = vpop.f32.mrb[0].mxu0
    %v4891 = vadd.f32 0.0, %v4890
    %v4892 = vpop.f32.mrb[0].mxu0
    %4893 = vdwg.mxu0
    %4894 = vrot.lane.b32.xlu0 %v549, 64
    %v4895 = vpop.permute.xlu0 %4894
    %4896 = vrot.lane.b32.xlu0 %v554, 64
    %v4897 = vpop.permute.xlu0 %4896
    %v4901 = vsel %vm3754, %v4405, 0
    %v4904 = vsel %vm3754, %v4406, 0
    %4906 = vmatprep.subr.mxu0 0.0
    %4907 = vmatpush1.msra.mxu0 %v4895
    %4908 = vmatprep.subr.mxu0 0.0
    %4909 = vmatpush1.msra.mxu0 %v4897
    %4910 = vmatprep.subr.mxu0 0.0
    %4911 = vmatpush1.msra.mxu0 0.0
    %4912 = vmatprep.subr.mxu0 0.0
    %4913 = vmatpush1.msra.mxu0 0.0
    %4914 = vmatprep.subr.mxu0 0.0
    %4915 = vmatpush1.msra.mxu0 0.0
    %4916 = vmatprep.subr.mxu0 0.0
    %4917 = vmatpush1.msra.mxu0 0.0
    %4918 = vmatprep.subr.mxu0 0.0
    %4919 = vmatpush1.msra.mxu0 0.0
    %4920 = vmatprep.subr.mxu0 0.0
    %4921 = vmatpush1.msra.mxu0 0.0
    %4922 = vmatprep.subr.mxu0 0.0
    %4923 = vmatpush1.msra.mxu0 0.0
    %4924 = vmatprep.subr.mxu0 0.0
    %4925 = vmatpush1.msra.mxu0 0.0
    %4926 = vmatprep.subr.mxu0 0.0
    %4927 = vmatpush1.msra.mxu0 0.0
    %4928 = vmatprep.subr.mxu0 0.0
    %4929 = vmatpush1.msra.mxu0 0.0
    %4930 = vmatprep.subr.mxu0 0.0
    %4931 = vmatpush1.msra.mxu0 0.0
    %4932 = vmatprep.subr.mxu0 0.0
    %4933 = vmatpush1.msra.mxu0 0.0
    %4934 = vmatprep.subr.mxu0 0.0
    %4935 = vmatpush1.msra.mxu0 0.0
    %4936 = vmatprep.subr.mxu0 0.0
    %4937 = vmatpush1.msra.mxu0 0.0
    %4938 = vmatprep.subr.mxu0 0.0
    %4939 = vmatpush1.msra.mxu0 0.0
    %4940 = vmatprep.subr.mxu0 0.0
    %4941 = vmatpush1.msra.mxu0 0.0
    %4942 = vmatprep.subr.mxu0 0.0
    %4943 = vmatpush1.msra.mxu0 0.0
    %4944 = vmatprep.subr.mxu0 0.0
    %4945 = vmatpush1.msra.mxu0 0.0
    %4946 = vmatprep.subr.mxu0 0.0
    %4947 = vmatpush1.msra.mxu0 0.0
    %4948 = vmatprep.subr.mxu0 0.0
    %4949 = vmatpush1.msra.mxu0 0.0
    %4950 = vmatprep.subr.mxu0 0.0
    %4951 = vmatpush1.msra.mxu0 0.0
    %4952 = vmatprep.subr.mxu0 0.0
    %4953 = vmatpush1.msra.mxu0 0.0
    %4954 = vmatprep.subr.mxu0 0.0
    %4955 = vmatpush1.msra.mxu0 0.0
    %4956 = vmatprep.subr.mxu0 0.0
    %4957 = vmatpush1.msra.mxu0 0.0
    %4958 = vmatprep.subr.mxu0 0.0
    %4959 = vmatpush1.msra.mxu0 0.0
    %4960 = vmatprep.subr.mxu0 0.0
    %4961 = vmatpush1.msra.mxu0 0.0
    %4962 = vmatprep.subr.mxu0 0.0
    %4963 = vmatpush1.msra.mxu0 0.0
    %4964 = vmatprep.subr.mxu0 0.0
    %4965 = vmatpush1.msra.mxu0 0.0
    %4966 = vmatprep.subr.mxu0 0.0
    %4967 = vmatpush1.msra.mxu0 0.0
    %4968 = vmatprep.subr.mxu0 0.0
    %4969 = vmatpush1.msra.mxu0 0.0
    %4970 = vmatprep.mubr.f32.mxu0 0.0
    %4971 = vmatmul.mubr.f32.gmra.mrb[0].mxu0 %v4901
    %v4972 = vpop.f32.mrb[0].mxu0
    %v4973 = vadd.f32 0.0, %v4972
    %v4974 = vpop.f32.mrb[0].mxu0
    %4975 = vmatprep.mubr.f32.mxu0 0.0
    %4976 = vmatmul.mubr.f32.gmra.mrb[0].mxu0 %v4904
    %v4977 = vpop.f32.mrb[0].mxu0
    %v4978 = vadd.f32 0.0, %v4977
    %v4979 = vpop.f32.mrb[0].mxu0
    %4980 = vdwg.mxu0
    %4981 = vrot.lane.b32.xlu0 %v559, 64
    %v4982 = vpop.permute.xlu0 %4981
    %4983 = vrot.lane.b32.xlu0 %v564, 64
    %v4984 = vpop.permute.xlu0 %4983
    %v4988 = vsel %vm3754, %v4407, 0
    %v4991 = vsel %vm3754, %v4408, 0
    %4993 = vmatprep.subr.mxu0 0.0
    %4994 = vmatpush1.msra.mxu0 %v4982
    %4995 = vmatprep.subr.mxu0 0.0
    %4996 = vmatpush1.msra.mxu0 %v4984
    %4997 = vmatprep.subr.mxu0 0.0
    %4998 = vmatpush1.msra.mxu0 0.0
    %4999 = vmatprep.subr.mxu0 0.0
    %5000 = vmatpush1.msra.mxu0 0.0
    %5001 = vmatprep.subr.mxu0 0.0
    %5002 = vmatpush1.msra.mxu0 0.0
    %5003 = vmatprep.subr.mxu0 0.0
    %5004 = vmatpush1.msra.mxu0 0.0
    %5005 = vmatprep.subr.mxu0 0.0
    %5006 = vmatpush1.msra.mxu0 0.0
    %5007 = vmatprep.subr.mxu0 0.0
    %5008 = vmatpush1.msra.mxu0 0.0
    %5009 = vmatprep.subr.mxu0 0.0
    %5010 = vmatpush1.msra.mxu0 0.0
    %5011 = vmatprep.subr.mxu0 0.0
    %5012 = vmatpush1.msra.mxu0 0.0
    %5013 = vmatprep.subr.mxu0 0.0
    %5014 = vmatpush1.msra.mxu0 0.0
    %5015 = vmatprep.subr.mxu0 0.0
    %5016 = vmatpush1.msra.mxu0 0.0
    %5017 = vmatprep.subr.mxu0 0.0
    %5018 = vmatpush1.msra.mxu0 0.0
    %5019 = vmatprep.subr.mxu0 0.0
    %5020 = vmatpush1.msra.mxu0 0.0
    %5021 = vmatprep.subr.mxu0 0.0
    %5022 = vmatpush1.msra.mxu0 0.0
    %5023 = vmatprep.subr.mxu0 0.0
    %5024 = vmatpush1.msra.mxu0 0.0
    %5025 = vmatprep.subr.mxu0 0.0
    %5026 = vmatpush1.msra.mxu0 0.0
    %5027 = vmatprep.subr.mxu0 0.0
    %5028 = vmatpush1.msra.mxu0 0.0
    %5029 = vmatprep.subr.mxu0 0.0
    %5030 = vmatpush1.msra.mxu0 0.0
    %5031 = vmatprep.subr.mxu0 0.0
    %5032 = vmatpush1.msra.mxu0 0.0
    %5033 = vmatprep.subr.mxu0 0.0
    %5034 = vmatpush1.msra.mxu0 0.0
    %5035 = vmatprep.subr.mxu0 0.0
    %5036 = vmatpush1.msra.mxu0 0.0
    %5037 = vmatprep.subr.mxu0 0.0
    %5038 = vmatpush1.msra.mxu0 0.0
    %5039 = vmatprep.subr.mxu0 0.0
    %5040 = vmatpush1.msra.mxu0 0.0
    %5041 = vmatprep.subr.mxu0 0.0
    %5042 = vmatpush1.msra.mxu0 0.0
    %5043 = vmatprep.subr.mxu0 0.0
    %5044 = vmatpush1.msra.mxu0 0.0
    %5045 = vmatprep.subr.mxu0 0.0
    %5046 = vmatpush1.msra.mxu0 0.0
    %5047 = vmatprep.subr.mxu0 0.0
    %5048 = vmatpush1.msra.mxu0 0.0
    %5049 = vmatprep.subr.mxu0 0.0
    %5050 = vmatpush1.msra.mxu0 0.0
    %5051 = vmatprep.subr.mxu0 0.0
    %5052 = vmatpush1.msra.mxu0 0.0
    %5053 = vmatprep.subr.mxu0 0.0
    %5054 = vmatpush1.msra.mxu0 0.0
    %5055 = vmatprep.subr.mxu0 0.0
    %5056 = vmatpush1.msra.mxu0 0.0
    %5057 = vmatprep.mubr.f32.mxu0 0.0
    %5058 = vmatmul.mubr.f32.gmra.mrb[0].mxu0 %v4988
    %v5059 = vpop.f32.mrb[0].mxu0
    %v5060 = vadd.f32 0.0, %v5059
    %v5061 = vpop.f32.mrb[0].mxu0
    %5062 = vmatprep.mubr.f32.mxu0 0.0
    %5063 = vmatmul.mubr.f32.gmra.mrb[0].mxu0 %v4991
    %v5064 = vpop.f32.mrb[0].mxu0
    %v5065 = vadd.f32 0.0, %v5064
    %v5066 = vpop.f32.mrb[0].mxu0
    %5067 = vdwg.mxu0
    %5068 = vrot.lane.b32.xlu0 %v569, 64
    %v5069 = vpop.permute.xlu0 %5068
    %5070 = vrot.lane.b32.xlu0 %v574, 64
    %v5071 = vpop.permute.xlu0 %5070
    %v5075 = vsel %vm3754, %v4409, 0
    %v5078 = vsel %vm3754, %v4410, 0
    %5080 = vmatprep.subr.mxu0 0.0
    %5081 = vmatpush1.msra.mxu0 %v5069
    %5082 = vmatprep.subr.mxu0 0.0
    %5083 = vmatpush1.msra.mxu0 %v5071
    %5084 = vmatprep.subr.mxu0 0.0
    %5085 = vmatpush1.msra.mxu0 0.0
    %5086 = vmatprep.subr.mxu0 0.0
    %5087 = vmatpush1.msra.mxu0 0.0
    %5088 = vmatprep.subr.mxu0 0.0
    %5089 = vmatpush1.msra.mxu0 0.0
    %5090 = vmatprep.subr.mxu0 0.0
    %5091 = vmatpush1.msra.mxu0 0.0
    %5092 = vmatprep.subr.mxu0 0.0
    %5093 = vmatpush1.msra.mxu0 0.0
    %5094 = vmatprep.subr.mxu0 0.0
    %5095 = vmatpush1.msra.mxu0 0.0
    %5096 = vmatprep.subr.mxu0 0.0
    %5097 = vmatpush1.msra.mxu0 0.0
    %5098 = vmatprep.subr.mxu0 0.0
    %5099 = vmatpush1.msra.mxu0 0.0
    %5100 = vmatprep.subr.mxu0 0.0
    %5101 = vmatpush1.msra.mxu0 0.0
    %5102 = vmatprep.subr.mxu0 0.0
    %5103 = vmatpush1.msra.mxu0 0.0
    %5104 = vmatprep.subr.mxu0 0.0
    %5105 = vmatpush1.msra.mxu0 0.0
    %5106 = vmatprep.subr.mxu0 0.0
    %5107 = vmatpush1.msra.mxu0 0.0
    %5108 = vmatprep.subr.mxu0 0.0
    %5109 = vmatpush1.msra.mxu0 0.0
    %5110 = vmatprep.subr.mxu0 0.0
    %5111 = vmatpush1.msra.mxu0 0.0
    %5112 = vmatprep.subr.mxu0 0.0
    %5113 = vmatpush1.msra.mxu0 0.0
    %5114 = vmatprep.subr.mxu0 0.0
    %5115 = vmatpush1.msra.mxu0 0.0
    %5116 = vmatprep.subr.mxu0 0.0
    %5117 = vmatpush1.msra.mxu0 0.0
    %5118 = vmatprep.subr.mxu0 0.0
    %5119 = vmatpush1.msra.mxu0 0.0
    %5120 = vmatprep.subr.mxu0 0.0
    %5121 = vmatpush1.msra.mxu0 0.0
    %5122 = vmatprep.subr.mxu0 0.0
    %5123 = vmatpush1.msra.mxu0 0.0
    %5124 = vmatprep.subr.mxu0 0.0
    %5125 = vmatpush1.msra.mxu0 0.0
    %5126 = vmatprep.subr.mxu0 0.0
    %5127 = vmatpush1.msra.mxu0 0.0
    %5128 = vmatprep.subr.mxu0 0.0
    %5129 = vmatpush1.msra.mxu0 0.0
    %5130 = vmatprep.subr.mxu0 0.0
    %5131 = vmatpush1.msra.mxu0 0.0
    %5132 = vmatprep.subr.mxu0 0.0
    %5133 = vmatpush1.msra.mxu0 0.0
    %5134 = vmatprep.subr.mxu0 0.0
    %5135 = vmatpush1.msra.mxu0 0.0
    %5136 = vmatprep.subr.mxu0 0.0
    %5137 = vmatpush1.msra.mxu0 0.0
    %5138 = vmatprep.subr.mxu0 0.0
    %5139 = vmatpush1.msra.mxu0 0.0
    %5140 = vmatprep.subr.mxu0 0.0
    %5141 = vmatpush1.msra.mxu0 0.0
    %5142 = vmatprep.subr.mxu0 0.0
    %5143 = vmatpush1.msra.mxu0 0.0
    %5144 = vmatprep.mubr.f32.mxu0 0.0
    %5145 = vmatmul.mubr.f32.gmra.mrb[0].mxu0 %v5075
    %v5146 = vpop.f32.mrb[0].mxu0
    %v5147 = vadd.f32 0.0, %v5146
    %v5148 = vpop.f32.mrb[0].mxu0
    %5149 = vmatprep.mubr.f32.mxu0 0.0
    %5150 = vmatmul.mubr.f32.gmra.mrb[0].mxu0 %v5078
    %v5151 = vpop.f32.mrb[0].mxu0
    %v5152 = vadd.f32 0.0, %v5151
    %v5153 = vpop.f32.mrb[0].mxu0
    %5154 = vdwg.mxu0
    %5155 = vrot.lane.b32.xlu0 %v722, 64
    %v5156 = vpop.permute.xlu0 %5155
    %5157 = vrot.lane.b32.xlu0 %v724, 64
    %v5158 = vpop.permute.xlu0 %5157
    %v5162 = vsel %vm3754, %v4411, 0
    %v5165 = vsel %vm3754, %v4412, 0
    %5167 = vmatprep.subr.mxu0 0.0
    %5168 = vmatpush1.msra.mxu0 %v5156
    %5169 = vmatprep.subr.mxu0 0.0
    %5170 = vmatpush1.msra.mxu0 %v5158
    %5171 = vmatprep.subr.mxu0 0.0
    %5172 = vmatpush1.msra.mxu0 0.0
    %5173 = vmatprep.subr.mxu0 0.0
    %5174 = vmatpush1.msra.mxu0 0.0
    %5175 = vmatprep.subr.mxu0 0.0
    %5176 = vmatpush1.msra.mxu0 0.0
    %5177 = vmatprep.subr.mxu0 0.0
    %5178 = vmatpush1.msra.mxu0 0.0
    %5179 = vmatprep.subr.mxu0 0.0
    %5180 = vmatpush1.msra.mxu0 0.0
    %5181 = vmatprep.subr.mxu0 0.0
    %5182 = vmatpush1.msra.mxu0 0.0
    %5183 = vmatprep.subr.mxu0 0.0
    %5184 = vmatpush1.msra.mxu0 0.0
    %5185 = vmatprep.subr.mxu0 0.0
    %5186 = vmatpush1.msra.mxu0 0.0
    %5187 = vmatprep.subr.mxu0 0.0
    %5188 = vmatpush1.msra.mxu0 0.0
    %5189 = vmatprep.subr.mxu0 0.0
    %5190 = vmatpush1.msra.mxu0 0.0
    %5191 = vmatprep.subr.mxu0 0.0
    %5192 = vmatpush1.msra.mxu0 0.0
    %5193 = vmatprep.subr.mxu0 0.0
    %5194 = vmatpush1.msra.mxu0 0.0
    %5195 = vmatprep.subr.mxu0 0.0
    %5196 = vmatpush1.msra.mxu0 0.0
    %5197 = vmatprep.subr.mxu0 0.0
    %5198 = vmatpush1.msra.mxu0 0.0
    %5199 = vmatprep.subr.mxu0 0.0
    %5200 = vmatpush1.msra.mxu0 0.0
    %5201 = vmatprep.subr.mxu0 0.0
    %5202 = vmatpush1.msra.mxu0 0.0
    %5203 = vmatprep.subr.mxu0 0.0
    %5204 = vmatpush1.msra.mxu0 0.0
    %5205 = vmatprep.subr.mxu0 0.0
    %5206 = vmatpush1.msra.mxu0 0.0
    %5207 = vmatprep.subr.mxu0 0.0
    %5208 = vmatpush1.msra.mxu0 0.0
    %5209 = vmatprep.subr.mxu0 0.0
    %5210 = vmatpush1.msra.mxu0 0.0
    %5211 = vmatprep.subr.mxu0 0.0
    %5212 = vmatpush1.msra.mxu0 0.0
    %5213 = vmatprep.subr.mxu0 0.0
    %5214 = vmatpush1.msra.mxu0 0.0
    %5215 = vmatprep.subr.mxu0 0.0
    %5216 = vmatpush1.msra.mxu0 0.0
    %5217 = vmatprep.subr.mxu0 0.0
    %5218 = vmatpush1.msra.mxu0 0.0
    %5219 = vmatprep.subr.mxu0 0.0
    %5220 = vmatpush1.msra.mxu0 0.0
    %5221 = vmatprep.subr.mxu0 0.0
    %5222 = vmatpush1.msra.mxu0 0.0
    %5223 = vmatprep.subr.mxu0 0.0
    %5224 = vmatpush1.msra.mxu0 0.0
    %5225 = vmatprep.subr.mxu0 0.0
    %5226 = vmatpush1.msra.mxu0 0.0
    %5227 = vmatprep.subr.mxu0 0.0
    %5228 = vmatpush1.msra.mxu0 0.0
    %5229 = vmatprep.subr.mxu0 0.0
    %5230 = vmatpush1.msra.mxu0 0.0
    %5231 = vmatprep.mubr.f32.mxu0 0.0
    %5232 = vmatmul.mubr.f32.gmra.mrb[0].mxu0 %v5162
    %v5233 = vpop.f32.mrb[0].mxu0
    %v5234 = vadd.f32 0.0, %v5233
    %v5235 = vpop.f32.mrb[0].mxu0
    %5236 = vmatprep.mubr.f32.mxu0 0.0
    %5237 = vmatmul.mubr.f32.gmra.mrb[0].mxu0 %v5165
    %v5238 = vpop.f32.mrb[0].mxu0
    %v5239 = vadd.f32 0.0, %v5238
    %v5240 = vpop.f32.mrb[0].mxu0
    %5241 = vdwg.mxu0
    %5242 = vrot.lane.b32.xlu0 %v726, 64
    %v5243 = vpop.permute.xlu0 %5242
    %5244 = vrot.lane.b32.xlu0 %v728, 64
    %v5245 = vpop.permute.xlu0 %5244
    %v5249 = vsel %vm3754, %v4413, 0
    %v5252 = vsel %vm3754, %v4414, 0
    %5254 = vmatprep.subr.mxu0 0.0
    %5255 = vmatpush1.msra.mxu0 %v5243
    %5256 = vmatprep.subr.mxu0 0.0
    %5257 = vmatpush1.msra.mxu0 %v5245
    %5258 = vmatprep.subr.mxu0 0.0
    %5259 = vmatpush1.msra.mxu0 0.0
    %5260 = vmatprep.subr.mxu0 0.0
    %5261 = vmatpush1.msra.mxu0 0.0
    %5262 = vmatprep.subr.mxu0 0.0
    %5263 = vmatpush1.msra.mxu0 0.0
    %5264 = vmatprep.subr.mxu0 0.0
    %5265 = vmatpush1.msra.mxu0 0.0
    %5266 = vmatprep.subr.mxu0 0.0
    %5267 = vmatpush1.msra.mxu0 0.0
    %5268 = vmatprep.subr.mxu0 0.0
    %5269 = vmatpush1.msra.mxu0 0.0
    %5270 = vmatprep.subr.mxu0 0.0
    %5271 = vmatpush1.msra.mxu0 0.0
    %5272 = vmatprep.subr.mxu0 0.0
    %5273 = vmatpush1.msra.mxu0 0.0
    %5274 = vmatprep.subr.mxu0 0.0
    %5275 = vmatpush1.msra.mxu0 0.0
    %5276 = vmatprep.subr.mxu0 0.0
    %5277 = vmatpush1.msra.mxu0 0.0
    %5278 = vmatprep.subr.mxu0 0.0
    %5279 = vmatpush1.msra.mxu0 0.0
    %5280 = vmatprep.subr.mxu0 0.0
    %5281 = vmatpush1.msra.mxu0 0.0
    %5282 = vmatprep.subr.mxu0 0.0
    %5283 = vmatpush1.msra.mxu0 0.0
    %5284 = vmatprep.subr.mxu0 0.0
    %5285 = vmatpush1.msra.mxu0 0.0
    %5286 = vmatprep.subr.mxu0 0.0
    %5287 = vmatpush1.msra.mxu0 0.0
    %5288 = vmatprep.subr.mxu0 0.0
    %5289 = vmatpush1.msra.mxu0 0.0
    %5290 = vmatprep.subr.mxu0 0.0
    %5291 = vmatpush1.msra.mxu0 0.0
    %5292 = vmatprep.subr.mxu0 0.0
    %5293 = vmatpush1.msra.mxu0 0.0
    %5294 = vmatprep.subr.mxu0 0.0
    %5295 = vmatpush1.msra.mxu0 0.0
    %5296 = vmatprep.subr.mxu0 0.0
    %5297 = vmatpush1.msra.mxu0 0.0
    %5298 = vmatprep.subr.mxu0 0.0
    %5299 = vmatpush1.msra.mxu0 0.0
    %5300 = vmatprep.subr.mxu0 0.0
    %5301 = vmatpush1.msra.mxu0 0.0
    %5302 = vmatprep.subr.mxu0 0.0
    %5303 = vmatpush1.msra.mxu0 0.0
    %5304 = vmatprep.subr.mxu0 0.0
    %5305 = vmatpush1.msra.mxu0 0.0
    %5306 = vmatprep.subr.mxu0 0.0
    %5307 = vmatpush1.msra.mxu0 0.0
    %5308 = vmatprep.subr.mxu0 0.0
    %5309 = vmatpush1.msra.mxu0 0.0
    %5310 = vmatprep.subr.mxu0 0.0
    %5311 = vmatpush1.msra.mxu0 0.0
    %5312 = vmatprep.subr.mxu0 0.0
    %5313 = vmatpush1.msra.mxu0 0.0
    %5314 = vmatprep.subr.mxu0 0.0
    %5315 = vmatpush1.msra.mxu0 0.0
    %5316 = vmatprep.subr.mxu0 0.0
    %5317 = vmatpush1.msra.mxu0 0.0
    %5318 = vmatprep.mubr.f32.mxu0 0.0
    %5319 = vmatmul.mubr.f32.gmra.mrb[0].mxu0 %v5249
    %v5320 = vpop.f32.mrb[0].mxu0
    %v5321 = vadd.f32 0.0, %v5320
    %v5322 = vpop.f32.mrb[0].mxu0
    %5323 = vmatprep.mubr.f32.mxu0 0.0
    %5324 = vmatmul.mubr.f32.gmra.mrb[0].mxu0 %v5252
    %v5325 = vpop.f32.mrb[0].mxu0
    %v5326 = vadd.f32 0.0, %v5325
    %v5327 = vpop.f32.mrb[0].mxu0
    %5328 = vdwg.mxu0
    %5329 = vrot.lane.b32.xlu0 %v730, 64
    %v5330 = vpop.permute.xlu0 %5329
    %5331 = vrot.lane.b32.xlu0 %v732, 64
    %v5332 = vpop.permute.xlu0 %5331
    %v5336 = vsel %vm3754, %v4415, 0
    %v5339 = vsel %vm3754, %v4416, 0
    %5341 = vmatprep.subr.mxu0 0.0
    %5342 = vmatpush1.msra.mxu0 %v5330
    %5343 = vmatprep.subr.mxu0 0.0
    %5344 = vmatpush1.msra.mxu0 %v5332
    %5345 = vmatprep.subr.mxu0 0.0
    %5346 = vmatpush1.msra.mxu0 0.0
    %5347 = vmatprep.subr.mxu0 0.0
    %5348 = vmatpush1.msra.mxu0 0.0
    %5349 = vmatprep.subr.mxu0 0.0
    %5350 = vmatpush1.msra.mxu0 0.0
    %5351 = vmatprep.subr.mxu0 0.0
    %5352 = vmatpush1.msra.mxu0 0.0
    %5353 = vmatprep.subr.mxu0 0.0
    %5354 = vmatpush1.msra.mxu0 0.0
    %5355 = vmatprep.subr.mxu0 0.0
    %5356 = vmatpush1.msra.mxu0 0.0
    %5357 = vmatprep.subr.mxu0 0.0
    %5358 = vmatpush1.msra.mxu0 0.0
    %5359 = vmatprep.subr.mxu0 0.0
    %5360 = vmatpush1.msra.mxu0 0.0
    %5361 = vmatprep.subr.mxu0 0.0
    %5362 = vmatpush1.msra.mxu0 0.0
    %5363 = vmatprep.subr.mxu0 0.0
    %5364 = vmatpush1.msra.mxu0 0.0
    %5365 = vmatprep.subr.mxu0 0.0
    %5366 = vmatpush1.msra.mxu0 0.0
    %5367 = vmatprep.subr.mxu0 0.0
    %5368 = vmatpush1.msra.mxu0 0.0
    %5369 = vmatprep.subr.mxu0 0.0
    %5370 = vmatpush1.msra.mxu0 0.0
    %5371 = vmatprep.subr.mxu0 0.0
    %5372 = vmatpush1.msra.mxu0 0.0
    %5373 = vmatprep.subr.mxu0 0.0
    %5374 = vmatpush1.msra.mxu0 0.0
    %5375 = vmatprep.subr.mxu0 0.0
    %5376 = vmatpush1.msra.mxu0 0.0
    %5377 = vmatprep.subr.mxu0 0.0
    %5378 = vmatpush1.msra.mxu0 0.0
    %5379 = vmatprep.subr.mxu0 0.0
    %5380 = vmatpush1.msra.mxu0 0.0
    %5381 = vmatprep.subr.mxu0 0.0
    %5382 = vmatpush1.msra.mxu0 0.0
    %5383 = vmatprep.subr.mxu0 0.0
    %5384 = vmatpush1.msra.mxu0 0.0
    %5385 = vmatprep.subr.mxu0 0.0
    %5386 = vmatpush1.msra.mxu0 0.0
    %5387 = vmatprep.subr.mxu0 0.0
    %5388 = vmatpush1.msra.mxu0 0.0
    %5389 = vmatprep.subr.mxu0 0.0
    %5390 = vmatpush1.msra.mxu0 0.0
    %5391 = vmatprep.subr.mxu0 0.0
    %5392 = vmatpush1.msra.mxu0 0.0
    %5393 = vmatprep.subr.mxu0 0.0
    %5394 = vmatpush1.msra.mxu0 0.0
    %5395 = vmatprep.subr.mxu0 0.0
    %5396 = vmatpush1.msra.mxu0 0.0
    %5397 = vmatprep.subr.mxu0 0.0
    %5398 = vmatpush1.msra.mxu0 0.0
    %5399 = vmatprep.subr.mxu0 0.0
    %5400 = vmatpush1.msra.mxu0 0.0
    %5401 = vmatprep.subr.mxu0 0.0
    %5402 = vmatpush1.msra.mxu0 0.0
    %5403 = vmatprep.subr.mxu0 0.0
    %5404 = vmatpush1.msra.mxu0 0.0
    %5405 = vmatprep.mubr.f32.mxu0 0.0
    %5406 = vmatmul.mubr.f32.gmra.mrb[0].mxu0 %v5336
    %v5407 = vpop.f32.mrb[0].mxu0
    %v5408 = vadd.f32 0.0, %v5407
    %v5409 = vpop.f32.mrb[0].mxu0
    %5410 = vmatprep.mubr.f32.mxu0 0.0
    %5411 = vmatmul.mubr.f32.gmra.mrb[0].mxu0 %v5339
    %v5412 = vpop.f32.mrb[0].mxu0
    %v5413 = vadd.f32 0.0, %v5412
    %v5414 = vpop.f32.mrb[0].mxu0
    %5415 = vdwg.mxu0
    %5416 = vrot.lane.b32.xlu0 %v734, 64
    %v5417 = vpop.permute.xlu0 %5416
    %5418 = vrot.lane.b32.xlu0 %v736, 64
    %v5419 = vpop.permute.xlu0 %5418
    %v5423 = vsel %vm3754, %v4417, 0
    %v5426 = vsel %vm3754, %v4418, 0
    %5428 = vmatprep.subr.mxu0 0.0
    %5429 = vmatpush1.msra.mxu0 %v5417
    %5430 = vmatprep.subr.mxu0 0.0
    %5431 = vmatpush1.msra.mxu0 %v5419
    %5432 = vmatprep.subr.mxu0 0.0
    %5433 = vmatpush1.msra.mxu0 0.0
    %5434 = vmatprep.subr.mxu0 0.0
    %5435 = vmatpush1.msra.mxu0 0.0
    %5436 = vmatprep.subr.mxu0 0.0
    %5437 = vmatpush1.msra.mxu0 0.0
    %5438 = vmatprep.subr.mxu0 0.0
    %5439 = vmatpush1.msra.mxu0 0.0
    %5440 = vmatprep.subr.mxu0 0.0
    %5441 = vmatpush1.msra.mxu0 0.0
    %5442 = vmatprep.subr.mxu0 0.0
    %5443 = vmatpush1.msra.mxu0 0.0
    %5444 = vmatprep.subr.mxu0 0.0
    %5445 = vmatpush1.msra.mxu0 0.0
    %5446 = vmatprep.subr.mxu0 0.0
    %5447 = vmatpush1.msra.mxu0 0.0
    %5448 = vmatprep.subr.mxu0 0.0
    %5449 = vmatpush1.msra.mxu0 0.0
    %5450 = vmatprep.subr.mxu0 0.0
    %5451 = vmatpush1.msra.mxu0 0.0
    %5452 = vmatprep.subr.mxu0 0.0
    %5453 = vmatpush1.msra.mxu0 0.0
    %5454 = vmatprep.subr.mxu0 0.0
    %5455 = vmatpush1.msra.mxu0 0.0
    %5456 = vmatprep.subr.mxu0 0.0
    %5457 = vmatpush1.msra.mxu0 0.0
    %5458 = vmatprep.subr.mxu0 0.0
    %5459 = vmatpush1.msra.mxu0 0.0
    %5460 = vmatprep.subr.mxu0 0.0
    %5461 = vmatpush1.msra.mxu0 0.0
    %5462 = vmatprep.subr.mxu0 0.0
    %5463 = vmatpush1.msra.mxu0 0.0
    %5464 = vmatprep.subr.mxu0 0.0
    %5465 = vmatpush1.msra.mxu0 0.0
    %5466 = vmatprep.subr.mxu0 0.0
    %5467 = vmatpush1.msra.mxu0 0.0
    %5468 = vmatprep.subr.mxu0 0.0
    %5469 = vmatpush1.msra.mxu0 0.0
    %5470 = vmatprep.subr.mxu0 0.0
    %5471 = vmatpush1.msra.mxu0 0.0
    %5472 = vmatprep.subr.mxu0 0.0
    %5473 = vmatpush1.msra.mxu0 0.0
    %5474 = vmatprep.subr.mxu0 0.0
    %5475 = vmatpush1.msra.mxu0 0.0
    %5476 = vmatprep.subr.mxu0 0.0
    %5477 = vmatpush1.msra.mxu0 0.0
    %5478 = vmatprep.subr.mxu0 0.0
    %5479 = vmatpush1.msra.mxu0 0.0
    %5480 = vmatprep.subr.mxu0 0.0
    %5481 = vmatpush1.msra.mxu0 0.0
    %5482 = vmatprep.subr.mxu0 0.0
    %5483 = vmatpush1.msra.mxu0 0.0
    %5484 = vmatprep.subr.mxu0 0.0
    %5485 = vmatpush1.msra.mxu0 0.0
    %5486 = vmatprep.subr.mxu0 0.0
    %5487 = vmatpush1.msra.mxu0 0.0
    %5488 = vmatprep.subr.mxu0 0.0
    %5489 = vmatpush1.msra.mxu0 0.0
    %5490 = vmatprep.subr.mxu0 0.0
    %5491 = vmatpush1.msra.mxu0 0.0
    %5492 = vmatprep.mubr.f32.mxu0 0.0
    %5493 = vmatmul.mubr.f32.gmra.mrb[0].mxu0 %v5423
    %v5494 = vpop.f32.mrb[0].mxu0
    %v5495 = vadd.f32 0.0, %v5494
    %v5496 = vpop.f32.mrb[0].mxu0
    %5497 = vmatprep.mubr.f32.mxu0 0.0
    %5498 = vmatmul.mubr.f32.gmra.mrb[0].mxu0 %v5426
    %v5499 = vpop.f32.mrb[0].mxu0
    %v5500 = vadd.f32 0.0, %v5499
    %v5501 = vpop.f32.mrb[0].mxu0
    %5502 = vdwg.mxu0
    %5503 = vrot.lane.b32.xlu0 %v738, 64
    %v5504 = vpop.permute.xlu0 %5503
    %5505 = vrot.lane.b32.xlu0 %v740, 64
    %v5506 = vpop.permute.xlu0 %5505
    %v5510 = vsel %vm3754, %v4419, 0
    %v5513 = vsel %vm3754, %v4420, 0
    %5515 = vmatprep.subr.mxu0 0.0
    %5516 = vmatpush1.msra.mxu0 %v5504
    %5517 = vmatprep.subr.mxu0 0.0
    %5518 = vmatpush1.msra.mxu0 %v5506
    %5519 = vmatprep.subr.mxu0 0.0
    %5520 = vmatpush1.msra.mxu0 0.0
    %5521 = vmatprep.subr.mxu0 0.0
    %5522 = vmatpush1.msra.mxu0 0.0
    %5523 = vmatprep.subr.mxu0 0.0
    %5524 = vmatpush1.msra.mxu0 0.0
    %5525 = vmatprep.subr.mxu0 0.0
    %5526 = vmatpush1.msra.mxu0 0.0
    %5527 = vmatprep.subr.mxu0 0.0
    %5528 = vmatpush1.msra.mxu0 0.0
    %5529 = vmatprep.subr.mxu0 0.0
    %5530 = vmatpush1.msra.mxu0 0.0
    %5531 = vmatprep.subr.mxu0 0.0
    %5532 = vmatpush1.msra.mxu0 0.0
    %5533 = vmatprep.subr.mxu0 0.0
    %5534 = vmatpush1.msra.mxu0 0.0
    %5535 = vmatprep.subr.mxu0 0.0
    %5536 = vmatpush1.msra.mxu0 0.0
    %5537 = vmatprep.subr.mxu0 0.0
    %5538 = vmatpush1.msra.mxu0 0.0
    %5539 = vmatprep.subr.mxu0 0.0
    %5540 = vmatpush1.msra.mxu0 0.0
    %5541 = vmatprep.subr.mxu0 0.0
    %5542 = vmatpush1.msra.mxu0 0.0
    %5543 = vmatprep.subr.mxu0 0.0
    %5544 = vmatpush1.msra.mxu0 0.0
    %5545 = vmatprep.subr.mxu0 0.0
    %5546 = vmatpush1.msra.mxu0 0.0
    %5547 = vmatprep.subr.mxu0 0.0
    %5548 = vmatpush1.msra.mxu0 0.0
    %5549 = vmatprep.subr.mxu0 0.0
    %5550 = vmatpush1.msra.mxu0 0.0
    %5551 = vmatprep.subr.mxu0 0.0
    %5552 = vmatpush1.msra.mxu0 0.0
    %5553 = vmatprep.subr.mxu0 0.0
    %5554 = vmatpush1.msra.mxu0 0.0
    %5555 = vmatprep.subr.mxu0 0.0
    %5556 = vmatpush1.msra.mxu0 0.0
    %5557 = vmatprep.subr.mxu0 0.0
    %5558 = vmatpush1.msra.mxu0 0.0
    %5559 = vmatprep.subr.mxu0 0.0
    %5560 = vmatpush1.msra.mxu0 0.0
    %5561 = vmatprep.subr.mxu0 0.0
    %5562 = vmatpush1.msra.mxu0 0.0
    %5563 = vmatprep.subr.mxu0 0.0
    %5564 = vmatpush1.msra.mxu0 0.0
    %5565 = vmatprep.subr.mxu0 0.0
    %5566 = vmatpush1.msra.mxu0 0.0
    %5567 = vmatprep.subr.mxu0 0.0
    %5568 = vmatpush1.msra.mxu0 0.0
    %5569 = vmatprep.subr.mxu0 0.0
    %5570 = vmatpush1.msra.mxu0 0.0
    %5571 = vmatprep.subr.mxu0 0.0
    %5572 = vmatpush1.msra.mxu0 0.0
    %5573 = vmatprep.subr.mxu0 0.0
    %5574 = vmatpush1.msra.mxu0 0.0
    %5575 = vmatprep.subr.mxu0 0.0
    %5576 = vmatpush1.msra.mxu0 0.0
    %5577 = vmatprep.subr.mxu0 0.0
    %5578 = vmatpush1.msra.mxu0 0.0
    %5579 = vmatprep.mubr.f32.mxu0 0.0
    %5580 = vmatmul.mubr.f32.gmra.mrb[0].mxu0 %v5510
    %v5581 = vpop.f32.mrb[0].mxu0
    %v5582 = vadd.f32 0.0, %v5581
    %v5583 = vpop.f32.mrb[0].mxu0
    %5584 = vmatprep.mubr.f32.mxu0 0.0
    %5585 = vmatmul.mubr.f32.gmra.mrb[0].mxu0 %v5513
    %v5586 = vpop.f32.mrb[0].mxu0
    %v5587 = vadd.f32 0.0, %v5586
    %v5588 = vpop.f32.mrb[0].mxu0
    %5589 = vdwg.mxu0
    %5590 = vrot.lane.b32.xlu0 %v742, 64
    %v5591 = vpop.permute.xlu0 %5590
    %5592 = vrot.lane.b32.xlu0 %v744, 64
    %v5593 = vpop.permute.xlu0 %5592
    %v5597 = vsel %vm3754, %v4421, 0
    %v5600 = vsel %vm3754, %v4422, 0
    %5602 = vmatprep.subr.mxu0 0.0
    %5603 = vmatpush1.msra.mxu0 %v5591
    %5604 = vmatprep.subr.mxu0 0.0
    %5605 = vmatpush1.msra.mxu0 %v5593
    %5606 = vmatprep.subr.mxu0 0.0
    %5607 = vmatpush1.msra.mxu0 0.0
    %5608 = vmatprep.subr.mxu0 0.0
    %5609 = vmatpush1.msra.mxu0 0.0
    %5610 = vmatprep.subr.mxu0 0.0
    %5611 = vmatpush1.msra.mxu0 0.0
    %5612 = vmatprep.subr.mxu0 0.0
    %5613 = vmatpush1.msra.mxu0 0.0
    %5614 = vmatprep.subr.mxu0 0.0
    %5615 = vmatpush1.msra.mxu0 0.0
    %5616 = vmatprep.subr.mxu0 0.0
    %5617 = vmatpush1.msra.mxu0 0.0
    %5618 = vmatprep.subr.mxu0 0.0
    %5619 = vmatpush1.msra.mxu0 0.0
    %5620 = vmatprep.subr.mxu0 0.0
    %5621 = vmatpush1.msra.mxu0 0.0
    %5622 = vmatprep.subr.mxu0 0.0
    %5623 = vmatpush1.msra.mxu0 0.0
    %5624 = vmatprep.subr.mxu0 0.0
    %5625 = vmatpush1.msra.mxu0 0.0
    %5626 = vmatprep.subr.mxu0 0.0
    %5627 = vmatpush1.msra.mxu0 0.0
    %5628 = vmatprep.subr.mxu0 0.0
    %5629 = vmatpush1.msra.mxu0 0.0
    %5630 = vmatprep.subr.mxu0 0.0
    %5631 = vmatpush1.msra.mxu0 0.0
    %5632 = vmatprep.subr.mxu0 0.0
    %5633 = vmatpush1.msra.mxu0 0.0
    %5634 = vmatprep.subr.mxu0 0.0
    %5635 = vmatpush1.msra.mxu0 0.0
    %5636 = vmatprep.subr.mxu0 0.0
    %5637 = vmatpush1.msra.mxu0 0.0
    %5638 = vmatprep.subr.mxu0 0.0
    %5639 = vmatpush1.msra.mxu0 0.0
    %5640 = vmatprep.subr.mxu0 0.0
    %5641 = vmatpush1.msra.mxu0 0.0
    %5642 = vmatprep.subr.mxu0 0.0
    %5643 = vmatpush1.msra.mxu0 0.0
    %5644 = vmatprep.subr.mxu0 0.0
    %5645 = vmatpush1.msra.mxu0 0.0
    %5646 = vmatprep.subr.mxu0 0.0
    %5647 = vmatpush1.msra.mxu0 0.0
    %5648 = vmatprep.subr.mxu0 0.0
    %5649 = vmatpush1.msra.mxu0 0.0
    %5650 = vmatprep.subr.mxu0 0.0
    %5651 = vmatpush1.msra.mxu0 0.0
    %5652 = vmatprep.subr.mxu0 0.0
    %5653 = vmatpush1.msra.mxu0 0.0
    %5654 = vmatprep.subr.mxu0 0.0
    %5655 = vmatpush1.msra.mxu0 0.0
    %5656 = vmatprep.subr.mxu0 0.0
    %5657 = vmatpush1.msra.mxu0 0.0
    %5658 = vmatprep.subr.mxu0 0.0
    %5659 = vmatpush1.msra.mxu0 0.0
    %5660 = vmatprep.subr.mxu0 0.0
    %5661 = vmatpush1.msra.mxu0 0.0
    %5662 = vmatprep.subr.mxu0 0.0
    %5663 = vmatpush1.msra.mxu0 0.0
    %5664 = vmatprep.subr.mxu0 0.0
    %5665 = vmatpush1.msra.mxu0 0.0
    %5666 = vmatprep.mubr.f32.mxu0 0.0
    %5667 = vmatmul.mubr.f32.gmra.mrb[0].mxu0 %v5597
    %v5668 = vpop.f32.mrb[0].mxu0
    %v5669 = vadd.f32 0.0, %v5668
    %v5670 = vpop.f32.mrb[0].mxu0
    %5671 = vmatprep.mubr.f32.mxu0 0.0
    %5672 = vmatmul.mubr.f32.gmra.mrb[0].mxu0 %v5600
    %v5673 = vpop.f32.mrb[0].mxu0
    %v5674 = vadd.f32 0.0, %v5673
    %v5675 = vpop.f32.mrb[0].mxu0
    %5676 = vdwg.mxu0
    %5677 = vrot.lane.b32.xlu0 %v746, 64
    %v5678 = vpop.permute.xlu0 %5677
    %5679 = vrot.lane.b32.xlu0 %v748, 64
    %v5680 = vpop.permute.xlu0 %5679
    %v5684 = vsel %vm3754, %v4423, 0
    %v5687 = vsel %vm3754, %v4424, 0
    %5689 = vmatprep.subr.mxu0 0.0
    %5690 = vmatpush1.msra.mxu0 %v5678
    %5691 = vmatprep.subr.mxu0 0.0
    %5692 = vmatpush1.msra.mxu0 %v5680
    %5693 = vmatprep.subr.mxu0 0.0
    %5694 = vmatpush1.msra.mxu0 0.0
    %5695 = vmatprep.subr.mxu0 0.0
    %5696 = vmatpush1.msra.mxu0 0.0
    %5697 = vmatprep.subr.mxu0 0.0
    %5698 = vmatpush1.msra.mxu0 0.0
    %5699 = vmatprep.subr.mxu0 0.0
    %5700 = vmatpush1.msra.mxu0 0.0
    %5701 = vmatprep.subr.mxu0 0.0
    %5702 = vmatpush1.msra.mxu0 0.0
    %5703 = vmatprep.subr.mxu0 0.0
    %5704 = vmatpush1.msra.mxu0 0.0
    %5705 = vmatprep.subr.mxu0 0.0
    %5706 = vmatpush1.msra.mxu0 0.0
    %5707 = vmatprep.subr.mxu0 0.0
    %5708 = vmatpush1.msra.mxu0 0.0
    %5709 = vmatprep.subr.mxu0 0.0
    %5710 = vmatpush1.msra.mxu0 0.0
    %5711 = vmatprep.subr.mxu0 0.0
    %5712 = vmatpush1.msra.mxu0 0.0
    %5713 = vmatprep.subr.mxu0 0.0
    %5714 = vmatpush1.msra.mxu0 0.0
    %5715 = vmatprep.subr.mxu0 0.0
    %5716 = vmatpush1.msra.mxu0 0.0
    %5717 = vmatprep.subr.mxu0 0.0
    %5718 = vmatpush1.msra.mxu0 0.0
    %5719 = vmatprep.subr.mxu0 0.0
    %5720 = vmatpush1.msra.mxu0 0.0
    %5721 = vmatprep.subr.mxu0 0.0
    %5722 = vmatpush1.msra.mxu0 0.0
    %5723 = vmatprep.subr.mxu0 0.0
    %5724 = vmatpush1.msra.mxu0 0.0
    %5725 = vmatprep.subr.mxu0 0.0
    %5726 = vmatpush1.msra.mxu0 0.0
    %5727 = vmatprep.subr.mxu0 0.0
    %5728 = vmatpush1.msra.mxu0 0.0
    %5729 = vmatprep.subr.mxu0 0.0
    %5730 = vmatpush1.msra.mxu0 0.0
    %5731 = vmatprep.subr.mxu0 0.0
    %5732 = vmatpush1.msra.mxu0 0.0
    %5733 = vmatprep.subr.mxu0 0.0
    %5734 = vmatpush1.msra.mxu0 0.0
    %5735 = vmatprep.subr.mxu0 0.0
    %5736 = vmatpush1.msra.mxu0 0.0
    %5737 = vmatprep.subr.mxu0 0.0
    %5738 = vmatpush1.msra.mxu0 0.0
    %5739 = vmatprep.subr.mxu0 0.0
    %5740 = vmatpush1.msra.mxu0 0.0
    %5741 = vmatprep.subr.mxu0 0.0
    %5742 = vmatpush1.msra.mxu0 0.0
    %5743 = vmatprep.subr.mxu0 0.0
    %5744 = vmatpush1.msra.mxu0 0.0
    %5745 = vmatprep.subr.mxu0 0.0
    %5746 = vmatpush1.msra.mxu0 0.0
    %5747 = vmatprep.subr.mxu0 0.0
    %5748 = vmatpush1.msra.mxu0 0.0
    %5749 = vmatprep.subr.mxu0 0.0
    %5750 = vmatpush1.msra.mxu0 0.0
    %5751 = vmatprep.subr.mxu0 0.0
    %5752 = vmatpush1.msra.mxu0 0.0
    %5753 = vmatprep.mubr.f32.mxu0 0.0
    %5754 = vmatmul.mubr.f32.gmra.mrb[0].mxu0 %v5684
    %v5755 = vpop.f32.mrb[0].mxu0
    %v5756 = vadd.f32 0.0, %v5755
    %v5757 = vpop.f32.mrb[0].mxu0
    %5758 = vmatprep.mubr.f32.mxu0 0.0
    %5759 = vmatmul.mubr.f32.gmra.mrb[0].mxu0 %v5687
    %v5760 = vpop.f32.mrb[0].mxu0
    %v5761 = vadd.f32 0.0, %v5760
    %v5762 = vpop.f32.mrb[0].mxu0
    %5763 = vdwg.mxu0
    %5764 = vrot.lane.b32.xlu0 %v750, 64
    %v5765 = vpop.permute.xlu0 %5764
    %5766 = vrot.lane.b32.xlu0 %v752, 64
    %v5767 = vpop.permute.xlu0 %5766
    %v5771 = vsel %vm3754, %v4425, 0
    %v5774 = vsel %vm3754, %v4426, 0
    %5776 = vmatprep.subr.mxu0 0.0
    %5777 = vmatpush1.msra.mxu0 %v5765
    %5778 = vmatprep.subr.mxu0 0.0
    %5779 = vmatpush1.msra.mxu0 %v5767
    %5780 = vmatprep.subr.mxu0 0.0
    %5781 = vmatpush1.msra.mxu0 0.0
    %5782 = vmatprep.subr.mxu0 0.0
    %5783 = vmatpush1.msra.mxu0 0.0
    %5784 = vmatprep.subr.mxu0 0.0
    %5785 = vmatpush1.msra.mxu0 0.0
    %5786 = vmatprep.subr.mxu0 0.0
    %5787 = vmatpush1.msra.mxu0 0.0
    %5788 = vmatprep.subr.mxu0 0.0
    %5789 = vmatpush1.msra.mxu0 0.0
    %5790 = vmatprep.subr.mxu0 0.0
    %5791 = vmatpush1.msra.mxu0 0.0
    %5792 = vmatprep.subr.mxu0 0.0
    %5793 = vmatpush1.msra.mxu0 0.0
    %5794 = vmatprep.subr.mxu0 0.0
    %5795 = vmatpush1.msra.mxu0 0.0
    %5796 = vmatprep.subr.mxu0 0.0
    %5797 = vmatpush1.msra.mxu0 0.0
    %5798 = vmatprep.subr.mxu0 0.0
    %5799 = vmatpush1.msra.mxu0 0.0
    %5800 = vmatprep.subr.mxu0 0.0
    %5801 = vmatpush1.msra.mxu0 0.0
    %5802 = vmatprep.subr.mxu0 0.0
    %5803 = vmatpush1.msra.mxu0 0.0
    %5804 = vmatprep.subr.mxu0 0.0
    %5805 = vmatpush1.msra.mxu0 0.0
    %5806 = vmatprep.subr.mxu0 0.0
    %5807 = vmatpush1.msra.mxu0 0.0
    %5808 = vmatprep.subr.mxu0 0.0
    %5809 = vmatpush1.msra.mxu0 0.0
    %5810 = vmatprep.subr.mxu0 0.0
    %5811 = vmatpush1.msra.mxu0 0.0
    %5812 = vmatprep.subr.mxu0 0.0
    %5813 = vmatpush1.msra.mxu0 0.0
    %5814 = vmatprep.subr.mxu0 0.0
    %5815 = vmatpush1.msra.mxu0 0.0
    %5816 = vmatprep.subr.mxu0 0.0
    %5817 = vmatpush1.msra.mxu0 0.0
    %5818 = vmatprep.subr.mxu0 0.0
    %5819 = vmatpush1.msra.mxu0 0.0
    %5820 = vmatprep.subr.mxu0 0.0
    %5821 = vmatpush1.msra.mxu0 0.0
    %5822 = vmatprep.subr.mxu0 0.0
    %5823 = vmatpush1.msra.mxu0 0.0
    %5824 = vmatprep.subr.mxu0 0.0
    %5825 = vmatpush1.msra.mxu0 0.0
    %5826 = vmatprep.subr.mxu0 0.0
    %5827 = vmatpush1.msra.mxu0 0.0
    %5828 = vmatprep.subr.mxu0 0.0
    %5829 = vmatpush1.msra.mxu0 0.0
    %5830 = vmatprep.subr.mxu0 0.0
    %5831 = vmatpush1.msra.mxu0 0.0
    %5832 = vmatprep.subr.mxu0 0.0
    %5833 = vmatpush1.msra.mxu0 0.0
    %5834 = vmatprep.subr.mxu0 0.0
    %5835 = vmatpush1.msra.mxu0 0.0
    %5836 = vmatprep.subr.mxu0 0.0
    %5837 = vmatpush1.msra.mxu0 0.0
    %5838 = vmatprep.subr.mxu0 0.0
    %5839 = vmatpush1.msra.mxu0 0.0
    %5840 = vmatprep.mubr.f32.mxu0 0.0
    %5841 = vmatmul.mubr.f32.gmra.mrb[0].mxu0 %v5771
    %v5842 = vpop.f32.mrb[0].mxu0
    %v5843 = vadd.f32 0.0, %v5842
    %v5844 = vpop.f32.mrb[0].mxu0
    %5845 = vmatprep.mubr.f32.mxu0 0.0
    %5846 = vmatmul.mubr.f32.gmra.mrb[0].mxu0 %v5774
    %v5847 = vpop.f32.mrb[0].mxu0
    %v5848 = vadd.f32 0.0, %v5847
    %v5849 = vpop.f32.mrb[0].mxu0
    %5850 = vdwg.mxu0
    %5851 = vrot.lane.b32.xlu0 %v754, 64
    %v5852 = vpop.permute.xlu0 %5851
    %5853 = vrot.lane.b32.xlu0 %v756, 64
    %v5854 = vpop.permute.xlu0 %5853
    %v5858 = vsel %vm3754, %v4427, 0
    %v5861 = vsel %vm3754, %v4428, 0
    %5863 = vmatprep.subr.mxu0 0.0
    %5864 = vmatpush1.msra.mxu0 %v5852
    %5865 = vmatprep.subr.mxu0 0.0
    %5866 = vmatpush1.msra.mxu0 %v5854
    %5867 = vmatprep.subr.mxu0 0.0
    %5868 = vmatpush1.msra.mxu0 0.0
    %5869 = vmatprep.subr.mxu0 0.0
    %5870 = vmatpush1.msra.mxu0 0.0
    %5871 = vmatprep.subr.mxu0 0.0
    %5872 = vmatpush1.msra.mxu0 0.0
    %5873 = vmatprep.subr.mxu0 0.0
    %5874 = vmatpush1.msra.mxu0 0.0
    %5875 = vmatprep.subr.mxu0 0.0
    %5876 = vmatpush1.msra.mxu0 0.0
    %5877 = vmatprep.subr.mxu0 0.0
    %5878 = vmatpush1.msra.mxu0 0.0
    %5879 = vmatprep.subr.mxu0 0.0
    %5880 = vmatpush1.msra.mxu0 0.0
    %5881 = vmatprep.subr.mxu0 0.0
    %5882 = vmatpush1.msra.mxu0 0.0
    %5883 = vmatprep.subr.mxu0 0.0
    %5884 = vmatpush1.msra.mxu0 0.0
    %5885 = vmatprep.subr.mxu0 0.0
    %5886 = vmatpush1.msra.mxu0 0.0
    %5887 = vmatprep.subr.mxu0 0.0
    %5888 = vmatpush1.msra.mxu0 0.0
    %5889 = vmatprep.subr.mxu0 0.0
    %5890 = vmatpush1.msra.mxu0 0.0
    %5891 = vmatprep.subr.mxu0 0.0
    %5892 = vmatpush1.msra.mxu0 0.0
    %5893 = vmatprep.subr.mxu0 0.0
    %5894 = vmatpush1.msra.mxu0 0.0
    %5895 = vmatprep.subr.mxu0 0.0
    %5896 = vmatpush1.msra.mxu0 0.0
    %5897 = vmatprep.subr.mxu0 0.0
    %5898 = vmatpush1.msra.mxu0 0.0
    %5899 = vmatprep.subr.mxu0 0.0
    %5900 = vmatpush1.msra.mxu0 0.0
    %5901 = vmatprep.subr.mxu0 0.0
    %5902 = vmatpush1.msra.mxu0 0.0
    %5903 = vmatprep.subr.mxu0 0.0
    %5904 = vmatpush1.msra.mxu0 0.0
    %5905 = vmatprep.subr.mxu0 0.0
    %5906 = vmatpush1.msra.mxu0 0.0
    %5907 = vmatprep.subr.mxu0 0.0
    %5908 = vmatpush1.msra.mxu0 0.0
    %5909 = vmatprep.subr.mxu0 0.0
    %5910 = vmatpush1.msra.mxu0 0.0
    %5911 = vmatprep.subr.mxu0 0.0
    %5912 = vmatpush1.msra.mxu0 0.0
    %5913 = vmatprep.subr.mxu0 0.0
    %5914 = vmatpush1.msra.mxu0 0.0
    %5915 = vmatprep.subr.mxu0 0.0
    %5916 = vmatpush1.msra.mxu0 0.0
    %5917 = vmatprep.subr.mxu0 0.0
    %5918 = vmatpush1.msra.mxu0 0.0
    %5919 = vmatprep.subr.mxu0 0.0
    %5920 = vmatpush1.msra.mxu0 0.0
    %5921 = vmatprep.subr.mxu0 0.0
    %5922 = vmatpush1.msra.mxu0 0.0
    %5923 = vmatprep.subr.mxu0 0.0
    %5924 = vmatpush1.msra.mxu0 0.0
    %5925 = vmatprep.subr.mxu0 0.0
    %5926 = vmatpush1.msra.mxu0 0.0
    %5927 = vmatprep.mubr.f32.mxu0 0.0
    %5928 = vmatmul.mubr.f32.gmra.mrb[0].mxu0 %v5858
    %v5929 = vpop.f32.mrb[0].mxu0
    %v5930 = vadd.f32 0.0, %v5929
    %v5931 = vpop.f32.mrb[0].mxu0
    %5932 = vmatprep.mubr.f32.mxu0 0.0
    %5933 = vmatmul.mubr.f32.gmra.mrb[0].mxu0 %v5861
    %v5934 = vpop.f32.mrb[0].mxu0
    %v5935 = vadd.f32 0.0, %v5934
    %v5936 = vpop.f32.mrb[0].mxu0
    %5937 = vdwg.mxu0
    %5938 = vrot.lane.b32.xlu0 %v758, 64
    %v5939 = vpop.permute.xlu0 %5938
    %5940 = vrot.lane.b32.xlu0 %v760, 64
    %v5941 = vpop.permute.xlu0 %5940
    %v5945 = vsel %vm3754, %v4429, 0
    %v5948 = vsel %vm3754, %v4430, 0
    %5950 = vmatprep.subr.mxu0 0.0
    %5951 = vmatpush1.msra.mxu0 %v5939
    %5952 = vmatprep.subr.mxu0 0.0
    %5953 = vmatpush1.msra.mxu0 %v5941
    %5954 = vmatprep.subr.mxu0 0.0
    %5955 = vmatpush1.msra.mxu0 0.0
    %5956 = vmatprep.subr.mxu0 0.0
    %5957 = vmatpush1.msra.mxu0 0.0
    %5958 = vmatprep.subr.mxu0 0.0
    %5959 = vmatpush1.msra.mxu0 0.0
    %5960 = vmatprep.subr.mxu0 0.0
    %5961 = vmatpush1.msra.mxu0 0.0
    %5962 = vmatprep.subr.mxu0 0.0
    %5963 = vmatpush1.msra.mxu0 0.0
    %5964 = vmatprep.subr.mxu0 0.0
    %5965 = vmatpush1.msra.mxu0 0.0
    %5966 = vmatprep.subr.mxu0 0.0
    %5967 = vmatpush1.msra.mxu0 0.0
    %5968 = vmatprep.subr.mxu0 0.0
    %5969 = vmatpush1.msra.mxu0 0.0
    %5970 = vmatprep.subr.mxu0 0.0
    %5971 = vmatpush1.msra.mxu0 0.0
    %5972 = vmatprep.subr.mxu0 0.0
    %5973 = vmatpush1.msra.mxu0 0.0
    %5974 = vmatprep.subr.mxu0 0.0
    %5975 = vmatpush1.msra.mxu0 0.0
    %5976 = vmatprep.subr.mxu0 0.0
    %5977 = vmatpush1.msra.mxu0 0.0
    %5978 = vmatprep.subr.mxu0 0.0
    %5979 = vmatpush1.msra.mxu0 0.0
    %5980 = vmatprep.subr.mxu0 0.0
    %5981 = vmatpush1.msra.mxu0 0.0
    %5982 = vmatprep.subr.mxu0 0.0
    %5983 = vmatpush1.msra.mxu0 0.0
    %5984 = vmatprep.subr.mxu0 0.0
    %5985 = vmatpush1.msra.mxu0 0.0
    %5986 = vmatprep.subr.mxu0 0.0
    %5987 = vmatpush1.msra.mxu0 0.0
    %5988 = vmatprep.subr.mxu0 0.0
    %5989 = vmatpush1.msra.mxu0 0.0
    %5990 = vmatprep.subr.mxu0 0.0
    %5991 = vmatpush1.msra.mxu0 0.0
    %5992 = vmatprep.subr.mxu0 0.0
    %5993 = vmatpush1.msra.mxu0 0.0
    %5994 = vmatprep.subr.mxu0 0.0
    %5995 = vmatpush1.msra.mxu0 0.0
    %5996 = vmatprep.subr.mxu0 0.0
    %5997 = vmatpush1.msra.mxu0 0.0
    %5998 = vmatprep.subr.mxu0 0.0
    %5999 = vmatpush1.msra.mxu0 0.0
    %6000 = vmatprep.subr.mxu0 0.0
    %6001 = vmatpush1.msra.mxu0 0.0
    %6002 = vmatprep.subr.mxu0 0.0
    %6003 = vmatpush1.msra.mxu0 0.0
    %6004 = vmatprep.subr.mxu0 0.0
    %6005 = vmatpush1.msra.mxu0 0.0
    %6006 = vmatprep.subr.mxu0 0.0
    %6007 = vmatpush1.msra.mxu0 0.0
    %6008 = vmatprep.subr.mxu0 0.0
    %6009 = vmatpush1.msra.mxu0 0.0
    %6010 = vmatprep.subr.mxu0 0.0
    %6011 = vmatpush1.msra.mxu0 0.0
    %6012 = vmatprep.subr.mxu0 0.0
    %6013 = vmatpush1.msra.mxu0 0.0
    %6014 = vmatprep.mubr.f32.mxu0 0.0
    %6015 = vmatmul.mubr.f32.gmra.mrb[0].mxu0 %v5945
    %v6016 = vpop.f32.mrb[0].mxu0
    %v6017 = vadd.f32 0.0, %v6016
    %v6018 = vpop.f32.mrb[0].mxu0
    %6019 = vmatprep.mubr.f32.mxu0 0.0
    %6020 = vmatmul.mubr.f32.gmra.mrb[0].mxu0 %v5948
    %v6021 = vpop.f32.mrb[0].mxu0
    %v6022 = vadd.f32 0.0, %v6021
    %v6023 = vpop.f32.mrb[0].mxu0
    %6024 = vdwg.mxu0
    %6025 = vrot.lane.b32.xlu0 %v762, 64
    %v6026 = vpop.permute.xlu0 %6025
    %6027 = vrot.lane.b32.xlu0 %v764, 64
    %v6028 = vpop.permute.xlu0 %6027
    %v6032 = vsel %vm3754, %v4431, 0
    %v6035 = vsel %vm3754, %v4432, 0
    %6037 = vmatprep.subr.mxu0 0.0
    %6038 = vmatpush1.msra.mxu0 %v6026
    %6039 = vmatprep.subr.mxu0 0.0
    %6040 = vmatpush1.msra.mxu0 %v6028
    %6041 = vmatprep.subr.mxu0 0.0
    %6042 = vmatpush1.msra.mxu0 0.0
    %6043 = vmatprep.subr.mxu0 0.0
    %6044 = vmatpush1.msra.mxu0 0.0
    %6045 = vmatprep.subr.mxu0 0.0
    %6046 = vmatpush1.msra.mxu0 0.0
    %6047 = vmatprep.subr.mxu0 0.0
    %6048 = vmatpush1.msra.mxu0 0.0
    %6049 = vmatprep.subr.mxu0 0.0
    %6050 = vmatpush1.msra.mxu0 0.0
    %6051 = vmatprep.subr.mxu0 0.0
    %6052 = vmatpush1.msra.mxu0 0.0
    %6053 = vmatprep.subr.mxu0 0.0
    %6054 = vmatpush1.msra.mxu0 0.0
    %6055 = vmatprep.subr.mxu0 0.0
    %6056 = vmatpush1.msra.mxu0 0.0
    %6057 = vmatprep.subr.mxu0 0.0
    %6058 = vmatpush1.msra.mxu0 0.0
    %6059 = vmatprep.subr.mxu0 0.0
    %6060 = vmatpush1.msra.mxu0 0.0
    %6061 = vmatprep.subr.mxu0 0.0
    %6062 = vmatpush1.msra.mxu0 0.0
    %6063 = vmatprep.subr.mxu0 0.0
    %6064 = vmatpush1.msra.mxu0 0.0
    %6065 = vmatprep.subr.mxu0 0.0
    %6066 = vmatpush1.msra.mxu0 0.0
    %6067 = vmatprep.subr.mxu0 0.0
    %6068 = vmatpush1.msra.mxu0 0.0
    %6069 = vmatprep.subr.mxu0 0.0
    %6070 = vmatpush1.msra.mxu0 0.0
    %6071 = vmatprep.subr.mxu0 0.0
    %6072 = vmatpush1.msra.mxu0 0.0
    %6073 = vmatprep.subr.mxu0 0.0
    %6074 = vmatpush1.msra.mxu0 0.0
    %6075 = vmatprep.subr.mxu0 0.0
    %6076 = vmatpush1.msra.mxu0 0.0
    %6077 = vmatprep.subr.mxu0 0.0
    %6078 = vmatpush1.msra.mxu0 0.0
    %6079 = vmatprep.subr.mxu0 0.0
    %6080 = vmatpush1.msra.mxu0 0.0
    %6081 = vmatprep.subr.mxu0 0.0
    %6082 = vmatpush1.msra.mxu0 0.0
    %6083 = vmatprep.subr.mxu0 0.0
    %6084 = vmatpush1.msra.mxu0 0.0
    %6085 = vmatprep.subr.mxu0 0.0
    %6086 = vmatpush1.msra.mxu0 0.0
    %6087 = vmatprep.subr.mxu0 0.0
    %6088 = vmatpush1.msra.mxu0 0.0
    %6089 = vmatprep.subr.mxu0 0.0
    %6090 = vmatpush1.msra.mxu0 0.0
    %6091 = vmatprep.subr.mxu0 0.0
    %6092 = vmatpush1.msra.mxu0 0.0
    %6093 = vmatprep.subr.mxu0 0.0
    %6094 = vmatpush1.msra.mxu0 0.0
    %6095 = vmatprep.subr.mxu0 0.0
    %6096 = vmatpush1.msra.mxu0 0.0
    %6097 = vmatprep.subr.mxu0 0.0
    %6098 = vmatpush1.msra.mxu0 0.0
    %6099 = vmatprep.subr.mxu0 0.0
    %6100 = vmatpush1.msra.mxu0 0.0
    %6101 = vmatprep.mubr.f32.mxu0 0.0
    %6102 = vmatmul.mubr.f32.gmra.mrb[0].mxu0 %v6032
    %v6103 = vpop.f32.mrb[0].mxu0
    %v6104 = vadd.f32 0.0, %v6103
    %v6105 = vpop.f32.mrb[0].mxu0
    %6106 = vmatprep.mubr.f32.mxu0 0.0
    %6107 = vmatmul.mubr.f32.gmra.mrb[0].mxu0 %v6035
    %v6108 = vpop.f32.mrb[0].mxu0
    %v6109 = vadd.f32 0.0, %v6108
    %v6110 = vpop.f32.mrb[0].mxu0
    %6111 = vdwg.mxu0
    %6112 = vrot.lane.b32.xlu0 %v766, 64
    %v6113 = vpop.permute.xlu0 %6112
    %6114 = vrot.lane.b32.xlu0 %v768, 64
    %v6115 = vpop.permute.xlu0 %6114
    %v6119 = vsel %vm3754, %v4433, 0
    %v6122 = vsel %vm3754, %v4434, 0
    %6124 = vmatprep.subr.mxu0 0.0
    %6125 = vmatpush1.msra.mxu0 %v6113
    %6126 = vmatprep.subr.mxu0 0.0
    %6127 = vmatpush1.msra.mxu0 %v6115
    %6128 = vmatprep.subr.mxu0 0.0
    %6129 = vmatpush1.msra.mxu0 0.0
    %6130 = vmatprep.subr.mxu0 0.0
    %6131 = vmatpush1.msra.mxu0 0.0
    %6132 = vmatprep.subr.mxu0 0.0
    %6133 = vmatpush1.msra.mxu0 0.0
    %6134 = vmatprep.subr.mxu0 0.0
    %6135 = vmatpush1.msra.mxu0 0.0
    %6136 = vmatprep.subr.mxu0 0.0
    %6137 = vmatpush1.msra.mxu0 0.0
    %6138 = vmatprep.subr.mxu0 0.0
    %6139 = vmatpush1.msra.mxu0 0.0
    %6140 = vmatprep.subr.mxu0 0.0
    %6141 = vmatpush1.msra.mxu0 0.0
    %6142 = vmatprep.subr.mxu0 0.0
    %6143 = vmatpush1.msra.mxu0 0.0
    %6144 = vmatprep.subr.mxu0 0.0
    %6145 = vmatpush1.msra.mxu0 0.0
    %6146 = vmatprep.subr.mxu0 0.0
    %6147 = vmatpush1.msra.mxu0 0.0
    %6148 = vmatprep.subr.mxu0 0.0
    %6149 = vmatpush1.msra.mxu0 0.0
    %6150 = vmatprep.subr.mxu0 0.0
    %6151 = vmatpush1.msra.mxu0 0.0
    %6152 = vmatprep.subr.mxu0 0.0
    %6153 = vmatpush1.msra.mxu0 0.0
    %6154 = vmatprep.subr.mxu0 0.0
    %6155 = vmatpush1.msra.mxu0 0.0
    %6156 = vmatprep.subr.mxu0 0.0
    %6157 = vmatpush1.msra.mxu0 0.0
    %6158 = vmatprep.subr.mxu0 0.0
    %6159 = vmatpush1.msra.mxu0 0.0
    %6160 = vmatprep.subr.mxu0 0.0
    %6161 = vmatpush1.msra.mxu0 0.0
    %6162 = vmatprep.subr.mxu0 0.0
    %6163 = vmatpush1.msra.mxu0 0.0
    %6164 = vmatprep.subr.mxu0 0.0
    %6165 = vmatpush1.msra.mxu0 0.0
    %6166 = vmatprep.subr.mxu0 0.0
    %6167 = vmatpush1.msra.mxu0 0.0
    %6168 = vmatprep.subr.mxu0 0.0
    %6169 = vmatpush1.msra.mxu0 0.0
    %6170 = vmatprep.subr.mxu0 0.0
    %6171 = vmatpush1.msra.mxu0 0.0
    %6172 = vmatprep.subr.mxu0 0.0
    %6173 = vmatpush1.msra.mxu0 0.0
    %6174 = vmatprep.subr.mxu0 0.0
    %6175 = vmatpush1.msra.mxu0 0.0
    %6176 = vmatprep.subr.mxu0 0.0
    %6177 = vmatpush1.msra.mxu0 0.0
    %6178 = vmatprep.subr.mxu0 0.0
    %6179 = vmatpush1.msra.mxu0 0.0
    %6180 = vmatprep.subr.mxu0 0.0
    %6181 = vmatpush1.msra.mxu0 0.0
    %6182 = vmatprep.subr.mxu0 0.0
    %6183 = vmatpush1.msra.mxu0 0.0
    %6184 = vmatprep.subr.mxu0 0.0
    %6185 = vmatpush1.msra.mxu0 0.0
    %6186 = vmatprep.subr.mxu0 0.0
    %6187 = vmatpush1.msra.mxu0 0.0
    %6188 = vmatprep.mubr.f32.mxu0 0.0
    %6189 = vmatmul.mubr.f32.gmra.mrb[0].mxu0 %v6119
    %v6190 = vpop.f32.mrb[0].mxu0
    %v6191 = vadd.f32 0.0, %v6190
    %v6192 = vpop.f32.mrb[0].mxu0
    %6193 = vmatprep.mubr.f32.mxu0 0.0
    %6194 = vmatmul.mubr.f32.gmra.mrb[0].mxu0 %v6122
    %v6195 = vpop.f32.mrb[0].mxu0
    %v6196 = vadd.f32 0.0, %v6195
    %v6197 = vpop.f32.mrb[0].mxu0
    %6198 = vdwg.mxu0
    %6199 = vrot.lane.b32.xlu0 %v770, 64
    %v6200 = vpop.permute.xlu0 %6199
    %6201 = vrot.lane.b32.xlu0 %v772, 64
    %v6202 = vpop.permute.xlu0 %6201
    %v6206 = vsel %vm3754, %v4435, 0
    %v6209 = vsel %vm3754, %v4436, 0
    %6211 = vmatprep.subr.mxu0 0.0
    %6212 = vmatpush1.msra.mxu0 %v6200
    %6213 = vmatprep.subr.mxu0 0.0
    %6214 = vmatpush1.msra.mxu0 %v6202
    %6215 = vmatprep.subr.mxu0 0.0
    %6216 = vmatpush1.msra.mxu0 0.0
    %6217 = vmatprep.subr.mxu0 0.0
    %6218 = vmatpush1.msra.mxu0 0.0
    %6219 = vmatprep.subr.mxu0 0.0
    %6220 = vmatpush1.msra.mxu0 0.0
    %6221 = vmatprep.subr.mxu0 0.0
    %6222 = vmatpush1.msra.mxu0 0.0
    %6223 = vmatprep.subr.mxu0 0.0
    %6224 = vmatpush1.msra.mxu0 0.0
    %6225 = vmatprep.subr.mxu0 0.0
    %6226 = vmatpush1.msra.mxu0 0.0
    %6227 = vmatprep.subr.mxu0 0.0
    %6228 = vmatpush1.msra.mxu0 0.0
    %6229 = vmatprep.subr.mxu0 0.0
    %6230 = vmatpush1.msra.mxu0 0.0
    %6231 = vmatprep.subr.mxu0 0.0
    %6232 = vmatpush1.msra.mxu0 0.0
    %6233 = vmatprep.subr.mxu0 0.0
    %6234 = vmatpush1.msra.mxu0 0.0
    %6235 = vmatprep.subr.mxu0 0.0
    %6236 = vmatpush1.msra.mxu0 0.0
    %6237 = vmatprep.subr.mxu0 0.0
    %6238 = vmatpush1.msra.mxu0 0.0
    %6239 = vmatprep.subr.mxu0 0.0
    %6240 = vmatpush1.msra.mxu0 0.0
    %6241 = vmatprep.subr.mxu0 0.0
    %6242 = vmatpush1.msra.mxu0 0.0
    %6243 = vmatprep.subr.mxu0 0.0
    %6244 = vmatpush1.msra.mxu0 0.0
    %6245 = vmatprep.subr.mxu0 0.0
    %6246 = vmatpush1.msra.mxu0 0.0
    %6247 = vmatprep.subr.mxu0 0.0
    %6248 = vmatpush1.msra.mxu0 0.0
    %6249 = vmatprep.subr.mxu0 0.0
    %6250 = vmatpush1.msra.mxu0 0.0
    %6251 = vmatprep.subr.mxu0 0.0
    %6252 = vmatpush1.msra.mxu0 0.0
    %6253 = vmatprep.subr.mxu0 0.0
    %6254 = vmatpush1.msra.mxu0 0.0
    %6255 = vmatprep.subr.mxu0 0.0
    %6256 = vmatpush1.msra.mxu0 0.0
    %6257 = vmatprep.subr.mxu0 0.0
    %6258 = vmatpush1.msra.mxu0 0.0
    %6259 = vmatprep.subr.mxu0 0.0
    %6260 = vmatpush1.msra.mxu0 0.0
    %6261 = vmatprep.subr.mxu0 0.0
    %6262 = vmatpush1.msra.mxu0 0.0
    %6263 = vmatprep.subr.mxu0 0.0
    %6264 = vmatpush1.msra.mxu0 0.0
    %6265 = vmatprep.subr.mxu0 0.0
    %6266 = vmatpush1.msra.mxu0 0.0
    %6267 = vmatprep.subr.mxu0 0.0
    %6268 = vmatpush1.msra.mxu0 0.0
    %6269 = vmatprep.subr.mxu0 0.0
    %6270 = vmatpush1.msra.mxu0 0.0
    %6271 = vmatprep.subr.mxu0 0.0
    %6272 = vmatpush1.msra.mxu0 0.0
    %6273 = vmatprep.subr.mxu0 0.0
    %6274 = vmatpush1.msra.mxu0 0.0
    %6275 = vmatprep.mubr.f32.mxu0 0.0
    %6276 = vmatmul.mubr.f32.gmra.mrb[0].mxu0 %v6206
    %v6277 = vpop.f32.mrb[0].mxu0
    %v6278 = vadd.f32 0.0, %v6277
    %v6279 = vpop.f32.mrb[0].mxu0
    %6280 = vmatprep.mubr.f32.mxu0 0.0
    %6281 = vmatmul.mubr.f32.gmra.mrb[0].mxu0 %v6209
    %v6282 = vpop.f32.mrb[0].mxu0
    %v6283 = vadd.f32 0.0, %v6282
    %v6284 = vpop.f32.mrb[0].mxu0
    %6285 = vdwg.mxu0
    %6286 = vrot.lane.b32.xlu0 %v774, 64
    %v6287 = vpop.permute.xlu0 %6286
    %6288 = vrot.lane.b32.xlu0 %v776, 64
    %v6289 = vpop.permute.xlu0 %6288
    %v6293 = vsel %vm3754, %v4437, 0
    %v6296 = vsel %vm3754, %v4438, 0
    %6298 = vmatprep.subr.mxu0 0.0
    %6299 = vmatpush1.msra.mxu0 %v6287
    %6300 = vmatprep.subr.mxu0 0.0
    %6301 = vmatpush1.msra.mxu0 %v6289
    %6302 = vmatprep.subr.mxu0 0.0
    %6303 = vmatpush1.msra.mxu0 0.0
    %6304 = vmatprep.subr.mxu0 0.0
    %6305 = vmatpush1.msra.mxu0 0.0
    %6306 = vmatprep.subr.mxu0 0.0
    %6307 = vmatpush1.msra.mxu0 0.0
    %6308 = vmatprep.subr.mxu0 0.0
    %6309 = vmatpush1.msra.mxu0 0.0
    %6310 = vmatprep.subr.mxu0 0.0
    %6311 = vmatpush1.msra.mxu0 0.0
    %6312 = vmatprep.subr.mxu0 0.0
    %6313 = vmatpush1.msra.mxu0 0.0
    %6314 = vmatprep.subr.mxu0 0.0
    %6315 = vmatpush1.msra.mxu0 0.0
    %6316 = vmatprep.subr.mxu0 0.0
    %6317 = vmatpush1.msra.mxu0 0.0
    %6318 = vmatprep.subr.mxu0 0.0
    %6319 = vmatpush1.msra.mxu0 0.0
    %6320 = vmatprep.subr.mxu0 0.0
    %6321 = vmatpush1.msra.mxu0 0.0
    %6322 = vmatprep.subr.mxu0 0.0
    %6323 = vmatpush1.msra.mxu0 0.0
    %6324 = vmatprep.subr.mxu0 0.0
    %6325 = vmatpush1.msra.mxu0 0.0
    %6326 = vmatprep.subr.mxu0 0.0
    %6327 = vmatpush1.msra.mxu0 0.0
    %6328 = vmatprep.subr.mxu0 0.0
    %6329 = vmatpush1.msra.mxu0 0.0
    %6330 = vmatprep.subr.mxu0 0.0
    %6331 = vmatpush1.msra.mxu0 0.0
    %6332 = vmatprep.subr.mxu0 0.0
    %6333 = vmatpush1.msra.mxu0 0.0
    %6334 = vmatprep.subr.mxu0 0.0
    %6335 = vmatpush1.msra.mxu0 0.0
    %6336 = vmatprep.subr.mxu0 0.0
    %6337 = vmatpush1.msra.mxu0 0.0
    %6338 = vmatprep.subr.mxu0 0.0
    %6339 = vmatpush1.msra.mxu0 0.0
    %6340 = vmatprep.subr.mxu0 0.0
    %6341 = vmatpush1.msra.mxu0 0.0
    %6342 = vmatprep.subr.mxu0 0.0
    %6343 = vmatpush1.msra.mxu0 0.0
    %6344 = vmatprep.subr.mxu0 0.0
    %6345 = vmatpush1.msra.mxu0 0.0
    %6346 = vmatprep.subr.mxu0 0.0
    %6347 = vmatpush1.msra.mxu0 0.0
    %6348 = vmatprep.subr.mxu0 0.0
    %6349 = vmatpush1.msra.mxu0 0.0
    %6350 = vmatprep.subr.mxu0 0.0
    %6351 = vmatpush1.msra.mxu0 0.0
    %6352 = vmatprep.subr.mxu0 0.0
    %6353 = vmatpush1.msra.mxu0 0.0
    %6354 = vmatprep.subr.mxu0 0.0
    %6355 = vmatpush1.msra.mxu0 0.0
    %6356 = vmatprep.subr.mxu0 0.0
    %6357 = vmatpush1.msra.mxu0 0.0
    %6358 = vmatprep.subr.mxu0 0.0
    %6359 = vmatpush1.msra.mxu0 0.0
    %6360 = vmatprep.subr.mxu0 0.0
    %6361 = vmatpush1.msra.mxu0 0.0
    %6362 = vmatprep.mubr.f32.mxu0 0.0
    %6363 = vmatmul.mubr.f32.gmra.mrb[0].mxu0 %v6293
    %v6364 = vpop.f32.mrb[0].mxu0
    %v6365 = vadd.f32 0.0, %v6364
    %v6366 = vpop.f32.mrb[0].mxu0
    %6367 = vmatprep.mubr.f32.mxu0 0.0
    %6368 = vmatmul.mubr.f32.gmra.mrb[0].mxu0 %v6296
    %v6369 = vpop.f32.mrb[0].mxu0
    %v6370 = vadd.f32 0.0, %v6369
    %v6371 = vpop.f32.mrb[0].mxu0
    %6372 = vdwg.mxu0
    %6373 = vrot.lane.b32.xlu0 %v778, 64
    %v6374 = vpop.permute.xlu0 %6373
    %6375 = vrot.lane.b32.xlu0 %v780, 64
    %v6376 = vpop.permute.xlu0 %6375
    %v6380 = vsel %vm3754, %v4439, 0
    %v6383 = vsel %vm3754, %v4440, 0
    %6385 = vmatprep.subr.mxu0 0.0
    %6386 = vmatpush1.msra.mxu0 %v6374
    %6387 = vmatprep.subr.mxu0 0.0
    %6388 = vmatpush1.msra.mxu0 %v6376
    %6389 = vmatprep.subr.mxu0 0.0
    %6390 = vmatpush1.msra.mxu0 0.0
    %6391 = vmatprep.subr.mxu0 0.0
    %6392 = vmatpush1.msra.mxu0 0.0
    %6393 = vmatprep.subr.mxu0 0.0
    %6394 = vmatpush1.msra.mxu0 0.0
    %6395 = vmatprep.subr.mxu0 0.0
    %6396 = vmatpush1.msra.mxu0 0.0
    %6397 = vmatprep.subr.mxu0 0.0
    %6398 = vmatpush1.msra.mxu0 0.0
    %6399 = vmatprep.subr.mxu0 0.0
    %6400 = vmatpush1.msra.mxu0 0.0
    %6401 = vmatprep.subr.mxu0 0.0
    %6402 = vmatpush1.msra.mxu0 0.0
    %6403 = vmatprep.subr.mxu0 0.0
    %6404 = vmatpush1.msra.mxu0 0.0
    %6405 = vmatprep.subr.mxu0 0.0
    %6406 = vmatpush1.msra.mxu0 0.0
    %6407 = vmatprep.subr.mxu0 0.0
    %6408 = vmatpush1.msra.mxu0 0.0
    %6409 = vmatprep.subr.mxu0 0.0
    %6410 = vmatpush1.msra.mxu0 0.0
    %6411 = vmatprep.subr.mxu0 0.0
    %6412 = vmatpush1.msra.mxu0 0.0
    %6413 = vmatprep.subr.mxu0 0.0
    %6414 = vmatpush1.msra.mxu0 0.0
    %6415 = vmatprep.subr.mxu0 0.0
    %6416 = vmatpush1.msra.mxu0 0.0
    %6417 = vmatprep.subr.mxu0 0.0
    %6418 = vmatpush1.msra.mxu0 0.0
    %6419 = vmatprep.subr.mxu0 0.0
    %6420 = vmatpush1.msra.mxu0 0.0
    %6421 = vmatprep.subr.mxu0 0.0
    %6422 = vmatpush1.msra.mxu0 0.0
    %6423 = vmatprep.subr.mxu0 0.0
    %6424 = vmatpush1.msra.mxu0 0.0
    %6425 = vmatprep.subr.mxu0 0.0
    %6426 = vmatpush1.msra.mxu0 0.0
    %6427 = vmatprep.subr.mxu0 0.0
    %6428 = vmatpush1.msra.mxu0 0.0
    %6429 = vmatprep.subr.mxu0 0.0
    %6430 = vmatpush1.msra.mxu0 0.0
    %6431 = vmatprep.subr.mxu0 0.0
    %6432 = vmatpush1.msra.mxu0 0.0
    %6433 = vmatprep.subr.mxu0 0.0
    %6434 = vmatpush1.msra.mxu0 0.0
    %6435 = vmatprep.subr.mxu0 0.0
    %6436 = vmatpush1.msra.mxu0 0.0
    %6437 = vmatprep.subr.mxu0 0.0
    %6438 = vmatpush1.msra.mxu0 0.0
    %6439 = vmatprep.subr.mxu0 0.0
    %6440 = vmatpush1.msra.mxu0 0.0
    %6441 = vmatprep.subr.mxu0 0.0
    %6442 = vmatpush1.msra.mxu0 0.0
    %6443 = vmatprep.subr.mxu0 0.0
    %6444 = vmatpush1.msra.mxu0 0.0
    %6445 = vmatprep.subr.mxu0 0.0
    %6446 = vmatpush1.msra.mxu0 0.0
    %6447 = vmatprep.subr.mxu0 0.0
    %6448 = vmatpush1.msra.mxu0 0.0
    %6449 = vmatprep.mubr.f32.mxu0 0.0
    %6450 = vmatmul.mubr.f32.gmra.mrb[0].mxu0 %v6380
    %v6451 = vpop.f32.mrb[0].mxu0
    %v6452 = vadd.f32 0.0, %v6451
    %v6453 = vpop.f32.mrb[0].mxu0
    %6454 = vmatprep.mubr.f32.mxu0 0.0
    %6455 = vmatmul.mubr.f32.gmra.mrb[0].mxu0 %v6383
    %v6456 = vpop.f32.mrb[0].mxu0
    %v6457 = vadd.f32 0.0, %v6456
    %v6458 = vpop.f32.mrb[0].mxu0
    %6459 = vdwg.mxu0
    %6460 = vrot.lane.b32.xlu0 %v782, 64
    %v6461 = vpop.permute.xlu0 %6460
    %6462 = vrot.lane.b32.xlu0 %v784, 64
    %v6463 = vpop.permute.xlu0 %6462
    %v6467 = vsel %vm3754, %v4441, 0
    %v6470 = vsel %vm3754, %v4442, 0
    %6472 = vmatprep.subr.mxu0 0.0
    %6473 = vmatpush1.msra.mxu0 %v6461
    %6474 = vmatprep.subr.mxu0 0.0
    %6475 = vmatpush1.msra.mxu0 %v6463
    %6476 = vmatprep.subr.mxu0 0.0
    %6477 = vmatpush1.msra.mxu0 0.0
    %6478 = vmatprep.subr.mxu0 0.0
    %6479 = vmatpush1.msra.mxu0 0.0
    %6480 = vmatprep.subr.mxu0 0.0
    %6481 = vmatpush1.msra.mxu0 0.0
    %6482 = vmatprep.subr.mxu0 0.0
    %6483 = vmatpush1.msra.mxu0 0.0
    %6484 = vmatprep.subr.mxu0 0.0
    %6485 = vmatpush1.msra.mxu0 0.0
    %6486 = vmatprep.subr.mxu0 0.0
    %6487 = vmatpush1.msra.mxu0 0.0
    %6488 = vmatprep.subr.mxu0 0.0
    %6489 = vmatpush1.msra.mxu0 0.0
    %6490 = vmatprep.subr.mxu0 0.0
    %6491 = vmatpush1.msra.mxu0 0.0
    %6492 = vmatprep.subr.mxu0 0.0
    %6493 = vmatpush1.msra.mxu0 0.0
    %6494 = vmatprep.subr.mxu0 0.0
    %6495 = vmatpush1.msra.mxu0 0.0
    %6496 = vmatprep.subr.mxu0 0.0
    %6497 = vmatpush1.msra.mxu0 0.0
    %6498 = vmatprep.subr.mxu0 0.0
    %6499 = vmatpush1.msra.mxu0 0.0
    %6500 = vmatprep.subr.mxu0 0.0
    %6501 = vmatpush1.msra.mxu0 0.0
    %6502 = vmatprep.subr.mxu0 0.0
    %6503 = vmatpush1.msra.mxu0 0.0
    %6504 = vmatprep.subr.mxu0 0.0
    %6505 = vmatpush1.msra.mxu0 0.0
    %6506 = vmatprep.subr.mxu0 0.0
    %6507 = vmatpush1.msra.mxu0 0.0
    %6508 = vmatprep.subr.mxu0 0.0
    %6509 = vmatpush1.msra.mxu0 0.0
    %6510 = vmatprep.subr.mxu0 0.0
    %6511 = vmatpush1.msra.mxu0 0.0
    %6512 = vmatprep.subr.mxu0 0.0
    %6513 = vmatpush1.msra.mxu0 0.0
    %6514 = vmatprep.subr.mxu0 0.0
    %6515 = vmatpush1.msra.mxu0 0.0
    %6516 = vmatprep.subr.mxu0 0.0
    %6517 = vmatpush1.msra.mxu0 0.0
    %6518 = vmatprep.subr.mxu0 0.0
    %6519 = vmatpush1.msra.mxu0 0.0
    %6520 = vmatprep.subr.mxu0 0.0
    %6521 = vmatpush1.msra.mxu0 0.0
    %6522 = vmatprep.subr.mxu0 0.0
    %6523 = vmatpush1.msra.mxu0 0.0
    %6524 = vmatprep.subr.mxu0 0.0
    %6525 = vmatpush1.msra.mxu0 0.0
    %6526 = vmatprep.subr.mxu0 0.0
    %6527 = vmatpush1.msra.mxu0 0.0
    %6528 = vmatprep.subr.mxu0 0.0
    %6529 = vmatpush1.msra.mxu0 0.0
    %6530 = vmatprep.subr.mxu0 0.0
    %6531 = vmatpush1.msra.mxu0 0.0
    %6532 = vmatprep.subr.mxu0 0.0
    %6533 = vmatpush1.msra.mxu0 0.0
    %6534 = vmatprep.subr.mxu0 0.0
    %6535 = vmatpush1.msra.mxu0 0.0
    %6536 = vmatprep.mubr.f32.mxu0 0.0
    %6537 = vmatmul.mubr.f32.gmra.mrb[0].mxu0 %v6467
    %v6538 = vpop.f32.mrb[0].mxu0
    %v6539 = vadd.f32 0.0, %v6538
    %v6540 = vpop.f32.mrb[0].mxu0
    %6541 = vmatprep.mubr.f32.mxu0 0.0
    %6542 = vmatmul.mubr.f32.gmra.mrb[0].mxu0 %v6470
    %v6543 = vpop.f32.mrb[0].mxu0
    %v6544 = vadd.f32 0.0, %v6543
    %v6545 = vpop.f32.mrb[0].mxu0
    %6546 = vdwg.mxu0
    %6547 = vrot.lane.b32.xlu0 %v786, 64
    %v6548 = vpop.permute.xlu0 %6547
    %6549 = vrot.lane.b32.xlu0 %v788, 64
    %v6550 = vpop.permute.xlu0 %6549
    %v6554 = vsel %vm3754, %v4443, 0
    %v6557 = vsel %vm3754, %v4444, 0
    %6559 = vmatprep.subr.mxu0 0.0
    %6560 = vmatpush1.msra.mxu0 %v6548
    %6561 = vmatprep.subr.mxu0 0.0
    %6562 = vmatpush1.msra.mxu0 %v6550
    %6563 = vmatprep.subr.mxu0 0.0
    %6564 = vmatpush1.msra.mxu0 0.0
    %6565 = vmatprep.subr.mxu0 0.0
    %6566 = vmatpush1.msra.mxu0 0.0
    %6567 = vmatprep.subr.mxu0 0.0
    %6568 = vmatpush1.msra.mxu0 0.0
    %6569 = vmatprep.subr.mxu0 0.0
    %6570 = vmatpush1.msra.mxu0 0.0
    %6571 = vmatprep.subr.mxu0 0.0
    %6572 = vmatpush1.msra.mxu0 0.0
    %6573 = vmatprep.subr.mxu0 0.0
    %6574 = vmatpush1.msra.mxu0 0.0
    %6575 = vmatprep.subr.mxu0 0.0
    %6576 = vmatpush1.msra.mxu0 0.0
    %6577 = vmatprep.subr.mxu0 0.0
    %6578 = vmatpush1.msra.mxu0 0.0
    %6579 = vmatprep.subr.mxu0 0.0
    %6580 = vmatpush1.msra.mxu0 0.0
    %6581 = vmatprep.subr.mxu0 0.0
    %6582 = vmatpush1.msra.mxu0 0.0
    %6583 = vmatprep.subr.mxu0 0.0
    %6584 = vmatpush1.msra.mxu0 0.0
    %6585 = vmatprep.subr.mxu0 0.0
    %6586 = vmatpush1.msra.mxu0 0.0
    %6587 = vmatprep.subr.mxu0 0.0
    %6588 = vmatpush1.msra.mxu0 0.0
    %6589 = vmatprep.subr.mxu0 0.0
    %6590 = vmatpush1.msra.mxu0 0.0
    %6591 = vmatprep.subr.mxu0 0.0
    %6592 = vmatpush1.msra.mxu0 0.0
    %6593 = vmatprep.subr.mxu0 0.0
    %6594 = vmatpush1.msra.mxu0 0.0
    %6595 = vmatprep.subr.mxu0 0.0
    %6596 = vmatpush1.msra.mxu0 0.0
    %6597 = vmatprep.subr.mxu0 0.0
    %6598 = vmatpush1.msra.mxu0 0.0
    %6599 = vmatprep.subr.mxu0 0.0
    %6600 = vmatpush1.msra.mxu0 0.0
    %6601 = vmatprep.subr.mxu0 0.0
    %6602 = vmatpush1.msra.mxu0 0.0
    %6603 = vmatprep.subr.mxu0 0.0
    %6604 = vmatpush1.msra.mxu0 0.0
    %6605 = vmatprep.subr.mxu0 0.0
    %6606 = vmatpush1.msra.mxu0 0.0
    %6607 = vmatprep.subr.mxu0 0.0
    %6608 = vmatpush1.msra.mxu0 0.0
    %6609 = vmatprep.subr.mxu0 0.0
    %6610 = vmatpush1.msra.mxu0 0.0
    %6611 = vmatprep.subr.mxu0 0.0
    %6612 = vmatpush1.msra.mxu0 0.0
    %6613 = vmatprep.subr.mxu0 0.0
    %6614 = vmatpush1.msra.mxu0 0.0
    %6615 = vmatprep.subr.mxu0 0.0
    %6616 = vmatpush1.msra.mxu0 0.0
    %6617 = vmatprep.subr.mxu0 0.0
    %6618 = vmatpush1.msra.mxu0 0.0
    %6619 = vmatprep.subr.mxu0 0.0
    %6620 = vmatpush1.msra.mxu0 0.0
    %6621 = vmatprep.subr.mxu0 0.0
    %6622 = vmatpush1.msra.mxu0 0.0
    %6623 = vmatprep.mubr.f32.mxu0 0.0
    %6624 = vmatmul.mubr.f32.gmra.mrb[0].mxu0 %v6554
    %v6625 = vpop.f32.mrb[0].mxu0
    %v6626 = vadd.f32 0.0, %v6625
    %v6627 = vpop.f32.mrb[0].mxu0
    %6628 = vmatprep.mubr.f32.mxu0 0.0
    %6629 = vmatmul.mubr.f32.gmra.mrb[0].mxu0 %v6557
    %v6630 = vpop.f32.mrb[0].mxu0
    %v6631 = vadd.f32 0.0, %v6630
    %v6632 = vpop.f32.mrb[0].mxu0
    %6633 = vdwg.mxu0
    %6634 = vrot.lane.b32.xlu0 %v790, 64
    %v6635 = vpop.permute.xlu0 %6634
    %6636 = vrot.lane.b32.xlu0 %v792, 64
    %v6637 = vpop.permute.xlu0 %6636
    %v6641 = vsel %vm3754, %v4445, 0
    %v6644 = vsel %vm3754, %v4446, 0
    %6646 = vmatprep.subr.mxu0 0.0
    %6647 = vmatpush1.msra.mxu0 %v6635
    %6648 = vmatprep.subr.mxu0 0.0
    %6649 = vmatpush1.msra.mxu0 %v6637
    %6650 = vmatprep.subr.mxu0 0.0
    %6651 = vmatpush1.msra.mxu0 0.0
    %6652 = vmatprep.subr.mxu0 0.0
    %6653 = vmatpush1.msra.mxu0 0.0
    %6654 = vmatprep.subr.mxu0 0.0
    %6655 = vmatpush1.msra.mxu0 0.0
    %6656 = vmatprep.subr.mxu0 0.0
    %6657 = vmatpush1.msra.mxu0 0.0
    %6658 = vmatprep.subr.mxu0 0.0
    %6659 = vmatpush1.msra.mxu0 0.0
    %6660 = vmatprep.subr.mxu0 0.0
    %6661 = vmatpush1.msra.mxu0 0.0
    %6662 = vmatprep.subr.mxu0 0.0
    %6663 = vmatpush1.msra.mxu0 0.0
    %6664 = vmatprep.subr.mxu0 0.0
    %6665 = vmatpush1.msra.mxu0 0.0
    %6666 = vmatprep.subr.mxu0 0.0
    %6667 = vmatpush1.msra.mxu0 0.0
    %6668 = vmatprep.subr.mxu0 0.0
    %6669 = vmatpush1.msra.mxu0 0.0
    %6670 = vmatprep.subr.mxu0 0.0
    %6671 = vmatpush1.msra.mxu0 0.0
    %6672 = vmatprep.subr.mxu0 0.0
    %6673 = vmatpush1.msra.mxu0 0.0
    %6674 = vmatprep.subr.mxu0 0.0
    %6675 = vmatpush1.msra.mxu0 0.0
    %6676 = vmatprep.subr.mxu0 0.0
    %6677 = vmatpush1.msra.mxu0 0.0
    %6678 = vmatprep.subr.mxu0 0.0
    %6679 = vmatpush1.msra.mxu0 0.0
    %6680 = vmatprep.subr.mxu0 0.0
    %6681 = vmatpush1.msra.mxu0 0.0
    %6682 = vmatprep.subr.mxu0 0.0
    %6683 = vmatpush1.msra.mxu0 0.0
    %6684 = vmatprep.subr.mxu0 0.0
    %6685 = vmatpush1.msra.mxu0 0.0
    %6686 = vmatprep.subr.mxu0 0.0
    %6687 = vmatpush1.msra.mxu0 0.0
    %6688 = vmatprep.subr.mxu0 0.0
    %6689 = vmatpush1.msra.mxu0 0.0
    %6690 = vmatprep.subr.mxu0 0.0
    %6691 = vmatpush1.msra.mxu0 0.0
    %6692 = vmatprep.subr.mxu0 0.0
    %6693 = vmatpush1.msra.mxu0 0.0
    %6694 = vmatprep.subr.mxu0 0.0
    %6695 = vmatpush1.msra.mxu0 0.0
    %6696 = vmatprep.subr.mxu0 0.0
    %6697 = vmatpush1.msra.mxu0 0.0
    %6698 = vmatprep.subr.mxu0 0.0
    %6699 = vmatpush1.msra.mxu0 0.0
    %6700 = vmatprep.subr.mxu0 0.0
    %6701 = vmatpush1.msra.mxu0 0.0
    %6702 = vmatprep.subr.mxu0 0.0
    %6703 = vmatpush1.msra.mxu0 0.0
    %6704 = vmatprep.subr.mxu0 0.0
    %6705 = vmatpush1.msra.mxu0 0.0
    %6706 = vmatprep.subr.mxu0 0.0
    %6707 = vmatpush1.msra.mxu0 0.0
    %6708 = vmatprep.subr.mxu0 0.0
    %6709 = vmatpush1.msra.mxu0 0.0
    %6710 = vmatprep.mubr.f32.mxu0 0.0
    %6711 = vmatmul.mubr.f32.gmra.mrb[0].mxu0 %v6641
    %v6712 = vpop.f32.mrb[0].mxu0
    %v6713 = vadd.f32 0.0, %v6712
    %v6714 = vpop.f32.mrb[0].mxu0
    %6715 = vmatprep.mubr.f32.mxu0 0.0
    %6716 = vmatmul.mubr.f32.gmra.mrb[0].mxu0 %v6644
    %v6717 = vpop.f32.mrb[0].mxu0
    %v6718 = vadd.f32 0.0, %v6717
    %v6719 = vpop.f32.mrb[0].mxu0
    %6720 = vdwg.mxu0
    %6721 = vrot.lane.b32.xlu0 %v794, 64
    %v6722 = vpop.permute.xlu0 %6721
    %6723 = vrot.lane.b32.xlu0 %v796, 64
    %v6724 = vpop.permute.xlu0 %6723
    %v6728 = vsel %vm3754, %v4447, 0
    %v6731 = vsel %vm3754, %v4448, 0
    %6733 = vmatprep.subr.mxu0 0.0
    %6734 = vmatpush1.msra.mxu0 %v6722
    %6735 = vmatprep.subr.mxu0 0.0
    %6736 = vmatpush1.msra.mxu0 %v6724
    %6737 = vmatprep.subr.mxu0 0.0
    %6738 = vmatpush1.msra.mxu0 0.0
    %6739 = vmatprep.subr.mxu0 0.0
    %6740 = vmatpush1.msra.mxu0 0.0
    %6741 = vmatprep.subr.mxu0 0.0
    %6742 = vmatpush1.msra.mxu0 0.0
    %6743 = vmatprep.subr.mxu0 0.0
    %6744 = vmatpush1.msra.mxu0 0.0
    %6745 = vmatprep.subr.mxu0 0.0
    %6746 = vmatpush1.msra.mxu0 0.0
    %6747 = vmatprep.subr.mxu0 0.0
    %6748 = vmatpush1.msra.mxu0 0.0
    %6749 = vmatprep.subr.mxu0 0.0
    %6750 = vmatpush1.msra.mxu0 0.0
    %6751 = vmatprep.subr.mxu0 0.0
    %6752 = vmatpush1.msra.mxu0 0.0
    %6753 = vmatprep.subr.mxu0 0.0
    %6754 = vmatpush1.msra.mxu0 0.0
    %6755 = vmatprep.subr.mxu0 0.0
    %6756 = vmatpush1.msra.mxu0 0.0
    %6757 = vmatprep.subr.mxu0 0.0
    %6758 = vmatpush1.msra.mxu0 0.0
    %6759 = vmatprep.subr.mxu0 0.0
    %6760 = vmatpush1.msra.mxu0 0.0
    %6761 = vmatprep.subr.mxu0 0.0
    %6762 = vmatpush1.msra.mxu0 0.0
    %6763 = vmatprep.subr.mxu0 0.0
    %6764 = vmatpush1.msra.mxu0 0.0
    %6765 = vmatprep.subr.mxu0 0.0
    %6766 = vmatpush1.msra.mxu0 0.0
    %6767 = vmatprep.subr.mxu0 0.0
    %6768 = vmatpush1.msra.mxu0 0.0
    %6769 = vmatprep.subr.mxu0 0.0
    %6770 = vmatpush1.msra.mxu0 0.0
    %6771 = vmatprep.subr.mxu0 0.0
    %6772 = vmatpush1.msra.mxu0 0.0
    %6773 = vmatprep.subr.mxu0 0.0
    %6774 = vmatpush1.msra.mxu0 0.0
    %6775 = vmatprep.subr.mxu0 0.0
    %6776 = vmatpush1.msra.mxu0 0.0
    %6777 = vmatprep.subr.mxu0 0.0
    %6778 = vmatpush1.msra.mxu0 0.0
    %6779 = vmatprep.subr.mxu0 0.0
    %6780 = vmatpush1.msra.mxu0 0.0
    %6781 = vmatprep.subr.mxu0 0.0
    %6782 = vmatpush1.msra.mxu0 0.0
    %6783 = vmatprep.subr.mxu0 0.0
    %6784 = vmatpush1.msra.mxu0 0.0
    %6785 = vmatprep.subr.mxu0 0.0
    %6786 = vmatpush1.msra.mxu0 0.0
    %6787 = vmatprep.subr.mxu0 0.0
    %6788 = vmatpush1.msra.mxu0 0.0
    %6789 = vmatprep.subr.mxu0 0.0
    %6790 = vmatpush1.msra.mxu0 0.0
    %6791 = vmatprep.subr.mxu0 0.0
    %6792 = vmatpush1.msra.mxu0 0.0
    %6793 = vmatprep.subr.mxu0 0.0
    %6794 = vmatpush1.msra.mxu0 0.0
    %6795 = vmatprep.subr.mxu0 0.0
    %6796 = vmatpush1.msra.mxu0 0.0
    %6797 = vmatprep.mubr.f32.mxu0 0.0
    %6798 = vmatmul.mubr.f32.gmra.mrb[0].mxu0 %v6728
    %v6799 = vpop.f32.mrb[0].mxu0
    %v6800 = vadd.f32 0.0, %v6799
    %v6801 = vpop.f32.mrb[0].mxu0
    %6802 = vmatprep.mubr.f32.mxu0 0.0
    %6803 = vmatmul.mubr.f32.gmra.mrb[0].mxu0 %v6731
    %v6804 = vpop.f32.mrb[0].mxu0
    %v6805 = vadd.f32 0.0, %v6804
    %v6806 = vpop.f32.mrb[0].mxu0
    %6807 = vdwg.mxu0
    %6808 = vrot.lane.b32.xlu0 %v798, 64
    %v6809 = vpop.permute.xlu0 %6808
    %6810 = vrot.lane.b32.xlu0 %v800, 64
    %v6811 = vpop.permute.xlu0 %6810
    %v6815 = vsel %vm3754, %v4449, 0
    %v6818 = vsel %vm3754, %v4450, 0
    %6820 = vmatprep.subr.mxu0 0.0
    %6821 = vmatpush1.msra.mxu0 %v6809
    %6822 = vmatprep.subr.mxu0 0.0
    %6823 = vmatpush1.msra.mxu0 %v6811
    %6824 = vmatprep.subr.mxu0 0.0
    %6825 = vmatpush1.msra.mxu0 0.0
    %6826 = vmatprep.subr.mxu0 0.0
    %6827 = vmatpush1.msra.mxu0 0.0
    %6828 = vmatprep.subr.mxu0 0.0
    %6829 = vmatpush1.msra.mxu0 0.0
    %6830 = vmatprep.subr.mxu0 0.0
    %6831 = vmatpush1.msra.mxu0 0.0
    %6832 = vmatprep.subr.mxu0 0.0
    %6833 = vmatpush1.msra.mxu0 0.0
    %6834 = vmatprep.subr.mxu0 0.0
    %6835 = vmatpush1.msra.mxu0 0.0
    %6836 = vmatprep.subr.mxu0 0.0
    %6837 = vmatpush1.msra.mxu0 0.0
    %6838 = vmatprep.subr.mxu0 0.0
    %6839 = vmatpush1.msra.mxu0 0.0
    %6840 = vmatprep.subr.mxu0 0.0
    %6841 = vmatpush1.msra.mxu0 0.0
    %6842 = vmatprep.subr.mxu0 0.0
    %6843 = vmatpush1.msra.mxu0 0.0
    %6844 = vmatprep.subr.mxu0 0.0
    %6845 = vmatpush1.msra.mxu0 0.0
    %6846 = vmatprep.subr.mxu0 0.0
    %6847 = vmatpush1.msra.mxu0 0.0
    %6848 = vmatprep.subr.mxu0 0.0
    %6849 = vmatpush1.msra.mxu0 0.0
    %6850 = vmatprep.subr.mxu0 0.0
    %6851 = vmatpush1.msra.mxu0 0.0
    %6852 = vmatprep.subr.mxu0 0.0
    %6853 = vmatpush1.msra.mxu0 0.0
    %6854 = vmatprep.subr.mxu0 0.0
    %6855 = vmatpush1.msra.mxu0 0.0
    %6856 = vmatprep.subr.mxu0 0.0
    %6857 = vmatpush1.msra.mxu0 0.0
    %6858 = vmatprep.subr.mxu0 0.0
    %6859 = vmatpush1.msra.mxu0 0.0
    %6860 = vmatprep.subr.mxu0 0.0
    %6861 = vmatpush1.msra.mxu0 0.0
    %6862 = vmatprep.subr.mxu0 0.0
    %6863 = vmatpush1.msra.mxu0 0.0
    %6864 = vmatprep.subr.mxu0 0.0
    %6865 = vmatpush1.msra.mxu0 0.0
    %6866 = vmatprep.subr.mxu0 0.0
    %6867 = vmatpush1.msra.mxu0 0.0
    %6868 = vmatprep.subr.mxu0 0.0
    %6869 = vmatpush1.msra.mxu0 0.0
    %6870 = vmatprep.subr.mxu0 0.0
    %6871 = vmatpush1.msra.mxu0 0.0
    %6872 = vmatprep.subr.mxu0 0.0
    %6873 = vmatpush1.msra.mxu0 0.0
    %6874 = vmatprep.subr.mxu0 0.0
    %6875 = vmatpush1.msra.mxu0 0.0
    %6876 = vmatprep.subr.mxu0 0.0
    %6877 = vmatpush1.msra.mxu0 0.0
    %6878 = vmatprep.subr.mxu0 0.0
    %6879 = vmatpush1.msra.mxu0 0.0
    %6880 = vmatprep.subr.mxu0 0.0
    %6881 = vmatpush1.msra.mxu0 0.0
    %6882 = vmatprep.subr.mxu0 0.0
    %6883 = vmatpush1.msra.mxu0 0.0
    %6884 = vmatprep.mubr.f32.mxu0 0.0
    %6885 = vmatmul.mubr.f32.gmra.mrb[0].mxu0 %v6815
    %v6886 = vpop.f32.mrb[0].mxu0
    %v6887 = vadd.f32 0.0, %v6886
    %v6888 = vpop.f32.mrb[0].mxu0
    %6889 = vmatprep.mubr.f32.mxu0 0.0
    %6890 = vmatmul.mubr.f32.gmra.mrb[0].mxu0 %v6818
    %v6891 = vpop.f32.mrb[0].mxu0
    %v6892 = vadd.f32 0.0, %v6891
    %v6893 = vpop.f32.mrb[0].mxu0
    %6894 = vdwg.mxu0
    %6895 = vrot.lane.b32.xlu0 %v802, 64
    %v6896 = vpop.permute.xlu0 %6895
    %6897 = vrot.lane.b32.xlu0 %v804, 64
    %v6898 = vpop.permute.xlu0 %6897
    %v6902 = vsel %vm3754, %v4451, 0
    %v6905 = vsel %vm3754, %v4452, 0
    %6907 = vmatprep.subr.mxu0 0.0
    %6908 = vmatpush1.msra.mxu0 %v6896
    %6909 = vmatprep.subr.mxu0 0.0
    %6910 = vmatpush1.msra.mxu0 %v6898
    %6911 = vmatprep.subr.mxu0 0.0
    %6912 = vmatpush1.msra.mxu0 0.0
    %6913 = vmatprep.subr.mxu0 0.0
    %6914 = vmatpush1.msra.mxu0 0.0
    %6915 = vmatprep.subr.mxu0 0.0
    %6916 = vmatpush1.msra.mxu0 0.0
    %6917 = vmatprep.subr.mxu0 0.0
    %6918 = vmatpush1.msra.mxu0 0.0
    %6919 = vmatprep.subr.mxu0 0.0
    %6920 = vmatpush1.msra.mxu0 0.0
    %6921 = vmatprep.subr.mxu0 0.0
    %6922 = vmatpush1.msra.mxu0 0.0
    %6923 = vmatprep.subr.mxu0 0.0
    %6924 = vmatpush1.msra.mxu0 0.0
    %6925 = vmatprep.subr.mxu0 0.0
    %6926 = vmatpush1.msra.mxu0 0.0
    %6927 = vmatprep.subr.mxu0 0.0
    %6928 = vmatpush1.msra.mxu0 0.0
    %6929 = vmatprep.subr.mxu0 0.0
    %6930 = vmatpush1.msra.mxu0 0.0
    %6931 = vmatprep.subr.mxu0 0.0
    %6932 = vmatpush1.msra.mxu0 0.0
    %6933 = vmatprep.subr.mxu0 0.0
    %6934 = vmatpush1.msra.mxu0 0.0
    %6935 = vmatprep.subr.mxu0 0.0
    %6936 = vmatpush1.msra.mxu0 0.0
    %6937 = vmatprep.subr.mxu0 0.0
    %6938 = vmatpush1.msra.mxu0 0.0
    %6939 = vmatprep.subr.mxu0 0.0
    %6940 = vmatpush1.msra.mxu0 0.0
    %6941 = vmatprep.subr.mxu0 0.0
    %6942 = vmatpush1.msra.mxu0 0.0
    %6943 = vmatprep.subr.mxu0 0.0
    %6944 = vmatpush1.msra.mxu0 0.0
    %6945 = vmatprep.subr.mxu0 0.0
    %6946 = vmatpush1.msra.mxu0 0.0
    %6947 = vmatprep.subr.mxu0 0.0
    %6948 = vmatpush1.msra.mxu0 0.0
    %6949 = vmatprep.subr.mxu0 0.0
    %6950 = vmatpush1.msra.mxu0 0.0
    %6951 = vmatprep.subr.mxu0 0.0
    %6952 = vmatpush1.msra.mxu0 0.0
    %6953 = vmatprep.subr.mxu0 0.0
    %6954 = vmatpush1.msra.mxu0 0.0
    %6955 = vmatprep.subr.mxu0 0.0
    %6956 = vmatpush1.msra.mxu0 0.0
    %6957 = vmatprep.subr.mxu0 0.0
    %6958 = vmatpush1.msra.mxu0 0.0
    %6959 = vmatprep.subr.mxu0 0.0
    %6960 = vmatpush1.msra.mxu0 0.0
    %6961 = vmatprep.subr.mxu0 0.0
    %6962 = vmatpush1.msra.mxu0 0.0
    %6963 = vmatprep.subr.mxu0 0.0
    %6964 = vmatpush1.msra.mxu0 0.0
    %6965 = vmatprep.subr.mxu0 0.0
    %6966 = vmatpush1.msra.mxu0 0.0
    %6967 = vmatprep.subr.mxu0 0.0
    %6968 = vmatpush1.msra.mxu0 0.0
    %6969 = vmatprep.subr.mxu0 0.0
    %6970 = vmatpush1.msra.mxu0 0.0
    %6971 = vmatprep.mubr.f32.mxu0 0.0
    %6972 = vmatmul.mubr.f32.gmra.mrb[0].mxu0 %v6902
    %v6973 = vpop.f32.mrb[0].mxu0
    %v6974 = vadd.f32 0.0, %v6973
    %v6975 = vpop.f32.mrb[0].mxu0
    %6976 = vmatprep.mubr.f32.mxu0 0.0
    %6977 = vmatmul.mubr.f32.gmra.mrb[0].mxu0 %v6905
    %v6978 = vpop.f32.mrb[0].mxu0
    %v6979 = vadd.f32 0.0, %v6978
    %v6980 = vpop.f32.mrb[0].mxu0
    %6981 = vdwg.mxu0
    %6982 = vrot.lane.b32.xlu0 %v806, 64
    %v6983 = vpop.permute.xlu0 %6982
    %6984 = vrot.lane.b32.xlu0 %v808, 64
    %v6985 = vpop.permute.xlu0 %6984
    %v6989 = vsel %vm3754, %v4453, 0
    %v6992 = vsel %vm3754, %v4454, 0
    %6994 = vmatprep.subr.mxu0 0.0
    %6995 = vmatpush1.msra.mxu0 %v6983
    %6996 = vmatprep.subr.mxu0 0.0
    %6997 = vmatpush1.msra.mxu0 %v6985
    %6998 = vmatprep.subr.mxu0 0.0
    %6999 = vmatpush1.msra.mxu0 0.0
    %7000 = vmatprep.subr.mxu0 0.0
    %7001 = vmatpush1.msra.mxu0 0.0
    %7002 = vmatprep.subr.mxu0 0.0
    %7003 = vmatpush1.msra.mxu0 0.0
    %7004 = vmatprep.subr.mxu0 0.0
    %7005 = vmatpush1.msra.mxu0 0.0
    %7006 = vmatprep.subr.mxu0 0.0
    %7007 = vmatpush1.msra.mxu0 0.0
    %7008 = vmatprep.subr.mxu0 0.0
    %7009 = vmatpush1.msra.mxu0 0.0
    %7010 = vmatprep.subr.mxu0 0.0
    %7011 = vmatpush1.msra.mxu0 0.0
    %7012 = vmatprep.subr.mxu0 0.0
    %7013 = vmatpush1.msra.mxu0 0.0
    %7014 = vmatprep.subr.mxu0 0.0
    %7015 = vmatpush1.msra.mxu0 0.0
    %7016 = vmatprep.subr.mxu0 0.0
    %7017 = vmatpush1.msra.mxu0 0.0
    %7018 = vmatprep.subr.mxu0 0.0
    %7019 = vmatpush1.msra.mxu0 0.0
    %7020 = vmatprep.subr.mxu0 0.0
    %7021 = vmatpush1.msra.mxu0 0.0
    %7022 = vmatprep.subr.mxu0 0.0
    %7023 = vmatpush1.msra.mxu0 0.0
    %7024 = vmatprep.subr.mxu0 0.0
    %7025 = vmatpush1.msra.mxu0 0.0
    %7026 = vmatprep.subr.mxu0 0.0
    %7027 = vmatpush1.msra.mxu0 0.0
    %7028 = vmatprep.subr.mxu0 0.0
    %7029 = vmatpush1.msra.mxu0 0.0
    %7030 = vmatprep.subr.mxu0 0.0
    %7031 = vmatpush1.msra.mxu0 0.0
    %7032 = vmatprep.subr.mxu0 0.0
    %7033 = vmatpush1.msra.mxu0 0.0
    %7034 = vmatprep.subr.mxu0 0.0
    %7035 = vmatpush1.msra.mxu0 0.0
    %7036 = vmatprep.subr.mxu0 0.0
    %7037 = vmatpush1.msra.mxu0 0.0
    %7038 = vmatprep.subr.mxu0 0.0
    %7039 = vmatpush1.msra.mxu0 0.0
    %7040 = vmatprep.subr.mxu0 0.0
    %7041 = vmatpush1.msra.mxu0 0.0
    %7042 = vmatprep.subr.mxu0 0.0
    %7043 = vmatpush1.msra.mxu0 0.0
    %7044 = vmatprep.subr.mxu0 0.0
    %7045 = vmatpush1.msra.mxu0 0.0
    %7046 = vmatprep.subr.mxu0 0.0
    %7047 = vmatpush1.msra.mxu0 0.0
    %7048 = vmatprep.subr.mxu0 0.0
    %7049 = vmatpush1.msra.mxu0 0.0
    %7050 = vmatprep.subr.mxu0 0.0
    %7051 = vmatpush1.msra.mxu0 0.0
    %7052 = vmatprep.subr.mxu0 0.0
    %7053 = vmatpush1.msra.mxu0 0.0
    %7054 = vmatprep.subr.mxu0 0.0
    %7055 = vmatpush1.msra.mxu0 0.0
    %7056 = vmatprep.subr.mxu0 0.0
    %7057 = vmatpush1.msra.mxu0 0.0
    %7058 = vmatprep.mubr.f32.mxu0 0.0
    %7059 = vmatmul.mubr.f32.gmra.mrb[0].mxu0 %v6989
    %v7060 = vpop.f32.mrb[0].mxu0
    %v7061 = vadd.f32 0.0, %v7060
    %v7062 = vpop.f32.mrb[0].mxu0
    %7063 = vmatprep.mubr.f32.mxu0 0.0
    %7064 = vmatmul.mubr.f32.gmra.mrb[0].mxu0 %v6992
    %v7065 = vpop.f32.mrb[0].mxu0
    %v7066 = vadd.f32 0.0, %v7065
    %v7067 = vpop.f32.mrb[0].mxu0
    %7068 = vdwg.mxu0
    %7069 = vrot.lane.b32.xlu0 %v810, 64
    %v7070 = vpop.permute.xlu0 %7069
    %7071 = vrot.lane.b32.xlu0 %v812, 64
    %v7072 = vpop.permute.xlu0 %7071
    %v7076 = vsel %vm3754, %v4455, 0
    %v7079 = vsel %vm3754, %v4456, 0
    %7081 = vmatprep.subr.mxu0 0.0
    %7082 = vmatpush1.msra.mxu0 %v7070
    %7083 = vmatprep.subr.mxu0 0.0
    %7084 = vmatpush1.msra.mxu0 %v7072
    %7085 = vmatprep.subr.mxu0 0.0
    %7086 = vmatpush1.msra.mxu0 0.0
    %7087 = vmatprep.subr.mxu0 0.0
    %7088 = vmatpush1.msra.mxu0 0.0
    %7089 = vmatprep.subr.mxu0 0.0
    %7090 = vmatpush1.msra.mxu0 0.0
    %7091 = vmatprep.subr.mxu0 0.0
    %7092 = vmatpush1.msra.mxu0 0.0
    %7093 = vmatprep.subr.mxu0 0.0
    %7094 = vmatpush1.msra.mxu0 0.0
    %7095 = vmatprep.subr.mxu0 0.0
    %7096 = vmatpush1.msra.mxu0 0.0
    %7097 = vmatprep.subr.mxu0 0.0
    %7098 = vmatpush1.msra.mxu0 0.0
    %7099 = vmatprep.subr.mxu0 0.0
    %7100 = vmatpush1.msra.mxu0 0.0
    %7101 = vmatprep.subr.mxu0 0.0
    %7102 = vmatpush1.msra.mxu0 0.0
    %7103 = vmatprep.subr.mxu0 0.0
    %7104 = vmatpush1.msra.mxu0 0.0
    %7105 = vmatprep.subr.mxu0 0.0
    %7106 = vmatpush1.msra.mxu0 0.0
    %7107 = vmatprep.subr.mxu0 0.0
    %7108 = vmatpush1.msra.mxu0 0.0
    %7109 = vmatprep.subr.mxu0 0.0
    %7110 = vmatpush1.msra.mxu0 0.0
    %7111 = vmatprep.subr.mxu0 0.0
    %7112 = vmatpush1.msra.mxu0 0.0
    %7113 = vmatprep.subr.mxu0 0.0
    %7114 = vmatpush1.msra.mxu0 0.0
    %7115 = vmatprep.subr.mxu0 0.0
    %7116 = vmatpush1.msra.mxu0 0.0
    %7117 = vmatprep.subr.mxu0 0.0
    %7118 = vmatpush1.msra.mxu0 0.0
    %7119 = vmatprep.subr.mxu0 0.0
    %7120 = vmatpush1.msra.mxu0 0.0
    %7121 = vmatprep.subr.mxu0 0.0
    %7122 = vmatpush1.msra.mxu0 0.0
    %7123 = vmatprep.subr.mxu0 0.0
    %7124 = vmatpush1.msra.mxu0 0.0
    %7125 = vmatprep.subr.mxu0 0.0
    %7126 = vmatpush1.msra.mxu0 0.0
    %7127 = vmatprep.subr.mxu0 0.0
    %7128 = vmatpush1.msra.mxu0 0.0
    %7129 = vmatprep.subr.mxu0 0.0
    %7130 = vmatpush1.msra.mxu0 0.0
    %7131 = vmatprep.subr.mxu0 0.0
    %7132 = vmatpush1.msra.mxu0 0.0
    %7133 = vmatprep.subr.mxu0 0.0
    %7134 = vmatpush1.msra.mxu0 0.0
    %7135 = vmatprep.subr.mxu0 0.0
    %7136 = vmatpush1.msra.mxu0 0.0
    %7137 = vmatprep.subr.mxu0 0.0
    %7138 = vmatpush1.msra.mxu0 0.0
    %7139 = vmatprep.subr.mxu0 0.0
    %7140 = vmatpush1.msra.mxu0 0.0
    %7141 = vmatprep.subr.mxu0 0.0
    %7142 = vmatpush1.msra.mxu0 0.0
    %7143 = vmatprep.subr.mxu0 0.0
    %7144 = vmatpush1.msra.mxu0 0.0
    %7145 = vmatprep.mubr.f32.mxu0 0.0
    %7146 = vmatmul.mubr.f32.gmra.mrb[0].mxu0 %v7076
    %v7147 = vpop.f32.mrb[0].mxu0
    %v7148 = vadd.f32 0.0, %v7147
    %v7149 = vpop.f32.mrb[0].mxu0
    %7150 = vmatprep.mubr.f32.mxu0 0.0
    %7151 = vmatmul.mubr.f32.gmra.mrb[0].mxu0 %v7079
    %v7152 = vpop.f32.mrb[0].mxu0
    %v7153 = vadd.f32 0.0, %v7152
    %v7154 = vpop.f32.mrb[0].mxu0
    %7155 = vdwg.mxu0
    %7156 = vrot.lane.b32.xlu0 %v814, 64
    %v7157 = vpop.permute.xlu0 %7156
    %7158 = vrot.lane.b32.xlu0 %v816, 64
    %v7159 = vpop.permute.xlu0 %7158
    %v7163 = vsel %vm3754, %v4457, 0
    %v7166 = vsel %vm3754, %v4458, 0
    %7168 = vmatprep.subr.mxu0 0.0
    %7169 = vmatpush1.msra.mxu0 %v7157
    %7170 = vmatprep.subr.mxu0 0.0
    %7171 = vmatpush1.msra.mxu0 %v7159
    %7172 = vmatprep.subr.mxu0 0.0
    %7173 = vmatpush1.msra.mxu0 0.0
    %7174 = vmatprep.subr.mxu0 0.0
    %7175 = vmatpush1.msra.mxu0 0.0
    %7176 = vmatprep.subr.mxu0 0.0
    %7177 = vmatpush1.msra.mxu0 0.0
    %7178 = vmatprep.subr.mxu0 0.0
    %7179 = vmatpush1.msra.mxu0 0.0
    %7180 = vmatprep.subr.mxu0 0.0
    %7181 = vmatpush1.msra.mxu0 0.0
    %7182 = vmatprep.subr.mxu0 0.0
    %7183 = vmatpush1.msra.mxu0 0.0
    %7184 = vmatprep.subr.mxu0 0.0
    %7185 = vmatpush1.msra.mxu0 0.0
    %7186 = vmatprep.subr.mxu0 0.0
    %7187 = vmatpush1.msra.mxu0 0.0
    %7188 = vmatprep.subr.mxu0 0.0
    %7189 = vmatpush1.msra.mxu0 0.0
    %7190 = vmatprep.subr.mxu0 0.0
    %7191 = vmatpush1.msra.mxu0 0.0
    %7192 = vmatprep.subr.mxu0 0.0
    %7193 = vmatpush1.msra.mxu0 0.0
    %7194 = vmatprep.subr.mxu0 0.0
    %7195 = vmatpush1.msra.mxu0 0.0
    %7196 = vmatprep.subr.mxu0 0.0
    %7197 = vmatpush1.msra.mxu0 0.0
    %7198 = vmatprep.subr.mxu0 0.0
    %7199 = vmatpush1.msra.mxu0 0.0
    %7200 = vmatprep.subr.mxu0 0.0
    %7201 = vmatpush1.msra.mxu0 0.0
    %7202 = vmatprep.subr.mxu0 0.0
    %7203 = vmatpush1.msra.mxu0 0.0
    %7204 = vmatprep.subr.mxu0 0.0
    %7205 = vmatpush1.msra.mxu0 0.0
    %7206 = vmatprep.subr.mxu0 0.0
    %7207 = vmatpush1.msra.mxu0 0.0
    %7208 = vmatprep.subr.mxu0 0.0
    %7209 = vmatpush1.msra.mxu0 0.0
    %7210 = vmatprep.subr.mxu0 0.0
    %7211 = vmatpush1.msra.mxu0 0.0
    %7212 = vmatprep.subr.mxu0 0.0
    %7213 = vmatpush1.msra.mxu0 0.0
    %7214 = vmatprep.subr.mxu0 0.0
    %7215 = vmatpush1.msra.mxu0 0.0
    %7216 = vmatprep.subr.mxu0 0.0
    %7217 = vmatpush1.msra.mxu0 0.0
    %7218 = vmatprep.subr.mxu0 0.0
    %7219 = vmatpush1.msra.mxu0 0.0
    %7220 = vmatprep.subr.mxu0 0.0
    %7221 = vmatpush1.msra.mxu0 0.0
    %7222 = vmatprep.subr.mxu0 0.0
    %7223 = vmatpush1.msra.mxu0 0.0
    %7224 = vmatprep.subr.mxu0 0.0
    %7225 = vmatpush1.msra.mxu0 0.0
    %7226 = vmatprep.subr.mxu0 0.0
    %7227 = vmatpush1.msra.mxu0 0.0
    %7228 = vmatprep.subr.mxu0 0.0
    %7229 = vmatpush1.msra.mxu0 0.0
    %7230 = vmatprep.subr.mxu0 0.0
    %7231 = vmatpush1.msra.mxu0 0.0
    %7232 = vmatprep.mubr.f32.mxu0 0.0
    %7233 = vmatmul.mubr.f32.gmra.mrb[0].mxu0 %v7163
    %v7234 = vpop.f32.mrb[0].mxu0
    %v7235 = vadd.f32 0.0, %v7234
    %v7236 = vpop.f32.mrb[0].mxu0
    %7237 = vmatprep.mubr.f32.mxu0 0.0
    %7238 = vmatmul.mubr.f32.gmra.mrb[0].mxu0 %v7166
    %v7239 = vpop.f32.mrb[0].mxu0
    %v7240 = vadd.f32 0.0, %v7239
    %v7241 = vpop.f32.mrb[0].mxu0
    %7242 = vdwg.mxu0
    %7259 = vrot.lane.b32.xlu0 %v5234, 8
    %v7260 = vpop.permute.xlu0 %7259
    %7261 = vrot.lane.b32.xlu0 %v5239, 8
    %v7262 = vpop.permute.xlu0 %7261
    %7263 = vrot.lane.b32.xlu0 %v5321, 8
    %v7264 = vpop.permute.xlu0 %7263
    %7265 = vrot.lane.b32.xlu0 %v5326, 8
    %v7266 = vpop.permute.xlu0 %7265
    %7267 = vrot.lane.b32.xlu0 %v5408, 8
    %v7268 = vpop.permute.xlu0 %7267
    %7269 = vrot.lane.b32.xlu0 %v5413, 8
    %v7270 = vpop.permute.xlu0 %7269
    %7271 = vrot.lane.b32.xlu0 %v5495, 8
    %v7272 = vpop.permute.xlu0 %7271
    %7273 = vrot.lane.b32.xlu0 %v5500, 8
    %v7274 = vpop.permute.xlu0 %7273
    %7275 = vrot.lane.b32.xlu0 %v5582, 8
    %v7276 = vpop.permute.xlu0 %7275
    %7277 = vrot.lane.b32.xlu0 %v5587, 8
    %v7278 = vpop.permute.xlu0 %7277
    %7279 = vrot.lane.b32.xlu0 %v5669, 8
    %v7280 = vpop.permute.xlu0 %7279
    %7281 = vrot.lane.b32.xlu0 %v5674, 8
    %v7282 = vpop.permute.xlu0 %7281
    %7283 = vrot.lane.b32.xlu0 %v5756, 8
    %v7284 = vpop.permute.xlu0 %7283
    %7285 = vrot.lane.b32.xlu0 %v5761, 8
    %v7286 = vpop.permute.xlu0 %7285
    %7287 = vrot.lane.b32.xlu0 %v5843, 8
    %v7288 = vpop.permute.xlu0 %7287
    %7289 = vrot.lane.b32.xlu0 %v5848, 8
    %v7290 = vpop.permute.xlu0 %7289
    %7323 = vrot.lane.b32.xlu0 %v5930, 16
    %v7324 = vpop.permute.xlu0 %7323
    %7325 = vrot.lane.b32.xlu0 %v5935, 16
    %v7326 = vpop.permute.xlu0 %7325
    %7327 = vrot.lane.b32.xlu0 %v6017, 16
    %v7328 = vpop.permute.xlu0 %7327
    %7329 = vrot.lane.b32.xlu0 %v6022, 16
    %v7330 = vpop.permute.xlu0 %7329
    %7331 = vrot.lane.b32.xlu0 %v6104, 16
    %v7332 = vpop.permute.xlu0 %7331
    %7333 = vrot.lane.b32.xlu0 %v6109, 16
    %v7334 = vpop.permute.xlu0 %7333
    %7335 = vrot.lane.b32.xlu0 %v6191, 16
    %v7336 = vpop.permute.xlu0 %7335
    %7337 = vrot.lane.b32.xlu0 %v6196, 16
    %v7338 = vpop.permute.xlu0 %7337
    %7339 = vrot.lane.b32.xlu0 %v6278, 16
    %v7340 = vpop.permute.xlu0 %7339
    %7341 = vrot.lane.b32.xlu0 %v6283, 16
    %v7342 = vpop.permute.xlu0 %7341
    %7343 = vrot.lane.b32.xlu0 %v6365, 16
    %v7344 = vpop.permute.xlu0 %7343
    %7345 = vrot.lane.b32.xlu0 %v6370, 16
    %v7346 = vpop.permute.xlu0 %7345
    %7347 = vrot.lane.b32.xlu0 %v6452, 16
    %v7348 = vpop.permute.xlu0 %7347
    %7349 = vrot.lane.b32.xlu0 %v6457, 16
    %v7350 = vpop.permute.xlu0 %7349
    %7351 = vrot.lane.b32.xlu0 %v6539, 16
    %v7352 = vpop.permute.xlu0 %7351
    %7353 = vrot.lane.b32.xlu0 %v6544, 16
    %v7354 = vpop.permute.xlu0 %7353
    %7387 = vrot.lane.b32.xlu0 %v6626, 24
    %v7388 = vpop.permute.xlu0 %7387
    %7389 = vrot.lane.b32.xlu0 %v6631, 24
    %v7390 = vpop.permute.xlu0 %7389
    %7391 = vrot.lane.b32.xlu0 %v6713, 24
    %v7392 = vpop.permute.xlu0 %7391
    %7393 = vrot.lane.b32.xlu0 %v6718, 24
    %v7394 = vpop.permute.xlu0 %7393
    %7395 = vrot.lane.b32.xlu0 %v6800, 24
    %v7396 = vpop.permute.xlu0 %7395
    %7397 = vrot.lane.b32.xlu0 %v6805, 24
    %v7398 = vpop.permute.xlu0 %7397
    %7399 = vrot.lane.b32.xlu0 %v6887, 24
    %v7400 = vpop.permute.xlu0 %7399
    %7401 = vrot.lane.b32.xlu0 %v6892, 24
    %v7402 = vpop.permute.xlu0 %7401
    %7403 = vrot.lane.b32.xlu0 %v6974, 24
    %v7404 = vpop.permute.xlu0 %7403
    %7405 = vrot.lane.b32.xlu0 %v6979, 24
    %v7406 = vpop.permute.xlu0 %7405
    %7407 = vrot.lane.b32.xlu0 %v7061, 24
    %v7408 = vpop.permute.xlu0 %7407
    %7409 = vrot.lane.b32.xlu0 %v7066, 24
    %v7410 = vpop.permute.xlu0 %7409
    %7411 = vrot.lane.b32.xlu0 %v7148, 24
    %v7412 = vpop.permute.xlu0 %7411
    %7413 = vrot.lane.b32.xlu0 %v7153, 24
    %v7414 = vpop.permute.xlu0 %7413
    %7415 = vrot.lane.b32.xlu0 %v7235, 24
    %v7416 = vpop.permute.xlu0 %7415
    %7417 = vrot.lane.b32.xlu0 %v7240, 24
    %v7418 = vpop.permute.xlu0 %7417
    %v7435 = vsel %vm821, %v4538, %v7260
    %v7436 = vsel %vm821, %v4543, %v7262
    %v7437 = vsel %vm821, %v4625, %v7264
    %v7438 = vsel %vm821, %v4630, %v7266
    %v7439 = vsel %vm821, %v4712, %v7268
    %v7440 = vsel %vm821, %v4717, %v7270
    %v7441 = vsel %vm821, %v4799, %v7272
    %v7442 = vsel %vm821, %v4804, %v7274
    %v7443 = vsel %vm821, %v4886, %v7276
    %v7444 = vsel %vm821, %v4891, %v7278
    %v7445 = vsel %vm821, %v4973, %v7280
    %v7446 = vsel %vm821, %v4978, %v7282
    %v7447 = vsel %vm821, %v5060, %v7284
    %v7448 = vsel %vm821, %v5065, %v7286
    %v7449 = vsel %vm821, %v5147, %v7288
    %v7450 = vsel %vm821, %v5152, %v7290
    %v7451 = vsel %vm3754, %v7435, %v7324
    %v7452 = vsel %vm3754, %v7436, %v7326
    %v7453 = vsel %vm3754, %v7437, %v7328
    %v7454 = vsel %vm3754, %v7438, %v7330
    %v7455 = vsel %vm3754, %v7439, %v7332
    %v7456 = vsel %vm3754, %v7440, %v7334
    %v7457 = vsel %vm3754, %v7441, %v7336
    %v7458 = vsel %vm3754, %v7442, %v7338
    %v7459 = vsel %vm3754, %v7443, %v7340
    %v7460 = vsel %vm3754, %v7444, %v7342
    %v7461 = vsel %vm3754, %v7445, %v7344
    %v7462 = vsel %vm3754, %v7446, %v7346
    %v7463 = vsel %vm3754, %v7447, %v7348
    %v7464 = vsel %vm3754, %v7448, %v7350
    %v7465 = vsel %vm3754, %v7449, %v7352
    %v7466 = vsel %vm3754, %v7450, %v7354
    %vm7467 = vcmask 195584
    %v7468 = vsel %vm7467, %v7451, %v7388
    %v7469 = vsel %vm7467, %v7452, %v7390
    %v7470 = vsel %vm7467, %v7453, %v7392
    %v7471 = vsel %vm7467, %v7454, %v7394
    %v7472 = vsel %vm7467, %v7455, %v7396
    %v7473 = vsel %vm7467, %v7456, %v7398
    %v7474 = vsel %vm7467, %v7457, %v7400
    %v7475 = vsel %vm7467, %v7458, %v7402
    %v7476 = vsel %vm7467, %v7459, %v7404
    %v7477 = vsel %vm7467, %v7460, %v7406
    %v7478 = vsel %vm7467, %v7461, %v7408
    %v7479 = vsel %vm7467, %v7462, %v7410
    %v7480 = vsel %vm7467, %v7463, %v7412
    %v7481 = vsel %vm7467, %v7464, %v7414
    %v7482 = vsel %vm7467, %v7465, %v7416
    %v7483 = vsel %vm7467, %v7466, %v7418
    %v7484 = vld [vmem:[#allocation10] sm:$0xff]
    %v7485 = vld [vmem:[#allocation10 + $0x8] sm:$0xff]
    %v7486 = vld [vmem:[#allocation10 + $0x10] sm:$0xff]
    %v7487 = vld [vmem:[#allocation10 + $0x18] sm:$0xff]
    %v7488 = vld [vmem:[%s8] sm:$0x1]
    %v7490 = vlaneseq
    %v7491 = vshrl.u32 %v7490, 7
    %v7492 = vsub.s32 0, %v7491
    %v7493 = vrot.slane %v7488, %v7492
    %v7496 = vsel %vm117, %v7468, 0
    %v7499 = vsel %vm117, %v7469, 0
    %v7502 = vsel %vm117, %v7470, 0
    %v7505 = vsel %vm117, %v7471, 0
    %v7508 = vsel %vm117, %v7472, 0
    %v7511 = vsel %vm117, %v7473, 0
    %v7514 = vsel %vm117, %v7474, 0
    %v7517 = vsel %vm117, %v7475, 0
    %v7520 = vsel %vm117, %v7476, 0
    %v7523 = vsel %vm117, %v7477, 0
    %v7526 = vsel %vm117, %v7478, 0
    %v7529 = vsel %vm117, %v7479, 0
    %v7532 = vsel %vm117, %v7480, 0
    %v7535 = vsel %vm117, %v7481, 0
    %v7538 = vsel %vm117, %v7482, 0
    %v7541 = vsel %vm117, %v7483, 0
    %7543 = vmatprep.subr.mxu0 0.0
    %7544 = vmatpush1.msra.mxu0 %v7484
    %7545 = vmatprep.subr.mxu0 0.0
    %7546 = vmatpush1.msra.mxu0 %v7485
    %7547 = vmatprep.subr.mxu0 0.0
    %7548 = vmatpush1.msra.mxu0 %v7486
    %7549 = vmatprep.subr.mxu0 0.0
    %7550 = vmatpush1.msra.mxu0 %v7487
    %7551 = vmatprep.subr.mxu0 0.0
    %7552 = vmatpush1.msra.mxu0 0.0
    %7553 = vmatprep.subr.mxu0 0.0
    %7554 = vmatpush1.msra.mxu0 0.0
    %7555 = vmatprep.subr.mxu0 0.0
    %7556 = vmatpush1.msra.mxu0 0.0
    %7557 = vmatprep.subr.mxu0 0.0
    %7558 = vmatpush1.msra.mxu0 0.0
    %7559 = vmatprep.subr.mxu0 0.0
    %7560 = vmatpush1.msra.mxu0 0.0
    %7561 = vmatprep.subr.mxu0 0.0
    %7562 = vmatpush1.msra.mxu0 0.0
    %7563 = vmatprep.subr.mxu0 0.0
    %7564 = vmatpush1.msra.mxu0 0.0
    %7565 = vmatprep.subr.mxu0 0.0
    %7566 = vmatpush1.msra.mxu0 0.0
    %7567 = vmatprep.subr.mxu0 0.0
    %7568 = vmatpush1.msra.mxu0 0.0
    %7569 = vmatprep.subr.mxu0 0.0
    %7570 = vmatpush1.msra.mxu0 0.0
    %7571 = vmatprep.subr.mxu0 0.0
    %7572 = vmatpush1.msra.mxu0 0.0
    %7573 = vmatprep.subr.mxu0 0.0
    %7574 = vmatpush1.msra.mxu0 0.0
    %7575 = vmatprep.subr.mxu0 0.0
    %7576 = vmatpush1.msra.mxu0 0.0
    %7577 = vmatprep.subr.mxu0 0.0
    %7578 = vmatpush1.msra.mxu0 0.0
    %7579 = vmatprep.subr.mxu0 0.0
    %7580 = vmatpush1.msra.mxu0 0.0
    %7581 = vmatprep.subr.mxu0 0.0
    %7582 = vmatpush1.msra.mxu0 0.0
    %7583 = vmatprep.subr.mxu0 0.0
    %7584 = vmatpush1.msra.mxu0 0.0
    %7585 = vmatprep.subr.mxu0 0.0
    %7586 = vmatpush1.msra.mxu0 0.0
    %7587 = vmatprep.subr.mxu0 0.0
    %7588 = vmatpush1.msra.mxu0 0.0
    %7589 = vmatprep.subr.mxu0 0.0
    %7590 = vmatpush1.msra.mxu0 0.0
    %7591 = vmatprep.subr.mxu0 0.0
    %7592 = vmatpush1.msra.mxu0 0.0
    %7593 = vmatprep.subr.mxu0 0.0
    %7594 = vmatpush1.msra.mxu0 0.0
    %7595 = vmatprep.subr.mxu0 0.0
    %7596 = vmatpush1.msra.mxu0 0.0
    %7597 = vmatprep.subr.mxu0 0.0
    %7598 = vmatpush1.msra.mxu0 0.0
    %7599 = vmatprep.subr.mxu0 0.0
    %7600 = vmatpush1.msra.mxu0 0.0
    %7601 = vmatprep.subr.mxu0 0.0
    %7602 = vmatpush1.msra.mxu0 0.0
    %7603 = vmatprep.subr.mxu0 0.0
    %7604 = vmatpush1.msra.mxu0 0.0
    %7605 = vmatprep.subr.mxu0 0.0
    %7606 = vmatpush1.msra.mxu0 0.0
    %7607 = vmatprep.mubr.f32.mxu0 0.0
    %7608 = vmatmul.mubr.f32.gmra.mrb[0].mxu0 %v7496
    %v7609 = vpop.f32.mrb[0].mxu0
    %v7610 = vadd.f32 %v7493, %v7609
    %v7611 = vpop.f32.mrb[0].mxu0
    %7612 = vmatprep.mubr.f32.mxu0 0.0
    %7613 = vmatmul.mubr.f32.gmra.mrb[0].mxu0 %v7499
    %v7614 = vpop.f32.mrb[0].mxu0
    %v7615 = vadd.f32 %v7493, %v7614
    %v7616 = vpop.f32.mrb[0].mxu0
    %7617 = vmatprep.mubr.f32.mxu0 0.0
    %7618 = vmatmul.mubr.f32.gmra.mrb[0].mxu0 %v7502
    %v7619 = vpop.f32.mrb[0].mxu0
    %v7620 = vadd.f32 %v7493, %v7619
    %v7621 = vpop.f32.mrb[0].mxu0
    %7622 = vmatprep.mubr.f32.mxu0 0.0
    %7623 = vmatmul.mubr.f32.gmra.mrb[0].mxu0 %v7505
    %v7624 = vpop.f32.mrb[0].mxu0
    %v7625 = vadd.f32 %v7493, %v7624
    %v7626 = vpop.f32.mrb[0].mxu0
    %7627 = vmatprep.mubr.f32.mxu0 0.0
    %7628 = vmatmul.mubr.f32.gmra.mrb[0].mxu0 %v7508
    %v7629 = vpop.f32.mrb[0].mxu0
    %v7630 = vadd.f32 %v7493, %v7629
    %v7631 = vpop.f32.mrb[0].mxu0
    %7632 = vmatprep.mubr.f32.mxu0 0.0
    %7633 = vmatmul.mubr.f32.gmra.mrb[0].mxu0 %v7511
    %v7634 = vpop.f32.mrb[0].mxu0
    %v7635 = vadd.f32 %v7493, %v7634
    %v7636 = vpop.f32.mrb[0].mxu0
    %7637 = vmatprep.mubr.f32.mxu0 0.0
    %7638 = vmatmul.mubr.f32.gmra.mrb[0].mxu0 %v7514
    %v7639 = vpop.f32.mrb[0].mxu0
    %v7640 = vadd.f32 %v7493, %v7639
    %v7641 = vpop.f32.mrb[0].mxu0
    %7642 = vmatprep.mubr.f32.mxu0 0.0
    %7643 = vmatmul.mubr.f32.gmra.mrb[0].mxu0 %v7517
    %v7644 = vpop.f32.mrb[0].mxu0
    %v7645 = vadd.f32 %v7493, %v7644
    %v7646 = vpop.f32.mrb[0].mxu0
    %7647 = vmatprep.mubr.f32.mxu0 0.0
    %7648 = vmatmul.mubr.f32.gmra.mrb[0].mxu0 %v7520
    %v7649 = vpop.f32.mrb[0].mxu0
    %v7650 = vadd.f32 %v7493, %v7649
    %v7651 = vpop.f32.mrb[0].mxu0
    %7652 = vmatprep.mubr.f32.mxu0 0.0
    %7653 = vmatmul.mubr.f32.gmra.mrb[0].mxu0 %v7523
    %v7654 = vpop.f32.mrb[0].mxu0
    %v7655 = vadd.f32 %v7493, %v7654
    %v7656 = vpop.f32.mrb[0].mxu0
    %7657 = vmatprep.mubr.f32.mxu0 0.0
    %7658 = vmatmul.mubr.f32.gmra.mrb[0].mxu0 %v7526
    %v7659 = vpop.f32.mrb[0].mxu0
    %v7660 = vadd.f32 %v7493, %v7659
    %v7661 = vpop.f32.mrb[0].mxu0
    %7662 = vmatprep.mubr.f32.mxu0 0.0
    %7663 = vmatmul.mubr.f32.gmra.mrb[0].mxu0 %v7529
    %v7664 = vpop.f32.mrb[0].mxu0
    %v7665 = vadd.f32 %v7493, %v7664
    %v7666 = vpop.f32.mrb[0].mxu0
    %7667 = vmatprep.mubr.f32.mxu0 0.0
    %7668 = vmatmul.mubr.f32.gmra.mrb[0].mxu0 %v7532
    %v7669 = vpop.f32.mrb[0].mxu0
    %v7670 = vadd.f32 %v7493, %v7669
    %v7671 = vpop.f32.mrb[0].mxu0
    %7672 = vmatprep.mubr.f32.mxu0 0.0
    %7673 = vmatmul.mubr.f32.gmra.mrb[0].mxu0 %v7535
    %v7674 = vpop.f32.mrb[0].mxu0
    %v7675 = vadd.f32 %v7493, %v7674
    %v7676 = vpop.f32.mrb[0].mxu0
    %7677 = vmatprep.mubr.f32.mxu0 0.0
    %7678 = vmatmul.mubr.f32.gmra.mrb[0].mxu0 %v7538
    %v7679 = vpop.f32.mrb[0].mxu0
    %v7680 = vadd.f32 %v7493, %v7679
    %v7681 = vpop.f32.mrb[0].mxu0
    %7682 = vmatprep.mubr.f32.mxu0 0.0
    %7683 = vmatmul.mubr.f32.gmra.mrb[0].mxu0 %v7541
    %v7684 = vpop.f32.mrb[0].mxu0
    %v7685 = vadd.f32 %v7493, %v7684
    %v7686 = vpop.f32.mrb[0].mxu0
    %7687 = vdwg.mxu0
    %7688 = vst.msk [vmem:[#allocation11] sm:$0xff] %vm117, %v7610
    %7689 = vst.msk [vmem:[#allocation11 + $0x8] sm:$0xff] %vm117, %v7615
    %7690 = vst.msk [vmem:[#allocation11 + $0x10] sm:$0xff] %vm117, %v7620
    %7691 = vst.msk [vmem:[#allocation11 + $0x18] sm:$0xff] %vm117, %v7625
    %7692 = vst.msk [vmem:[#allocation11 + $0x20] sm:$0xff] %vm117, %v7630
    %7693 = vst.msk [vmem:[#allocation11 + $0x28] sm:$0xff] %vm117, %v7635
    %7694 = vst.msk [vmem:[#allocation11 + $0x30] sm:$0xff] %vm117, %v7640
    %7695 = vst.msk [vmem:[#allocation11 + $0x38] sm:$0xff] %vm117, %v7645
    %7696 = vst.msk [vmem:[#allocation11 + $0x40] sm:$0xff] %vm117, %v7650
    %7697 = vst.msk [vmem:[#allocation11 + $0x48] sm:$0xff] %vm117, %v7655
    %7698 = vst.msk [vmem:[#allocation11 + $0x50] sm:$0xff] %vm117, %v7660
    %7699 = vst.msk [vmem:[#allocation11 + $0x58] sm:$0xff] %vm117, %v7665
    %7700 = vst.msk [vmem:[#allocation11 + $0x60] sm:$0xff] %vm117, %v7670
    %7701 = vst.msk [vmem:[#allocation11 + $0x68] sm:$0xff] %vm117, %v7675
    %7702 = vst.msk [vmem:[#allocation11 + $0x70] sm:$0xff] %vm117, %v7680
    %7703 = vst.msk [vmem:[#allocation11 + $0x78] sm:$0xff] %vm117, %v7685
    // Predicated region
    $region58: #{tpu_custom_call.1} parent=1 // pred_check
      _
    $region59: #{tpu_custom_call.1} parent=1 // pred_check_branch
      %7705 = sbr.rel (0) target = $region61
    $region60: #{tpu_custom_call.1} parent=1 // pred_region
      %s7707 = ssub.s32 2048, 2048
      %7708 = vsyncadd [#allocation4], %s7707
      %s7709 = sshll.u32 [#allocation11], 4
      %s7710 = int_to_ptr.vmem [resolvable:$true] %s7709
      %7715 = dma.vmem_to_hbm [thread:$0]  %s7710, 2048, %s9, [#allocation4], 128, 128, 8
    $region61: #{tpu_custom_call.1} parent=1 // pred_fallthru
      _
    // Predicated region
    $region62: #{tpu_custom_call.1} parent=1 // pred_check
      _
    $region63: #{tpu_custom_call.1} parent=1 // pred_check_branch
      %7717 = sbr.rel (0) target = $region65
    $region64: #{tpu_custom_call.1} parent=1 // pred_region
      %7718 = dma.done [#allocation4], 2048
    $region65: #{tpu_custom_call.1} parent=1 // pred_fallthru
      _
    %7719 = vsyncpa [#allocation3], 1
    %7720 = vsyncpa [#allocation6], 1
    %7721 = vsyncpa [#allocation9], 1
    %7722 = vsyncpa [#allocation4], 1

</llo_original>
